<compile_context>
chip_gen: v7x
topology: tpu7x:2x2x1
jax: 0.10.0
libtpu: 0.0.40
codegen_flags: <defaults>
</compile_context>

<pallas_src>
import functools

import jax
import jax.numpy as jnp
from jax import lax
from jax.experimental import pallas as pl
from jax.experimental.pallas import tpu as pltpu

VMEM_LIMIT_BYTES = 32 * 1024 * 1024  # safe on v7x (64 MiB physical), fine v5e/v6e


def _round_up(x, m):
    return (x + m - 1) // m * m


# --------------------------- MaxPool3d(k=2, s=2) ---------------------------

def _maxpool_kernel(x_ref, o_ref):
    # x_ref: (1, 2, H, W2, 2*C) -- axis 1 = depth pair, lanes pack (w-pair, C).
    C = o_ref.shape[-1]
    t = x_ref[...]
    a = jnp.maximum(t[:, 0], t[:, 1])                        # depth pair
    _, H, W2, twoC = a.shape
    a = jnp.max(a.reshape(1, H // 2, 2, W2, twoC), axis=2)   # height pair
    o_ref[...] = jnp.maximum(a[..., :C], a[..., C:])         # width pair (lane halves)


def pallas_maxpool3d(x):
    """x: (N, D, H, W, C) NDHWC -> (N, D//2, H//2, W//2, C)."""
    N, D, H, W, C = x.shape
    D2, H2, W2 = D // 2, H // 2, W // 2
    x = x[:, :2 * D2, :2 * H2, :2 * W2, :]
    # Contiguous (copy-free) reshape view: no HBM transpose for the taps.
    t = x.reshape(N * D2, 2, 2 * H2, W2, 2 * C)
    out = pl.pallas_call(
        _maxpool_kernel,
        grid=(N * D2,),
        in_specs=[pl.BlockSpec((1, 2, 2 * H2, W2, 2 * C),
                               lambda i: (i, 0, 0, 0, 0))],
        out_specs=pl.BlockSpec((1, H2, W2, C), lambda i: (i, 0, 0, 0)),
        out_shape=jax.ShapeDtypeStruct((N * D2, H2, W2, C), x.dtype),
        compiler_params=pltpu.CompilerParams(
            dimension_semantics=("parallel",),
            vmem_limit_bytes=VMEM_LIMIT_BYTES),
    )(t)
    return out.reshape(N, D2, H2, W2, C)


# ----------------- Conv3d(3,1,1)+bias, implicit GEMM + BN stats -----------------

def _conv3d_bn_stats_kernel(xm_ref, x0_ref, xp_ref, sc_ref, sh_ref, w_ref,
                            b_ref, y_ref, sum_ref, sq_ref, pad_ref,
                            *, apply_input_norm):
    """One (n, d) output slice of a 'same' 3x3x3 conv as 27 tap matmuls.

    Optionally fuses the previous block's folded BN (scale/shift) + ReLU into
    the input-tap load, and accumulates per-sample BN batch statistics
    (sum / sum-of-squares of the raw conv+bias output) across the depth axis.
    """
    d = pl.program_id(1)
    n_d = pl.num_programs(1)
    H, W, CP = y_ref.shape[2], y_ref.shape[3], y_ref.shape[4]
    Wp = pad_ref.shape[2]

    # Zero the halo scratch and the per-sample stat accumulators once per
    # depth column.  Only the scratch interior is rewritten below, so the
    # zero border supplies the 'same' padding.
    @pl.when(d == 0)
    def _():
        pad_ref[...] = jnp.zeros_like(pad_ref)
        sum_ref[...] = jnp.zeros_like(sum_ref)
        sq_ref[...] = jnp.zeros_like(sq_ref)

    # Stage the three depth taps (normalized on the fly) into the scratch.
    # Out-of-range depth taps are zeroed (the index map clamps the DMA).
    for kd, slab_ref in enumerate((xm_ref, x0_ref, xp_ref)):
        s = slab_ref[0, 0].astype(jnp.float32)               # (H, W, Cin)
        if apply_input_norm:
            s = jnp.maximum(s * sc_ref[...] + sh_ref[...], 0.0)
        dd = d + (kd - 1)
        valid = jnp.logical_and(dd >= 0, dd < n_d).astype(jnp.float32)
        pad_ref[kd, 1:H + 1, 1:W + 1, :] = s * valid

    # Implicit GEMM: 27 tap matmuls accumulated into an f32 register tile.
    # The scratch width Wp is a multiple of 8, so the flatten/unflatten of the
    # (row, Wp) sublane dims is a layout no-op.
    acc = jnp.zeros((H, W, CP), jnp.float32)
    for kd in range(3):
        for kh in range(3):
            f = pad_ref[kd, kh:kh + H, :, :].reshape(H * Wp, -1)
            for kw in range(3):
                r = jnp.dot(f, w_ref[kd, kh, kw],
                            preferred_element_type=jnp.float32)
                acc = acc + r.reshape(H, Wp, CP)[:, kw:kw + W, :]

    y = acc + b_ref[...]
    y_ref[0, 0] = y

    sum_ref[...] += jnp.sum(y, axis=(0, 1), keepdims=True)
    sq_ref[...] += jnp.sum(y * y, axis=(0, 1), keepdims=True)


def conv3d_bn_stats(x5, w, b, in_scale=None, in_shift=None):
    """Conv3d(k=3, s=1, p=1)+bias on NDHWC, raw (pre-BN) output + batch stats.

    If in_scale/in_shift are given, the previous block's BN + ReLU is fused
    into the input load (x_norm = relu(x * in_scale + in_shift)).
    Output channels are zero-padded to a multiple of 128.
    """
    N, Dc, Hc, Wc, Cin_p = x5.shape
    Cout, Cin = w.shape[0], w.shape[1]
    CP = _round_up(Cout, 128)
    Wp = _round_up(Wc + 2, 8)

    apply_norm = in_scale is not None
    if not apply_norm:
        in_scale = jnp.ones((1, Cin_p), jnp.float32)
        in_shift = jnp.zeros((1, Cin_p), jnp.float32)

    # (Cout, Cin, 3, 3, 3) -> (3, 3, 3, Cin_p, CP), zero-padded channels.
    wk = jnp.transpose(w, (2, 3, 4, 1, 0)).astype(jnp.float32)
    wk = jnp.pad(wk, ((0, 0), (0, 0), (0, 0),
                      (0, Cin_p - Cin), (0, CP - Cout)))
    bp = jnp.pad(b.astype(jnp.float32), (0, CP - Cout)).reshape(1, CP)

    def slab_spec(off):
        return pl.BlockSpec(
            (1, 1, Hc, Wc, Cin_p),
            lambda n, d: (n, jnp.clip(d + off, 0, Dc - 1), 0, 0, 0))

    y, s1, s2 = pl.pallas_call(
        functools.partial(_conv3d_bn_stats_kernel, apply_input_norm=apply_norm),
        grid=(N, Dc),
        in_specs=[
            slab_spec(-1), slab_spec(0), slab_spec(1),
            pl.BlockSpec((1, Cin_p), lambda n, d: (0, 0)),
            pl.BlockSpec((1, Cin_p), lambda n, d: (0, 0)),
            pl.BlockSpec((3, 3, 3, Cin_p, CP), lambda n, d: (0, 0, 0, 0, 0)),
            pl.BlockSpec((1, CP), lambda n, d: (0, 0)),
        ],
        out_specs=[
            pl.BlockSpec((1, 1, Hc, Wc, CP), lambda n, d: (n, d, 0, 0, 0)),
            pl.BlockSpec((1, 1, CP), lambda n, d: (n, 0, 0)),
            pl.BlockSpec((1, 1, CP), lambda n, d: (n, 0, 0)),
        ],
        out_shape=[
            jax.ShapeDtypeStruct((N, Dc, Hc, Wc, CP), jnp.float32),
            jax.ShapeDtypeStruct((N, 1, CP), jnp.float32),
            jax.ShapeDtypeStruct((N, 1, CP), jnp.float32),
        ],
        scratch_shapes=[pltpu.VMEM((3, Hc + 2, Wp, Cin_p), jnp.float32)],
        compiler_params=pltpu.CompilerParams(
            dimension_semantics=("parallel", "arbitrary"),
            vmem_limit_bytes=VMEM_LIMIT_BYTES),
    )(x5, x5, x5, in_scale, in_shift, wk, bp)

    # Combine the per-sample partial statistics (megacore-friendly) in JAX.
    return y, jnp.sum(s1, axis=0), jnp.sum(s2, axis=0)


def _bn_fold_scale_shift(ysum, ysq, m, gamma, beta, eps=1e-5):
    """Fold training-mode BatchNorm (batch stats, biased variance) into one
    per-channel scale/shift over the channel-padded lane dim."""
    cp = ysum.shape[-1]
    cout = gamma.shape[0]
    mean = ysum / m
    var = ysq / m - mean * mean
    g = jnp.pad(gamma.astype(jnp.float32), (0, cp - cout)).reshape(1, cp)
    bt = jnp.pad(beta.astype(jnp.float32), (0, cp - cout)).reshape(1, cp)
    scale = g * lax.rsqrt(var + eps)
    shift = bt - mean * scale
    return scale, shift


def down_forward(x_ncdhw, params, eps=1e-5):
    """Down.forward: NCDHW in, NCDHW out (training-mode BatchNorm)."""
    x = jnp.transpose(x_ncdhw, (0, 2, 3, 4, 1)).astype(jnp.float32)  # NDHWC
    x = pallas_maxpool3d(x)
    N, D2, H2, W2, _ = x.shape
    M = N * D2 * H2 * W2

    # Conv1 (+bias) with fused batch-stat accumulation (raw pre-BN output).
    y1, s1, q1 = conv3d_bn_stats(x, params["w1"], params["b1"])
    scale1, shift1 = _bn_fold_scale_shift(s1, q1, M, params["g1"],
                                          params["bt1"], eps)

    # Conv2 consumes y1 with BN1 + ReLU fused into its input load.
    y2, s2, q2 = conv3d_bn_stats(y1, params["w2"], params["b2"],
                                 in_scale=scale1, in_shift=shift1)
    scale2, shift2 = _bn_fold_scale_shift(s2, q2, M, params["g2"],
                                          params["bt2"], eps)

    # Final BN2 + ReLU folded into the channel-unpad / NCDHW transpose
    # epilogue (single fused XLA pass; no standalone normalize kernel).
    Cout = params["w2"].shape[0]
    out = jnp.maximum(y2 * scale2 + shift2, 0.0)[..., :Cout]
    return jnp.transpose(out, (0, 4, 1, 2, 3))


# ----------------------------- Pure-JAX reference -----------------------------

def _ref_down(x_ncdhw, params, eps=1e-5):
    x = jnp.transpose(x_ncdhw, (0, 2, 3, 4, 1))
    N, D, H, W, C = x.shape
    x = x.reshape(N, D // 2, 2, H // 2, 2, W // 2, 2, C).max(axis=(2, 4, 6))

    def block(x, w, b, g, bt):
        wk = jnp.transpose(w, (2, 3, 4, 1, 0))  # DHWIO
        y = lax.conv_general_dilated(
            x, wk, window_strides=(1, 1, 1), padding="SAME",
            dimension_numbers=("NDHWC", "DHWIO", "NDHWC")) + b
        mean = y.mean(axis=(0, 1, 2, 3), keepdims=True)
        var = ((y - mean) ** 2).mean(axis=(0, 1, 2, 3), keepdims=True)
        return jnp.maximum((y - mean) * lax.rsqrt(var + eps) * g + bt, 0.0)

    x = block(x, params["w1"], params["b1"], params["g1"], params["bt1"])
    x = block(x, params["w2"], params["b2"], params["g2"], params["bt2"])
    return jnp.transpose(x, (0, 4, 1, 2, 3))


# ----------------------------- Main -----------------------------

if __name__ == "__main__":
    key = jax.random.PRNGKey(0)
    N, Cin, Cout = 2, 4, 8
    D = H = W = 8  # pooled spatial = 4

    ks = jax.random.split(key, 9)
    x = jax.random.normal(ks[0], (N, Cin, D, H, W), jnp.float32)

    params = {
        "w1": 0.1 * jax.random.normal(ks[1], (Cout, Cin, 3, 3, 3), jnp.float32),
        "b1": 0.1 * jax.random.normal(ks[2], (Cout,), jnp.float32),
        "g1": 1.0 + 0.1 * jax.random.normal(ks[3], (Cout,), jnp.float32),
        "bt1": 0.1 * jax.random.normal(ks[4], (Cout,), jnp.float32),
        "w2": 0.1 * jax.random.normal(ks[5], (Cout, Cout, 3, 3, 3), jnp.float32),
        "b2": 0.1 * jax.random.normal(ks[6], (Cout,), jnp.float32),
        "g2": 1.0 + 0.1 * jax.random.normal(ks[7], (Cout,), jnp.float32),
        "bt2": 0.1 * jax.random.normal(ks[8], (Cout,), jnp.float32),
    }

    out = jax.block_until_ready(jax.jit(down_forward)(x, params))
    assert out.shape == (N, Cout, D // 2, H // 2, W // 2), out.shape

    ref = jax.block_until_ready(_ref_down(x, params))
    err = float(jnp.abs(out - ref).max())
    assert jnp.allclose(out, ref, rtol=1e-3, atol=1e-3), err

    print("KERNEL_OK")
</pallas_src>

<mosaic_0001>
module attributes {stable_mosaic.version = 11 : i64} {
  func.func @_maxpool_kernel(%arg0: i32, %arg1: memref<1x2x8x4x8xf32, #tpu.memory_space<vmem>>, %arg2: memref<1x4x4x4xf32, #tpu.memory_space<vmem>>) attributes {dimension_semantics = [#tpu.dimension_semantics<parallel>], iteration_bounds = array<i64: 8>, scalar_prefetch = 0 : i64, scratch_operands = 0 : i64, tpu.core_type = #tpu.core_type<tc>, window_params = [{transform_indices = @transform_0, window_bounds = array<i64: 1, 2, 8, 4, 8>}, {transform_indices = @transform_1, window_bounds = array<i64: 1, 4, 4, 4>}]} {
    %c0 = arith.constant 0 : index
    %c0_0 = arith.constant 0 : index
    %c0_1 = arith.constant 0 : index
    %c0_2 = arith.constant 0 : index
    %c0_3 = arith.constant 0 : index
    %0 = vector.load %arg1[%c0, %c0_0, %c0_1, %c0_2, %c0_3] : memref<1x2x8x4x8xf32, #tpu.memory_space<vmem>>, vector<1x2x8x4x8xf32>
    %1 = vector.extract_strided_slice %0 {offsets = [0, 0, 0, 0, 0], sizes = [1, 1, 8, 4, 8], strides = [1, 1, 1, 1, 1]} : vector<1x2x8x4x8xf32> to vector<1x1x8x4x8xf32>
    %2 = vector.shape_cast %1 : vector<1x1x8x4x8xf32> to vector<1x8x4x8xf32>
    %3 = vector.extract_strided_slice %0 {offsets = [0, 1, 0, 0, 0], sizes = [1, 1, 8, 4, 8], strides = [1, 1, 1, 1, 1]} : vector<1x2x8x4x8xf32> to vector<1x1x8x4x8xf32>
    %4 = vector.shape_cast %3 : vector<1x1x8x4x8xf32> to vector<1x8x4x8xf32>
    %5 = arith.maximumf %2, %4 : vector<1x8x4x8xf32>
    %6 = vector.shape_cast %5 : vector<1x8x4x8xf32> to vector<1x4x2x4x8xf32>
    %cst = arith.constant dense<0xFF800000> : vector<1x4x4x8xf32>
    %7 = vector.multi_reduction <maximumf>, %6, %cst [2] : vector<1x4x2x4x8xf32> to vector<1x4x4x8xf32>
    %8 = vector.extract_strided_slice %7 {offsets = [0, 0, 0, 0], sizes = [1, 4, 4, 4], strides = [1, 1, 1, 1]} : vector<1x4x4x8xf32> to vector<1x4x4x4xf32>
    %9 = vector.extract_strided_slice %7 {offsets = [0, 0, 0, 4], sizes = [1, 4, 4, 4], strides = [1, 1, 1, 1]} : vector<1x4x4x8xf32> to vector<1x4x4x4xf32>
    %10 = arith.maximumf %8, %9 : vector<1x4x4x4xf32>
    %c0_4 = arith.constant 0 : index
    %c0_5 = arith.constant 0 : index
    %c0_6 = arith.constant 0 : index
    %c0_7 = arith.constant 0 : index
    %11 = vector.load %arg2[%c0_4, %c0_5, %c0_6, %c0_7] : memref<1x4x4x4xf32, #tpu.memory_space<vmem>>, vector<1x4x4x4xf32>
    tpu.vector_store %arg2[%c0_4, %c0_5, %c0_6, %c0_7], %10 {strides = array<i32>} : memref<1x4x4x4xf32, #tpu.memory_space<vmem>>, vector<1x4x4x4xf32>,
    return
  }
  func.func @transform_0(%arg0: i32) -> (i32, i32, i32, i32, i32) {
    %c0_i32 = arith.constant 0 : i32
    %c0_i32_0 = arith.constant 0 : i32
    %c0_i32_1 = arith.constant 0 : i32
    %c0_i32_2 = arith.constant 0 : i32
    %c0_i32_3 = arith.constant 0 : i32
    return %arg0, %c0_i32, %c0_i32_0, %c0_i32_1, %c0_i32_2 : i32, i32, i32, i32, i32
  }
  func.func @transform_1(%arg0: i32) -> (i32, i32, i32, i32) {
    %c0_i32 = arith.constant 0 : i32
    %c0_i32_0 = arith.constant 0 : i32
    %c0_i32_1 = arith.constant 0 : i32
    %c0_i32_2 = arith.constant 0 : i32
    return %arg0, %c0_i32, %c0_i32_0, %c0_i32_1 : i32, i32, i32, i32
  }
}

module attributes {stable_mosaic.version = 11 : i64} {
  func.func @_conv3d_bn_stats_kernel(%arg0: i32, %arg1: i32, %arg2: memref<1x1x4x4x4xf32, #tpu.memory_space<vmem>>, %arg3: memref<1x1x4x4x4xf32, #tpu.memory_space<vmem>>, %arg4: memref<1x1x4x4x4xf32, #tpu.memory_space<vmem>>, %arg5: memref<1x4xf32, #tpu.memory_space<vmem>>, %arg6: memref<1x4xf32, #tpu.memory_space<vmem>>, %arg7: memref<3x3x3x4x128xf32, #tpu.memory_space<vmem>>, %arg8: memref<1x128xf32, #tpu.memory_space<vmem>>, %arg9: memref<1x1x4x4x128xf32, #tpu.memory_space<vmem>>, %arg10: memref<1x1x128xf32, #tpu.memory_space<vmem>>, %arg11: memref<1x1x128xf32, #tpu.memory_space<vmem>>, %arg12: memref<3x6x8x4xf32, #tpu.memory_space<vmem>>) attributes {dimension_semantics = [#tpu.dimension_semantics<parallel>, #tpu.dimension_semantics<arbitrary>], iteration_bounds = array<i64: 2, 4>, scalar_prefetch = 0 : i64, scratch_operands = 1 : i64, tpu.core_type = #tpu.core_type<tc>, window_params = [{transform_indices = @transform_0, window_bounds = array<i64: 1, 1, 4, 4, 4>}, {transform_indices = @transform_1, window_bounds = array<i64: 1, 1, 4, 4, 4>}, {transform_indices = @transform_2, window_bounds = array<i64: 1, 1, 4, 4, 4>}, {pipeline_mode = #tpu.pipeline_mode<synchronous>, transform_indices = @transform_3, window_bounds = array<i64: 1, 4>}, {pipeline_mode = #tpu.pipeline_mode<synchronous>, transform_indices = @transform_4, window_bounds = array<i64: 1, 4>}, {pipeline_mode = #tpu.pipeline_mode<synchronous>, transform_indices = @transform_5, window_bounds = array<i64: 3, 3, 3, 4, 128>}, {pipeline_mode = #tpu.pipeline_mode<synchronous>, transform_indices = @transform_6, window_bounds = array<i64: 1, 128>}, {transform_indices = @transform_7, window_bounds = array<i64: 1, 1, 4, 4, 128>}, {transform_indices = @transform_8, window_bounds = array<i64: 1, 1, 128>}, {transform_indices = @transform_9, window_bounds = array<i64: 1, 1, 128>}]} {
    %c0_i32 = arith.constant 0 : i32
    %0 = arith.cmpi eq, %arg1, %c0_i32 : i32
    %1 = arith.extui %0 : i1 to i32
    %c0_i32_0 = arith.constant 0 : i32
    %2 = arith.cmpi ne, %1, %c0_i32_0 : i32
    scf.if %2 {
      %cst_250 = arith.constant 0.000000e+00 : f32
      %250 = vector.broadcast %cst_250 : f32 to vector<3x6x8x4xf32>
      %c0_251 = arith.constant 0 : index
      %c0_252 = arith.constant 0 : index
      %c0_253 = arith.constant 0 : index
      %c0_254 = arith.constant 0 : index
      %251 = vector.load %arg12[%c0_251, %c0_252, %c0_253, %c0_254] : memref<3x6x8x4xf32, #tpu.memory_space<vmem>>, vector<3x6x8x4xf32>
      tpu.vector_store %arg12[%c0_251, %c0_252, %c0_253, %c0_254], %250 {strides = array<i32>} : memref<3x6x8x4xf32, #tpu.memory_space<vmem>>, vector<3x6x8x4xf32>,
      %cst_255 = arith.constant 0.000000e+00 : f32
      %252 = vector.broadcast %cst_255 : f32 to vector<1x1x128xf32>
      %c0_256 = arith.constant 0 : index
      %c0_257 = arith.constant 0 : index
      %c0_258 = arith.constant 0 : index
      %253 = vector.load %arg10[%c0_256, %c0_257, %c0_258] : memref<1x1x128xf32, #tpu.memory_space<vmem>>, vector<1x1x128xf32>
      tpu.vector_store %arg10[%c0_256, %c0_257, %c0_258], %252 {strides = array<i32>} : memref<1x1x128xf32, #tpu.memory_space<vmem>>, vector<1x1x128xf32>,
      %cst_259 = arith.constant 0.000000e+00 : f32
      %254 = vector.broadcast %cst_259 : f32 to vector<1x1x128xf32>
      %c0_260 = arith.constant 0 : index
      %c0_261 = arith.constant 0 : index
      %c0_262 = arith.constant 0 : index
      %255 = vector.load %arg11[%c0_260, %c0_261, %c0_262] : memref<1x1x128xf32, #tpu.memory_space<vmem>>, vector<1x1x128xf32>
      tpu.vector_store %arg11[%c0_260, %c0_261, %c0_262], %254 {strides = array<i32>} : memref<1x1x128xf32, #tpu.memory_space<vmem>>, vector<1x1x128xf32>,
    } else {
    }
    %c0 = arith.constant 0 : index
    %c0_1 = arith.constant 0 : index
    %c0_2 = arith.constant 0 : index
    %c0_3 = arith.constant 0 : index
    %c0_4 = arith.constant 0 : index
    %3 = vector.load %arg2[%c0, %c0_1, %c0_2, %c0_3, %c0_4] : memref<1x1x4x4x4xf32, #tpu.memory_space<vmem>>, vector<1x1x4x4x4xf32>
    %4 = vector.shape_cast %3 : vector<1x1x4x4x4xf32> to vector<4x4x4xf32>
    %c-1_i32 = arith.constant -1 : i32
    %5 = arith.addi %arg1, %c-1_i32 : i32
    %c0_i32_5 = arith.constant 0 : i32
    %6 = arith.cmpi sge, %5, %c0_i32_5 : i32
    %c4_i32 = arith.constant 4 : i32
    %7 = arith.cmpi slt, %5, %c4_i32 : i32
    %8 = arith.andi %6, %7 : i1
    %9 = arith.extui %8 : i1 to i32
    %10 = arith.sitofp %9 : i32 to f32
    %11 = vector.broadcast %10 : f32 to vector<4x4x4xf32>
    %12 = arith.mulf %4, %11 : vector<4x4x4xf32>
    %c0_6 = arith.constant 0 : index
    %c1 = arith.constant 1 : index
    %c1_7 = arith.constant 1 : index
    %c0_8 = arith.constant 0 : index
    %13 = vector.load %arg12[%c0_6, %c1, %c1_7, %c0_8] : memref<3x6x8x4xf32, #tpu.memory_space<vmem>>, vector<1x4x4x4xf32>
    %14 = vector.shape_cast %13 : vector<1x4x4x4xf32> to vector<4x4x4xf32>
    %15 = vector.shape_cast %12 : vector<4x4x4xf32> to vector<1x4x4x4xf32>
    tpu.vector_store %arg12[%c0_6, %c1, %c1_7, %c0_8], %15 {strides = array<i32>} : memref<3x6x8x4xf32, #tpu.memory_space<vmem>>, vector<1x4x4x4xf32>,
    %c0_9 = arith.constant 0 : index
    %c0_10 = arith.constant 0 : index
    %c0_11 = arith.constant 0 : index
    %c0_12 = arith.constant 0 : index
    %c0_13 = arith.constant 0 : index
    %16 = vector.load %arg3[%c0_9, %c0_10, %c0_11, %c0_12, %c0_13] : memref<1x1x4x4x4xf32, #tpu.memory_space<vmem>>, vector<1x1x4x4x4xf32>
    %17 = vector.shape_cast %16 : vector<1x1x4x4x4xf32> to vector<4x4x4xf32>
    %c0_i32_14 = arith.constant 0 : i32
    %18 = arith.addi %arg1, %c0_i32_14 : i32
    %c0_i32_15 = arith.constant 0 : i32
    %19 = arith.cmpi sge, %18, %c0_i32_15 : i32
    %c4_i32_16 = arith.constant 4 : i32
    %20 = arith.cmpi slt, %18, %c4_i32_16 : i32
    %21 = arith.andi %19, %20 : i1
    %22 = arith.extui %21 : i1 to i32
    %23 = arith.sitofp %22 : i32 to f32
    %24 = vector.broadcast %23 : f32 to vector<4x4x4xf32>
    %25 = arith.mulf %17, %24 : vector<4x4x4xf32>
    %c1_17 = arith.constant 1 : index
    %c1_18 = arith.constant 1 : index
    %c1_19 = arith.constant 1 : index
    %c0_20 = arith.constant 0 : index
    %26 = vector.load %arg12[%c1_17, %c1_18, %c1_19, %c0_20] : memref<3x6x8x4xf32, #tpu.memory_space<vmem>>, vector<1x4x4x4xf32>
    %27 = vector.shape_cast %26 : vector<1x4x4x4xf32> to vector<4x4x4xf32>
    %28 = vector.shape_cast %25 : vector<4x4x4xf32> to vector<1x4x4x4xf32>
    tpu.vector_store %arg12[%c1_17, %c1_18, %c1_19, %c0_20], %28 {strides = array<i32>} : memref<3x6x8x4xf32, #tpu.memory_space<vmem>>, vector<1x4x4x4xf32>,
    %c0_21 = arith.constant 0 : index
    %c0_22 = arith.constant 0 : index
    %c0_23 = arith.constant 0 : index
    %c0_24 = arith.constant 0 : index
    %c0_25 = arith.constant 0 : index
    %29 = vector.load %arg4[%c0_21, %c0_22, %c0_23, %c0_24, %c0_25] : memref<1x1x4x4x4xf32, #tpu.memory_space<vmem>>, vector<1x1x4x4x4xf32>
    %30 = vector.shape_cast %29 : vector<1x1x4x4x4xf32> to vector<4x4x4xf32>
    %c1_i32 = arith.constant 1 : i32
    %31 = arith.addi %arg1, %c1_i32 : i32
    %c0_i32_26 = arith.constant 0 : i32
    %32 = arith.cmpi sge, %31, %c0_i32_26 : i32
    %c4_i32_27 = arith.constant 4 : i32
    %33 = arith.cmpi slt, %31, %c4_i32_27 : i32
    %34 = arith.andi %32, %33 : i1
    %35 = arith.extui %34 : i1 to i32
    %36 = arith.sitofp %35 : i32 to f32
    %37 = vector.broadcast %36 : f32 to vector<4x4x4xf32>
    %38 = arith.mulf %30, %37 : vector<4x4x4xf32>
    %c2 = arith.constant 2 : index
    %c1_28 = arith.constant 1 : index
    %c1_29 = arith.constant 1 : index
    %c0_30 = arith.constant 0 : index
    %39 = vector.load %arg12[%c2, %c1_28, %c1_29, %c0_30] : memref<3x6x8x4xf32, #tpu.memory_space<vmem>>, vector<1x4x4x4xf32>
    %40 = vector.shape_cast %39 : vector<1x4x4x4xf32> to vector<4x4x4xf32>
    %41 = vector.shape_cast %38 : vector<4x4x4xf32> to vector<1x4x4x4xf32>
    tpu.vector_store %arg12[%c2, %c1_28, %c1_29, %c0_30], %41 {strides = array<i32>} : memref<3x6x8x4xf32, #tpu.memory_space<vmem>>, vector<1x4x4x4xf32>,
    %cst = arith.constant 0.000000e+00 : f32
    %42 = vector.broadcast %cst : f32 to vector<4x4x128xf32>
    %c0_31 = arith.constant 0 : index
    %c0_32 = arith.constant 0 : index
    %c0_33 = arith.constant 0 : index
    %c0_34 = arith.constant 0 : index
    %43 = vector.load %arg12[%c0_31, %c0_32, %c0_33, %c0_34] : memref<3x6x8x4xf32, #tpu.memory_space<vmem>>, vector<1x4x8x4xf32>
    %44 = vector.shape_cast %43 : vector<1x4x8x4xf32> to vector<4x8x4xf32>
    %45 = vector.shape_cast %44 : vector<4x8x4xf32> to vector<32x4xf32>
    %c0_35 = arith.constant 0 : index
    %c0_36 = arith.constant 0 : index
    %c0_37 = arith.constant 0 : index
    %c0_38 = arith.constant 0 : index
    %c0_39 = arith.constant 0 : index
    %46 = vector.load %arg7[%c0_35, %c0_36, %c0_37, %c0_38, %c0_39] : memref<3x3x3x4x128xf32, #tpu.memory_space<vmem>>, vector<1x1x1x4x128xf32>
    %47 = vector.shape_cast %46 : vector<1x1x1x4x128xf32> to vector<4x128xf32>
    %cst_40 = arith.constant dense<0.000000e+00> : vector<32x128xf32>
    %48 = tpu.matmul %45, %47, %cst_40 {dimension_numbers = #tpu.dot_dimension_numbers<[1], [0], [0], [1], [0, 0, 1, 1], [], []>} : vector<32x4xf32>, vector<4x128xf32>, vector<32x128xf32> -> vector<32x128xf32>
    %49 = vector.shape_cast %48 : vector<32x128xf32> to vector<4x8x128xf32>
    %50 = vector.extract_strided_slice %49 {offsets = [0, 0, 0], sizes = [4, 4, 128], strides = [1, 1, 1]} : vector<4x8x128xf32> to vector<4x4x128xf32>
    %51 = arith.addf %42, %50 : vector<4x4x128xf32>
    %c0_41 = arith.constant 0 : index
    %c0_42 = arith.constant 0 : index
    %c1_43 = arith.constant 1 : index
    %c0_44 = arith.constant 0 : index
    %c0_45 = arith.constant 0 : index
    %52 = vector.load %arg7[%c0_41, %c0_42, %c1_43, %c0_44, %c0_45] : memref<3x3x3x4x128xf32, #tpu.memory_space<vmem>>, vector<1x1x1x4x128xf32>
    %53 = vector.shape_cast %52 : vector<1x1x1x4x128xf32> to vector<4x128xf32>
    %cst_46 = arith.constant dense<0.000000e+00> : vector<32x128xf32>
    %54 = tpu.matmul %45, %53, %cst_46 {dimension_numbers = #tpu.dot_dimension_numbers<[1], [0], [0], [1], [0, 0, 1, 1], [], []>} : vector<32x4xf32>, vector<4x128xf32>, vector<32x128xf32> -> vector<32x128xf32>
    %55 = vector.shape_cast %54 : vector<32x128xf32> to vector<4x8x128xf32>
    %56 = vector.extract_strided_slice %55 {offsets = [0, 1, 0], sizes = [4, 4, 128], strides = [1, 1, 1]} : vector<4x8x128xf32> to vector<4x4x128xf32>
    %57 = arith.addf %51, %56 : vector<4x4x128xf32>
    %c0_47 = arith.constant 0 : index
    %c0_48 = arith.constant 0 : index
    %c2_49 = arith.constant 2 : index
    %c0_50 = arith.constant 0 : index
    %c0_51 = arith.constant 0 : index
    %58 = vector.load %arg7[%c0_47, %c0_48, %c2_49, %c0_50, %c0_51] : memref<3x3x3x4x128xf32, #tpu.memory_space<vmem>>, vector<1x1x1x4x128xf32>
    %59 = vector.shape_cast %58 : vector<1x1x1x4x128xf32> to vector<4x128xf32>
    %cst_52 = arith.constant dense<0.000000e+00> : vector<32x128xf32>
    %60 = tpu.matmul %45, %59, %cst_52 {dimension_numbers = #tpu.dot_dimension_numbers<[1], [0], [0], [1], [0, 0, 1, 1], [], []>} : vector<32x4xf32>, vector<4x128xf32>, vector<32x128xf32> -> vector<32x128xf32>
    %61 = vector.shape_cast %60 : vector<32x128xf32> to vector<4x8x128xf32>
    %62 = vector.extract_strided_slice %61 {offsets = [0, 2, 0], sizes = [4, 4, 128], strides = [1, 1, 1]} : vector<4x8x128xf32> to vector<4x4x128xf32>
    %63 = arith.addf %57, %62 : vector<4x4x128xf32>
    %c0_53 = arith.constant 0 : index
    %c1_54 = arith.constant 1 : index
    %c0_55 = arith.constant 0 : index
    %c0_56 = arith.constant 0 : index
    %64 = vector.load %arg12[%c0_53, %c1_54, %c0_55, %c0_56] : memref<3x6x8x4xf32, #tpu.memory_space<vmem>>, vector<1x4x8x4xf32>
    %65 = vector.shape_cast %64 : vector<1x4x8x4xf32> to vector<4x8x4xf32>
    %66 = vector.shape_cast %65 : vector<4x8x4xf32> to vector<32x4xf32>
    %c0_57 = arith.constant 0 : index
    %c1_58 = arith.constant 1 : index
    %c0_59 = arith.constant 0 : index
    %c0_60 = arith.constant 0 : index
    %c0_61 = arith.constant 0 : index
    %67 = vector.load %arg7[%c0_57, %c1_58, %c0_59, %c0_60, %c0_61] : memref<3x3x3x4x128xf32, #tpu.memory_space<vmem>>, vector<1x1x1x4x128xf32>
    %68 = vector.shape_cast %67 : vector<1x1x1x4x128xf32> to vector<4x128xf32>
    %cst_62 = arith.constant dense<0.000000e+00> : vector<32x128xf32>
    %69 = tpu.matmul %66, %68, %cst_62 {dimension_numbers = #tpu.dot_dimension_numbers<[1], [0], [0], [1], [0, 0, 1, 1], [], []>} : vector<32x4xf32>, vector<4x128xf32>, vector<32x128xf32> -> vector<32x128xf32>
    %70 = vector.shape_cast %69 : vector<32x128xf32> to vector<4x8x128xf32>
    %71 = vector.extract_strided_slice %70 {offsets = [0, 0, 0], sizes = [4, 4, 128], strides = [1, 1, 1]} : vector<4x8x128xf32> to vector<4x4x128xf32>
    %72 = arith.addf %63, %71 : vector<4x4x128xf32>
    %c0_63 = arith.constant 0 : index
    %c1_64 = arith.constant 1 : index
    %c1_65 = arith.constant 1 : index
    %c0_66 = arith.constant 0 : index
    %c0_67 = arith.constant 0 : index
    %73 = vector.load %arg7[%c0_63, %c1_64, %c1_65, %c0_66, %c0_67] : memref<3x3x3x4x128xf32, #tpu.memory_space<vmem>>, vector<1x1x1x4x128xf32>
    %74 = vector.shape_cast %73 : vector<1x1x1x4x128xf32> to vector<4x128xf32>
    %cst_68 = arith.constant dense<0.000000e+00> : vector<32x128xf32>
    %75 = tpu.matmul %66, %74, %cst_68 {dimension_numbers = #tpu.dot_dimension_numbers<[1], [0], [0], [1], [0, 0, 1, 1], [], []>} : vector<32x4xf32>, vector<4x128xf32>, vector<32x128xf32> -> vector<32x128xf32>
    %76 = vector.shape_cast %75 : vector<32x128xf32> to vector<4x8x128xf32>
    %77 = vector.extract_strided_slice %76 {offsets = [0, 1, 0], sizes = [4, 4, 128], strides = [1, 1, 1]} : vector<4x8x128xf32> to vector<4x4x128xf32>
    %78 = arith.addf %72, %77 : vector<4x4x128xf32>
    %c0_69 = arith.constant 0 : index
    %c1_70 = arith.constant 1 : index
    %c2_71 = arith.constant 2 : index
    %c0_72 = arith.constant 0 : index
    %c0_73 = arith.constant 0 : index
    %79 = vector.load %arg7[%c0_69, %c1_70, %c2_71, %c0_72, %c0_73] : memref<3x3x3x4x128xf32, #tpu.memory_space<vmem>>, vector<1x1x1x4x128xf32>
    %80 = vector.shape_cast %79 : vector<1x1x1x4x128xf32> to vector<4x128xf32>
    %cst_74 = arith.constant dense<0.000000e+00> : vector<32x128xf32>
    %81 = tpu.matmul %66, %80, %cst_74 {dimension_numbers = #tpu.dot_dimension_numbers<[1], [0], [0], [1], [0, 0, 1, 1], [], []>} : vector<32x4xf32>, vector<4x128xf32>, vector<32x128xf32> -> vector<32x128xf32>
    %82 = vector.shape_cast %81 : vector<32x128xf32> to vector<4x8x128xf32>
    %83 = vector.extract_strided_slice %82 {offsets = [0, 2, 0], sizes = [4, 4, 128], strides = [1, 1, 1]} : vector<4x8x128xf32> to vector<4x4x128xf32>
    %84 = arith.addf %78, %83 : vector<4x4x128xf32>
    %c0_75 = arith.constant 0 : index
    %c2_76 = arith.constant 2 : index
    %c0_77 = arith.constant 0 : index
    %c0_78 = arith.constant 0 : index
    %85 = vector.load %arg12[%c0_75, %c2_76, %c0_77, %c0_78] : memref<3x6x8x4xf32, #tpu.memory_space<vmem>>, vector<1x4x8x4xf32>
    %86 = vector.shape_cast %85 : vector<1x4x8x4xf32> to vector<4x8x4xf32>
    %87 = vector.shape_cast %86 : vector<4x8x4xf32> to vector<32x4xf32>
    %c0_79 = arith.constant 0 : index
    %c2_80 = arith.constant 2 : index
    %c0_81 = arith.constant 0 : index
    %c0_82 = arith.constant 0 : index
    %c0_83 = arith.constant 0 : index
    %88 = vector.load %arg7[%c0_79, %c2_80, %c0_81, %c0_82, %c0_83] : memref<3x3x3x4x128xf32, #tpu.memory_space<vmem>>, vector<1x1x1x4x128xf32>
    %89 = vector.shape_cast %88 : vector<1x1x1x4x128xf32> to vector<4x128xf32>
    %cst_84 = arith.constant dense<0.000000e+00> : vector<32x128xf32>
    %90 = tpu.matmul %87, %89, %cst_84 {dimension_numbers = #tpu.dot_dimension_numbers<[1], [0], [0], [1], [0, 0, 1, 1], [], []>} : vector<32x4xf32>, vector<4x128xf32>, vector<32x128xf32> -> vector<32x128xf32>
    %91 = vector.shape_cast %90 : vector<32x128xf32> to vector<4x8x128xf32>
    %92 = vector.extract_strided_slice %91 {offsets = [0, 0, 0], sizes = [4, 4, 128], strides = [1, 1, 1]} : vector<4x8x128xf32> to vector<4x4x128xf32>
    %93 = arith.addf %84, %92 : vector<4x4x128xf32>
    %c0_85 = arith.constant 0 : index
    %c2_86 = arith.constant 2 : index
    %c1_87 = arith.constant 1 : index
    %c0_88 = arith.constant 0 : index
    %c0_89 = arith.constant 0 : index
    %94 = vector.load %arg7[%c0_85, %c2_86, %c1_87, %c0_88, %c0_89] : memref<3x3x3x4x128xf32, #tpu.memory_space<vmem>>, vector<1x1x1x4x128xf32>
    %95 = vector.shape_cast %94 : vector<1x1x1x4x128xf32> to vector<4x128xf32>
    %cst_90 = arith.constant dense<0.000000e+00> : vector<32x128xf32>
    %96 = tpu.matmul %87, %95, %cst_90 {dimension_numbers = #tpu.dot_dimension_numbers<[1], [0], [0], [1], [0, 0, 1, 1], [], []>} : vector<32x4xf32>, vector<4x128xf32>, vector<32x128xf32> -> vector<32x128xf32>
    %97 = vector.shape_cast %96 : vector<32x128xf32> to vector<4x8x128xf32>
    %98 = vector.extract_strided_slice %97 {offsets = [0, 1, 0], sizes = [4, 4, 128], strides = [1, 1, 1]} : vector<4x8x128xf32> to vector<4x4x128xf32>
    %99 = arith.addf %93, %98 : vector<4x4x128xf32>
    %c0_91 = arith.constant 0 : index
    %c2_92 = arith.constant 2 : index
    %c2_93 = arith.constant 2 : index
    %c0_94 = arith.constant 0 : index
    %c0_95 = arith.constant 0 : index
    %100 = vector.load %arg7[%c0_91, %c2_92, %c2_93, %c0_94, %c0_95] : memref<3x3x3x4x128xf32, #tpu.memory_space<vmem>>, vector<1x1x1x4x128xf32>
    %101 = vector.shape_cast %100 : vector<1x1x1x4x128xf32> to vector<4x128xf32>
    %cst_96 = arith.constant dense<0.000000e+00> : vector<32x128xf32>
    %102 = tpu.matmul %87, %101, %cst_96 {dimension_numbers = #tpu.dot_dimension_numbers<[1], [0], [0], [1], [0, 0, 1, 1], [], []>} : vector<32x4xf32>, vector<4x128xf32>, vector<32x128xf32> -> vector<32x128xf32>
    %103 = vector.shape_cast %102 : vector<32x128xf32> to vector<4x8x128xf32>
    %104 = vector.extract_strided_slice %103 {offsets = [0, 2, 0], sizes = [4, 4, 128], strides = [1, 1, 1]} : vector<4x8x128xf32> to vector<4x4x128xf32>
    %105 = arith.addf %99, %104 : vector<4x4x128xf32>
    %c1_97 = arith.constant 1 : index
    %c0_98 = arith.constant 0 : index
    %c0_99 = arith.constant 0 : index
    %c0_100 = arith.constant 0 : index
    %106 = vector.load %arg12[%c1_97, %c0_98, %c0_99, %c0_100] : memref<3x6x8x4xf32, #tpu.memory_space<vmem>>, vector<1x4x8x4xf32>
    %107 = vector.shape_cast %106 : vector<1x4x8x4xf32> to vector<4x8x4xf32>
    %108 = vector.shape_cast %107 : vector<4x8x4xf32> to vector<32x4xf32>
    %c1_101 = arith.constant 1 : index
    %c0_102 = arith.constant 0 : index
    %c0_103 = arith.constant 0 : index
    %c0_104 = arith.constant 0 : index
    %c0_105 = arith.constant 0 : index
    %109 = vector.load %arg7[%c1_101, %c0_102, %c0_103, %c0_104, %c0_105] : memref<3x3x3x4x128xf32, #tpu.memory_space<vmem>>, vector<1x1x1x4x128xf32>
    %110 = vector.shape_cast %109 : vector<1x1x1x4x128xf32> to vector<4x128xf32>
    %cst_106 = arith.constant dense<0.000000e+00> : vector<32x128xf32>
    %111 = tpu.matmul %108, %110, %cst_106 {dimension_numbers = #tpu.dot_dimension_numbers<[1], [0], [0], [1], [0, 0, 1, 1], [], []>} : vector<32x4xf32>, vector<4x128xf32>, vector<32x128xf32> -> vector<32x128xf32>
    %112 = vector.shape_cast %111 : vector<32x128xf32> to vector<4x8x128xf32>
    %113 = vector.extract_strided_slice %112 {offsets = [0, 0, 0], sizes = [4, 4, 128], strides = [1, 1, 1]} : vector<4x8x128xf32> to vector<4x4x128xf32>
    %114 = arith.addf %105, %113 : vector<4x4x128xf32>
    %c1_107 = arith.constant 1 : index
    %c0_108 = arith.constant 0 : index
    %c1_109 = arith.constant 1 : index
    %c0_110 = arith.constant 0 : index
    %c0_111 = arith.constant 0 : index
    %115 = vector.load %arg7[%c1_107, %c0_108, %c1_109, %c0_110, %c0_111] : memref<3x3x3x4x128xf32, #tpu.memory_space<vmem>>, vector<1x1x1x4x128xf32>
    %116 = vector.shape_cast %115 : vector<1x1x1x4x128xf32> to vector<4x128xf32>
    %cst_112 = arith.constant dense<0.000000e+00> : vector<32x128xf32>
    %117 = tpu.matmul %108, %116, %cst_112 {dimension_numbers = #tpu.dot_dimension_numbers<[1], [0], [0], [1], [0, 0, 1, 1], [], []>} : vector<32x4xf32>, vector<4x128xf32>, vector<32x128xf32> -> vector<32x128xf32>
    %118 = vector.shape_cast %117 : vector<32x128xf32> to vector<4x8x128xf32>
    %119 = vector.extract_strided_slice %118 {offsets = [0, 1, 0], sizes = [4, 4, 128], strides = [1, 1, 1]} : vector<4x8x128xf32> to vector<4x4x128xf32>
    %120 = arith.addf %114, %119 : vector<4x4x128xf32>
    %c1_113 = arith.constant 1 : index
    %c0_114 = arith.constant 0 : index
    %c2_115 = arith.constant 2 : index
    %c0_116 = arith.constant 0 : index
    %c0_117 = arith.constant 0 : index
    %121 = vector.load %arg7[%c1_113, %c0_114, %c2_115, %c0_116, %c0_117] : memref<3x3x3x4x128xf32, #tpu.memory_space<vmem>>, vector<1x1x1x4x128xf32>
    %122 = vector.shape_cast %121 : vector<1x1x1x4x128xf32> to vector<4x128xf32>
    %cst_118 = arith.constant dense<0.000000e+00> : vector<32x128xf32>
    %123 = tpu.matmul %108, %122, %cst_118 {dimension_numbers = #tpu.dot_dimension_numbers<[1], [0], [0], [1], [0, 0, 1, 1], [], []>} : vector<32x4xf32>, vector<4x128xf32>, vector<32x128xf32> -> vector<32x128xf32>
    %124 = vector.shape_cast %123 : vector<32x128xf32> to vector<4x8x128xf32>
    %125 = vector.extract_strided_slice %124 {offsets = [0, 2, 0], sizes = [4, 4, 128], strides = [1, 1, 1]} : vector<4x8x128xf32> to vector<4x4x128xf32>
    %126 = arith.addf %120, %125 : vector<4x4x128xf32>
    %c1_119 = arith.constant 1 : index
    %c1_120 = arith.constant 1 : index
    %c0_121 = arith.constant 0 : index
    %c0_122 = arith.constant 0 : index
    %127 = vector.load %arg12[%c1_119, %c1_120, %c0_121, %c0_122] : memref<3x6x8x4xf32, #tpu.memory_space<vmem>>, vector<1x4x8x4xf32>
    %128 = vector.shape_cast %127 : vector<1x4x8x4xf32> to vector<4x8x4xf32>
    %129 = vector.shape_cast %128 : vector<4x8x4xf32> to vector<32x4xf32>
    %c1_123 = arith.constant 1 : index
    %c1_124 = arith.constant 1 : index
    %c0_125 = arith.constant 0 : index
    %c0_126 = arith.constant 0 : index
    %c0_127 = arith.constant 0 : index
    %130 = vector.load %arg7[%c1_123, %c1_124, %c0_125, %c0_126, %c0_127] : memref<3x3x3x4x128xf32, #tpu.memory_space<vmem>>, vector<1x1x1x4x128xf32>
    %131 = vector.shape_cast %130 : vector<1x1x1x4x128xf32> to vector<4x128xf32>
    %cst_128 = arith.constant dense<0.000000e+00> : vector<32x128xf32>
    %132 = tpu.matmul %129, %131, %cst_128 {dimension_numbers = #tpu.dot_dimension_numbers<[1], [0], [0], [1], [0, 0, 1, 1], [], []>} : vector<32x4xf32>, vector<4x128xf32>, vector<32x128xf32> -> vector<32x128xf32>
    %133 = vector.shape_cast %132 : vector<32x128xf32> to vector<4x8x128xf32>
    %134 = vector.extract_strided_slice %133 {offsets = [0, 0, 0], sizes = [4, 4, 128], strides = [1, 1, 1]} : vector<4x8x128xf32> to vector<4x4x128xf32>
    %135 = arith.addf %126, %134 : vector<4x4x128xf32>
    %c1_129 = arith.constant 1 : index
    %c1_130 = arith.constant 1 : index
    %c1_131 = arith.constant 1 : index
    %c0_132 = arith.constant 0 : index
    %c0_133 = arith.constant 0 : index
    %136 = vector.load %arg7[%c1_129, %c1_130, %c1_131, %c0_132, %c0_133] : memref<3x3x3x4x128xf32, #tpu.memory_space<vmem>>, vector<1x1x1x4x128xf32>
    %137 = vector.shape_cast %136 : vector<1x1x1x4x128xf32> to vector<4x128xf32>
    %cst_134 = arith.constant dense<0.000000e+00> : vector<32x128xf32>
    %138 = tpu.matmul %129, %137, %cst_134 {dimension_numbers = #tpu.dot_dimension_numbers<[1], [0], [0], [1], [0, 0, 1, 1], [], []>} : vector<32x4xf32>, vector<4x128xf32>, vector<32x128xf32> -> vector<32x128xf32>
    %139 = vector.shape_cast %138 : vector<32x128xf32> to vector<4x8x128xf32>
    %140 = vector.extract_strided_slice %139 {offsets = [0, 1, 0], sizes = [4, 4, 128], strides = [1, 1, 1]} : vector<4x8x128xf32> to vector<4x4x128xf32>
    %141 = arith.addf %135, %140 : vector<4x4x128xf32>
    %c1_135 = arith.constant 1 : index
    %c1_136 = arith.constant 1 : index
    %c2_137 = arith.constant 2 : index
    %c0_138 = arith.constant 0 : index
    %c0_139 = arith.constant 0 : index
    %142 = vector.load %arg7[%c1_135, %c1_136, %c2_137, %c0_138, %c0_139] : memref<3x3x3x4x128xf32, #tpu.memory_space<vmem>>, vector<1x1x1x4x128xf32>
    %143 = vector.shape_cast %142 : vector<1x1x1x4x128xf32> to vector<4x128xf32>
    %cst_140 = arith.constant dense<0.000000e+00> : vector<32x128xf32>
    %144 = tpu.matmul %129, %143, %cst_140 {dimension_numbers = #tpu.dot_dimension_numbers<[1], [0], [0], [1], [0, 0, 1, 1], [], []>} : vector<32x4xf32>, vector<4x128xf32>, vector<32x128xf32> -> vector<32x128xf32>
    %145 = vector.shape_cast %144 : vector<32x128xf32> to vector<4x8x128xf32>
    %146 = vector.extract_strided_slice %145 {offsets = [0, 2, 0], sizes = [4, 4, 128], strides = [1, 1, 1]} : vector<4x8x128xf32> to vector<4x4x128xf32>
    %147 = arith.addf %141, %146 : vector<4x4x128xf32>
    %c1_141 = arith.constant 1 : index
    %c2_142 = arith.constant 2 : index
    %c0_143 = arith.constant 0 : index
    %c0_144 = arith.constant 0 : index
    %148 = vector.load %arg12[%c1_141, %c2_142, %c0_143, %c0_144] : memref<3x6x8x4xf32, #tpu.memory_space<vmem>>, vector<1x4x8x4xf32>
    %149 = vector.shape_cast %148 : vector<1x4x8x4xf32> to vector<4x8x4xf32>
    %150 = vector.shape_cast %149 : vector<4x8x4xf32> to vector<32x4xf32>
    %c1_145 = arith.constant 1 : index
    %c2_146 = arith.constant 2 : index
    %c0_147 = arith.constant 0 : index
    %c0_148 = arith.constant 0 : index
    %c0_149 = arith.constant 0 : index
    %151 = vector.load %arg7[%c1_145, %c2_146, %c0_147, %c0_148, %c0_149] : memref<3x3x3x4x128xf32, #tpu.memory_space<vmem>>, vector<1x1x1x4x128xf32>
    %152 = vector.shape_cast %151 : vector<1x1x1x4x128xf32> to vector<4x128xf32>
    %cst_150 = arith.constant dense<0.000000e+00> : vector<32x128xf32>
    %153 = tpu.matmul %150, %152, %cst_150 {dimension_numbers = #tpu.dot_dimension_numbers<[1], [0], [0], [1], [0, 0, 1, 1], [], []>} : vector<32x4xf32>, vector<4x128xf32>, vector<32x128xf32> -> vector<32x128xf32>
    %154 = vector.shape_cast %153 : vector<32x128xf32> to vector<4x8x128xf32>
    %155 = vector.extract_strided_slice %154 {offsets = [0, 0, 0], sizes = [4, 4, 128], strides = [1, 1, 1]} : vector<4x8x128xf32> to vector<4x4x128xf32>
    %156 = arith.addf %147, %155 : vector<4x4x128xf32>
    %c1_151 = arith.constant 1 : index
    %c2_152 = arith.constant 2 : index
    %c1_153 = arith.constant 1 : index
    %c0_154 = arith.constant 0 : index
    %c0_155 = arith.constant 0 : index
    %157 = vector.load %arg7[%c1_151, %c2_152, %c1_153, %c0_154, %c0_155] : memref<3x3x3x4x128xf32, #tpu.memory_space<vmem>>, vector<1x1x1x4x128xf32>
    %158 = vector.shape_cast %157 : vector<1x1x1x4x128xf32> to vector<4x128xf32>
    %cst_156 = arith.constant dense<0.000000e+00> : vector<32x128xf32>
    %159 = tpu.matmul %150, %158, %cst_156 {dimension_numbers = #tpu.dot_dimension_numbers<[1], [0], [0], [1], [0, 0, 1, 1], [], []>} : vector<32x4xf32>, vector<4x128xf32>, vector<32x128xf32> -> vector<32x128xf32>
    %160 = vector.shape_cast %159 : vector<32x128xf32> to vector<4x8x128xf32>
    %161 = vector.extract_strided_slice %160 {offsets = [0, 1, 0], sizes = [4, 4, 128], strides = [1, 1, 1]} : vector<4x8x128xf32> to vector<4x4x128xf32>
    %162 = arith.addf %156, %161 : vector<4x4x128xf32>
    %c1_157 = arith.constant 1 : index
    %c2_158 = arith.constant 2 : index
    %c2_159 = arith.constant 2 : index
    %c0_160 = arith.constant 0 : index
    %c0_161 = arith.constant 0 : index
    %163 = vector.load %arg7[%c1_157, %c2_158, %c2_159, %c0_160, %c0_161] : memref<3x3x3x4x128xf32, #tpu.memory_space<vmem>>, vector<1x1x1x4x128xf32>
    %164 = vector.shape_cast %163 : vector<1x1x1x4x128xf32> to vector<4x128xf32>
    %cst_162 = arith.constant dense<0.000000e+00> : vector<32x128xf32>
    %165 = tpu.matmul %150, %164, %cst_162 {dimension_numbers = #tpu.dot_dimension_numbers<[1], [0], [0], [1], [0, 0, 1, 1], [], []>} : vector<32x4xf32>, vector<4x128xf32>, vector<32x128xf32> -> vector<32x128xf32>
    %166 = vector.shape_cast %165 : vector<32x128xf32> to vector<4x8x128xf32>
    %167 = vector.extract_strided_slice %166 {offsets = [0, 2, 0], sizes = [4, 4, 128], strides = [1, 1, 1]} : vector<4x8x128xf32> to vector<4x4x128xf32>
    %168 = arith.addf %162, %167 : vector<4x4x128xf32>
    %c2_163 = arith.constant 2 : index
    %c0_164 = arith.constant 0 : index
    %c0_165 = arith.constant 0 : index
    %c0_166 = arith.constant 0 : index
    %169 = vector.load %arg12[%c2_163, %c0_164, %c0_165, %c0_166] : memref<3x6x8x4xf32, #tpu.memory_space<vmem>>, vector<1x4x8x4xf32>
    %170 = vector.shape_cast %169 : vector<1x4x8x4xf32> to vector<4x8x4xf32>
    %171 = vector.shape_cast %170 : vector<4x8x4xf32> to vector<32x4xf32>
    %c2_167 = arith.constant 2 : index
    %c0_168 = arith.constant 0 : index
    %c0_169 = arith.constant 0 : index
    %c0_170 = arith.constant 0 : index
    %c0_171 = arith.constant 0 : index
    %172 = vector.load %arg7[%c2_167, %c0_168, %c0_169, %c0_170, %c0_171] : memref<3x3x3x4x128xf32, #tpu.memory_space<vmem>>, vector<1x1x1x4x128xf32>
    %173 = vector.shape_cast %172 : vector<1x1x1x4x128xf32> to vector<4x128xf32>
    %cst_172 = arith.constant dense<0.000000e+00> : vector<32x128xf32>
    %174 = tpu.matmul %171, %173, %cst_172 {dimension_numbers = #tpu.dot_dimension_numbers<[1], [0], [0], [1], [0, 0, 1, 1], [], []>} : vector<32x4xf32>, vector<4x128xf32>, vector<32x128xf32> -> vector<32x128xf32>
    %175 = vector.shape_cast %174 : vector<32x128xf32> to vector<4x8x128xf32>
    %176 = vector.extract_strided_slice %175 {offsets = [0, 0, 0], sizes = [4, 4, 128], strides = [1, 1, 1]} : vector<4x8x128xf32> to vector<4x4x128xf32>
    %177 = arith.addf %168, %176 : vector<4x4x128xf32>
    %c2_173 = arith.constant 2 : index
    %c0_174 = arith.constant 0 : index
    %c1_175 = arith.constant 1 : index
    %c0_176 = arith.constant 0 : index
    %c0_177 = arith.constant 0 : index
    %178 = vector.load %arg7[%c2_173, %c0_174, %c1_175, %c0_176, %c0_177] : memref<3x3x3x4x128xf32, #tpu.memory_space<vmem>>, vector<1x1x1x4x128xf32>
    %179 = vector.shape_cast %178 : vector<1x1x1x4x128xf32> to vector<4x128xf32>
    %cst_178 = arith.constant dense<0.000000e+00> : vector<32x128xf32>
    %180 = tpu.matmul %171, %179, %cst_178 {dimension_numbers = #tpu.dot_dimension_numbers<[1], [0], [0], [1], [0, 0, 1, 1], [], []>} : vector<32x4xf32>, vector<4x128xf32>, vector<32x128xf32> -> vector<32x128xf32>
    %181 = vector.shape_cast %180 : vector<32x128xf32> to vector<4x8x128xf32>
    %182 = vector.extract_strided_slice %181 {offsets = [0, 1, 0], sizes = [4, 4, 128], strides = [1, 1, 1]} : vector<4x8x128xf32> to vector<4x4x128xf32>
    %183 = arith.addf %177, %182 : vector<4x4x128xf32>
    %c2_179 = arith.constant 2 : index
    %c0_180 = arith.constant 0 : index
    %c2_181 = arith.constant 2 : index
    %c0_182 = arith.constant 0 : index
    %c0_183 = arith.constant 0 : index
    %184 = vector.load %arg7[%c2_179, %c0_180, %c2_181, %c0_182, %c0_183] : memref<3x3x3x4x128xf32, #tpu.memory_space<vmem>>, vector<1x1x1x4x128xf32>
    %185 = vector.shape_cast %184 : vector<1x1x1x4x128xf32> to vector<4x128xf32>
    %cst_184 = arith.constant dense<0.000000e+00> : vector<32x128xf32>
    %186 = tpu.matmul %171, %185, %cst_184 {dimension_numbers = #tpu.dot_dimension_numbers<[1], [0], [0], [1], [0, 0, 1, 1], [], []>} : vector<32x4xf32>, vector<4x128xf32>, vector<32x128xf32> -> vector<32x128xf32>
    %187 = vector.shape_cast %186 : vector<32x128xf32> to vector<4x8x128xf32>
    %188 = vector.extract_strided_slice %187 {offsets = [0, 2, 0], sizes = [4, 4, 128], strides = [1, 1, 1]} : vector<4x8x128xf32> to vector<4x4x128xf32>
    %189 = arith.addf %183, %188 : vector<4x4x128xf32>
    %c2_185 = arith.constant 2 : index
    %c1_186 = arith.constant 1 : index
    %c0_187 = arith.constant 0 : index
    %c0_188 = arith.constant 0 : index
    %190 = vector.load %arg12[%c2_185, %c1_186, %c0_187, %c0_188] : memref<3x6x8x4xf32, #tpu.memory_space<vmem>>, vector<1x4x8x4xf32>
    %191 = vector.shape_cast %190 : vector<1x4x8x4xf32> to vector<4x8x4xf32>
    %192 = vector.shape_cast %191 : vector<4x8x4xf32> to vector<32x4xf32>
    %c2_189 = arith.constant 2 : index
    %c1_190 = arith.constant 1 : index
    %c0_191 = arith.constant 0 : index
    %c0_192 = arith.constant 0 : index
    %c0_193 = arith.constant 0 : index
    %193 = vector.load %arg7[%c2_189, %c1_190, %c0_191, %c0_192, %c0_193] : memref<3x3x3x4x128xf32, #tpu.memory_space<vmem>>, vector<1x1x1x4x128xf32>
    %194 = vector.shape_cast %193 : vector<1x1x1x4x128xf32> to vector<4x128xf32>
    %cst_194 = arith.constant dense<0.000000e+00> : vector<32x128xf32>
    %195 = tpu.matmul %192, %194, %cst_194 {dimension_numbers = #tpu.dot_dimension_numbers<[1], [0], [0], [1], [0, 0, 1, 1], [], []>} : vector<32x4xf32>, vector<4x128xf32>, vector<32x128xf32> -> vector<32x128xf32>
    %196 = vector.shape_cast %195 : vector<32x128xf32> to vector<4x8x128xf32>
    %197 = vector.extract_strided_slice %196 {offsets = [0, 0, 0], sizes = [4, 4, 128], strides = [1, 1, 1]} : vector<4x8x128xf32> to vector<4x4x128xf32>
    %198 = arith.addf %189, %197 : vector<4x4x128xf32>
    %c2_195 = arith.constant 2 : index
    %c1_196 = arith.constant 1 : index
    %c1_197 = arith.constant 1 : index
    %c0_198 = arith.constant 0 : index
    %c0_199 = arith.constant 0 : index
    %199 = vector.load %arg7[%c2_195, %c1_196, %c1_197, %c0_198, %c0_199] : memref<3x3x3x4x128xf32, #tpu.memory_space<vmem>>, vector<1x1x1x4x128xf32>
    %200 = vector.shape_cast %199 : vector<1x1x1x4x128xf32> to vector<4x128xf32>
    %cst_200 = arith.constant dense<0.000000e+00> : vector<32x128xf32>
    %201 = tpu.matmul %192, %200, %cst_200 {dimension_numbers = #tpu.dot_dimension_numbers<[1], [0], [0], [1], [0, 0, 1, 1], [], []>} : vector<32x4xf32>, vector<4x128xf32>, vector<32x128xf32> -> vector<32x128xf32>
    %202 = vector.shape_cast %201 : vector<32x128xf32> to vector<4x8x128xf32>
    %203 = vector.extract_strided_slice %202 {offsets = [0, 1, 0], sizes = [4, 4, 128], strides = [1, 1, 1]} : vector<4x8x128xf32> to vector<4x4x128xf32>
    %204 = arith.addf %198, %203 : vector<4x4x128xf32>
    %c2_201 = arith.constant 2 : index
    %c1_202 = arith.constant 1 : index
    %c2_203 = arith.constant 2 : index
    %c0_204 = arith.constant 0 : index
    %c0_205 = arith.constant 0 : index
    %205 = vector.load %arg7[%c2_201, %c1_202, %c2_203, %c0_204, %c0_205] : memref<3x3x3x4x128xf32, #tpu.memory_space<vmem>>, vector<1x1x1x4x128xf32>
    %206 = vector.shape_cast %205 : vector<1x1x1x4x128xf32> to vector<4x128xf32>
    %cst_206 = arith.constant dense<0.000000e+00> : vector<32x128xf32>
    %207 = tpu.matmul %192, %206, %cst_206 {dimension_numbers = #tpu.dot_dimension_numbers<[1], [0], [0], [1], [0, 0, 1, 1], [], []>} : vector<32x4xf32>, vector<4x128xf32>, vector<32x128xf32> -> vector<32x128xf32>
    %208 = vector.shape_cast %207 : vector<32x128xf32> to vector<4x8x128xf32>
    %209 = vector.extract_strided_slice %208 {offsets = [0, 2, 0], sizes = [4, 4, 128], strides = [1, 1, 1]} : vector<4x8x128xf32> to vector<4x4x128xf32>
    %210 = arith.addf %204, %209 : vector<4x4x128xf32>
    %c2_207 = arith.constant 2 : index
    %c2_208 = arith.constant 2 : index
    %c0_209 = arith.constant 0 : index
    %c0_210 = arith.constant 0 : index
    %211 = vector.load %arg12[%c2_207, %c2_208, %c0_209, %c0_210] : memref<3x6x8x4xf32, #tpu.memory_space<vmem>>, vector<1x4x8x4xf32>
    %212 = vector.shape_cast %211 : vector<1x4x8x4xf32> to vector<4x8x4xf32>
    %213 = vector.shape_cast %212 : vector<4x8x4xf32> to vector<32x4xf32>
    %c2_211 = arith.constant 2 : index
    %c2_212 = arith.constant 2 : index
    %c0_213 = arith.constant 0 : index
    %c0_214 = arith.constant 0 : index
    %c0_215 = arith.constant 0 : index
    %214 = vector.load %arg7[%c2_211, %c2_212, %c0_213, %c0_214, %c0_215] : memref<3x3x3x4x128xf32, #tpu.memory_space<vmem>>, vector<1x1x1x4x128xf32>
    %215 = vector.shape_cast %214 : vector<1x1x1x4x128xf32> to vector<4x128xf32>
    %cst_216 = arith.constant dense<0.000000e+00> : vector<32x128xf32>
    %216 = tpu.matmul %213, %215, %cst_216 {dimension_numbers = #tpu.dot_dimension_numbers<[1], [0], [0], [1], [0, 0, 1, 1], [], []>} : vector<32x4xf32>, vector<4x128xf32>, vector<32x128xf32> -> vector<32x128xf32>
    %217 = vector.shape_cast %216 : vector<32x128xf32> to vector<4x8x128xf32>
    %218 = vector.extract_strided_slice %217 {offsets = [0, 0, 0], sizes = [4, 4, 128], strides = [1, 1, 1]} : vector<4x8x128xf32> to vector<4x4x128xf32>
    %219 = arith.addf %210, %218 : vector<4x4x128xf32>
    %c2_217 = arith.constant 2 : index
    %c2_218 = arith.constant 2 : index
    %c1_219 = arith.constant 1 : index
    %c0_220 = arith.constant 0 : index
    %c0_221 = arith.constant 0 : index
    %220 = vector.load %arg7[%c2_217, %c2_218, %c1_219, %c0_220, %c0_221] : memref<3x3x3x4x128xf32, #tpu.memory_space<vmem>>, vector<1x1x1x4x128xf32>
    %221 = vector.shape_cast %220 : vector<1x1x1x4x128xf32> to vector<4x128xf32>
    %cst_222 = arith.constant dense<0.000000e+00> : vector<32x128xf32>
    %222 = tpu.matmul %213, %221, %cst_222 {dimension_numbers = #tpu.dot_dimension_numbers<[1], [0], [0], [1], [0, 0, 1, 1], [], []>} : vector<32x4xf32>, vector<4x128xf32>, vector<32x128xf32> -> vector<32x128xf32>
    %223 = vector.shape_cast %222 : vector<32x128xf32> to vector<4x8x128xf32>
    %224 = vector.extract_strided_slice %223 {offsets = [0, 1, 0], sizes = [4, 4, 128], strides = [1, 1, 1]} : vector<4x8x128xf32> to vector<4x4x128xf32>
    %225 = arith.addf %219, %224 : vector<4x4x128xf32>
    %c2_223 = arith.constant 2 : index
    %c2_224 = arith.constant 2 : index
    %c2_225 = arith.constant 2 : index
    %c0_226 = arith.constant 0 : index
    %c0_227 = arith.constant 0 : index
    %226 = vector.load %arg7[%c2_223, %c2_224, %c2_225, %c0_226, %c0_227] : memref<3x3x3x4x128xf32, #tpu.memory_space<vmem>>, vector<1x1x1x4x128xf32>
    %227 = vector.shape_cast %226 : vector<1x1x1x4x128xf32> to vector<4x128xf32>
    %cst_228 = arith.constant dense<0.000000e+00> : vector<32x128xf32>
    %228 = tpu.matmul %213, %227, %cst_228 {dimension_numbers = #tpu.dot_dimension_numbers<[1], [0], [0], [1], [0, 0, 1, 1], [], []>} : vector<32x4xf32>, vector<4x128xf32>, vector<32x128xf32> -> vector<32x128xf32>
    %229 = vector.shape_cast %228 : vector<32x128xf32> to vector<4x8x128xf32>
    %230 = vector.extract_strided_slice %229 {offsets = [0, 2, 0], sizes = [4, 4, 128], strides = [1, 1, 1]} : vector<4x8x128xf32> to vector<4x4x128xf32>
    %231 = arith.addf %225, %230 : vector<4x4x128xf32>
    %c0_229 = arith.constant 0 : index
    %c0_230 = arith.constant 0 : index
    %232 = vector.load %arg8[%c0_229, %c0_230] : memref<1x128xf32, #tpu.memory_space<vmem>>, vector<1x128xf32>
    %233 = vector.shape_cast %232 : vector<1x128xf32> to vector<1x1x128xf32>
    %234 = vector.broadcast %233 : vector<1x1x128xf32> to vector<4x4x128xf32>
    %235 = arith.addf %231, %234 : vector<4x4x128xf32>
    %c0_231 = arith.constant 0 : index
    %c0_232 = arith.constant 0 : index
    %c0_233 = arith.constant 0 : index
    %c0_234 = arith.constant 0 : index
    %c0_235 = arith.constant 0 : index
    %236 = vector.load %arg9[%c0_231, %c0_232, %c0_233, %c0_234, %c0_235] : memref<1x1x4x4x128xf32, #tpu.memory_space<vmem>>, vector<1x1x4x4x128xf32>
    %237 = vector.shape_cast %236 : vector<1x1x4x4x128xf32> to vector<4x4x128xf32>
    %238 = vector.shape_cast %235 : vector<4x4x128xf32> to vector<1x1x4x4x128xf32>
    tpu.vector_store %arg9[%c0_231, %c0_232, %c0_233, %c0_234, %c0_235], %238 {strides = array<i32>} : memref<1x1x4x4x128xf32, #tpu.memory_space<vmem>>, vector<1x1x4x4x128xf32>,
    %c0_236 = arith.constant 0 : index
    %c0_237 = arith.constant 0 : index
    %c0_238 = arith.constant 0 : index
    %239 = vector.load %arg10[%c0_236, %c0_237, %c0_238] : memref<1x1x128xf32, #tpu.memory_space<vmem>>, vector<1x1x128xf32>
    %cst_239 = arith.constant dense<0.000000e+00> : vector<128xf32>
    %240 = vector.multi_reduction <add>, %235, %cst_239 [0, 1] : vector<4x4x128xf32> to vector<128xf32>
    %241 = vector.shape_cast %240 : vector<128xf32> to vector<1x1x128xf32>
    %242 = arith.addf %239, %241 : vector<1x1x128xf32>
    %c0_240 = arith.constant 0 : index
    %c0_241 = arith.constant 0 : index
    %c0_242 = arith.constant 0 : index
    %243 = vector.load %arg10[%c0_240, %c0_241, %c0_242] : memref<1x1x128xf32, #tpu.memory_space<vmem>>, vector<1x1x128xf32>
    tpu.vector_store %arg10[%c0_240, %c0_241, %c0_242], %242 {strides = array<i32>} : memref<1x1x128xf32, #tpu.memory_space<vmem>>, vector<1x1x128xf32>,
    %c0_243 = arith.constant 0 : index
    %c0_244 = arith.constant 0 : index
    %c0_245 = arith.constant 0 : index
    %244 = vector.load %arg11[%c0_243, %c0_244, %c0_245] : memref<1x1x128xf32, #tpu.memory_space<vmem>>, vector<1x1x128xf32>
    %245 = arith.mulf %235, %235 : vector<4x4x128xf32>
    %cst_246 = arith.constant dense<0.000000e+00> : vector<128xf32>
    %246 = vector.multi_reduction <add>, %245, %cst_246 [0, 1] : vector<4x4x128xf32> to vector<128xf32>
    %247 = vector.shape_cast %246 : vector<128xf32> to vector<1x1x128xf32>
    %248 = arith.addf %244, %247 : vector<1x1x128xf32>
    %c0_247 = arith.constant 0 : index
    %c0_248 = arith.constant 0 : index
    %c0_249 = arith.constant 0 : index
    %249 = vector.load %arg11[%c0_247, %c0_248, %c0_249] : memref<1x1x128xf32, #tpu.memory_space<vmem>>, vector<1x1x128xf32>
    tpu.vector_store %arg11[%c0_247, %c0_248, %c0_249], %248 {strides = array<i32>} : memref<1x1x128xf32, #tpu.memory_space<vmem>>, vector<1x1x128xf32>,
    return
  }
  func.func @transform_0(%arg0: i32, %arg1: i32) -> (i32, i32, i32, i32, i32) {
    %c-1_i32 = arith.constant -1 : i32
    %0 = arith.addi %arg1, %c-1_i32 : i32
    %c0_i32 = arith.constant 0 : i32
    %c3_i32 = arith.constant 3 : i32
    %1 = arith.maxsi %c0_i32, %0 : i32
    %2 = arith.minsi %c3_i32, %1 : i32
    %c0_i32_0 = arith.constant 0 : i32
    %c0_i32_1 = arith.constant 0 : i32
    %c0_i32_2 = arith.constant 0 : i32
    %c0_i32_3 = arith.constant 0 : i32
    return %arg0, %2, %c0_i32_0, %c0_i32_1, %c0_i32_2 : i32, i32, i32, i32, i32
  }
  func.func @transform_1(%arg0: i32, %arg1: i32) -> (i32, i32, i32, i32, i32) {
    %c0_i32 = arith.constant 0 : i32
    %0 = arith.addi %arg1, %c0_i32 : i32
    %c0_i32_0 = arith.constant 0 : i32
    %c3_i32 = arith.constant 3 : i32
    %1 = arith.maxsi %c0_i32_0, %0 : i32
    %2 = arith.minsi %c3_i32, %1 : i32
    %c0_i32_1 = arith.constant 0 : i32
    %c0_i32_2 = arith.constant 0 : i32
    %c0_i32_3 = arith.constant 0 : i32
    %c0_i32_4 = arith.constant 0 : i32
    return %arg0, %2, %c0_i32_1, %c0_i32_2, %c0_i32_3 : i32, i32, i32, i32, i32
  }
  func.func @transform_2(%arg0: i32, %arg1: i32) -> (i32, i32, i32, i32, i32) {
    %c1_i32 = arith.constant 1 : i32
    %0 = arith.addi %arg1, %c1_i32 : i32
    %c0_i32 = arith.constant 0 : i32
    %c3_i32 = arith.constant 3 : i32
    %1 = arith.maxsi %c0_i32, %0 : i32
    %2 = arith.minsi %c3_i32, %1 : i32
    %c0_i32_0 = arith.constant 0 : i32
    %c0_i32_1 = arith.constant 0 : i32
    %c0_i32_2 = arith.constant 0 : i32
    %c0_i32_3 = arith.constant 0 : i32
    return %arg0, %2, %c0_i32_0, %c0_i32_1, %c0_i32_2 : i32, i32, i32, i32, i32
  }
  func.func @transform_3(%arg0: i32, %arg1: i32) -> (i32, i32) {
    %c0_i32 = arith.constant 0 : i32
    %c0_i32_0 = arith.constant 0 : i32
    %c0_i32_1 = arith.constant 0 : i32
    return %c0_i32, %c0_i32_0 : i32, i32
  }
  func.func @transform_4(%arg0: i32, %arg1: i32) -> (i32, i32) {
    %c0_i32 = arith.constant 0 : i32
    %c0_i32_0 = arith.constant 0 : i32
    %c0_i32_1 = arith.constant 0 : i32
    return %c0_i32, %c0_i32_0 : i32, i32
  }
  func.func @transform_5(%arg0: i32, %arg1: i32) -> (i32, i32, i32, i32, i32) {
    %c0_i32 = arith.constant 0 : i32
    %c0_i32_0 = arith.constant 0 : i32
    %c0_i32_1 = arith.constant 0 : i32
    %c0_i32_2 = arith.constant 0 : i32
    %c0_i32_3 = arith.constant 0 : i32
    %c0_i32_4 = arith.constant 0 : i32
    return %c0_i32, %c0_i32_0, %c0_i32_1, %c0_i32_2, %c0_i32_3 : i32, i32, i32, i32, i32
  }
  func.func @transform_6(%arg0: i32, %arg1: i32) -> (i32, i32) {
    %c0_i32 = arith.constant 0 : i32
    %c0_i32_0 = arith.constant 0 : i32
    %c0_i32_1 = arith.constant 0 : i32
    return %c0_i32, %c0_i32_0 : i32, i32
  }
  func.func @transform_7(%arg0: i32, %arg1: i32) -> (i32, i32, i32, i32, i32) {
    %c0_i32 = arith.constant 0 : i32
    %c0_i32_0 = arith.constant 0 : i32
    %c0_i32_1 = arith.constant 0 : i32
    %c0_i32_2 = arith.constant 0 : i32
    return %arg0, %arg1, %c0_i32, %c0_i32_0, %c0_i32_1 : i32, i32, i32, i32, i32
  }
  func.func @transform_8(%arg0: i32, %arg1: i32) -> (i32, i32, i32) {
    %c0_i32 = arith.constant 0 : i32
    %c0_i32_0 = arith.constant 0 : i32
    %c0_i32_1 = arith.constant 0 : i32
    return %arg0, %c0_i32, %c0_i32_0 : i32, i32, i32
  }
  func.func @transform_9(%arg0: i32, %arg1: i32) -> (i32, i32, i32) {
    %c0_i32 = arith.constant 0 : i32
    %c0_i32_0 = arith.constant 0 : i32
    %c0_i32_1 = arith.constant 0 : i32
    return %arg0, %c0_i32, %c0_i32_0 : i32, i32, i32
  }
}

module attributes {stable_mosaic.version = 11 : i64} {
  func.func @_conv3d_bn_stats_kernel(%arg0: i32, %arg1: i32, %arg2: memref<1x1x4x4x128xf32, #tpu.memory_space<vmem>>, %arg3: memref<1x1x4x4x128xf32, #tpu.memory_space<vmem>>, %arg4: memref<1x1x4x4x128xf32, #tpu.memory_space<vmem>>, %arg5: memref<1x128xf32, #tpu.memory_space<vmem>>, %arg6: memref<1x128xf32, #tpu.memory_space<vmem>>, %arg7: memref<3x3x3x128x128xf32, #tpu.memory_space<vmem>>, %arg8: memref<1x128xf32, #tpu.memory_space<vmem>>, %arg9: memref<1x1x4x4x128xf32, #tpu.memory_space<vmem>>, %arg10: memref<1x1x128xf32, #tpu.memory_space<vmem>>, %arg11: memref<1x1x128xf32, #tpu.memory_space<vmem>>, %arg12: memref<3x6x8x128xf32, #tpu.memory_space<vmem>>) attributes {dimension_semantics = [#tpu.dimension_semantics<parallel>, #tpu.dimension_semantics<arbitrary>], iteration_bounds = array<i64: 2, 4>, scalar_prefetch = 0 : i64, scratch_operands = 1 : i64, tpu.core_type = #tpu.core_type<tc>, window_params = [{transform_indices = @transform_0, window_bounds = array<i64: 1, 1, 4, 4, 128>}, {transform_indices = @transform_1, window_bounds = array<i64: 1, 1, 4, 4, 128>}, {transform_indices = @transform_2, window_bounds = array<i64: 1, 1, 4, 4, 128>}, {pipeline_mode = #tpu.pipeline_mode<synchronous>, transform_indices = @transform_3, window_bounds = array<i64: 1, 128>}, {pipeline_mode = #tpu.pipeline_mode<synchronous>, transform_indices = @transform_4, window_bounds = array<i64: 1, 128>}, {pipeline_mode = #tpu.pipeline_mode<synchronous>, transform_indices = @transform_5, window_bounds = array<i64: 3, 3, 3, 128, 128>}, {pipeline_mode = #tpu.pipeline_mode<synchronous>, transform_indices = @transform_6, window_bounds = array<i64: 1, 128>}, {transform_indices = @transform_7, window_bounds = array<i64: 1, 1, 4, 4, 128>}, {transform_indices = @transform_8, window_bounds = array<i64: 1, 1, 128>}, {transform_indices = @transform_9, window_bounds = array<i64: 1, 1, 128>}]} {
    %c0_i32 = arith.constant 0 : i32
    %0 = arith.cmpi eq, %arg1, %c0_i32 : i32
    %1 = arith.extui %0 : i1 to i32
    %c0_i32_0 = arith.constant 0 : i32
    %2 = arith.cmpi ne, %1, %c0_i32_0 : i32
    scf.if %2 {
      %cst_265 = arith.constant 0.000000e+00 : f32
      %280 = vector.broadcast %cst_265 : f32 to vector<3x6x8x128xf32>
      %c0_266 = arith.constant 0 : index
      %c0_267 = arith.constant 0 : index
      %c0_268 = arith.constant 0 : index
      %c0_269 = arith.constant 0 : index
      %281 = vector.load %arg12[%c0_266, %c0_267, %c0_268, %c0_269] : memref<3x6x8x128xf32, #tpu.memory_space<vmem>>, vector<3x6x8x128xf32>
      tpu.vector_store %arg12[%c0_266, %c0_267, %c0_268, %c0_269], %280 {strides = array<i32>} : memref<3x6x8x128xf32, #tpu.memory_space<vmem>>, vector<3x6x8x128xf32>,
      %cst_270 = arith.constant 0.000000e+00 : f32
      %282 = vector.broadcast %cst_270 : f32 to vector<1x1x128xf32>
      %c0_271 = arith.constant 0 : index
      %c0_272 = arith.constant 0 : index
      %c0_273 = arith.constant 0 : index
      %283 = vector.load %arg10[%c0_271, %c0_272, %c0_273] : memref<1x1x128xf32, #tpu.memory_space<vmem>>, vector<1x1x128xf32>
      tpu.vector_store %arg10[%c0_271, %c0_272, %c0_273], %282 {strides = array<i32>} : memref<1x1x128xf32, #tpu.memory_space<vmem>>, vector<1x1x128xf32>,
      %cst_274 = arith.constant 0.000000e+00 : f32
      %284 = vector.broadcast %cst_274 : f32 to vector<1x1x128xf32>
      %c0_275 = arith.constant 0 : index
      %c0_276 = arith.constant 0 : index
      %c0_277 = arith.constant 0 : index
      %285 = vector.load %arg11[%c0_275, %c0_276, %c0_277] : memref<1x1x128xf32, #tpu.memory_space<vmem>>, vector<1x1x128xf32>
      tpu.vector_store %arg11[%c0_275, %c0_276, %c0_277], %284 {strides = array<i32>} : memref<1x1x128xf32, #tpu.memory_space<vmem>>, vector<1x1x128xf32>,
    } else {
    }
    %c0 = arith.constant 0 : index
    %c0_1 = arith.constant 0 : index
    %c0_2 = arith.constant 0 : index
    %c0_3 = arith.constant 0 : index
    %c0_4 = arith.constant 0 : index
    %3 = vector.load %arg2[%c0, %c0_1, %c0_2, %c0_3, %c0_4] : memref<1x1x4x4x128xf32, #tpu.memory_space<vmem>>, vector<1x1x4x4x128xf32>
    %4 = vector.shape_cast %3 : vector<1x1x4x4x128xf32> to vector<4x4x128xf32>
    %c0_5 = arith.constant 0 : index
    %c0_6 = arith.constant 0 : index
    %5 = vector.load %arg5[%c0_5, %c0_6] : memref<1x128xf32, #tpu.memory_space<vmem>>, vector<1x128xf32>
    %6 = vector.shape_cast %5 : vector<1x128xf32> to vector<1x1x128xf32>
    %7 = vector.broadcast %6 : vector<1x1x128xf32> to vector<4x4x128xf32>
    %8 = arith.mulf %4, %7 : vector<4x4x128xf32>
    %c0_7 = arith.constant 0 : index
    %c0_8 = arith.constant 0 : index
    %9 = vector.load %arg6[%c0_7, %c0_8] : memref<1x128xf32, #tpu.memory_space<vmem>>, vector<1x128xf32>
    %10 = vector.shape_cast %9 : vector<1x128xf32> to vector<1x1x128xf32>
    %11 = vector.broadcast %10 : vector<1x1x128xf32> to vector<4x4x128xf32>
    %12 = arith.addf %8, %11 : vector<4x4x128xf32>
    %cst = arith.constant 0.000000e+00 : f32
    %13 = vector.broadcast %cst : f32 to vector<4x4x128xf32>
    %14 = arith.maximumf %12, %13 : vector<4x4x128xf32>
    %c-1_i32 = arith.constant -1 : i32
    %15 = arith.addi %arg1, %c-1_i32 : i32
    %c0_i32_9 = arith.constant 0 : i32
    %16 = arith.cmpi sge, %15, %c0_i32_9 : i32
    %c4_i32 = arith.constant 4 : i32
    %17 = arith.cmpi slt, %15, %c4_i32 : i32
    %18 = arith.andi %16, %17 : i1
    %19 = arith.extui %18 : i1 to i32
    %20 = arith.sitofp %19 : i32 to f32
    %21 = vector.broadcast %20 : f32 to vector<4x4x128xf32>
    %22 = arith.mulf %14, %21 : vector<4x4x128xf32>
    %c0_10 = arith.constant 0 : index
    %c1 = arith.constant 1 : index
    %c1_11 = arith.constant 1 : index
    %c0_12 = arith.constant 0 : index
    %23 = vector.load %arg12[%c0_10, %c1, %c1_11, %c0_12] : memref<3x6x8x128xf32, #tpu.memory_space<vmem>>, vector<1x4x4x128xf32>
    %24 = vector.shape_cast %23 : vector<1x4x4x128xf32> to vector<4x4x128xf32>
    %25 = vector.shape_cast %22 : vector<4x4x128xf32> to vector<1x4x4x128xf32>
    tpu.vector_store %arg12[%c0_10, %c1, %c1_11, %c0_12], %25 {strides = array<i32>} : memref<3x6x8x128xf32, #tpu.memory_space<vmem>>, vector<1x4x4x128xf32>,
    %c0_13 = arith.constant 0 : index
    %c0_14 = arith.constant 0 : index
    %c0_15 = arith.constant 0 : index
    %c0_16 = arith.constant 0 : index
    %c0_17 = arith.constant 0 : index
    %26 = vector.load %arg3[%c0_13, %c0_14, %c0_15, %c0_16, %c0_17] : memref<1x1x4x4x128xf32, #tpu.memory_space<vmem>>, vector<1x1x4x4x128xf32>
    %27 = vector.shape_cast %26 : vector<1x1x4x4x128xf32> to vector<4x4x128xf32>
    %c0_18 = arith.constant 0 : index
    %c0_19 = arith.constant 0 : index
    %28 = vector.load %arg5[%c0_18, %c0_19] : memref<1x128xf32, #tpu.memory_space<vmem>>, vector<1x128xf32>
    %29 = vector.shape_cast %28 : vector<1x128xf32> to vector<1x1x128xf32>
    %30 = vector.broadcast %29 : vector<1x1x128xf32> to vector<4x4x128xf32>
    %31 = arith.mulf %27, %30 : vector<4x4x128xf32>
    %c0_20 = arith.constant 0 : index
    %c0_21 = arith.constant 0 : index
    %32 = vector.load %arg6[%c0_20, %c0_21] : memref<1x128xf32, #tpu.memory_space<vmem>>, vector<1x128xf32>
    %33 = vector.shape_cast %32 : vector<1x128xf32> to vector<1x1x128xf32>
    %34 = vector.broadcast %33 : vector<1x1x128xf32> to vector<4x4x128xf32>
    %35 = arith.addf %31, %34 : vector<4x4x128xf32>
    %cst_22 = arith.constant 0.000000e+00 : f32
    %36 = vector.broadcast %cst_22 : f32 to vector<4x4x128xf32>
    %37 = arith.maximumf %35, %36 : vector<4x4x128xf32>
    %c0_i32_23 = arith.constant 0 : i32
    %38 = arith.addi %arg1, %c0_i32_23 : i32
    %c0_i32_24 = arith.constant 0 : i32
    %39 = arith.cmpi sge, %38, %c0_i32_24 : i32
    %c4_i32_25 = arith.constant 4 : i32
    %40 = arith.cmpi slt, %38, %c4_i32_25 : i32
    %41 = arith.andi %39, %40 : i1
    %42 = arith.extui %41 : i1 to i32
    %43 = arith.sitofp %42 : i32 to f32
    %44 = vector.broadcast %43 : f32 to vector<4x4x128xf32>
    %45 = arith.mulf %37, %44 : vector<4x4x128xf32>
    %c1_26 = arith.constant 1 : index
    %c1_27 = arith.constant 1 : index
    %c1_28 = arith.constant 1 : index
    %c0_29 = arith.constant 0 : index
    %46 = vector.load %arg12[%c1_26, %c1_27, %c1_28, %c0_29] : memref<3x6x8x128xf32, #tpu.memory_space<vmem>>, vector<1x4x4x128xf32>
    %47 = vector.shape_cast %46 : vector<1x4x4x128xf32> to vector<4x4x128xf32>
    %48 = vector.shape_cast %45 : vector<4x4x128xf32> to vector<1x4x4x128xf32>
    tpu.vector_store %arg12[%c1_26, %c1_27, %c1_28, %c0_29], %48 {strides = array<i32>} : memref<3x6x8x128xf32, #tpu.memory_space<vmem>>, vector<1x4x4x128xf32>,
    %c0_30 = arith.constant 0 : index
    %c0_31 = arith.constant 0 : index
    %c0_32 = arith.constant 0 : index
    %c0_33 = arith.constant 0 : index
    %c0_34 = arith.constant 0 : index
    %49 = vector.load %arg4[%c0_30, %c0_31, %c0_32, %c0_33, %c0_34] : memref<1x1x4x4x128xf32, #tpu.memory_space<vmem>>, vector<1x1x4x4x128xf32>
    %50 = vector.shape_cast %49 : vector<1x1x4x4x128xf32> to vector<4x4x128xf32>
    %c0_35 = arith.constant 0 : index
    %c0_36 = arith.constant 0 : index
    %51 = vector.load %arg5[%c0_35, %c0_36] : memref<1x128xf32, #tpu.memory_space<vmem>>, vector<1x128xf32>
    %52 = vector.shape_cast %51 : vector<1x128xf32> to vector<1x1x128xf32>
    %53 = vector.broadcast %52 : vector<1x1x128xf32> to vector<4x4x128xf32>
    %54 = arith.mulf %50, %53 : vector<4x4x128xf32>
    %c0_37 = arith.constant 0 : index
    %c0_38 = arith.constant 0 : index
    %55 = vector.load %arg6[%c0_37, %c0_38] : memref<1x128xf32, #tpu.memory_space<vmem>>, vector<1x128xf32>
    %56 = vector.shape_cast %55 : vector<1x128xf32> to vector<1x1x128xf32>
    %57 = vector.broadcast %56 : vector<1x1x128xf32> to vector<4x4x128xf32>
    %58 = arith.addf %54, %57 : vector<4x4x128xf32>
    %cst_39 = arith.constant 0.000000e+00 : f32
    %59 = vector.broadcast %cst_39 : f32 to vector<4x4x128xf32>
    %60 = arith.maximumf %58, %59 : vector<4x4x128xf32>
    %c1_i32 = arith.constant 1 : i32
    %61 = arith.addi %arg1, %c1_i32 : i32
    %c0_i32_40 = arith.constant 0 : i32
    %62 = arith.cmpi sge, %61, %c0_i32_40 : i32
    %c4_i32_41 = arith.constant 4 : i32
    %63 = arith.cmpi slt, %61, %c4_i32_41 : i32
    %64 = arith.andi %62, %63 : i1
    %65 = arith.extui %64 : i1 to i32
    %66 = arith.sitofp %65 : i32 to f32
    %67 = vector.broadcast %66 : f32 to vector<4x4x128xf32>
    %68 = arith.mulf %60, %67 : vector<4x4x128xf32>
    %c2 = arith.constant 2 : index
    %c1_42 = arith.constant 1 : index
    %c1_43 = arith.constant 1 : index
    %c0_44 = arith.constant 0 : index
    %69 = vector.load %arg12[%c2, %c1_42, %c1_43, %c0_44] : memref<3x6x8x128xf32, #tpu.memory_space<vmem>>, vector<1x4x4x128xf32>
    %70 = vector.shape_cast %69 : vector<1x4x4x128xf32> to vector<4x4x128xf32>
    %71 = vector.shape_cast %68 : vector<4x4x128xf32> to vector<1x4x4x128xf32>
    tpu.vector_store %arg12[%c2, %c1_42, %c1_43, %c0_44], %71 {strides = array<i32>} : memref<3x6x8x128xf32, #tpu.memory_space<vmem>>, vector<1x4x4x128xf32>,
    %cst_45 = arith.constant 0.000000e+00 : f32
    %72 = vector.broadcast %cst_45 : f32 to vector<4x4x128xf32>
    %c0_46 = arith.constant 0 : index
    %c0_47 = arith.constant 0 : index
    %c0_48 = arith.constant 0 : index
    %c0_49 = arith.constant 0 : index
    %73 = vector.load %arg12[%c0_46, %c0_47, %c0_48, %c0_49] : memref<3x6x8x128xf32, #tpu.memory_space<vmem>>, vector<1x4x8x128xf32>
    %74 = vector.shape_cast %73 : vector<1x4x8x128xf32> to vector<4x8x128xf32>
    %75 = vector.shape_cast %74 : vector<4x8x128xf32> to vector<32x128xf32>
    %c0_50 = arith.constant 0 : index
    %c0_51 = arith.constant 0 : index
    %c0_52 = arith.constant 0 : index
    %c0_53 = arith.constant 0 : index
    %c0_54 = arith.constant 0 : index
    %76 = vector.load %arg7[%c0_50, %c0_51, %c0_52, %c0_53, %c0_54] : memref<3x3x3x128x128xf32, #tpu.memory_space<vmem>>, vector<1x1x1x128x128xf32>
    %77 = vector.shape_cast %76 : vector<1x1x1x128x128xf32> to vector<128x128xf32>
    %cst_55 = arith.constant dense<0.000000e+00> : vector<32x128xf32>
    %78 = tpu.matmul %75, %77, %cst_55 {dimension_numbers = #tpu.dot_dimension_numbers<[1], [0], [0], [1], [0, 0, 1, 1], [], []>} : vector<32x128xf32>, vector<128x128xf32>, vector<32x128xf32> -> vector<32x128xf32>
    %79 = vector.shape_cast %78 : vector<32x128xf32> to vector<4x8x128xf32>
    %80 = vector.extract_strided_slice %79 {offsets = [0, 0, 0], sizes = [4, 4, 128], strides = [1, 1, 1]} : vector<4x8x128xf32> to vector<4x4x128xf32>
    %81 = arith.addf %72, %80 : vector<4x4x128xf32>
    %c0_56 = arith.constant 0 : index
    %c0_57 = arith.constant 0 : index
    %c1_58 = arith.constant 1 : index
    %c0_59 = arith.constant 0 : index
    %c0_60 = arith.constant 0 : index
    %82 = vector.load %arg7[%c0_56, %c0_57, %c1_58, %c0_59, %c0_60] : memref<3x3x3x128x128xf32, #tpu.memory_space<vmem>>, vector<1x1x1x128x128xf32>
    %83 = vector.shape_cast %82 : vector<1x1x1x128x128xf32> to vector<128x128xf32>
    %cst_61 = arith.constant dense<0.000000e+00> : vector<32x128xf32>
    %84 = tpu.matmul %75, %83, %cst_61 {dimension_numbers = #tpu.dot_dimension_numbers<[1], [0], [0], [1], [0, 0, 1, 1], [], []>} : vector<32x128xf32>, vector<128x128xf32>, vector<32x128xf32> -> vector<32x128xf32>
    %85 = vector.shape_cast %84 : vector<32x128xf32> to vector<4x8x128xf32>
    %86 = vector.extract_strided_slice %85 {offsets = [0, 1, 0], sizes = [4, 4, 128], strides = [1, 1, 1]} : vector<4x8x128xf32> to vector<4x4x128xf32>
    %87 = arith.addf %81, %86 : vector<4x4x128xf32>
    %c0_62 = arith.constant 0 : index
    %c0_63 = arith.constant 0 : index
    %c2_64 = arith.constant 2 : index
    %c0_65 = arith.constant 0 : index
    %c0_66 = arith.constant 0 : index
    %88 = vector.load %arg7[%c0_62, %c0_63, %c2_64, %c0_65, %c0_66] : memref<3x3x3x128x128xf32, #tpu.memory_space<vmem>>, vector<1x1x1x128x128xf32>
    %89 = vector.shape_cast %88 : vector<1x1x1x128x128xf32> to vector<128x128xf32>
    %cst_67 = arith.constant dense<0.000000e+00> : vector<32x128xf32>
    %90 = tpu.matmul %75, %89, %cst_67 {dimension_numbers = #tpu.dot_dimension_numbers<[1], [0], [0], [1], [0, 0, 1, 1], [], []>} : vector<32x128xf32>, vector<128x128xf32>, vector<32x128xf32> -> vector<32x128xf32>
    %91 = vector.shape_cast %90 : vector<32x128xf32> to vector<4x8x128xf32>
    %92 = vector.extract_strided_slice %91 {offsets = [0, 2, 0], sizes = [4, 4, 128], strides = [1, 1, 1]} : vector<4x8x128xf32> to vector<4x4x128xf32>
    %93 = arith.addf %87, %92 : vector<4x4x128xf32>
    %c0_68 = arith.constant 0 : index
    %c1_69 = arith.constant 1 : index
    %c0_70 = arith.constant 0 : index
    %c0_71 = arith.constant 0 : index
    %94 = vector.load %arg12[%c0_68, %c1_69, %c0_70, %c0_71] : memref<3x6x8x128xf32, #tpu.memory_space<vmem>>, vector<1x4x8x128xf32>
    %95 = vector.shape_cast %94 : vector<1x4x8x128xf32> to vector<4x8x128xf32>
    %96 = vector.shape_cast %95 : vector<4x8x128xf32> to vector<32x128xf32>
    %c0_72 = arith.constant 0 : index
    %c1_73 = arith.constant 1 : index
    %c0_74 = arith.constant 0 : index
    %c0_75 = arith.constant 0 : index
    %c0_76 = arith.constant 0 : index
    %97 = vector.load %arg7[%c0_72, %c1_73, %c0_74, %c0_75, %c0_76] : memref<3x3x3x128x128xf32, #tpu.memory_space<vmem>>, vector<1x1x1x128x128xf32>
    %98 = vector.shape_cast %97 : vector<1x1x1x128x128xf32> to vector<128x128xf32>
    %cst_77 = arith.constant dense<0.000000e+00> : vector<32x128xf32>
    %99 = tpu.matmul %96, %98, %cst_77 {dimension_numbers = #tpu.dot_dimension_numbers<[1], [0], [0], [1], [0, 0, 1, 1], [], []>} : vector<32x128xf32>, vector<128x128xf32>, vector<32x128xf32> -> vector<32x128xf32>
    %100 = vector.shape_cast %99 : vector<32x128xf32> to vector<4x8x128xf32>
    %101 = vector.extract_strided_slice %100 {offsets = [0, 0, 0], sizes = [4, 4, 128], strides = [1, 1, 1]} : vector<4x8x128xf32> to vector<4x4x128xf32>
    %102 = arith.addf %93, %101 : vector<4x4x128xf32>
    %c0_78 = arith.constant 0 : index
    %c1_79 = arith.constant 1 : index
    %c1_80 = arith.constant 1 : index
    %c0_81 = arith.constant 0 : index
    %c0_82 = arith.constant 0 : index
    %103 = vector.load %arg7[%c0_78, %c1_79, %c1_80, %c0_81, %c0_82] : memref<3x3x3x128x128xf32, #tpu.memory_space<vmem>>, vector<1x1x1x128x128xf32>
    %104 = vector.shape_cast %103 : vector<1x1x1x128x128xf32> to vector<128x128xf32>
    %cst_83 = arith.constant dense<0.000000e+00> : vector<32x128xf32>
    %105 = tpu.matmul %96, %104, %cst_83 {dimension_numbers = #tpu.dot_dimension_numbers<[1], [0], [0], [1], [0, 0, 1, 1], [], []>} : vector<32x128xf32>, vector<128x128xf32>, vector<32x128xf32> -> vector<32x128xf32>
    %106 = vector.shape_cast %105 : vector<32x128xf32> to vector<4x8x128xf32>
    %107 = vector.extract_strided_slice %106 {offsets = [0, 1, 0], sizes = [4, 4, 128], strides = [1, 1, 1]} : vector<4x8x128xf32> to vector<4x4x128xf32>
    %108 = arith.addf %102, %107 : vector<4x4x128xf32>
    %c0_84 = arith.constant 0 : index
    %c1_85 = arith.constant 1 : index
    %c2_86 = arith.constant 2 : index
    %c0_87 = arith.constant 0 : index
    %c0_88 = arith.constant 0 : index
    %109 = vector.load %arg7[%c0_84, %c1_85, %c2_86, %c0_87, %c0_88] : memref<3x3x3x128x128xf32, #tpu.memory_space<vmem>>, vector<1x1x1x128x128xf32>
    %110 = vector.shape_cast %109 : vector<1x1x1x128x128xf32> to vector<128x128xf32>
    %cst_89 = arith.constant dense<0.000000e+00> : vector<32x128xf32>
    %111 = tpu.matmul %96, %110, %cst_89 {dimension_numbers = #tpu.dot_dimension_numbers<[1], [0], [0], [1], [0, 0, 1, 1], [], []>} : vector<32x128xf32>, vector<128x128xf32>, vector<32x128xf32> -> vector<32x128xf32>
    %112 = vector.shape_cast %111 : vector<32x128xf32> to vector<4x8x128xf32>
    %113 = vector.extract_strided_slice %112 {offsets = [0, 2, 0], sizes = [4, 4, 128], strides = [1, 1, 1]} : vector<4x8x128xf32> to vector<4x4x128xf32>
    %114 = arith.addf %108, %113 : vector<4x4x128xf32>
    %c0_90 = arith.constant 0 : index
    %c2_91 = arith.constant 2 : index
    %c0_92 = arith.constant 0 : index
    %c0_93 = arith.constant 0 : index
    %115 = vector.load %arg12[%c0_90, %c2_91, %c0_92, %c0_93] : memref<3x6x8x128xf32, #tpu.memory_space<vmem>>, vector<1x4x8x128xf32>
    %116 = vector.shape_cast %115 : vector<1x4x8x128xf32> to vector<4x8x128xf32>
    %117 = vector.shape_cast %116 : vector<4x8x128xf32> to vector<32x128xf32>
    %c0_94 = arith.constant 0 : index
    %c2_95 = arith.constant 2 : index
    %c0_96 = arith.constant 0 : index
    %c0_97 = arith.constant 0 : index
    %c0_98 = arith.constant 0 : index
    %118 = vector.load %arg7[%c0_94, %c2_95, %c0_96, %c0_97, %c0_98] : memref<3x3x3x128x128xf32, #tpu.memory_space<vmem>>, vector<1x1x1x128x128xf32>
    %119 = vector.shape_cast %118 : vector<1x1x1x128x128xf32> to vector<128x128xf32>
    %cst_99 = arith.constant dense<0.000000e+00> : vector<32x128xf32>
    %120 = tpu.matmul %117, %119, %cst_99 {dimension_numbers = #tpu.dot_dimension_numbers<[1], [0], [0], [1], [0, 0, 1, 1], [], []>} : vector<32x128xf32>, vector<128x128xf32>, vector<32x128xf32> -> vector<32x128xf32>
    %121 = vector.shape_cast %120 : vector<32x128xf32> to vector<4x8x128xf32>
    %122 = vector.extract_strided_slice %121 {offsets = [0, 0, 0], sizes = [4, 4, 128], strides = [1, 1, 1]} : vector<4x8x128xf32> to vector<4x4x128xf32>
    %123 = arith.addf %114, %122 : vector<4x4x128xf32>
    %c0_100 = arith.constant 0 : index
    %c2_101 = arith.constant 2 : index
    %c1_102 = arith.constant 1 : index
    %c0_103 = arith.constant 0 : index
    %c0_104 = arith.constant 0 : index
    %124 = vector.load %arg7[%c0_100, %c2_101, %c1_102, %c0_103, %c0_104] : memref<3x3x3x128x128xf32, #tpu.memory_space<vmem>>, vector<1x1x1x128x128xf32>
    %125 = vector.shape_cast %124 : vector<1x1x1x128x128xf32> to vector<128x128xf32>
    %cst_105 = arith.constant dense<0.000000e+00> : vector<32x128xf32>
    %126 = tpu.matmul %117, %125, %cst_105 {dimension_numbers = #tpu.dot_dimension_numbers<[1], [0], [0], [1], [0, 0, 1, 1], [], []>} : vector<32x128xf32>, vector<128x128xf32>, vector<32x128xf32> -> vector<32x128xf32>
    %127 = vector.shape_cast %126 : vector<32x128xf32> to vector<4x8x128xf32>
    %128 = vector.extract_strided_slice %127 {offsets = [0, 1, 0], sizes = [4, 4, 128], strides = [1, 1, 1]} : vector<4x8x128xf32> to vector<4x4x128xf32>
    %129 = arith.addf %123, %128 : vector<4x4x128xf32>
    %c0_106 = arith.constant 0 : index
    %c2_107 = arith.constant 2 : index
    %c2_108 = arith.constant 2 : index
    %c0_109 = arith.constant 0 : index
    %c0_110 = arith.constant 0 : index
    %130 = vector.load %arg7[%c0_106, %c2_107, %c2_108, %c0_109, %c0_110] : memref<3x3x3x128x128xf32, #tpu.memory_space<vmem>>, vector<1x1x1x128x128xf32>
    %131 = vector.shape_cast %130 : vector<1x1x1x128x128xf32> to vector<128x128xf32>
    %cst_111 = arith.constant dense<0.000000e+00> : vector<32x128xf32>
    %132 = tpu.matmul %117, %131, %cst_111 {dimension_numbers = #tpu.dot_dimension_numbers<[1], [0], [0], [1], [0, 0, 1, 1], [], []>} : vector<32x128xf32>, vector<128x128xf32>, vector<32x128xf32> -> vector<32x128xf32>
    %133 = vector.shape_cast %132 : vector<32x128xf32> to vector<4x8x128xf32>
    %134 = vector.extract_strided_slice %133 {offsets = [0, 2, 0], sizes = [4, 4, 128], strides = [1, 1, 1]} : vector<4x8x128xf32> to vector<4x4x128xf32>
    %135 = arith.addf %129, %134 : vector<4x4x128xf32>
    %c1_112 = arith.constant 1 : index
    %c0_113 = arith.constant 0 : index
    %c0_114 = arith.constant 0 : index
    %c0_115 = arith.constant 0 : index
    %136 = vector.load %arg12[%c1_112, %c0_113, %c0_114, %c0_115] : memref<3x6x8x128xf32, #tpu.memory_space<vmem>>, vector<1x4x8x128xf32>
    %137 = vector.shape_cast %136 : vector<1x4x8x128xf32> to vector<4x8x128xf32>
    %138 = vector.shape_cast %137 : vector<4x8x128xf32> to vector<32x128xf32>
    %c1_116 = arith.constant 1 : index
    %c0_117 = arith.constant 0 : index
    %c0_118 = arith.constant 0 : index
    %c0_119 = arith.constant 0 : index
    %c0_120 = arith.constant 0 : index
    %139 = vector.load %arg7[%c1_116, %c0_117, %c0_118, %c0_119, %c0_120] : memref<3x3x3x128x128xf32, #tpu.memory_space<vmem>>, vector<1x1x1x128x128xf32>
    %140 = vector.shape_cast %139 : vector<1x1x1x128x128xf32> to vector<128x128xf32>
    %cst_121 = arith.constant dense<0.000000e+00> : vector<32x128xf32>
    %141 = tpu.matmul %138, %140, %cst_121 {dimension_numbers = #tpu.dot_dimension_numbers<[1], [0], [0], [1], [0, 0, 1, 1], [], []>} : vector<32x128xf32>, vector<128x128xf32>, vector<32x128xf32> -> vector<32x128xf32>
    %142 = vector.shape_cast %141 : vector<32x128xf32> to vector<4x8x128xf32>
    %143 = vector.extract_strided_slice %142 {offsets = [0, 0, 0], sizes = [4, 4, 128], strides = [1, 1, 1]} : vector<4x8x128xf32> to vector<4x4x128xf32>
    %144 = arith.addf %135, %143 : vector<4x4x128xf32>
    %c1_122 = arith.constant 1 : index
    %c0_123 = arith.constant 0 : index
    %c1_124 = arith.constant 1 : index
    %c0_125 = arith.constant 0 : index
    %c0_126 = arith.constant 0 : index
    %145 = vector.load %arg7[%c1_122, %c0_123, %c1_124, %c0_125, %c0_126] : memref<3x3x3x128x128xf32, #tpu.memory_space<vmem>>, vector<1x1x1x128x128xf32>
    %146 = vector.shape_cast %145 : vector<1x1x1x128x128xf32> to vector<128x128xf32>
    %cst_127 = arith.constant dense<0.000000e+00> : vector<32x128xf32>
    %147 = tpu.matmul %138, %146, %cst_127 {dimension_numbers = #tpu.dot_dimension_numbers<[1], [0], [0], [1], [0, 0, 1, 1], [], []>} : vector<32x128xf32>, vector<128x128xf32>, vector<32x128xf32> -> vector<32x128xf32>
    %148 = vector.shape_cast %147 : vector<32x128xf32> to vector<4x8x128xf32>
    %149 = vector.extract_strided_slice %148 {offsets = [0, 1, 0], sizes = [4, 4, 128], strides = [1, 1, 1]} : vector<4x8x128xf32> to vector<4x4x128xf32>
    %150 = arith.addf %144, %149 : vector<4x4x128xf32>
    %c1_128 = arith.constant 1 : index
    %c0_129 = arith.constant 0 : index
    %c2_130 = arith.constant 2 : index
    %c0_131 = arith.constant 0 : index
    %c0_132 = arith.constant 0 : index
    %151 = vector.load %arg7[%c1_128, %c0_129, %c2_130, %c0_131, %c0_132] : memref<3x3x3x128x128xf32, #tpu.memory_space<vmem>>, vector<1x1x1x128x128xf32>
    %152 = vector.shape_cast %151 : vector<1x1x1x128x128xf32> to vector<128x128xf32>
    %cst_133 = arith.constant dense<0.000000e+00> : vector<32x128xf32>
    %153 = tpu.matmul %138, %152, %cst_133 {dimension_numbers = #tpu.dot_dimension_numbers<[1], [0], [0], [1], [0, 0, 1, 1], [], []>} : vector<32x128xf32>, vector<128x128xf32>, vector<32x128xf32> -> vector<32x128xf32>
    %154 = vector.shape_cast %153 : vector<32x128xf32> to vector<4x8x128xf32>
    %155 = vector.extract_strided_slice %154 {offsets = [0, 2, 0], sizes = [4, 4, 128], strides = [1, 1, 1]} : vector<4x8x128xf32> to vector<4x4x128xf32>
    %156 = arith.addf %150, %155 : vector<4x4x128xf32>
    %c1_134 = arith.constant 1 : index
    %c1_135 = arith.constant 1 : index
    %c0_136 = arith.constant 0 : index
    %c0_137 = arith.constant 0 : index
    %157 = vector.load %arg12[%c1_134, %c1_135, %c0_136, %c0_137] : memref<3x6x8x128xf32, #tpu.memory_space<vmem>>, vector<1x4x8x128xf32>
    %158 = vector.shape_cast %157 : vector<1x4x8x128xf32> to vector<4x8x128xf32>
    %159 = vector.shape_cast %158 : vector<4x8x128xf32> to vector<32x128xf32>
    %c1_138 = arith.constant 1 : index
    %c1_139 = arith.constant 1 : index
    %c0_140 = arith.constant 0 : index
    %c0_141 = arith.constant 0 : index
    %c0_142 = arith.constant 0 : index
    %160 = vector.load %arg7[%c1_138, %c1_139, %c0_140, %c0_141, %c0_142] : memref<3x3x3x128x128xf32, #tpu.memory_space<vmem>>, vector<1x1x1x128x128xf32>
    %161 = vector.shape_cast %160 : vector<1x1x1x128x128xf32> to vector<128x128xf32>
    %cst_143 = arith.constant dense<0.000000e+00> : vector<32x128xf32>
    %162 = tpu.matmul %159, %161, %cst_143 {dimension_numbers = #tpu.dot_dimension_numbers<[1], [0], [0], [1], [0, 0, 1, 1], [], []>} : vector<32x128xf32>, vector<128x128xf32>, vector<32x128xf32> -> vector<32x128xf32>
    %163 = vector.shape_cast %162 : vector<32x128xf32> to vector<4x8x128xf32>
    %164 = vector.extract_strided_slice %163 {offsets = [0, 0, 0], sizes = [4, 4, 128], strides = [1, 1, 1]} : vector<4x8x128xf32> to vector<4x4x128xf32>
    %165 = arith.addf %156, %164 : vector<4x4x128xf32>
    %c1_144 = arith.constant 1 : index
    %c1_145 = arith.constant 1 : index
    %c1_146 = arith.constant 1 : index
    %c0_147 = arith.constant 0 : index
    %c0_148 = arith.constant 0 : index
    %166 = vector.load %arg7[%c1_144, %c1_145, %c1_146, %c0_147, %c0_148] : memref<3x3x3x128x128xf32, #tpu.memory_space<vmem>>, vector<1x1x1x128x128xf32>
    %167 = vector.shape_cast %166 : vector<1x1x1x128x128xf32> to vector<128x128xf32>
    %cst_149 = arith.constant dense<0.000000e+00> : vector<32x128xf32>
    %168 = tpu.matmul %159, %167, %cst_149 {dimension_numbers = #tpu.dot_dimension_numbers<[1], [0], [0], [1], [0, 0, 1, 1], [], []>} : vector<32x128xf32>, vector<128x128xf32>, vector<32x128xf32> -> vector<32x128xf32>
    %169 = vector.shape_cast %168 : vector<32x128xf32> to vector<4x8x128xf32>
    %170 = vector.extract_strided_slice %169 {offsets = [0, 1, 0], sizes = [4, 4, 128], strides = [1, 1, 1]} : vector<4x8x128xf32> to vector<4x4x128xf32>
    %171 = arith.addf %165, %170 : vector<4x4x128xf32>
    %c1_150 = arith.constant 1 : index
    %c1_151 = arith.constant 1 : index
    %c2_152 = arith.constant 2 : index
    %c0_153 = arith.constant 0 : index
    %c0_154 = arith.constant 0 : index
    %172 = vector.load %arg7[%c1_150, %c1_151, %c2_152, %c0_153, %c0_154] : memref<3x3x3x128x128xf32, #tpu.memory_space<vmem>>, vector<1x1x1x128x128xf32>
    %173 = vector.shape_cast %172 : vector<1x1x1x128x128xf32> to vector<128x128xf32>
    %cst_155 = arith.constant dense<0.000000e+00> : vector<32x128xf32>
    %174 = tpu.matmul %159, %173, %cst_155 {dimension_numbers = #tpu.dot_dimension_numbers<[1], [0], [0], [1], [0, 0, 1, 1], [], []>} : vector<32x128xf32>, vector<128x128xf32>, vector<32x128xf32> -> vector<32x128xf32>
    %175 = vector.shape_cast %174 : vector<32x128xf32> to vector<4x8x128xf32>
    %176 = vector.extract_strided_slice %175 {offsets = [0, 2, 0], sizes = [4, 4, 128], strides = [1, 1, 1]} : vector<4x8x128xf32> to vector<4x4x128xf32>
    %177 = arith.addf %171, %176 : vector<4x4x128xf32>
    %c1_156 = arith.constant 1 : index
    %c2_157 = arith.constant 2 : index
    %c0_158 = arith.constant 0 : index
    %c0_159 = arith.constant 0 : index
    %178 = vector.load %arg12[%c1_156, %c2_157, %c0_158, %c0_159] : memref<3x6x8x128xf32, #tpu.memory_space<vmem>>, vector<1x4x8x128xf32>
    %179 = vector.shape_cast %178 : vector<1x4x8x128xf32> to vector<4x8x128xf32>
    %180 = vector.shape_cast %179 : vector<4x8x128xf32> to vector<32x128xf32>
    %c1_160 = arith.constant 1 : index
    %c2_161 = arith.constant 2 : index
    %c0_162 = arith.constant 0 : index
    %c0_163 = arith.constant 0 : index
    %c0_164 = arith.constant 0 : index
    %181 = vector.load %arg7[%c1_160, %c2_161, %c0_162, %c0_163, %c0_164] : memref<3x3x3x128x128xf32, #tpu.memory_space<vmem>>, vector<1x1x1x128x128xf32>
    %182 = vector.shape_cast %181 : vector<1x1x1x128x128xf32> to vector<128x128xf32>
    %cst_165 = arith.constant dense<0.000000e+00> : vector<32x128xf32>
    %183 = tpu.matmul %180, %182, %cst_165 {dimension_numbers = #tpu.dot_dimension_numbers<[1], [0], [0], [1], [0, 0, 1, 1], [], []>} : vector<32x128xf32>, vector<128x128xf32>, vector<32x128xf32> -> vector<32x128xf32>
    %184 = vector.shape_cast %183 : vector<32x128xf32> to vector<4x8x128xf32>
    %185 = vector.extract_strided_slice %184 {offsets = [0, 0, 0], sizes = [4, 4, 128], strides = [1, 1, 1]} : vector<4x8x128xf32> to vector<4x4x128xf32>
    %186 = arith.addf %177, %185 : vector<4x4x128xf32>
    %c1_166 = arith.constant 1 : index
    %c2_167 = arith.constant 2 : index
    %c1_168 = arith.constant 1 : index
    %c0_169 = arith.constant 0 : index
    %c0_170 = arith.constant 0 : index
    %187 = vector.load %arg7[%c1_166, %c2_167, %c1_168, %c0_169, %c0_170] : memref<3x3x3x128x128xf32, #tpu.memory_space<vmem>>, vector<1x1x1x128x128xf32>
    %188 = vector.shape_cast %187 : vector<1x1x1x128x128xf32> to vector<128x128xf32>
    %cst_171 = arith.constant dense<0.000000e+00> : vector<32x128xf32>
    %189 = tpu.matmul %180, %188, %cst_171 {dimension_numbers = #tpu.dot_dimension_numbers<[1], [0], [0], [1], [0, 0, 1, 1], [], []>} : vector<32x128xf32>, vector<128x128xf32>, vector<32x128xf32> -> vector<32x128xf32>
    %190 = vector.shape_cast %189 : vector<32x128xf32> to vector<4x8x128xf32>
    %191 = vector.extract_strided_slice %190 {offsets = [0, 1, 0], sizes = [4, 4, 128], strides = [1, 1, 1]} : vector<4x8x128xf32> to vector<4x4x128xf32>
    %192 = arith.addf %186, %191 : vector<4x4x128xf32>
    %c1_172 = arith.constant 1 : index
    %c2_173 = arith.constant 2 : index
    %c2_174 = arith.constant 2 : index
    %c0_175 = arith.constant 0 : index
    %c0_176 = arith.constant 0 : index
    %193 = vector.load %arg7[%c1_172, %c2_173, %c2_174, %c0_175, %c0_176] : memref<3x3x3x128x128xf32, #tpu.memory_space<vmem>>, vector<1x1x1x128x128xf32>
    %194 = vector.shape_cast %193 : vector<1x1x1x128x128xf32> to vector<128x128xf32>
    %cst_177 = arith.constant dense<0.000000e+00> : vector<32x128xf32>
    %195 = tpu.matmul %180, %194, %cst_177 {dimension_numbers = #tpu.dot_dimension_numbers<[1], [0], [0], [1], [0, 0, 1, 1], [], []>} : vector<32x128xf32>, vector<128x128xf32>, vector<32x128xf32> -> vector<32x128xf32>
    %196 = vector.shape_cast %195 : vector<32x128xf32> to vector<4x8x128xf32>
    %197 = vector.extract_strided_slice %196 {offsets = [0, 2, 0], sizes = [4, 4, 128], strides = [1, 1, 1]} : vector<4x8x128xf32> to vector<4x4x128xf32>
    %198 = arith.addf %192, %197 : vector<4x4x128xf32>
    %c2_178 = arith.constant 2 : index
    %c0_179 = arith.constant 0 : index
    %c0_180 = arith.constant 0 : index
    %c0_181 = arith.constant 0 : index
    %199 = vector.load %arg12[%c2_178, %c0_179, %c0_180, %c0_181] : memref<3x6x8x128xf32, #tpu.memory_space<vmem>>, vector<1x4x8x128xf32>
    %200 = vector.shape_cast %199 : vector<1x4x8x128xf32> to vector<4x8x128xf32>
    %201 = vector.shape_cast %200 : vector<4x8x128xf32> to vector<32x128xf32>
    %c2_182 = arith.constant 2 : index
    %c0_183 = arith.constant 0 : index
    %c0_184 = arith.constant 0 : index
    %c0_185 = arith.constant 0 : index
    %c0_186 = arith.constant 0 : index
    %202 = vector.load %arg7[%c2_182, %c0_183, %c0_184, %c0_185, %c0_186] : memref<3x3x3x128x128xf32, #tpu.memory_space<vmem>>, vector<1x1x1x128x128xf32>
    %203 = vector.shape_cast %202 : vector<1x1x1x128x128xf32> to vector<128x128xf32>
    %cst_187 = arith.constant dense<0.000000e+00> : vector<32x128xf32>
    %204 = tpu.matmul %201, %203, %cst_187 {dimension_numbers = #tpu.dot_dimension_numbers<[1], [0], [0], [1], [0, 0, 1, 1], [], []>} : vector<32x128xf32>, vector<128x128xf32>, vector<32x128xf32> -> vector<32x128xf32>
    %205 = vector.shape_cast %204 : vector<32x128xf32> to vector<4x8x128xf32>
    %206 = vector.extract_strided_slice %205 {offsets = [0, 0, 0], sizes = [4, 4, 128], strides = [1, 1, 1]} : vector<4x8x128xf32> to vector<4x4x128xf32>
    %207 = arith.addf %198, %206 : vector<4x4x128xf32>
    %c2_188 = arith.constant 2 : index
    %c0_189 = arith.constant 0 : index
    %c1_190 = arith.constant 1 : index
    %c0_191 = arith.constant 0 : index
    %c0_192 = arith.constant 0 : index
    %208 = vector.load %arg7[%c2_188, %c0_189, %c1_190, %c0_191, %c0_192] : memref<3x3x3x128x128xf32, #tpu.memory_space<vmem>>, vector<1x1x1x128x128xf32>
    %209 = vector.shape_cast %208 : vector<1x1x1x128x128xf32> to vector<128x128xf32>
    %cst_193 = arith.constant dense<0.000000e+00> : vector<32x128xf32>
    %210 = tpu.matmul %201, %209, %cst_193 {dimension_numbers = #tpu.dot_dimension_numbers<[1], [0], [0], [1], [0, 0, 1, 1], [], []>} : vector<32x128xf32>, vector<128x128xf32>, vector<32x128xf32> -> vector<32x128xf32>
    %211 = vector.shape_cast %210 : vector<32x128xf32> to vector<4x8x128xf32>
    %212 = vector.extract_strided_slice %211 {offsets = [0, 1, 0], sizes = [4, 4, 128], strides = [1, 1, 1]} : vector<4x8x128xf32> to vector<4x4x128xf32>
    %213 = arith.addf %207, %212 : vector<4x4x128xf32>
    %c2_194 = arith.constant 2 : index
    %c0_195 = arith.constant 0 : index
    %c2_196 = arith.constant 2 : index
    %c0_197 = arith.constant 0 : index
    %c0_198 = arith.constant 0 : index
    %214 = vector.load %arg7[%c2_194, %c0_195, %c2_196, %c0_197, %c0_198] : memref<3x3x3x128x128xf32, #tpu.memory_space<vmem>>, vector<1x1x1x128x128xf32>
    %215 = vector.shape_cast %214 : vector<1x1x1x128x128xf32> to vector<128x128xf32>
    %cst_199 = arith.constant dense<0.000000e+00> : vector<32x128xf32>
    %216 = tpu.matmul %201, %215, %cst_199 {dimension_numbers = #tpu.dot_dimension_numbers<[1], [0], [0], [1], [0, 0, 1, 1], [], []>} : vector<32x128xf32>, vector<128x128xf32>, vector<32x128xf32> -> vector<32x128xf32>
    %217 = vector.shape_cast %216 : vector<32x128xf32> to vector<4x8x128xf32>
    %218 = vector.extract_strided_slice %217 {offsets = [0, 2, 0], sizes = [4, 4, 128], strides = [1, 1, 1]} : vector<4x8x128xf32> to vector<4x4x128xf32>
    %219 = arith.addf %213, %218 : vector<4x4x128xf32>
    %c2_200 = arith.constant 2 : index
    %c1_201 = arith.constant 1 : index
    %c0_202 = arith.constant 0 : index
    %c0_203 = arith.constant 0 : index
    %220 = vector.load %arg12[%c2_200, %c1_201, %c0_202, %c0_203] : memref<3x6x8x128xf32, #tpu.memory_space<vmem>>, vector<1x4x8x128xf32>
    %221 = vector.shape_cast %220 : vector<1x4x8x128xf32> to vector<4x8x128xf32>
    %222 = vector.shape_cast %221 : vector<4x8x128xf32> to vector<32x128xf32>
    %c2_204 = arith.constant 2 : index
    %c1_205 = arith.constant 1 : index
    %c0_206 = arith.constant 0 : index
    %c0_207 = arith.constant 0 : index
    %c0_208 = arith.constant 0 : index
    %223 = vector.load %arg7[%c2_204, %c1_205, %c0_206, %c0_207, %c0_208] : memref<3x3x3x128x128xf32, #tpu.memory_space<vmem>>, vector<1x1x1x128x128xf32>
    %224 = vector.shape_cast %223 : vector<1x1x1x128x128xf32> to vector<128x128xf32>
    %cst_209 = arith.constant dense<0.000000e+00> : vector<32x128xf32>
    %225 = tpu.matmul %222, %224, %cst_209 {dimension_numbers = #tpu.dot_dimension_numbers<[1], [0], [0], [1], [0, 0, 1, 1], [], []>} : vector<32x128xf32>, vector<128x128xf32>, vector<32x128xf32> -> vector<32x128xf32>
    %226 = vector.shape_cast %225 : vector<32x128xf32> to vector<4x8x128xf32>
    %227 = vector.extract_strided_slice %226 {offsets = [0, 0, 0], sizes = [4, 4, 128], strides = [1, 1, 1]} : vector<4x8x128xf32> to vector<4x4x128xf32>
    %228 = arith.addf %219, %227 : vector<4x4x128xf32>
    %c2_210 = arith.constant 2 : index
    %c1_211 = arith.constant 1 : index
    %c1_212 = arith.constant 1 : index
    %c0_213 = arith.constant 0 : index
    %c0_214 = arith.constant 0 : index
    %229 = vector.load %arg7[%c2_210, %c1_211, %c1_212, %c0_213, %c0_214] : memref<3x3x3x128x128xf32, #tpu.memory_space<vmem>>, vector<1x1x1x128x128xf32>
    %230 = vector.shape_cast %229 : vector<1x1x1x128x128xf32> to vector<128x128xf32>
    %cst_215 = arith.constant dense<0.000000e+00> : vector<32x128xf32>
    %231 = tpu.matmul %222, %230, %cst_215 {dimension_numbers = #tpu.dot_dimension_numbers<[1], [0], [0], [1], [0, 0, 1, 1], [], []>} : vector<32x128xf32>, vector<128x128xf32>, vector<32x128xf32> -> vector<32x128xf32>
    %232 = vector.shape_cast %231 : vector<32x128xf32> to vector<4x8x128xf32>
    %233 = vector.extract_strided_slice %232 {offsets = [0, 1, 0], sizes = [4, 4, 128], strides = [1, 1, 1]} : vector<4x8x128xf32> to vector<4x4x128xf32>
    %234 = arith.addf %228, %233 : vector<4x4x128xf32>
    %c2_216 = arith.constant 2 : index
    %c1_217 = arith.constant 1 : index
    %c2_218 = arith.constant 2 : index
    %c0_219 = arith.constant 0 : index
    %c0_220 = arith.constant 0 : index
    %235 = vector.load %arg7[%c2_216, %c1_217, %c2_218, %c0_219, %c0_220] : memref<3x3x3x128x128xf32, #tpu.memory_space<vmem>>, vector<1x1x1x128x128xf32>
    %236 = vector.shape_cast %235 : vector<1x1x1x128x128xf32> to vector<128x128xf32>
    %cst_221 = arith.constant dense<0.000000e+00> : vector<32x128xf32>
    %237 = tpu.matmul %222, %236, %cst_221 {dimension_numbers = #tpu.dot_dimension_numbers<[1], [0], [0], [1], [0, 0, 1, 1], [], []>} : vector<32x128xf32>, vector<128x128xf32>, vector<32x128xf32> -> vector<32x128xf32>
    %238 = vector.shape_cast %237 : vector<32x128xf32> to vector<4x8x128xf32>
    %239 = vector.extract_strided_slice %238 {offsets = [0, 2, 0], sizes = [4, 4, 128], strides = [1, 1, 1]} : vector<4x8x128xf32> to vector<4x4x128xf32>
    %240 = arith.addf %234, %239 : vector<4x4x128xf32>
    %c2_222 = arith.constant 2 : index
    %c2_223 = arith.constant 2 : index
    %c0_224 = arith.constant 0 : index
    %c0_225 = arith.constant 0 : index
    %241 = vector.load %arg12[%c2_222, %c2_223, %c0_224, %c0_225] : memref<3x6x8x128xf32, #tpu.memory_space<vmem>>, vector<1x4x8x128xf32>
    %242 = vector.shape_cast %241 : vector<1x4x8x128xf32> to vector<4x8x128xf32>
    %243 = vector.shape_cast %242 : vector<4x8x128xf32> to vector<32x128xf32>
    %c2_226 = arith.constant 2 : index
    %c2_227 = arith.constant 2 : index
    %c0_228 = arith.constant 0 : index
    %c0_229 = arith.constant 0 : index
    %c0_230 = arith.constant 0 : index
    %244 = vector.load %arg7[%c2_226, %c2_227, %c0_228, %c0_229, %c0_230] : memref<3x3x3x128x128xf32, #tpu.memory_space<vmem>>, vector<1x1x1x128x128xf32>
    %245 = vector.shape_cast %244 : vector<1x1x1x128x128xf32> to vector<128x128xf32>
    %cst_231 = arith.constant dense<0.000000e+00> : vector<32x128xf32>
    %246 = tpu.matmul %243, %245, %cst_231 {dimension_numbers = #tpu.dot_dimension_numbers<[1], [0], [0], [1], [0, 0, 1, 1], [], []>} : vector<32x128xf32>, vector<128x128xf32>, vector<32x128xf32> -> vector<32x128xf32>
    %247 = vector.shape_cast %246 : vector<32x128xf32> to vector<4x8x128xf32>
    %248 = vector.extract_strided_slice %247 {offsets = [0, 0, 0], sizes = [4, 4, 128], strides = [1, 1, 1]} : vector<4x8x128xf32> to vector<4x4x128xf32>
    %249 = arith.addf %240, %248 : vector<4x4x128xf32>
    %c2_232 = arith.constant 2 : index
    %c2_233 = arith.constant 2 : index
    %c1_234 = arith.constant 1 : index
    %c0_235 = arith.constant 0 : index
    %c0_236 = arith.constant 0 : index
    %250 = vector.load %arg7[%c2_232, %c2_233, %c1_234, %c0_235, %c0_236] : memref<3x3x3x128x128xf32, #tpu.memory_space<vmem>>, vector<1x1x1x128x128xf32>
    %251 = vector.shape_cast %250 : vector<1x1x1x128x128xf32> to vector<128x128xf32>
    %cst_237 = arith.constant dense<0.000000e+00> : vector<32x128xf32>
    %252 = tpu.matmul %243, %251, %cst_237 {dimension_numbers = #tpu.dot_dimension_numbers<[1], [0], [0], [1], [0, 0, 1, 1], [], []>} : vector<32x128xf32>, vector<128x128xf32>, vector<32x128xf32> -> vector<32x128xf32>
    %253 = vector.shape_cast %252 : vector<32x128xf32> to vector<4x8x128xf32>
    %254 = vector.extract_strided_slice %253 {offsets = [0, 1, 0], sizes = [4, 4, 128], strides = [1, 1, 1]} : vector<4x8x128xf32> to vector<4x4x128xf32>
    %255 = arith.addf %249, %254 : vector<4x4x128xf32>
    %c2_238 = arith.constant 2 : index
    %c2_239 = arith.constant 2 : index
    %c2_240 = arith.constant 2 : index
    %c0_241 = arith.constant 0 : index
    %c0_242 = arith.constant 0 : index
    %256 = vector.load %arg7[%c2_238, %c2_239, %c2_240, %c0_241, %c0_242] : memref<3x3x3x128x128xf32, #tpu.memory_space<vmem>>, vector<1x1x1x128x128xf32>
    %257 = vector.shape_cast %256 : vector<1x1x1x128x128xf32> to vector<128x128xf32>
    %cst_243 = arith.constant dense<0.000000e+00> : vector<32x128xf32>
    %258 = tpu.matmul %243, %257, %cst_243 {dimension_numbers = #tpu.dot_dimension_numbers<[1], [0], [0], [1], [0, 0, 1, 1], [], []>} : vector<32x128xf32>, vector<128x128xf32>, vector<32x128xf32> -> vector<32x128xf32>
    %259 = vector.shape_cast %258 : vector<32x128xf32> to vector<4x8x128xf32>
    %260 = vector.extract_strided_slice %259 {offsets = [0, 2, 0], sizes = [4, 4, 128], strides = [1, 1, 1]} : vector<4x8x128xf32> to vector<4x4x128xf32>
    %261 = arith.addf %255, %260 : vector<4x4x128xf32>
    %c0_244 = arith.constant 0 : index
    %c0_245 = arith.constant 0 : index
    %262 = vector.load %arg8[%c0_244, %c0_245] : memref<1x128xf32, #tpu.memory_space<vmem>>, vector<1x128xf32>
    %263 = vector.shape_cast %262 : vector<1x128xf32> to vector<1x1x128xf32>
    %264 = vector.broadcast %263 : vector<1x1x128xf32> to vector<4x4x128xf32>
    %265 = arith.addf %261, %264 : vector<4x4x128xf32>
    %c0_246 = arith.constant 0 : index
    %c0_247 = arith.constant 0 : index
    %c0_248 = arith.constant 0 : index
    %c0_249 = arith.constant 0 : index
    %c0_250 = arith.constant 0 : index
    %266 = vector.load %arg9[%c0_246, %c0_247, %c0_248, %c0_249, %c0_250] : memref<1x1x4x4x128xf32, #tpu.memory_space<vmem>>, vector<1x1x4x4x128xf32>
    %267 = vector.shape_cast %266 : vector<1x1x4x4x128xf32> to vector<4x4x128xf32>
    %268 = vector.shape_cast %265 : vector<4x4x128xf32> to vector<1x1x4x4x128xf32>
    tpu.vector_store %arg9[%c0_246, %c0_247, %c0_248, %c0_249, %c0_250], %268 {strides = array<i32>} : memref<1x1x4x4x128xf32, #tpu.memory_space<vmem>>, vector<1x1x4x4x128xf32>,
    %c0_251 = arith.constant 0 : index
    %c0_252 = arith.constant 0 : index
    %c0_253 = arith.constant 0 : index
    %269 = vector.load %arg10[%c0_251, %c0_252, %c0_253] : memref<1x1x128xf32, #tpu.memory_space<vmem>>, vector<1x1x128xf32>
    %cst_254 = arith.constant dense<0.000000e+00> : vector<128xf32>
    %270 = vector.multi_reduction <add>, %265, %cst_254 [0, 1] : vector<4x4x128xf32> to vector<128xf32>
    %271 = vector.shape_cast %270 : vector<128xf32> to vector<1x1x128xf32>
    %272 = arith.addf %269, %271 : vector<1x1x128xf32>
    %c0_255 = arith.constant 0 : index
    %c0_256 = arith.constant 0 : index
    %c0_257 = arith.constant 0 : index
    %273 = vector.load %arg10[%c0_255, %c0_256, %c0_257] : memref<1x1x128xf32, #tpu.memory_space<vmem>>, vector<1x1x128xf32>
    tpu.vector_store %arg10[%c0_255, %c0_256, %c0_257], %272 {strides = array<i32>} : memref<1x1x128xf32, #tpu.memory_space<vmem>>, vector<1x1x128xf32>,
    %c0_258 = arith.constant 0 : index
    %c0_259 = arith.constant 0 : index
    %c0_260 = arith.constant 0 : index
    %274 = vector.load %arg11[%c0_258, %c0_259, %c0_260] : memref<1x1x128xf32, #tpu.memory_space<vmem>>, vector<1x1x128xf32>
    %275 = arith.mulf %265, %265 : vector<4x4x128xf32>
    %cst_261 = arith.constant dense<0.000000e+00> : vector<128xf32>
    %276 = vector.multi_reduction <add>, %275, %cst_261 [0, 1] : vector<4x4x128xf32> to vector<128xf32>
    %277 = vector.shape_cast %276 : vector<128xf32> to vector<1x1x128xf32>
    %278 = arith.addf %274, %277 : vector<1x1x128xf32>
    %c0_262 = arith.constant 0 : index
    %c0_263 = arith.constant 0 : index
    %c0_264 = arith.constant 0 : index
    %279 = vector.load %arg11[%c0_262, %c0_263, %c0_264] : memref<1x1x128xf32, #tpu.memory_space<vmem>>, vector<1x1x128xf32>
    tpu.vector_store %arg11[%c0_262, %c0_263, %c0_264], %278 {strides = array<i32>} : memref<1x1x128xf32, #tpu.memory_space<vmem>>, vector<1x1x128xf32>,
    return
  }
  func.func @transform_0(%arg0: i32, %arg1: i32) -> (i32, i32, i32, i32, i32) {
    %c-1_i32 = arith.constant -1 : i32
    %0 = arith.addi %arg1, %c-1_i32 : i32
    %c0_i32 = arith.constant 0 : i32
    %c3_i32 = arith.constant 3 : i32
    %1 = arith.maxsi %c0_i32, %0 : i32
    %2 = arith.minsi %c3_i32, %1 : i32
    %c0_i32_0 = arith.constant 0 : i32
    %c0_i32_1 = arith.constant 0 : i32
    %c0_i32_2 = arith.constant 0 : i32
    %c0_i32_3 = arith.constant 0 : i32
    return %arg0, %2, %c0_i32_0, %c0_i32_1, %c0_i32_2 : i32, i32, i32, i32, i32
  }
  func.func @transform_1(%arg0: i32, %arg1: i32) -> (i32, i32, i32, i32, i32) {
    %c0_i32 = arith.constant 0 : i32
    %0 = arith.addi %arg1, %c0_i32 : i32
    %c0_i32_0 = arith.constant 0 : i32
    %c3_i32 = arith.constant 3 : i32
    %1 = arith.maxsi %c0_i32_0, %0 : i32
    %2 = arith.minsi %c3_i32, %1 : i32
    %c0_i32_1 = arith.constant 0 : i32
    %c0_i32_2 = arith.constant 0 : i32
    %c0_i32_3 = arith.constant 0 : i32
    %c0_i32_4 = arith.constant 0 : i32
    return %arg0, %2, %c0_i32_1, %c0_i32_2, %c0_i32_3 : i32, i32, i32, i32, i32
  }
  func.func @transform_2(%arg0: i32, %arg1: i32) -> (i32, i32, i32, i32, i32) {
    %c1_i32 = arith.constant 1 : i32
    %0 = arith.addi %arg1, %c1_i32 : i32
    %c0_i32 = arith.constant 0 : i32
    %c3_i32 = arith.constant 3 : i32
    %1 = arith.maxsi %c0_i32, %0 : i32
    %2 = arith.minsi %c3_i32, %1 : i32
    %c0_i32_0 = arith.constant 0 : i32
    %c0_i32_1 = arith.constant 0 : i32
    %c0_i32_2 = arith.constant 0 : i32
    %c0_i32_3 = arith.constant 0 : i32
    return %arg0, %2, %c0_i32_0, %c0_i32_1, %c0_i32_2 : i32, i32, i32, i32, i32
  }
  func.func @transform_3(%arg0: i32, %arg1: i32) -> (i32, i32) {
    %c0_i32 = arith.constant 0 : i32
    %c0_i32_0 = arith.constant 0 : i32
    %c0_i32_1 = arith.constant 0 : i32
    return %c0_i32, %c0_i32_0 : i32, i32
  }
  func.func @transform_4(%arg0: i32, %arg1: i32) -> (i32, i32) {
    %c0_i32 = arith.constant 0 : i32
    %c0_i32_0 = arith.constant 0 : i32
    %c0_i32_1 = arith.constant 0 : i32
    return %c0_i32, %c0_i32_0 : i32, i32
  }
  func.func @transform_5(%arg0: i32, %arg1: i32) -> (i32, i32, i32, i32, i32) {
    %c0_i32 = arith.constant 0 : i32
    %c0_i32_0 = arith.constant 0 : i32
    %c0_i32_1 = arith.constant 0 : i32
    %c0_i32_2 = arith.constant 0 : i32
    %c0_i32_3 = arith.constant 0 : i32
    %c0_i32_4 = arith.constant 0 : i32
    return %c0_i32, %c0_i32_0, %c0_i32_1, %c0_i32_2, %c0_i32_3 : i32, i32, i32, i32, i32
  }
  func.func @transform_6(%arg0: i32, %arg1: i32) -> (i32, i32) {
    %c0_i32 = arith.constant 0 : i32
    %c0_i32_0 = arith.constant 0 : i32
    %c0_i32_1 = arith.constant 0 : i32
    return %c0_i32, %c0_i32_0 : i32, i32
  }
  func.func @transform_7(%arg0: i32, %arg1: i32) -> (i32, i32, i32, i32, i32) {
    %c0_i32 = arith.constant 0 : i32
    %c0_i32_0 = arith.constant 0 : i32
    %c0_i32_1 = arith.constant 0 : i32
    %c0_i32_2 = arith.constant 0 : i32
    return %arg0, %arg1, %c0_i32, %c0_i32_0, %c0_i32_1 : i32, i32, i32, i32, i32
  }
  func.func @transform_8(%arg0: i32, %arg1: i32) -> (i32, i32, i32) {
    %c0_i32 = arith.constant 0 : i32
    %c0_i32_0 = arith.constant 0 : i32
    %c0_i32_1 = arith.constant 0 : i32
    return %arg0, %c0_i32, %c0_i32_0 : i32, i32, i32
  }
  func.func @transform_9(%arg0: i32, %arg1: i32) -> (i32, i32, i32) {
    %c0_i32 = arith.constant 0 : i32
    %c0_i32_0 = arith.constant 0 : i32
    %c0_i32_1 = arith.constant 0 : i32
    return %arg0, %c0_i32, %c0_i32_0 : i32, i32, i32
  }
}

</mosaic_0001>

<llo_original>
// kernel: down_forward.3
$region0: #{down_forward.3}
  #allocation0 [shape = 'u32[]', space=smem, size = 0x4, offset = 0x4, fixed_abs, tag = 'smem constant byte address 0x4 - core index']
  #allocation1 [shape = 'u32[144,128]{1,0:T(1,128)}', space=vmem, size = 0x12000, scoped, tag = 'internal scratch']
  %s0 = inlined_call_operand.vmem [shape: f32[8,2,8,4,8], index: 0, kind: input, shape index: {}]
  %s1 = inlined_call_operand.vmem [shape: f32[8,4,4,4], index: 1, kind: output, shape index: {}]
  %s2 = sld [smem:[#allocation0]]
  $region37: #{down_forward.3} parent=0
    _
  %s4 = ssub.s32 1, %s2
  %s5 = scalar_select 0, %s4, %s2
  loop: start=0, step=1, limit=10
  $region2: #{down_forward.3} parent=0 // loop_pre_header
    _
  $region3: #{down_forward.3} parent=0 // loop_header
    %s7 = sphi 0, %s11
    %p8 = scmp.ge.s32.totalorder %s7, 10
    %s17 = sphi 0, %s19
    %s20 = sphi 0, %s17
    %s21 = sphi 0, %s20
    %s37 = sphi 0, %s21
    %s43 = sphi 0, %s45
    %s46 = sphi 0, %s43
    %s47 = sphi 0, %s46
    %s63 = sphi 0, %s47
  $region4: #{down_forward.3} parent=0 // loop_header_branch
    %10 = sbr.rel (%p8) target = $region8
  $region5: #{down_forward.3} parent=0 // loop_body
    %s12 = ssub.s32 %s7, 1
    %s13 = ssub.s32 %s7, 2
    %s14 = sadd.s32 %s7, 1
    %s15 = ssub.s32 %s7, %s14
    %p16 = scmp.eq.s32.totalorder %s15, 0
    %s18 = sadd.s32 %s17, 1
    %s19 = scalar_select %p16, %s17, %s18
    %p22 = pneg %p16
    %p23 = scmp.eq.s32.totalorder %s7, 7
    %p24 = por %p22, %p23
    %p25 = scmp.ne.s32.totalorder %s17, %s20
    %p26 = scmp.eq.s32.totalorder %s7, 0
    %p27 = por %p25, %p26
    %p28 = scmp.ne.s32.totalorder %s17, %s20
    %p29 = scmp.eq.s32.totalorder %s12, 7
    %p30 = por %p28, %p29
    %p31 = scmp.ne.s32.totalorder %s20, %s21
    %p32 = scmp.eq.s32.totalorder %s12, 0
    %p33 = por %p31, %p32
    %p34 = scmp.ne.s32.totalorder %s20, %s21
    %p35 = scmp.eq.s32.totalorder %s13, 7
    %p36 = por %p34, %p35
    %p38 = scmp.ne.s32.totalorder %s21, %s37
    %p39 = scmp.eq.s32.totalorder %s13, 0
    %p40 = por %p38, %p39
    %s41 = ssub.s32 %s7, %s14
    %p42 = scmp.eq.s32.totalorder %s41, 0
    %s44 = sadd.s32 %s43, 1
    %s45 = scalar_select %p42, %s43, %s44
    %p48 = pneg %p42
    %p49 = scmp.eq.s32.totalorder %s7, 7
    %p50 = por %p48, %p49
    %p51 = scmp.ne.s32.totalorder %s43, %s46
    %p52 = scmp.eq.s32.totalorder %s7, 0
    %p53 = por %p51, %p52
    %p54 = scmp.ne.s32.totalorder %s43, %s46
    %p55 = scmp.eq.s32.totalorder %s12, 7
    %p56 = por %p54, %p55
    %p57 = scmp.ne.s32.totalorder %s46, %s47
    %p58 = scmp.eq.s32.totalorder %s12, 0
    %p59 = por %p57, %p58
    %p60 = scmp.ne.s32.totalorder %s46, %s47
    %p61 = scmp.eq.s32.totalorder %s13, 7
    %p62 = por %p60, %p61
    %p64 = scmp.ne.s32.totalorder %s47, %s63
    %p65 = scmp.eq.s32.totalorder %s13, 0
    %p66 = por %p64, %p65
    %p67 = scmp.le.s32.totalorder 1, %s7
    %p68 = scmp.lt.s32.totalorder %s7, 9
    %p69 = pnand %p67, %p68
    %p70 = pneg %p69
    // Predicated region
    $region9: #{down_forward.3} parent=5 // pred_check
      _
    $region10: #{down_forward.3} parent=5 // pred_check_branch
      %72 = sbr.rel (%p69) target = $region12
    $region11: #{down_forward.3} parent=5 // pred_region
      %s73 = ssub.s32 %s7, 1
    $region12: #{down_forward.3} parent=5 // pred_fallthru
      _
    %p74 = scmp.lt.s32.totalorder %s7, 8
    // Predicated region
    $region13: #{down_forward.3} parent=5 // pred_check
      %p75 = pneg %p74
    $region14: #{down_forward.3} parent=5 // pred_check_branch
      %77 = sbr.rel (%p75) target = $region16
    $region15: #{down_forward.3} parent=5 // pred_region
      // Predicated region
      $region17: #{down_forward.3} parent=15 // pred_check
        %p78 = pneg %p27
      $region18: #{down_forward.3} parent=15 // pred_check_branch
        %80 = sbr.rel (%p78) target = $region20
      $region19: #{down_forward.3} parent=15 // pred_region
        %p81 = scmp.lt.s32.totalorder %s7, 7
        %s82 = scalar_select %p81, %s7, 7
        %s83 = smul.addr %s82, 16
        %s84 = smul.addr %s83, 4
        %s85 = scalar_lea.vmem %s0, %s84
      $region20: #{down_forward.3} parent=15 // pred_fallthru
        _
    $region16: #{down_forward.3} parent=5 // pred_fallthru
      _
    %p86 = scmp.le.s32.totalorder 1, %s7
    %p87 = scmp.lt.s32.totalorder %s7, 9
    %p88 = pnand %p86, %p87
    %p89 = pneg %p88
    // Predicated region
    $region21: #{down_forward.3} parent=5 // pred_check
      _
    $region22: #{down_forward.3} parent=5 // pred_check_branch
      %91 = sbr.rel (%p88) target = $region24
    $region23: #{down_forward.3} parent=5 // pred_region
      %s92 = ssub.s32 %s7, 1
      %p93 = scmp.lt.s32.totalorder %s12, 7
      %s94 = scalar_select %p93, %s12, 7
      %s95 = smul.addr %s94, 16
      %s96 = smul.addr %s95, 4
      %s97 = scalar_lea.vmem %s0, %s96
      %p98 = pneg %p33
      %p99 = pneg %p30
      %p100 = pneg %p59
      %p101 = pneg %p56
      %p102 = scmp.lt.s32.totalorder %s12, 7
      %s103 = scalar_select %p102, %s12, 7
      %s104 = smul.addr %s103, 4
      %s105 = smul.addr %s104, 4
      %s106 = scalar_lea.vmem %s1, %s105
      %p107 = scmp.lt.s32.totalorder %s12, 7
      %s108 = scalar_select %p107, %s12, 7
      %s109 = smul.addr %s108, 16
      %s110 = smul.addr %s109, 4
      %s111 = scalar_lea.vmem %s0, %s110
      %p112 = scmp.lt.s32.totalorder %s12, 7
      %s113 = scalar_select %p112, %s12, 7
      %s114 = smul.addr %s113, 4
      %s115 = smul.addr %s114, 4
      %s116 = scalar_lea.vmem %s1, %s115
      %v117 = vld [vmem:[%s111] sm:$0xf]
      %v118 = vld [vmem:[%s111 + $0x4] sm:$0xf]
      %v119 = vld [vmem:[%s111 + $0x8] sm:$0xf]
      %v120 = vld [vmem:[%s111 + $0xc] sm:$0xf]
      %v121 = vld [vmem:[%s111 + $0x10] sm:$0xf]
      %v122 = vld [vmem:[%s111 + $0x14] sm:$0xf]
      %v123 = vld [vmem:[%s111 + $0x18] sm:$0xf]
      %v124 = vld [vmem:[%s111 + $0x1c] sm:$0xf]
      %v125 = vld [vmem:[%s111 + $0x20] sm:$0xf]
      %v126 = vld [vmem:[%s111 + $0x24] sm:$0xf]
      %v127 = vld [vmem:[%s111 + $0x28] sm:$0xf]
      %v128 = vld [vmem:[%s111 + $0x2c] sm:$0xf]
      %v129 = vld [vmem:[%s111 + $0x30] sm:$0xf]
      %v130 = vld [vmem:[%s111 + $0x34] sm:$0xf]
      %v131 = vld [vmem:[%s111 + $0x38] sm:$0xf]
      %v132 = vld [vmem:[%s111 + $0x3c] sm:$0xf]
      %v133 = vmax.f32 %v117, %v125
      %v134 = vmax.f32 %v118, %v126
      %v135 = vmax.f32 %v119, %v127
      %v136 = vmax.f32 %v120, %v128
      %v137 = vmax.f32 %v121, %v129
      %v138 = vmax.f32 %v122, %v130
      %v139 = vmax.f32 %v123, %v131
      %v140 = vmax.f32 %v124, %v132
      %vm141 = vcmask 60416
      %v142 = vsel %vm141, %v133, -inf
      %v143 = vsel %vm141, %v134, -inf
      %v144 = vmax.f32 %v142, %v143
      %v145 = vsel %vm141, %v135, -inf
      %v146 = vsel %vm141, %v136, -inf
      %v147 = vmax.f32 %v145, %v146
      %v148 = vsel %vm141, %v137, -inf
      %v149 = vsel %vm141, %v138, -inf
      %v150 = vmax.f32 %v148, %v149
      %v151 = vsel %vm141, %v139, -inf
      %v152 = vsel %vm141, %v140, -inf
      %v153 = vmax.f32 %v151, %v152
      %158 = vrot.lane.b32.xlu0 %v144, 124
      %v159 = vpop.permute.xlu0 %158
      %160 = vrot.lane.b32.xlu0 %v147, 124
      %v161 = vpop.permute.xlu0 %160
      %162 = vrot.lane.b32.xlu0 %v150, 124
      %v163 = vpop.permute.xlu0 %162
      %164 = vrot.lane.b32.xlu0 %v153, 124
      %v165 = vpop.permute.xlu0 %164
      %v170 = vmax.f32 %v144, %v159
      %v171 = vmax.f32 %v147, %v161
      %v172 = vmax.f32 %v150, %v163
      %v173 = vmax.f32 %v153, %v165
      %vm174 = vcmask 27648
      %175 = vst.msk [vmem:[%s116] sm:$0xf] %vm174, %v170
      %176 = vst.msk [vmem:[%s116 + $0x4] sm:$0xf] %vm174, %v171
      %177 = vst.msk [vmem:[%s116 + $0x8] sm:$0xf] %vm174, %v172
      %178 = vst.msk [vmem:[%s116 + $0xc] sm:$0xf] %vm174, %v173
      %p179 = scmp.lt.s32.totalorder %s12, 7
      %s180 = scalar_select %p179, %s12, 7
      %s181 = smul.addr %s180, 4
      %s182 = smul.addr %s181, 4
      %s183 = scalar_lea.vmem %s1, %s182
      // Predicated region
      $region25: #{down_forward.3} parent=23 // pred_check
        %p184 = pneg %p56
      $region26: #{down_forward.3} parent=23 // pred_check_branch
        %186 = sbr.rel (%p184) target = $region28
      $region27: #{down_forward.3} parent=23 // pred_region
        _
      $region28: #{down_forward.3} parent=23 // pred_fallthru
        _
    $region24: #{down_forward.3} parent=5 // pred_fallthru
      _
    %p187 = scmp.le.s32.totalorder 2, %s7
    // Predicated region
    $region29: #{down_forward.3} parent=5 // pred_check
      %p188 = pneg %p187
    $region30: #{down_forward.3} parent=5 // pred_check_branch
      %190 = sbr.rel (%p188) target = $region32
    $region31: #{down_forward.3} parent=5 // pred_region
      %s191 = ssub.s32 %s7, 2
      // Predicated region
      $region33: #{down_forward.3} parent=31 // pred_check
        %p192 = pneg %p62
      $region34: #{down_forward.3} parent=31 // pred_check_branch
        %194 = sbr.rel (%p192) target = $region36
      $region35: #{down_forward.3} parent=31 // pred_region
        %p195 = scmp.lt.s32.totalorder %s13, 7
        %s196 = scalar_select %p195, %s13, 7
        %s197 = smul.addr %s196, 4
        %s198 = smul.addr %s197, 4
        %s199 = scalar_lea.vmem %s1, %s198
      $region36: #{down_forward.3} parent=31 // pred_fallthru
        _
    $region32: #{down_forward.3} parent=5 // pred_fallthru
      _
  $region6: #{down_forward.3} parent=0 // loop_footer
    %s11 = sadd.s32 1, %s7
  $region7: #{down_forward.3} parent=0 // loop_footer_branch
    %6 = sbr.rel target = $region3
  $region8: #{down_forward.3} parent=0 // loop_exit
    _

// kernel: down_forward.4
$region0: #{down_forward.4}
  #allocation0 [shape = 'u32[]', space=smem, size = 0x4, offset = 0x4, fixed_abs, tag = 'smem constant byte address 0x4 - core index']
  #allocation1 [shape = 'u32[144,128]{1,0:T(1,128)}', space=vmem, size = 0x12000, scoped, tag = 'internal scratch']
  #allocation2 [shape = 'f32[3,6,8,4]{3,2,1,0:T(8,128)}', space=vmem, size = 0x12000, scoped, tag = 'scratch operand']
  %s0 = inlined_call_operand.vmem [shape: f32[2,4,4,4,4], index: 0, kind: input, shape index: {}, may-alias: {0,1,2}]
  %s1 = inlined_call_operand.vmem [shape: f32[2,4,4,4,4], index: 1, kind: input, shape index: {}, may-alias: {0,1,2}]
  %s2 = inlined_call_operand.vmem [shape: f32[2,4,4,4,4], index: 2, kind: input, shape index: {}, may-alias: {0,1,2}]
  %s3 = inlined_call_operand.vmem [shape: f32[1,4], index: 3, kind: input, shape index: {}]
  %s4 = inlined_call_operand.vmem [shape: f32[1,4], index: 4, kind: input, shape index: {}]
  %s5 = inlined_call_operand.vmem [shape: f32[3,3,3,4,128], index: 5, kind: input, shape index: {}]
  %s6 = inlined_call_operand.vmem [shape: f32[1,128], index: 6, kind: input, shape index: {}]
  %s7 = inlined_call_operand.vmem [shape: f32[2,4,4,4,128], index: 7, kind: output, shape index: {0}]
  %s8 = inlined_call_operand.vmem [shape: f32[2,1,128], index: 8, kind: output, shape index: {1}]
  %s9 = inlined_call_operand.vmem [shape: f32[2,1,128], index: 9, kind: output, shape index: {2}]
  %10 = xla_tuple %s7, %s8, %s9
  %s11 = sld [smem:[#allocation0]]
  $region81: #{down_forward.4} parent=0
    _
  %s13 = ssub.s32 1, %s11
  %s14 = scalar_select 0, %s13, %s11
  loop: start=0, step=1, limit=10
  $region2: #{down_forward.4} parent=0 // loop_pre_header
    _
  $region3: #{down_forward.4} parent=0 // loop_header
    %s16 = sphi 0, %s20
    %p17 = scmp.ge.s32.totalorder %s16, 10
    %s23 = sphi 0, %s35
    %s24 = sphi 0, %s31
    %s25 = sphi 0, %s23
    %s26 = sphi 0, %s24
    %s27 = sphi 0, %s25
    %s28 = sphi 0, %s26
    %s50 = sphi 0, %s52
    %s53 = sphi 0, %s50
    %s54 = sphi 0, %s53
    %s70 = sphi 0, %s54
    %s86 = sphi 0, %s88
    %s89 = sphi 0, %s86
    %s90 = sphi 0, %s89
    %s106 = sphi 0, %s90
    %s124 = sphi 0, %s126
    %s127 = sphi 0, %s124
    %s128 = sphi 0, %s127
    %s144 = sphi 0, %s128
    %s148 = sphi 0, %s148
    %s150 = sphi 0, %s148
    %s151 = sphi 0, %s150
    %s165 = sphi 0, %s151
    %s169 = sphi 0, %s169
    %s171 = sphi 0, %s169
    %s172 = sphi 0, %s171
    %s186 = sphi 0, %s172
    %s190 = sphi 0, %s190
    %s192 = sphi 0, %s190
    %s193 = sphi 0, %s192
    %s207 = sphi 0, %s193
    %s211 = sphi 0, %s211
    %s213 = sphi 0, %s211
    %s214 = sphi 0, %s213
    %s228 = sphi 0, %s214
    %s236 = sphi 0, %s238
    %s239 = sphi 0, %s236
    %s240 = sphi 0, %s239
    %s256 = sphi 0, %s240
    %s262 = sphi 0, %s264
    %s265 = sphi 0, %s262
    %s266 = sphi 0, %s265
    %s282 = sphi 0, %s266
    %s288 = sphi 0, %s290
    %s291 = sphi 0, %s288
    %s292 = sphi 0, %s291
    %s308 = sphi 0, %s292
  $region4: #{down_forward.4} parent=0 // loop_header_branch
    %19 = sbr.rel (%p17) target = $region8
  $region5: #{down_forward.4} parent=0 // loop_body
    %s21 = ssub.s32 %s16, 1
    %s22 = ssub.s32 %s16, 2
    %s29 = sadd.s32 1, %s24
    %p30 = scmp.ge.s32.totalorder %s29, 4
    %s31 = scalar_select %p30, 0, %s29
    %s32 = sadd.s32 1, %s23
    %s33 = scalar_select %p30, %s32, %s23
    %p34 = scmp.ge.s32.totalorder %s33, 2
    %s35 = scalar_select %p34, 0, %s33
    %s36 = sadd.s32 %s24, 4294967295
    %p37 = scmp.gt.s32.totalorder %s36, 0
    %s38 = scalar_select %p37, %s36, 0
    %p39 = scmp.lt.s32.totalorder %s38, 3
    %s40 = scalar_select %p39, %s38, 3
    %s41 = sadd.s32 %s31, 4294967295
    %p42 = scmp.gt.s32.totalorder %s41, 0
    %s43 = scalar_select %p42, %s41, 0
    %p44 = scmp.lt.s32.totalorder %s43, 3
    %s45 = scalar_select %p44, %s43, 3
    %s46 = ssub.s32 %s23, %s35
    %s47 = ssub.s32 %s40, %s45
    %s48 = sor.u32 %s46, %s47
    %p49 = scmp.eq.s32.totalorder %s48, 0
    %s51 = sadd.s32 %s50, 1
    %s52 = scalar_select %p49, %s50, %s51
    %p55 = pneg %p49
    %p56 = scmp.eq.s32.totalorder %s16, 7
    %p57 = por %p55, %p56
    %p58 = scmp.ne.s32.totalorder %s50, %s53
    %p59 = scmp.eq.s32.totalorder %s16, 0
    %p60 = por %p58, %p59
    %p61 = scmp.ne.s32.totalorder %s50, %s53
    %p62 = scmp.eq.s32.totalorder %s21, 7
    %p63 = por %p61, %p62
    %p64 = scmp.ne.s32.totalorder %s53, %s54
    %p65 = scmp.eq.s32.totalorder %s21, 0
    %p66 = por %p64, %p65
    %p67 = scmp.ne.s32.totalorder %s53, %s54
    %p68 = scmp.eq.s32.totalorder %s22, 7
    %p69 = por %p67, %p68
    %p71 = scmp.ne.s32.totalorder %s54, %s70
    %p72 = scmp.eq.s32.totalorder %s22, 0
    %p73 = por %p71, %p72
    %p74 = scmp.gt.s32.totalorder %s24, 0
    %s75 = scalar_select %p74, %s24, 0
    %p76 = scmp.lt.s32.totalorder %s75, 3
    %s77 = scalar_select %p76, %s75, 3
    %p78 = scmp.gt.s32.totalorder %s31, 0
    %s79 = scalar_select %p78, %s31, 0
    %p80 = scmp.lt.s32.totalorder %s79, 3
    %s81 = scalar_select %p80, %s79, 3
    %s82 = ssub.s32 %s23, %s35
    %s83 = ssub.s32 %s77, %s81
    %s84 = sor.u32 %s82, %s83
    %p85 = scmp.eq.s32.totalorder %s84, 0
    %s87 = sadd.s32 %s86, 1
    %s88 = scalar_select %p85, %s86, %s87
    %p91 = pneg %p85
    %p92 = scmp.eq.s32.totalorder %s16, 7
    %p93 = por %p91, %p92
    %p94 = scmp.ne.s32.totalorder %s86, %s89
    %p95 = scmp.eq.s32.totalorder %s16, 0
    %p96 = por %p94, %p95
    %p97 = scmp.ne.s32.totalorder %s86, %s89
    %p98 = scmp.eq.s32.totalorder %s21, 7
    %p99 = por %p97, %p98
    %p100 = scmp.ne.s32.totalorder %s89, %s90
    %p101 = scmp.eq.s32.totalorder %s21, 0
    %p102 = por %p100, %p101
    %p103 = scmp.ne.s32.totalorder %s89, %s90
    %p104 = scmp.eq.s32.totalorder %s22, 7
    %p105 = por %p103, %p104
    %p107 = scmp.ne.s32.totalorder %s90, %s106
    %p108 = scmp.eq.s32.totalorder %s22, 0
    %p109 = por %p107, %p108
    %s110 = sadd.s32 %s24, 1
    %p111 = scmp.gt.s32.totalorder %s110, 0
    %s112 = scalar_select %p111, %s110, 0
    %p113 = scmp.lt.s32.totalorder %s112, 3
    %s114 = scalar_select %p113, %s112, 3
    %s115 = sadd.s32 %s31, 1
    %p116 = scmp.gt.s32.totalorder %s115, 0
    %s117 = scalar_select %p116, %s115, 0
    %p118 = scmp.lt.s32.totalorder %s117, 3
    %s119 = scalar_select %p118, %s117, 3
    %s120 = ssub.s32 %s23, %s35
    %s121 = ssub.s32 %s114, %s119
    %s122 = sor.u32 %s120, %s121
    %p123 = scmp.eq.s32.totalorder %s122, 0
    %s125 = sadd.s32 %s124, 1
    %s126 = scalar_select %p123, %s124, %s125
    %p129 = pneg %p123
    %p130 = scmp.eq.s32.totalorder %s16, 7
    %p131 = por %p129, %p130
    %p132 = scmp.ne.s32.totalorder %s124, %s127
    %p133 = scmp.eq.s32.totalorder %s16, 0
    %p134 = por %p132, %p133
    %p135 = scmp.ne.s32.totalorder %s124, %s127
    %p136 = scmp.eq.s32.totalorder %s21, 7
    %p137 = por %p135, %p136
    %p138 = scmp.ne.s32.totalorder %s127, %s128
    %p139 = scmp.eq.s32.totalorder %s21, 0
    %p140 = por %p138, %p139
    %p141 = scmp.ne.s32.totalorder %s127, %s128
    %p142 = scmp.eq.s32.totalorder %s22, 7
    %p143 = por %p141, %p142
    %p145 = scmp.ne.s32.totalorder %s128, %s144
    %p146 = scmp.eq.s32.totalorder %s22, 0
    %p147 = por %p145, %p146
    %s149 = sadd.s32 %s148, 1
    %p152 = scmp.eq.s32.totalorder %s16, 7
    %p153 = scmp.ne.s32.totalorder %s148, %s150
    %p154 = scmp.eq.s32.totalorder %s16, 0
    %p155 = por %p153, %p154
    %p156 = scmp.ne.s32.totalorder %s148, %s150
    %p157 = scmp.eq.s32.totalorder %s21, 7
    %p158 = por %p156, %p157
    %p159 = scmp.ne.s32.totalorder %s150, %s151
    %p160 = scmp.eq.s32.totalorder %s21, 0
    %p161 = por %p159, %p160
    %p162 = scmp.ne.s32.totalorder %s150, %s151
    %p163 = scmp.eq.s32.totalorder %s22, 7
    %p164 = por %p162, %p163
    %p166 = scmp.ne.s32.totalorder %s151, %s165
    %p167 = scmp.eq.s32.totalorder %s22, 0
    %p168 = por %p166, %p167
    %s170 = sadd.s32 %s169, 1
    %p173 = scmp.eq.s32.totalorder %s16, 7
    %p174 = scmp.ne.s32.totalorder %s169, %s171
    %p175 = scmp.eq.s32.totalorder %s16, 0
    %p176 = por %p174, %p175
    %p177 = scmp.ne.s32.totalorder %s169, %s171
    %p178 = scmp.eq.s32.totalorder %s21, 7
    %p179 = por %p177, %p178
    %p180 = scmp.ne.s32.totalorder %s171, %s172
    %p181 = scmp.eq.s32.totalorder %s21, 0
    %p182 = por %p180, %p181
    %p183 = scmp.ne.s32.totalorder %s171, %s172
    %p184 = scmp.eq.s32.totalorder %s22, 7
    %p185 = por %p183, %p184
    %p187 = scmp.ne.s32.totalorder %s172, %s186
    %p188 = scmp.eq.s32.totalorder %s22, 0
    %p189 = por %p187, %p188
    %s191 = sadd.s32 %s190, 1
    %p194 = scmp.eq.s32.totalorder %s16, 7
    %p195 = scmp.ne.s32.totalorder %s190, %s192
    %p196 = scmp.eq.s32.totalorder %s16, 0
    %p197 = por %p195, %p196
    %p198 = scmp.ne.s32.totalorder %s190, %s192
    %p199 = scmp.eq.s32.totalorder %s21, 7
    %p200 = por %p198, %p199
    %p201 = scmp.ne.s32.totalorder %s192, %s193
    %p202 = scmp.eq.s32.totalorder %s21, 0
    %p203 = por %p201, %p202
    %p204 = scmp.ne.s32.totalorder %s192, %s193
    %p205 = scmp.eq.s32.totalorder %s22, 7
    %p206 = por %p204, %p205
    %p208 = scmp.ne.s32.totalorder %s193, %s207
    %p209 = scmp.eq.s32.totalorder %s22, 0
    %p210 = por %p208, %p209
    %s212 = sadd.s32 %s211, 1
    %p215 = scmp.eq.s32.totalorder %s16, 7
    %p216 = scmp.ne.s32.totalorder %s211, %s213
    %p217 = scmp.eq.s32.totalorder %s16, 0
    %p218 = por %p216, %p217
    %p219 = scmp.ne.s32.totalorder %s211, %s213
    %p220 = scmp.eq.s32.totalorder %s21, 7
    %p221 = por %p219, %p220
    %p222 = scmp.ne.s32.totalorder %s213, %s214
    %p223 = scmp.eq.s32.totalorder %s21, 0
    %p224 = por %p222, %p223
    %p225 = scmp.ne.s32.totalorder %s213, %s214
    %p226 = scmp.eq.s32.totalorder %s22, 7
    %p227 = por %p225, %p226
    %p229 = scmp.ne.s32.totalorder %s214, %s228
    %p230 = scmp.eq.s32.totalorder %s22, 0
    %p231 = por %p229, %p230
    %s232 = ssub.s32 %s23, %s35
    %s233 = ssub.s32 %s24, %s31
    %s234 = sor.u32 %s232, %s233
    %p235 = scmp.eq.s32.totalorder %s234, 0
    %s237 = sadd.s32 %s236, 1
    %s238 = scalar_select %p235, %s236, %s237
    %p241 = pneg %p235
    %p242 = scmp.eq.s32.totalorder %s16, 7
    %p243 = por %p241, %p242
    %p244 = scmp.ne.s32.totalorder %s236, %s239
    %p245 = scmp.eq.s32.totalorder %s16, 0
    %p246 = por %p244, %p245
    %p247 = scmp.ne.s32.totalorder %s236, %s239
    %p248 = scmp.eq.s32.totalorder %s21, 7
    %p249 = por %p247, %p248
    %p250 = scmp.ne.s32.totalorder %s239, %s240
    %p251 = scmp.eq.s32.totalorder %s21, 0
    %p252 = por %p250, %p251
    %p253 = scmp.ne.s32.totalorder %s239, %s240
    %p254 = scmp.eq.s32.totalorder %s22, 7
    %p255 = por %p253, %p254
    %p257 = scmp.ne.s32.totalorder %s240, %s256
    %p258 = scmp.eq.s32.totalorder %s22, 0
    %p259 = por %p257, %p258
    %s260 = ssub.s32 %s23, %s35
    %p261 = scmp.eq.s32.totalorder %s260, 0
    %s263 = sadd.s32 %s262, 1
    %s264 = scalar_select %p261, %s262, %s263
    %p267 = pneg %p261
    %p268 = scmp.eq.s32.totalorder %s16, 7
    %p269 = por %p267, %p268
    %p270 = scmp.ne.s32.totalorder %s262, %s265
    %p271 = scmp.eq.s32.totalorder %s16, 0
    %p272 = por %p270, %p271
    %p273 = scmp.ne.s32.totalorder %s262, %s265
    %p274 = scmp.eq.s32.totalorder %s21, 7
    %p275 = por %p273, %p274
    %p276 = scmp.ne.s32.totalorder %s265, %s266
    %p277 = scmp.eq.s32.totalorder %s21, 0
    %p278 = por %p276, %p277
    %p279 = scmp.ne.s32.totalorder %s265, %s266
    %p280 = scmp.eq.s32.totalorder %s22, 7
    %p281 = por %p279, %p280
    %p283 = scmp.ne.s32.totalorder %s266, %s282
    %p284 = scmp.eq.s32.totalorder %s22, 0
    %p285 = por %p283, %p284
    %s286 = ssub.s32 %s23, %s35
    %p287 = scmp.eq.s32.totalorder %s286, 0
    %s289 = sadd.s32 %s288, 1
    %s290 = scalar_select %p287, %s288, %s289
    %p293 = pneg %p287
    %p294 = scmp.eq.s32.totalorder %s16, 7
    %p295 = por %p293, %p294
    %p296 = scmp.ne.s32.totalorder %s288, %s291
    %p297 = scmp.eq.s32.totalorder %s16, 0
    %p298 = por %p296, %p297
    %p299 = scmp.ne.s32.totalorder %s288, %s291
    %p300 = scmp.eq.s32.totalorder %s21, 7
    %p301 = por %p299, %p300
    %p302 = scmp.ne.s32.totalorder %s291, %s292
    %p303 = scmp.eq.s32.totalorder %s21, 0
    %p304 = por %p302, %p303
    %p305 = scmp.ne.s32.totalorder %s291, %s292
    %p306 = scmp.eq.s32.totalorder %s22, 7
    %p307 = por %p305, %p306
    %p309 = scmp.ne.s32.totalorder %s292, %s308
    %p310 = scmp.eq.s32.totalorder %s22, 0
    %p311 = por %p309, %p310
    %p312 = scmp.le.s32.totalorder 1, %s16
    %p313 = scmp.lt.s32.totalorder %s16, 9
    %p314 = pnand %p312, %p313
    %p315 = pneg %p314
    // Predicated region
    $region9: #{down_forward.4} parent=5 // pred_check
      _
    $region10: #{down_forward.4} parent=5 // pred_check_branch
      %317 = sbr.rel (%p314) target = $region12
    $region11: #{down_forward.4} parent=5 // pred_region
      %s318 = ssub.s32 %s16, 1
      // Predicated region
      $region13: #{down_forward.4} parent=11 // pred_check
        %p319 = pneg %p161
      $region14: #{down_forward.4} parent=11 // pred_check_branch
        %321 = sbr.rel (%p319) target = $region16
      $region15: #{down_forward.4} parent=11 // pred_region
        _
      $region16: #{down_forward.4} parent=11 // pred_fallthru
        _
      // Predicated region
      $region17: #{down_forward.4} parent=11 // pred_check
        %p322 = pneg %p182
      $region18: #{down_forward.4} parent=11 // pred_check_branch
        %324 = sbr.rel (%p322) target = $region20
      $region19: #{down_forward.4} parent=11 // pred_region
        _
      $region20: #{down_forward.4} parent=11 // pred_fallthru
        _
      // Predicated region
      $region21: #{down_forward.4} parent=11 // pred_check
        %p325 = pneg %p203
      $region22: #{down_forward.4} parent=11 // pred_check_branch
        %327 = sbr.rel (%p325) target = $region24
      $region23: #{down_forward.4} parent=11 // pred_region
        _
      $region24: #{down_forward.4} parent=11 // pred_fallthru
        _
      // Predicated region
      $region25: #{down_forward.4} parent=11 // pred_check
        %p328 = pneg %p224
      $region26: #{down_forward.4} parent=11 // pred_check_branch
        %330 = sbr.rel (%p328) target = $region28
      $region27: #{down_forward.4} parent=11 // pred_region
        _
      $region28: #{down_forward.4} parent=11 // pred_fallthru
        _
    $region12: #{down_forward.4} parent=5 // pred_fallthru
      _
    %p331 = scmp.lt.s32.totalorder %s16, 8
    // Predicated region
    $region29: #{down_forward.4} parent=5 // pred_check
      %p332 = pneg %p331
    $region30: #{down_forward.4} parent=5 // pred_check_branch
      %334 = sbr.rel (%p332) target = $region32
    $region31: #{down_forward.4} parent=5 // pred_region
      // Predicated region
      $region33: #{down_forward.4} parent=31 // pred_check
        %p335 = pneg %p60
      $region34: #{down_forward.4} parent=31 // pred_check_branch
        %337 = sbr.rel (%p335) target = $region36
      $region35: #{down_forward.4} parent=31 // pred_region
        %s338 = sadd.s32 %s24, 4294967295
        %p339 = scmp.gt.s32.totalorder %s338, 0
        %s340 = scalar_select %p339, %s338, 0
        %p341 = scmp.lt.s32.totalorder %s340, 3
        %s342 = scalar_select %p341, %s340, 3
        %p343 = scmp.lt.s32.totalorder %s23, 1
        %s344 = scalar_select %p343, %s23, 1
        %p345 = scmp.lt.s32.totalorder %s342, 3
        %s346 = scalar_select %p345, %s342, 3
        %s347 = smul.addr %s346, 4
        %s348 = smul.addr %s344, 16
        %s349 = sadd.s32 %s347, %s348
        %s350 = smul.addr %s349, 4
        %s351 = scalar_lea.vmem %s0, %s350
        %s352 = sadd.s32 %s24, 4294967295
        %p353 = scmp.gt.s32.totalorder %s352, 0
        %s354 = scalar_select %p353, %s352, 0
        %p355 = scmp.lt.s32.totalorder %s354, 3
        %s356 = scalar_select %p355, %s354, 3
      $region36: #{down_forward.4} parent=31 // pred_fallthru
        _
      // Predicated region
      $region37: #{down_forward.4} parent=31 // pred_check
        %p357 = pneg %p96
      $region38: #{down_forward.4} parent=31 // pred_check_branch
        %359 = sbr.rel (%p357) target = $region40
      $region39: #{down_forward.4} parent=31 // pred_region
        %p360 = scmp.gt.s32.totalorder %s24, 0
        %s361 = scalar_select %p360, %s24, 0
        %p362 = scmp.lt.s32.totalorder %s361, 3
        %s363 = scalar_select %p362, %s361, 3
        %p364 = scmp.lt.s32.totalorder %s23, 1
        %s365 = scalar_select %p364, %s23, 1
        %p366 = scmp.lt.s32.totalorder %s363, 3
        %s367 = scalar_select %p366, %s363, 3
        %s368 = smul.addr %s367, 4
        %s369 = smul.addr %s365, 16
        %s370 = sadd.s32 %s368, %s369
        %s371 = smul.addr %s370, 4
        %s372 = scalar_lea.vmem %s1, %s371
        %p373 = scmp.gt.s32.totalorder %s24, 0
        %s374 = scalar_select %p373, %s24, 0
        %p375 = scmp.lt.s32.totalorder %s374, 3
        %s376 = scalar_select %p375, %s374, 3
      $region40: #{down_forward.4} parent=31 // pred_fallthru
        _
      // Predicated region
      $region41: #{down_forward.4} parent=31 // pred_check
        %p377 = pneg %p134
      $region42: #{down_forward.4} parent=31 // pred_check_branch
        %379 = sbr.rel (%p377) target = $region44
      $region43: #{down_forward.4} parent=31 // pred_region
        %s380 = sadd.s32 %s24, 1
        %p381 = scmp.gt.s32.totalorder %s380, 0
        %s382 = scalar_select %p381, %s380, 0
        %p383 = scmp.lt.s32.totalorder %s382, 3
        %s384 = scalar_select %p383, %s382, 3
        %p385 = scmp.lt.s32.totalorder %s23, 1
        %s386 = scalar_select %p385, %s23, 1
        %p387 = scmp.lt.s32.totalorder %s384, 3
        %s388 = scalar_select %p387, %s384, 3
        %s389 = smul.addr %s388, 4
        %s390 = smul.addr %s386, 16
        %s391 = sadd.s32 %s389, %s390
        %s392 = smul.addr %s391, 4
        %s393 = scalar_lea.vmem %s2, %s392
        %s394 = sadd.s32 %s24, 1
        %p395 = scmp.gt.s32.totalorder %s394, 0
        %s396 = scalar_select %p395, %s394, 0
        %p397 = scmp.lt.s32.totalorder %s396, 3
        %s398 = scalar_select %p397, %s396, 3
      $region44: #{down_forward.4} parent=31 // pred_fallthru
        _
    $region32: #{down_forward.4} parent=5 // pred_fallthru
      _
    %p399 = scmp.le.s32.totalorder 1, %s16
    %p400 = scmp.lt.s32.totalorder %s16, 9
    %p401 = pnand %p399, %p400
    %p402 = pneg %p401
    // Predicated region
    $region45: #{down_forward.4} parent=5 // pred_check
      _
    $region46: #{down_forward.4} parent=5 // pred_check_branch
      %404 = sbr.rel (%p401) target = $region48
    $region47: #{down_forward.4} parent=5 // pred_region
      %s405 = ssub.s32 %s16, 1
      %s406 = sadd.s32 %s26, 4294967295
      %p407 = scmp.gt.s32.totalorder %s406, 0
      %s408 = scalar_select %p407, %s406, 0
      %p409 = scmp.lt.s32.totalorder %s408, 3
      %s410 = scalar_select %p409, %s408, 3
      %p411 = scmp.lt.s32.totalorder %s25, 1
      %s412 = scalar_select %p411, %s25, 1
      %p413 = scmp.lt.s32.totalorder %s410, 3
      %s414 = scalar_select %p413, %s410, 3
      %s415 = smul.addr %s414, 4
      %s416 = smul.addr %s412, 16
      %s417 = sadd.s32 %s415, %s416
      %s418 = smul.addr %s417, 4
      %s419 = scalar_lea.vmem %s0, %s418
      %p420 = pneg %p66
      %p421 = pneg %p63
      %p422 = scmp.gt.s32.totalorder %s26, 0
      %s423 = scalar_select %p422, %s26, 0
      %p424 = scmp.lt.s32.totalorder %s423, 3
      %s425 = scalar_select %p424, %s423, 3
      %p426 = scmp.lt.s32.totalorder %s25, 1
      %s427 = scalar_select %p426, %s25, 1
      %p428 = scmp.lt.s32.totalorder %s425, 3
      %s429 = scalar_select %p428, %s425, 3
      %s430 = smul.addr %s429, 4
      %s431 = smul.addr %s427, 16
      %s432 = sadd.s32 %s430, %s431
      %s433 = smul.addr %s432, 4
      %s434 = scalar_lea.vmem %s1, %s433
      %p435 = pneg %p102
      %p436 = pneg %p99
      %s437 = sadd.s32 %s26, 1
      %p438 = scmp.gt.s32.totalorder %s437, 0
      %s439 = scalar_select %p438, %s437, 0
      %p440 = scmp.lt.s32.totalorder %s439, 3
      %s441 = scalar_select %p440, %s439, 3
      %p442 = scmp.lt.s32.totalorder %s25, 1
      %s443 = scalar_select %p442, %s25, 1
      %p444 = scmp.lt.s32.totalorder %s441, 3
      %s445 = scalar_select %p444, %s441, 3
      %s446 = smul.addr %s445, 4
      %s447 = smul.addr %s443, 16
      %s448 = sadd.s32 %s446, %s447
      %s449 = smul.addr %s448, 4
      %s450 = scalar_lea.vmem %s2, %s449
      %p451 = pneg %p140
      %p452 = pneg %p137
      %p453 = pneg %p161
      %p454 = pneg %p158
      %p455 = pneg %p182
      %p456 = pneg %p179
      %p457 = pneg %p203
      %p458 = pneg %p200
      %p459 = pneg %p224
      %p460 = pneg %p221
      %p461 = pneg %p252
      %p462 = pneg %p249
      %p463 = scmp.lt.s32.totalorder %s25, 1
      %s464 = scalar_select %p463, %s25, 1
      %p465 = scmp.lt.s32.totalorder %s26, 3
      %s466 = scalar_select %p465, %s26, 3
      %s467 = smul.addr %s466, 4
      %s468 = smul.addr %s464, 16
      %s469 = sadd.s32 %s467, %s468
      %s470 = smul.addr %s469, 4
      %s471 = scalar_lea.vmem %s7, %s470
      %p472 = pneg %p278
      %p473 = pneg %p275
      %p474 = scmp.lt.s32.totalorder %s25, 1
      %s475 = scalar_select %p474, %s25, 1
      %s476 = scalar_lea.vmem %s8, %s475
      %p477 = pneg %p304
      %p478 = pneg %p301
      %p479 = scmp.lt.s32.totalorder %s25, 1
      %s480 = scalar_select %p479, %s25, 1
      %s481 = scalar_lea.vmem %s9, %s480
      %s482 = sadd.s32 %s26, 4294967295
      %p483 = scmp.gt.s32.totalorder %s482, 0
      %s484 = scalar_select %p483, %s482, 0
      %p485 = scmp.lt.s32.totalorder %s484, 3
      %s486 = scalar_select %p485, %s484, 3
      %p487 = scmp.lt.s32.totalorder %s25, 1
      %s488 = scalar_select %p487, %s25, 1
      %p489 = scmp.lt.s32.totalorder %s486, 3
      %s490 = scalar_select %p489, %s486, 3
      %s491 = smul.addr %s490, 4
      %s492 = smul.addr %s488, 16
      %s493 = sadd.s32 %s491, %s492
      %s494 = smul.addr %s493, 4
      %s495 = scalar_lea.vmem %s0, %s494
      %s496 = sadd.s32 %s26, 4294967295
      %p497 = scmp.gt.s32.totalorder %s496, 0
      %s498 = scalar_select %p497, %s496, 0
      %p499 = scmp.lt.s32.totalorder %s498, 3
      %s500 = scalar_select %p499, %s498, 3
      %p501 = scmp.gt.s32.totalorder %s26, 0
      %s502 = scalar_select %p501, %s26, 0
      %p503 = scmp.lt.s32.totalorder %s502, 3
      %s504 = scalar_select %p503, %s502, 3
      %p505 = scmp.lt.s32.totalorder %s25, 1
      %s506 = scalar_select %p505, %s25, 1
      %p507 = scmp.lt.s32.totalorder %s504, 3
      %s508 = scalar_select %p507, %s504, 3
      %s509 = smul.addr %s508, 4
      %s510 = smul.addr %s506, 16
      %s511 = sadd.s32 %s509, %s510
      %s512 = smul.addr %s511, 4
      %s513 = scalar_lea.vmem %s1, %s512
      %p514 = scmp.gt.s32.totalorder %s26, 0
      %s515 = scalar_select %p514, %s26, 0
      %p516 = scmp.lt.s32.totalorder %s515, 3
      %s517 = scalar_select %p516, %s515, 3
      %s518 = sadd.s32 %s26, 1
      %p519 = scmp.gt.s32.totalorder %s518, 0
      %s520 = scalar_select %p519, %s518, 0
      %p521 = scmp.lt.s32.totalorder %s520, 3
      %s522 = scalar_select %p521, %s520, 3
      %p523 = scmp.lt.s32.totalorder %s25, 1
      %s524 = scalar_select %p523, %s25, 1
      %p525 = scmp.lt.s32.totalorder %s522, 3
      %s526 = scalar_select %p525, %s522, 3
      %s527 = smul.addr %s526, 4
      %s528 = smul.addr %s524, 16
      %s529 = sadd.s32 %s527, %s528
      %s530 = smul.addr %s529, 4
      %s531 = scalar_lea.vmem %s2, %s530
      %s532 = sadd.s32 %s26, 1
      %p533 = scmp.gt.s32.totalorder %s532, 0
      %s534 = scalar_select %p533, %s532, 0
      %p535 = scmp.lt.s32.totalorder %s534, 3
      %s536 = scalar_select %p535, %s534, 3
      %p537 = scmp.lt.s32.totalorder %s25, 1
      %s538 = scalar_select %p537, %s25, 1
      %p539 = scmp.lt.s32.totalorder %s26, 3
      %s540 = scalar_select %p539, %s26, 3
      %s541 = smul.addr %s540, 4
      %s542 = smul.addr %s538, 16
      %s543 = sadd.s32 %s541, %s542
      %s544 = smul.addr %s543, 4
      %s545 = scalar_lea.vmem %s7, %s544
      %p546 = scmp.lt.s32.totalorder %s25, 1
      %s547 = scalar_select %p546, %s25, 1
      %s548 = scalar_lea.vmem %s8, %s547
      %p549 = scmp.lt.s32.totalorder %s25, 1
      %s550 = scalar_select %p549, %s25, 1
      %s551 = scalar_lea.vmem %s9, %s550
      %p552 = scmp.eq.s32.totalorder %s26, 0
      // Predicated region
      $region49: #{down_forward.4} parent=47 // pred_check
        %p553 = pneg %p552
      $region50: #{down_forward.4} parent=47 // pred_check_branch
        %555 = sbr.rel (%p553) target = $region52
      $region51: #{down_forward.4} parent=47 // pred_region
        %vm556 = vcmask 31744
        %557 = vst.msk [vmem:[#allocation2] sm:$0xff] %vm556, 0.0
        %558 = vst.msk [vmem:[#allocation2 + $0x8] sm:$0xff] %vm556, 0.0
        %559 = vst.msk [vmem:[#allocation2 + $0x10] sm:$0xff] %vm556, 0.0
        %560 = vst.msk [vmem:[#allocation2 + $0x18] sm:$0xff] %vm556, 0.0
        %561 = vst.msk [vmem:[#allocation2 + $0x20] sm:$0xff] %vm556, 0.0
        %562 = vst.msk [vmem:[#allocation2 + $0x28] sm:$0xff] %vm556, 0.0
        %563 = vst.msk [vmem:[#allocation2 + $0x30] sm:$0xff] %vm556, 0.0
        %564 = vst.msk [vmem:[#allocation2 + $0x38] sm:$0xff] %vm556, 0.0
        %565 = vst.msk [vmem:[#allocation2 + $0x40] sm:$0xff] %vm556, 0.0
        %566 = vst.msk [vmem:[#allocation2 + $0x48] sm:$0xff] %vm556, 0.0
        %567 = vst.msk [vmem:[#allocation2 + $0x50] sm:$0xff] %vm556, 0.0
        %568 = vst.msk [vmem:[#allocation2 + $0x58] sm:$0xff] %vm556, 0.0
        %569 = vst.msk [vmem:[#allocation2 + $0x60] sm:$0xff] %vm556, 0.0
        %570 = vst.msk [vmem:[#allocation2 + $0x68] sm:$0xff] %vm556, 0.0
        %571 = vst.msk [vmem:[#allocation2 + $0x70] sm:$0xff] %vm556, 0.0
        %572 = vst.msk [vmem:[#allocation2 + $0x78] sm:$0xff] %vm556, 0.0
        %573 = vst.msk [vmem:[#allocation2 + $0x80] sm:$0xff] %vm556, 0.0
        %574 = vst.msk [vmem:[#allocation2 + $0x88] sm:$0xff] %vm556, 0.0
        %575 = vst [vmem:[%s548] sm:$0x1] 0.0
        %576 = vst [vmem:[%s551] sm:$0x1] 0.0
      $region52: #{down_forward.4} parent=47 // pred_fallthru
        _
      %v577 = vld [vmem:[%s495] sm:$0xf]
      %v578 = vld [vmem:[%s495 + $0x4] sm:$0xf]
      %v579 = vld [vmem:[%s495 + $0x8] sm:$0xf]
      %v580 = vld [vmem:[%s495 + $0xc] sm:$0xf]
      %s581 = sadd.s32 %s26, 4294967295
      %p582 = scmp.ge.s32.totalorder %s581, 0
      %p583 = scmp.lt.s32.totalorder %s581, 4
      %p584 = pnand %p582, %p583
      %p585 = pneg %p584
      %s586 = scalar_select %p585, 1, 0
      %s587 = scvt.s32.f32 %s586
      %v588 = vstv %s587
      %v589 = vmul.f32 %v577, %v588
      %v590 = vmul.f32 %v578, %v588
      %v591 = vmul.f32 %v579, %v588
      %v592 = vmul.f32 %v580, %v588
      %s593 = scalar_lea.vmem [#allocation2], 8
      %vm594 = vcmask 27648
      %595 = vst.msk [vmem:[%s593 + $0x1] sm:$0xf] %vm594, %v589
      %596 = vst.msk [vmem:[%s593 + $0x9] sm:$0xf] %vm594, %v590
      %597 = vst.msk [vmem:[%s593 + $0x11] sm:$0xf] %vm594, %v591
      %598 = vst.msk [vmem:[%s593 + $0x19] sm:$0xf] %vm594, %v592
      %v599 = vld [vmem:[%s513] sm:$0xf]
      %v600 = vld [vmem:[%s513 + $0x4] sm:$0xf]
      %v601 = vld [vmem:[%s513 + $0x8] sm:$0xf]
      %v602 = vld [vmem:[%s513 + $0xc] sm:$0xf]
      %p603 = scmp.ge.s32.totalorder %s26, 0
      %p604 = scmp.lt.s32.totalorder %s26, 4
      %p605 = pnand %p603, %p604
      %p606 = pneg %p605
      %s607 = scalar_select %p606, 1, 0
      %s608 = scvt.s32.f32 %s607
      %v609 = vstv %s608
      %v610 = vmul.f32 %v599, %v609
      %v611 = vmul.f32 %v600, %v609
      %v612 = vmul.f32 %v601, %v609
      %v613 = vmul.f32 %v602, %v609
      %s614 = scalar_lea.vmem [#allocation2], 56
      %615 = vst.msk [vmem:[%s614 + $0x1] sm:$0xf] %vm594, %v610
      %616 = vst.msk [vmem:[%s614 + $0x9] sm:$0xf] %vm594, %v611
      %617 = vst.msk [vmem:[%s614 + $0x11] sm:$0xf] %vm594, %v612
      %618 = vst.msk [vmem:[%s614 + $0x19] sm:$0xf] %vm594, %v613
      %v619 = vld [vmem:[%s531] sm:$0xf]
      %v620 = vld [vmem:[%s531 + $0x4] sm:$0xf]
      %v621 = vld [vmem:[%s531 + $0x8] sm:$0xf]
      %v622 = vld [vmem:[%s531 + $0xc] sm:$0xf]
      %s623 = sadd.s32 %s26, 1
      %p624 = scmp.ge.s32.totalorder %s623, 0
      %p625 = scmp.lt.s32.totalorder %s623, 4
      %p626 = pnand %p624, %p625
      %p627 = pneg %p626
      %s628 = scalar_select %p627, 1, 0
      %s629 = scvt.s32.f32 %s628
      %v630 = vstv %s629
      %v631 = vmul.f32 %v619, %v630
      %v632 = vmul.f32 %v620, %v630
      %v633 = vmul.f32 %v621, %v630
      %v634 = vmul.f32 %v622, %v630
      %s635 = scalar_lea.vmem [#allocation2], 104
      %636 = vst.msk [vmem:[%s635 + $0x1] sm:$0xf] %vm594, %v631
      %637 = vst.msk [vmem:[%s635 + $0x9] sm:$0xf] %vm594, %v632
      %638 = vst.msk [vmem:[%s635 + $0x11] sm:$0xf] %vm594, %v633
      %639 = vst.msk [vmem:[%s635 + $0x19] sm:$0xf] %vm594, %v634
      %v640 = vld [vmem:[#allocation2] sm:$0xff]
      %v641 = vld [vmem:[#allocation2 + $0x8] sm:$0xff]
      %v642 = vld [vmem:[#allocation2 + $0x10] sm:$0xff]
      %v643 = vld [vmem:[#allocation2 + $0x18] sm:$0xff]
      %v644 = vld [vmem:[%s5] sm:$0xf]
      %vm645 = vcmask 31744
      %v647 = vsel %vm645, %v640, 0
      %v650 = vsel %vm645, %v641, 0
      %v653 = vsel %vm645, %v642, 0
      %v656 = vsel %vm645, %v643, 0
      %vm658 = vcmask 1043456
      %v660 = vsel %vm658, %v644, 0
      %662 = vmatprep.subr.mxu0 0.0
      %663 = vmatpush1.msra.mxu0 %v660
      %664 = vmatprep.subr.mxu0 0.0
      %665 = vmatpush1.msra.mxu0 0.0
      %666 = vmatprep.subr.mxu0 0.0
      %667 = vmatpush1.msra.mxu0 0.0
      %668 = vmatprep.subr.mxu0 0.0
      %669 = vmatpush1.msra.mxu0 0.0
      %670 = vmatprep.subr.mxu0 0.0
      %671 = vmatpush1.msra.mxu0 0.0
      %672 = vmatprep.subr.mxu0 0.0
      %673 = vmatpush1.msra.mxu0 0.0
      %674 = vmatprep.subr.mxu0 0.0
      %675 = vmatpush1.msra.mxu0 0.0
      %676 = vmatprep.subr.mxu0 0.0
      %677 = vmatpush1.msra.mxu0 0.0
      %678 = vmatprep.subr.mxu0 0.0
      %679 = vmatpush1.msra.mxu0 0.0
      %680 = vmatprep.subr.mxu0 0.0
      %681 = vmatpush1.msra.mxu0 0.0
      %682 = vmatprep.subr.mxu0 0.0
      %683 = vmatpush1.msra.mxu0 0.0
      %684 = vmatprep.subr.mxu0 0.0
      %685 = vmatpush1.msra.mxu0 0.0
      %686 = vmatprep.subr.mxu0 0.0
      %687 = vmatpush1.msra.mxu0 0.0
      %688 = vmatprep.subr.mxu0 0.0
      %689 = vmatpush1.msra.mxu0 0.0
      %690 = vmatprep.subr.mxu0 0.0
      %691 = vmatpush1.msra.mxu0 0.0
      %692 = vmatprep.subr.mxu0 0.0
      %693 = vmatpush1.msra.mxu0 0.0
      %694 = vmatprep.subr.mxu0 0.0
      %695 = vmatpush1.msra.mxu0 0.0
      %696 = vmatprep.subr.mxu0 0.0
      %697 = vmatpush1.msra.mxu0 0.0
      %698 = vmatprep.subr.mxu0 0.0
      %699 = vmatpush1.msra.mxu0 0.0
      %700 = vmatprep.subr.mxu0 0.0
      %701 = vmatpush1.msra.mxu0 0.0
      %702 = vmatprep.subr.mxu0 0.0
      %703 = vmatpush1.msra.mxu0 0.0
      %704 = vmatprep.subr.mxu0 0.0
      %705 = vmatpush1.msra.mxu0 0.0
      %706 = vmatprep.subr.mxu0 0.0
      %707 = vmatpush1.msra.mxu0 0.0
      %708 = vmatprep.subr.mxu0 0.0
      %709 = vmatpush1.msra.mxu0 0.0
      %710 = vmatprep.subr.mxu0 0.0
      %711 = vmatpush1.msra.mxu0 0.0
      %712 = vmatprep.subr.mxu0 0.0
      %713 = vmatpush1.msra.mxu0 0.0
      %714 = vmatprep.subr.mxu0 0.0
      %715 = vmatpush1.msra.mxu0 0.0
      %716 = vmatprep.subr.mxu0 0.0
      %717 = vmatpush1.msra.mxu0 0.0
      %718 = vmatprep.subr.mxu0 0.0
      %719 = vmatpush1.msra.mxu0 0.0
      %720 = vmatprep.subr.mxu0 0.0
      %721 = vmatpush1.msra.mxu0 0.0
      %722 = vmatprep.subr.mxu0 0.0
      %723 = vmatpush1.msra.mxu0 0.0
      %724 = vmatprep.subr.mxu0 0.0
      %725 = vmatpush1.msra.mxu0 0.0
      %726 = vmatprep.mubr.f32.mxu0 0.0
      %727 = vmatmul.mubr.f32.gmra.mrb[0].mxu0 %v647
      %v728 = vpop.f32.mrb[0].mxu0
      %v729 = vadd.f32 0.0, %v728
      %v730 = vpop.f32.mrb[0].mxu0
      %731 = vmatprep.mubr.f32.mxu0 0.0
      %732 = vmatmul.mubr.f32.gmra.mrb[0].mxu0 %v650
      %v733 = vpop.f32.mrb[0].mxu0
      %v734 = vadd.f32 0.0, %v733
      %v735 = vpop.f32.mrb[0].mxu0
      %736 = vmatprep.mubr.f32.mxu0 0.0
      %737 = vmatmul.mubr.f32.gmra.mrb[0].mxu0 %v653
      %v738 = vpop.f32.mrb[0].mxu0
      %v739 = vadd.f32 0.0, %v738
      %v740 = vpop.f32.mrb[0].mxu0
      %741 = vmatprep.mubr.f32.mxu0 0.0
      %742 = vmatmul.mubr.f32.gmra.mrb[0].mxu0 %v656
      %v743 = vpop.f32.mrb[0].mxu0
      %v744 = vadd.f32 0.0, %v743
      %v745 = vpop.f32.mrb[0].mxu0
      %746 = vdwg.mxu0
      %v747 = vadd.f32 %v729, 0.0
      %v748 = vadd.f32 %v734, 0.0
      %v749 = vadd.f32 %v739, 0.0
      %v750 = vadd.f32 %v744, 0.0
      %s751 = scalar_lea.vmem %s5, 4
      %v752 = vld [vmem:[%s751] sm:$0xf]
      %v754 = vsel %vm658, %v752, 0
      %756 = vmatprep.subr.mxu0 0.0
      %757 = vmatpush1.msra.mxu0 %v754
      %758 = vmatprep.subr.mxu0 0.0
      %759 = vmatpush1.msra.mxu0 0.0
      %760 = vmatprep.subr.mxu0 0.0
      %761 = vmatpush1.msra.mxu0 0.0
      %762 = vmatprep.subr.mxu0 0.0
      %763 = vmatpush1.msra.mxu0 0.0
      %764 = vmatprep.subr.mxu0 0.0
      %765 = vmatpush1.msra.mxu0 0.0
      %766 = vmatprep.subr.mxu0 0.0
      %767 = vmatpush1.msra.mxu0 0.0
      %768 = vmatprep.subr.mxu0 0.0
      %769 = vmatpush1.msra.mxu0 0.0
      %770 = vmatprep.subr.mxu0 0.0
      %771 = vmatpush1.msra.mxu0 0.0
      %772 = vmatprep.subr.mxu0 0.0
      %773 = vmatpush1.msra.mxu0 0.0
      %774 = vmatprep.subr.mxu0 0.0
      %775 = vmatpush1.msra.mxu0 0.0
      %776 = vmatprep.subr.mxu0 0.0
      %777 = vmatpush1.msra.mxu0 0.0
      %778 = vmatprep.subr.mxu0 0.0
      %779 = vmatpush1.msra.mxu0 0.0
      %780 = vmatprep.subr.mxu0 0.0
      %781 = vmatpush1.msra.mxu0 0.0
      %782 = vmatprep.subr.mxu0 0.0
      %783 = vmatpush1.msra.mxu0 0.0
      %784 = vmatprep.subr.mxu0 0.0
      %785 = vmatpush1.msra.mxu0 0.0
      %786 = vmatprep.subr.mxu0 0.0
      %787 = vmatpush1.msra.mxu0 0.0
      %788 = vmatprep.subr.mxu0 0.0
      %789 = vmatpush1.msra.mxu0 0.0
      %790 = vmatprep.subr.mxu0 0.0
      %791 = vmatpush1.msra.mxu0 0.0
      %792 = vmatprep.subr.mxu0 0.0
      %793 = vmatpush1.msra.mxu0 0.0
      %794 = vmatprep.subr.mxu0 0.0
      %795 = vmatpush1.msra.mxu0 0.0
      %796 = vmatprep.subr.mxu0 0.0
      %797 = vmatpush1.msra.mxu0 0.0
      %798 = vmatprep.subr.mxu0 0.0
      %799 = vmatpush1.msra.mxu0 0.0
      %800 = vmatprep.subr.mxu0 0.0
      %801 = vmatpush1.msra.mxu0 0.0
      %802 = vmatprep.subr.mxu0 0.0
      %803 = vmatpush1.msra.mxu0 0.0
      %804 = vmatprep.subr.mxu0 0.0
      %805 = vmatpush1.msra.mxu0 0.0
      %806 = vmatprep.subr.mxu0 0.0
      %807 = vmatpush1.msra.mxu0 0.0
      %808 = vmatprep.subr.mxu0 0.0
      %809 = vmatpush1.msra.mxu0 0.0
      %810 = vmatprep.subr.mxu0 0.0
      %811 = vmatpush1.msra.mxu0 0.0
      %812 = vmatprep.subr.mxu0 0.0
      %813 = vmatpush1.msra.mxu0 0.0
      %814 = vmatprep.subr.mxu0 0.0
      %815 = vmatpush1.msra.mxu0 0.0
      %816 = vmatprep.subr.mxu0 0.0
      %817 = vmatpush1.msra.mxu0 0.0
      %818 = vmatprep.subr.mxu0 0.0
      %819 = vmatpush1.msra.mxu0 0.0
      %820 = vmatprep.mubr.f32.mxu0 0.0
      %821 = vmatmul.mubr.f32.gmra.mrb[0].mxu0 %v647
      %v822 = vpop.f32.mrb[0].mxu0
      %v823 = vadd.f32 0.0, %v822
      %v824 = vpop.f32.mrb[0].mxu0
      %825 = vmatprep.mubr.f32.mxu0 0.0
      %826 = vmatmul.mubr.f32.gmra.mrb[0].mxu0 %v650
      %v827 = vpop.f32.mrb[0].mxu0
      %v828 = vadd.f32 0.0, %v827
      %v829 = vpop.f32.mrb[0].mxu0
      %830 = vmatprep.mubr.f32.mxu0 0.0
      %831 = vmatmul.mubr.f32.gmra.mrb[0].mxu0 %v653
      %v832 = vpop.f32.mrb[0].mxu0
      %v833 = vadd.f32 0.0, %v832
      %v834 = vpop.f32.mrb[0].mxu0
      %835 = vmatprep.mubr.f32.mxu0 0.0
      %836 = vmatmul.mubr.f32.gmra.mrb[0].mxu0 %v656
      %v837 = vpop.f32.mrb[0].mxu0
      %v838 = vadd.f32 0.0, %v837
      %v839 = vpop.f32.mrb[0].mxu0
      %840 = vdwg.mxu0
      %v845 = vrot.slane %v823, 1
      %v846 = vrot.slane %v828, 1
      %v847 = vrot.slane %v833, 1
      %v848 = vrot.slane %v838, 1
      %v853 = vadd.f32 %v747, %v845
      %v854 = vadd.f32 %v748, %v846
      %v855 = vadd.f32 %v749, %v847
      %v856 = vadd.f32 %v750, %v848
      %s857 = scalar_lea.vmem %s5, 8
      %v858 = vld [vmem:[%s857] sm:$0xf]
      %v860 = vsel %vm658, %v858, 0
      %862 = vmatprep.subr.mxu0 0.0
      %863 = vmatpush1.msra.mxu0 %v860
      %864 = vmatprep.subr.mxu0 0.0
      %865 = vmatpush1.msra.mxu0 0.0
      %866 = vmatprep.subr.mxu0 0.0
      %867 = vmatpush1.msra.mxu0 0.0
      %868 = vmatprep.subr.mxu0 0.0
      %869 = vmatpush1.msra.mxu0 0.0
      %870 = vmatprep.subr.mxu0 0.0
      %871 = vmatpush1.msra.mxu0 0.0
      %872 = vmatprep.subr.mxu0 0.0
      %873 = vmatpush1.msra.mxu0 0.0
      %874 = vmatprep.subr.mxu0 0.0
      %875 = vmatpush1.msra.mxu0 0.0
      %876 = vmatprep.subr.mxu0 0.0
      %877 = vmatpush1.msra.mxu0 0.0
      %878 = vmatprep.subr.mxu0 0.0
      %879 = vmatpush1.msra.mxu0 0.0
      %880 = vmatprep.subr.mxu0 0.0
      %881 = vmatpush1.msra.mxu0 0.0
      %882 = vmatprep.subr.mxu0 0.0
      %883 = vmatpush1.msra.mxu0 0.0
      %884 = vmatprep.subr.mxu0 0.0
      %885 = vmatpush1.msra.mxu0 0.0
      %886 = vmatprep.subr.mxu0 0.0
      %887 = vmatpush1.msra.mxu0 0.0
      %888 = vmatprep.subr.mxu0 0.0
      %889 = vmatpush1.msra.mxu0 0.0
      %890 = vmatprep.subr.mxu0 0.0
      %891 = vmatpush1.msra.mxu0 0.0
      %892 = vmatprep.subr.mxu0 0.0
      %893 = vmatpush1.msra.mxu0 0.0
      %894 = vmatprep.subr.mxu0 0.0
      %895 = vmatpush1.msra.mxu0 0.0
      %896 = vmatprep.subr.mxu0 0.0
      %897 = vmatpush1.msra.mxu0 0.0
      %898 = vmatprep.subr.mxu0 0.0
      %899 = vmatpush1.msra.mxu0 0.0
      %900 = vmatprep.subr.mxu0 0.0
      %901 = vmatpush1.msra.mxu0 0.0
      %902 = vmatprep.subr.mxu0 0.0
      %903 = vmatpush1.msra.mxu0 0.0
      %904 = vmatprep.subr.mxu0 0.0
      %905 = vmatpush1.msra.mxu0 0.0
      %906 = vmatprep.subr.mxu0 0.0
      %907 = vmatpush1.msra.mxu0 0.0
      %908 = vmatprep.subr.mxu0 0.0
      %909 = vmatpush1.msra.mxu0 0.0
      %910 = vmatprep.subr.mxu0 0.0
      %911 = vmatpush1.msra.mxu0 0.0
      %912 = vmatprep.subr.mxu0 0.0
      %913 = vmatpush1.msra.mxu0 0.0
      %914 = vmatprep.subr.mxu0 0.0
      %915 = vmatpush1.msra.mxu0 0.0
      %916 = vmatprep.subr.mxu0 0.0
      %917 = vmatpush1.msra.mxu0 0.0
      %918 = vmatprep.subr.mxu0 0.0
      %919 = vmatpush1.msra.mxu0 0.0
      %920 = vmatprep.subr.mxu0 0.0
      %921 = vmatpush1.msra.mxu0 0.0
      %922 = vmatprep.subr.mxu0 0.0
      %923 = vmatpush1.msra.mxu0 0.0
      %924 = vmatprep.subr.mxu0 0.0
      %925 = vmatpush1.msra.mxu0 0.0
      %926 = vmatprep.mubr.f32.mxu0 0.0
      %927 = vmatmul.mubr.f32.gmra.mrb[0].mxu0 %v647
      %v928 = vpop.f32.mrb[0].mxu0
      %v929 = vadd.f32 0.0, %v928
      %v930 = vpop.f32.mrb[0].mxu0
      %931 = vmatprep.mubr.f32.mxu0 0.0
      %932 = vmatmul.mubr.f32.gmra.mrb[0].mxu0 %v650
      %v933 = vpop.f32.mrb[0].mxu0
      %v934 = vadd.f32 0.0, %v933
      %v935 = vpop.f32.mrb[0].mxu0
      %936 = vmatprep.mubr.f32.mxu0 0.0
      %937 = vmatmul.mubr.f32.gmra.mrb[0].mxu0 %v653
      %v938 = vpop.f32.mrb[0].mxu0
      %v939 = vadd.f32 0.0, %v938
      %v940 = vpop.f32.mrb[0].mxu0
      %941 = vmatprep.mubr.f32.mxu0 0.0
      %942 = vmatmul.mubr.f32.gmra.mrb[0].mxu0 %v656
      %v943 = vpop.f32.mrb[0].mxu0
      %v944 = vadd.f32 0.0, %v943
      %v945 = vpop.f32.mrb[0].mxu0
      %946 = vdwg.mxu0
      %v951 = vrot.slane %v929, 2
      %v952 = vrot.slane %v934, 2
      %v953 = vrot.slane %v939, 2
      %v954 = vrot.slane %v944, 2
      %v959 = vadd.f32 %v853, %v951
      %v960 = vadd.f32 %v854, %v952
      %v961 = vadd.f32 %v855, %v953
      %v962 = vadd.f32 %v856, %v954
      %v963 = vld [vmem:[%s593] sm:$0xff]
      %v964 = vld [vmem:[%s593 + $0x8] sm:$0xff]
      %v965 = vld [vmem:[%s593 + $0x10] sm:$0xff]
      %v966 = vld [vmem:[%s593 + $0x18] sm:$0xff]
      %s967 = scalar_lea.vmem %s5, 12
      %v968 = vld [vmem:[%s967] sm:$0xf]
      %v970 = vsel %vm645, %v963, 0
      %v973 = vsel %vm645, %v964, 0
      %v976 = vsel %vm645, %v965, 0
      %v979 = vsel %vm645, %v966, 0
      %v982 = vsel %vm658, %v968, 0
      %984 = vmatprep.subr.mxu0 0.0
      %985 = vmatpush1.msra.mxu0 %v982
      %986 = vmatprep.subr.mxu0 0.0
      %987 = vmatpush1.msra.mxu0 0.0
      %988 = vmatprep.subr.mxu0 0.0
      %989 = vmatpush1.msra.mxu0 0.0
      %990 = vmatprep.subr.mxu0 0.0
      %991 = vmatpush1.msra.mxu0 0.0
      %992 = vmatprep.subr.mxu0 0.0
      %993 = vmatpush1.msra.mxu0 0.0
      %994 = vmatprep.subr.mxu0 0.0
      %995 = vmatpush1.msra.mxu0 0.0
      %996 = vmatprep.subr.mxu0 0.0
      %997 = vmatpush1.msra.mxu0 0.0
      %998 = vmatprep.subr.mxu0 0.0
      %999 = vmatpush1.msra.mxu0 0.0
      %1000 = vmatprep.subr.mxu0 0.0
      %1001 = vmatpush1.msra.mxu0 0.0
      %1002 = vmatprep.subr.mxu0 0.0
      %1003 = vmatpush1.msra.mxu0 0.0
      %1004 = vmatprep.subr.mxu0 0.0
      %1005 = vmatpush1.msra.mxu0 0.0
      %1006 = vmatprep.subr.mxu0 0.0
      %1007 = vmatpush1.msra.mxu0 0.0
      %1008 = vmatprep.subr.mxu0 0.0
      %1009 = vmatpush1.msra.mxu0 0.0
      %1010 = vmatprep.subr.mxu0 0.0
      %1011 = vmatpush1.msra.mxu0 0.0
      %1012 = vmatprep.subr.mxu0 0.0
      %1013 = vmatpush1.msra.mxu0 0.0
      %1014 = vmatprep.subr.mxu0 0.0
      %1015 = vmatpush1.msra.mxu0 0.0
      %1016 = vmatprep.subr.mxu0 0.0
      %1017 = vmatpush1.msra.mxu0 0.0
      %1018 = vmatprep.subr.mxu0 0.0
      %1019 = vmatpush1.msra.mxu0 0.0
      %1020 = vmatprep.subr.mxu0 0.0
      %1021 = vmatpush1.msra.mxu0 0.0
      %1022 = vmatprep.subr.mxu0 0.0
      %1023 = vmatpush1.msra.mxu0 0.0
      %1024 = vmatprep.subr.mxu0 0.0
      %1025 = vmatpush1.msra.mxu0 0.0
      %1026 = vmatprep.subr.mxu0 0.0
      %1027 = vmatpush1.msra.mxu0 0.0
      %1028 = vmatprep.subr.mxu0 0.0
      %1029 = vmatpush1.msra.mxu0 0.0
      %1030 = vmatprep.subr.mxu0 0.0
      %1031 = vmatpush1.msra.mxu0 0.0
      %1032 = vmatprep.subr.mxu0 0.0
      %1033 = vmatpush1.msra.mxu0 0.0
      %1034 = vmatprep.subr.mxu0 0.0
      %1035 = vmatpush1.msra.mxu0 0.0
      %1036 = vmatprep.subr.mxu0 0.0
      %1037 = vmatpush1.msra.mxu0 0.0
      %1038 = vmatprep.subr.mxu0 0.0
      %1039 = vmatpush1.msra.mxu0 0.0
      %1040 = vmatprep.subr.mxu0 0.0
      %1041 = vmatpush1.msra.mxu0 0.0
      %1042 = vmatprep.subr.mxu0 0.0
      %1043 = vmatpush1.msra.mxu0 0.0
      %1044 = vmatprep.subr.mxu0 0.0
      %1045 = vmatpush1.msra.mxu0 0.0
      %1046 = vmatprep.subr.mxu0 0.0
      %1047 = vmatpush1.msra.mxu0 0.0
      %1048 = vmatprep.mubr.f32.mxu0 0.0
      %1049 = vmatmul.mubr.f32.gmra.mrb[0].mxu0 %v970
      %v1050 = vpop.f32.mrb[0].mxu0
      %v1051 = vadd.f32 0.0, %v1050
      %v1052 = vpop.f32.mrb[0].mxu0
      %1053 = vmatprep.mubr.f32.mxu0 0.0
      %1054 = vmatmul.mubr.f32.gmra.mrb[0].mxu0 %v973
      %v1055 = vpop.f32.mrb[0].mxu0
      %v1056 = vadd.f32 0.0, %v1055
      %v1057 = vpop.f32.mrb[0].mxu0
      %1058 = vmatprep.mubr.f32.mxu0 0.0
      %1059 = vmatmul.mubr.f32.gmra.mrb[0].mxu0 %v976
      %v1060 = vpop.f32.mrb[0].mxu0
      %v1061 = vadd.f32 0.0, %v1060
      %v1062 = vpop.f32.mrb[0].mxu0
      %1063 = vmatprep.mubr.f32.mxu0 0.0
      %1064 = vmatmul.mubr.f32.gmra.mrb[0].mxu0 %v979
      %v1065 = vpop.f32.mrb[0].mxu0
      %v1066 = vadd.f32 0.0, %v1065
      %v1067 = vpop.f32.mrb[0].mxu0
      %1068 = vdwg.mxu0
      %v1069 = vadd.f32 %v959, %v1051
      %v1070 = vadd.f32 %v960, %v1056
      %v1071 = vadd.f32 %v961, %v1061
      %v1072 = vadd.f32 %v962, %v1066
      %s1073 = scalar_lea.vmem %s5, 16
      %v1074 = vld [vmem:[%s1073] sm:$0xf]
      %v1076 = vsel %vm658, %v1074, 0
      %1078 = vmatprep.subr.mxu0 0.0
      %1079 = vmatpush1.msra.mxu0 %v1076
      %1080 = vmatprep.subr.mxu0 0.0
      %1081 = vmatpush1.msra.mxu0 0.0
      %1082 = vmatprep.subr.mxu0 0.0
      %1083 = vmatpush1.msra.mxu0 0.0
      %1084 = vmatprep.subr.mxu0 0.0
      %1085 = vmatpush1.msra.mxu0 0.0
      %1086 = vmatprep.subr.mxu0 0.0
      %1087 = vmatpush1.msra.mxu0 0.0
      %1088 = vmatprep.subr.mxu0 0.0
      %1089 = vmatpush1.msra.mxu0 0.0
      %1090 = vmatprep.subr.mxu0 0.0
      %1091 = vmatpush1.msra.mxu0 0.0
      %1092 = vmatprep.subr.mxu0 0.0
      %1093 = vmatpush1.msra.mxu0 0.0
      %1094 = vmatprep.subr.mxu0 0.0
      %1095 = vmatpush1.msra.mxu0 0.0
      %1096 = vmatprep.subr.mxu0 0.0
      %1097 = vmatpush1.msra.mxu0 0.0
      %1098 = vmatprep.subr.mxu0 0.0
      %1099 = vmatpush1.msra.mxu0 0.0
      %1100 = vmatprep.subr.mxu0 0.0
      %1101 = vmatpush1.msra.mxu0 0.0
      %1102 = vmatprep.subr.mxu0 0.0
      %1103 = vmatpush1.msra.mxu0 0.0
      %1104 = vmatprep.subr.mxu0 0.0
      %1105 = vmatpush1.msra.mxu0 0.0
      %1106 = vmatprep.subr.mxu0 0.0
      %1107 = vmatpush1.msra.mxu0 0.0
      %1108 = vmatprep.subr.mxu0 0.0
      %1109 = vmatpush1.msra.mxu0 0.0
      %1110 = vmatprep.subr.mxu0 0.0
      %1111 = vmatpush1.msra.mxu0 0.0
      %1112 = vmatprep.subr.mxu0 0.0
      %1113 = vmatpush1.msra.mxu0 0.0
      %1114 = vmatprep.subr.mxu0 0.0
      %1115 = vmatpush1.msra.mxu0 0.0
      %1116 = vmatprep.subr.mxu0 0.0
      %1117 = vmatpush1.msra.mxu0 0.0
      %1118 = vmatprep.subr.mxu0 0.0
      %1119 = vmatpush1.msra.mxu0 0.0
      %1120 = vmatprep.subr.mxu0 0.0
      %1121 = vmatpush1.msra.mxu0 0.0
      %1122 = vmatprep.subr.mxu0 0.0
      %1123 = vmatpush1.msra.mxu0 0.0
      %1124 = vmatprep.subr.mxu0 0.0
      %1125 = vmatpush1.msra.mxu0 0.0
      %1126 = vmatprep.subr.mxu0 0.0
      %1127 = vmatpush1.msra.mxu0 0.0
      %1128 = vmatprep.subr.mxu0 0.0
      %1129 = vmatpush1.msra.mxu0 0.0
      %1130 = vmatprep.subr.mxu0 0.0
      %1131 = vmatpush1.msra.mxu0 0.0
      %1132 = vmatprep.subr.mxu0 0.0
      %1133 = vmatpush1.msra.mxu0 0.0
      %1134 = vmatprep.subr.mxu0 0.0
      %1135 = vmatpush1.msra.mxu0 0.0
      %1136 = vmatprep.subr.mxu0 0.0
      %1137 = vmatpush1.msra.mxu0 0.0
      %1138 = vmatprep.subr.mxu0 0.0
      %1139 = vmatpush1.msra.mxu0 0.0
      %1140 = vmatprep.subr.mxu0 0.0
      %1141 = vmatpush1.msra.mxu0 0.0
      %1142 = vmatprep.mubr.f32.mxu0 0.0
      %1143 = vmatmul.mubr.f32.gmra.mrb[0].mxu0 %v970
      %v1144 = vpop.f32.mrb[0].mxu0
      %v1145 = vadd.f32 0.0, %v1144
      %v1146 = vpop.f32.mrb[0].mxu0
      %1147 = vmatprep.mubr.f32.mxu0 0.0
      %1148 = vmatmul.mubr.f32.gmra.mrb[0].mxu0 %v973
      %v1149 = vpop.f32.mrb[0].mxu0
      %v1150 = vadd.f32 0.0, %v1149
      %v1151 = vpop.f32.mrb[0].mxu0
      %1152 = vmatprep.mubr.f32.mxu0 0.0
      %1153 = vmatmul.mubr.f32.gmra.mrb[0].mxu0 %v976
      %v1154 = vpop.f32.mrb[0].mxu0
      %v1155 = vadd.f32 0.0, %v1154
      %v1156 = vpop.f32.mrb[0].mxu0
      %1157 = vmatprep.mubr.f32.mxu0 0.0
      %1158 = vmatmul.mubr.f32.gmra.mrb[0].mxu0 %v979
      %v1159 = vpop.f32.mrb[0].mxu0
      %v1160 = vadd.f32 0.0, %v1159
      %v1161 = vpop.f32.mrb[0].mxu0
      %1162 = vdwg.mxu0
      %v1167 = vrot.slane %v1145, 1
      %v1168 = vrot.slane %v1150, 1
      %v1169 = vrot.slane %v1155, 1
      %v1170 = vrot.slane %v1160, 1
      %v1175 = vadd.f32 %v1069, %v1167
      %v1176 = vadd.f32 %v1070, %v1168
      %v1177 = vadd.f32 %v1071, %v1169
      %v1178 = vadd.f32 %v1072, %v1170
      %s1179 = scalar_lea.vmem %s5, 20
      %v1180 = vld [vmem:[%s1179] sm:$0xf]
      %v1182 = vsel %vm658, %v1180, 0
      %1184 = vmatprep.subr.mxu0 0.0
      %1185 = vmatpush1.msra.mxu0 %v1182
      %1186 = vmatprep.subr.mxu0 0.0
      %1187 = vmatpush1.msra.mxu0 0.0
      %1188 = vmatprep.subr.mxu0 0.0
      %1189 = vmatpush1.msra.mxu0 0.0
      %1190 = vmatprep.subr.mxu0 0.0
      %1191 = vmatpush1.msra.mxu0 0.0
      %1192 = vmatprep.subr.mxu0 0.0
      %1193 = vmatpush1.msra.mxu0 0.0
      %1194 = vmatprep.subr.mxu0 0.0
      %1195 = vmatpush1.msra.mxu0 0.0
      %1196 = vmatprep.subr.mxu0 0.0
      %1197 = vmatpush1.msra.mxu0 0.0
      %1198 = vmatprep.subr.mxu0 0.0
      %1199 = vmatpush1.msra.mxu0 0.0
      %1200 = vmatprep.subr.mxu0 0.0
      %1201 = vmatpush1.msra.mxu0 0.0
      %1202 = vmatprep.subr.mxu0 0.0
      %1203 = vmatpush1.msra.mxu0 0.0
      %1204 = vmatprep.subr.mxu0 0.0
      %1205 = vmatpush1.msra.mxu0 0.0
      %1206 = vmatprep.subr.mxu0 0.0
      %1207 = vmatpush1.msra.mxu0 0.0
      %1208 = vmatprep.subr.mxu0 0.0
      %1209 = vmatpush1.msra.mxu0 0.0
      %1210 = vmatprep.subr.mxu0 0.0
      %1211 = vmatpush1.msra.mxu0 0.0
      %1212 = vmatprep.subr.mxu0 0.0
      %1213 = vmatpush1.msra.mxu0 0.0
      %1214 = vmatprep.subr.mxu0 0.0
      %1215 = vmatpush1.msra.mxu0 0.0
      %1216 = vmatprep.subr.mxu0 0.0
      %1217 = vmatpush1.msra.mxu0 0.0
      %1218 = vmatprep.subr.mxu0 0.0
      %1219 = vmatpush1.msra.mxu0 0.0
      %1220 = vmatprep.subr.mxu0 0.0
      %1221 = vmatpush1.msra.mxu0 0.0
      %1222 = vmatprep.subr.mxu0 0.0
      %1223 = vmatpush1.msra.mxu0 0.0
      %1224 = vmatprep.subr.mxu0 0.0
      %1225 = vmatpush1.msra.mxu0 0.0
      %1226 = vmatprep.subr.mxu0 0.0
      %1227 = vmatpush1.msra.mxu0 0.0
      %1228 = vmatprep.subr.mxu0 0.0
      %1229 = vmatpush1.msra.mxu0 0.0
      %1230 = vmatprep.subr.mxu0 0.0
      %1231 = vmatpush1.msra.mxu0 0.0
      %1232 = vmatprep.subr.mxu0 0.0
      %1233 = vmatpush1.msra.mxu0 0.0
      %1234 = vmatprep.subr.mxu0 0.0
      %1235 = vmatpush1.msra.mxu0 0.0
      %1236 = vmatprep.subr.mxu0 0.0
      %1237 = vmatpush1.msra.mxu0 0.0
      %1238 = vmatprep.subr.mxu0 0.0
      %1239 = vmatpush1.msra.mxu0 0.0
      %1240 = vmatprep.subr.mxu0 0.0
      %1241 = vmatpush1.msra.mxu0 0.0
      %1242 = vmatprep.subr.mxu0 0.0
      %1243 = vmatpush1.msra.mxu0 0.0
      %1244 = vmatprep.subr.mxu0 0.0
      %1245 = vmatpush1.msra.mxu0 0.0
      %1246 = vmatprep.subr.mxu0 0.0
      %1247 = vmatpush1.msra.mxu0 0.0
      %1248 = vmatprep.mubr.f32.mxu0 0.0
      %1249 = vmatmul.mubr.f32.gmra.mrb[0].mxu0 %v970
      %v1250 = vpop.f32.mrb[0].mxu0
      %v1251 = vadd.f32 0.0, %v1250
      %v1252 = vpop.f32.mrb[0].mxu0
      %1253 = vmatprep.mubr.f32.mxu0 0.0
      %1254 = vmatmul.mubr.f32.gmra.mrb[0].mxu0 %v973
      %v1255 = vpop.f32.mrb[0].mxu0
      %v1256 = vadd.f32 0.0, %v1255
      %v1257 = vpop.f32.mrb[0].mxu0
      %1258 = vmatprep.mubr.f32.mxu0 0.0
      %1259 = vmatmul.mubr.f32.gmra.mrb[0].mxu0 %v976
      %v1260 = vpop.f32.mrb[0].mxu0
      %v1261 = vadd.f32 0.0, %v1260
      %v1262 = vpop.f32.mrb[0].mxu0
      %1263 = vmatprep.mubr.f32.mxu0 0.0
      %1264 = vmatmul.mubr.f32.gmra.mrb[0].mxu0 %v979
      %v1265 = vpop.f32.mrb[0].mxu0
      %v1266 = vadd.f32 0.0, %v1265
      %v1267 = vpop.f32.mrb[0].mxu0
      %1268 = vdwg.mxu0
      %v1273 = vrot.slane %v1251, 2
      %v1274 = vrot.slane %v1256, 2
      %v1275 = vrot.slane %v1261, 2
      %v1276 = vrot.slane %v1266, 2
      %v1281 = vadd.f32 %v1175, %v1273
      %v1282 = vadd.f32 %v1176, %v1274
      %v1283 = vadd.f32 %v1177, %v1275
      %v1284 = vadd.f32 %v1178, %v1276
      %s1285 = scalar_lea.vmem [#allocation2], 16
      %v1286 = vld [vmem:[%s1285] sm:$0xff]
      %v1287 = vld [vmem:[%s1285 + $0x8] sm:$0xff]
      %v1288 = vld [vmem:[%s1285 + $0x10] sm:$0xff]
      %v1289 = vld [vmem:[%s1285 + $0x18] sm:$0xff]
      %s1290 = scalar_lea.vmem %s5, 24
      %v1291 = vld [vmem:[%s1290] sm:$0xf]
      %v1293 = vsel %vm645, %v1286, 0
      %v1296 = vsel %vm645, %v1287, 0
      %v1299 = vsel %vm645, %v1288, 0
      %v1302 = vsel %vm645, %v1289, 0
      %v1305 = vsel %vm658, %v1291, 0
      %1307 = vmatprep.subr.mxu0 0.0
      %1308 = vmatpush1.msra.mxu0 %v1305
      %1309 = vmatprep.subr.mxu0 0.0
      %1310 = vmatpush1.msra.mxu0 0.0
      %1311 = vmatprep.subr.mxu0 0.0
      %1312 = vmatpush1.msra.mxu0 0.0
      %1313 = vmatprep.subr.mxu0 0.0
      %1314 = vmatpush1.msra.mxu0 0.0
      %1315 = vmatprep.subr.mxu0 0.0
      %1316 = vmatpush1.msra.mxu0 0.0
      %1317 = vmatprep.subr.mxu0 0.0
      %1318 = vmatpush1.msra.mxu0 0.0
      %1319 = vmatprep.subr.mxu0 0.0
      %1320 = vmatpush1.msra.mxu0 0.0
      %1321 = vmatprep.subr.mxu0 0.0
      %1322 = vmatpush1.msra.mxu0 0.0
      %1323 = vmatprep.subr.mxu0 0.0
      %1324 = vmatpush1.msra.mxu0 0.0
      %1325 = vmatprep.subr.mxu0 0.0
      %1326 = vmatpush1.msra.mxu0 0.0
      %1327 = vmatprep.subr.mxu0 0.0
      %1328 = vmatpush1.msra.mxu0 0.0
      %1329 = vmatprep.subr.mxu0 0.0
      %1330 = vmatpush1.msra.mxu0 0.0
      %1331 = vmatprep.subr.mxu0 0.0
      %1332 = vmatpush1.msra.mxu0 0.0
      %1333 = vmatprep.subr.mxu0 0.0
      %1334 = vmatpush1.msra.mxu0 0.0
      %1335 = vmatprep.subr.mxu0 0.0
      %1336 = vmatpush1.msra.mxu0 0.0
      %1337 = vmatprep.subr.mxu0 0.0
      %1338 = vmatpush1.msra.mxu0 0.0
      %1339 = vmatprep.subr.mxu0 0.0
      %1340 = vmatpush1.msra.mxu0 0.0
      %1341 = vmatprep.subr.mxu0 0.0
      %1342 = vmatpush1.msra.mxu0 0.0
      %1343 = vmatprep.subr.mxu0 0.0
      %1344 = vmatpush1.msra.mxu0 0.0
      %1345 = vmatprep.subr.mxu0 0.0
      %1346 = vmatpush1.msra.mxu0 0.0
      %1347 = vmatprep.subr.mxu0 0.0
      %1348 = vmatpush1.msra.mxu0 0.0
      %1349 = vmatprep.subr.mxu0 0.0
      %1350 = vmatpush1.msra.mxu0 0.0
      %1351 = vmatprep.subr.mxu0 0.0
      %1352 = vmatpush1.msra.mxu0 0.0
      %1353 = vmatprep.subr.mxu0 0.0
      %1354 = vmatpush1.msra.mxu0 0.0
      %1355 = vmatprep.subr.mxu0 0.0
      %1356 = vmatpush1.msra.mxu0 0.0
      %1357 = vmatprep.subr.mxu0 0.0
      %1358 = vmatpush1.msra.mxu0 0.0
      %1359 = vmatprep.subr.mxu0 0.0
      %1360 = vmatpush1.msra.mxu0 0.0
      %1361 = vmatprep.subr.mxu0 0.0
      %1362 = vmatpush1.msra.mxu0 0.0
      %1363 = vmatprep.subr.mxu0 0.0
      %1364 = vmatpush1.msra.mxu0 0.0
      %1365 = vmatprep.subr.mxu0 0.0
      %1366 = vmatpush1.msra.mxu0 0.0
      %1367 = vmatprep.subr.mxu0 0.0
      %1368 = vmatpush1.msra.mxu0 0.0
      %1369 = vmatprep.subr.mxu0 0.0
      %1370 = vmatpush1.msra.mxu0 0.0
      %1371 = vmatprep.mubr.f32.mxu0 0.0
      %1372 = vmatmul.mubr.f32.gmra.mrb[0].mxu0 %v1293
      %v1373 = vpop.f32.mrb[0].mxu0
      %v1374 = vadd.f32 0.0, %v1373
      %v1375 = vpop.f32.mrb[0].mxu0
      %1376 = vmatprep.mubr.f32.mxu0 0.0
      %1377 = vmatmul.mubr.f32.gmra.mrb[0].mxu0 %v1296
      %v1378 = vpop.f32.mrb[0].mxu0
      %v1379 = vadd.f32 0.0, %v1378
      %v1380 = vpop.f32.mrb[0].mxu0
      %1381 = vmatprep.mubr.f32.mxu0 0.0
      %1382 = vmatmul.mubr.f32.gmra.mrb[0].mxu0 %v1299
      %v1383 = vpop.f32.mrb[0].mxu0
      %v1384 = vadd.f32 0.0, %v1383
      %v1385 = vpop.f32.mrb[0].mxu0
      %1386 = vmatprep.mubr.f32.mxu0 0.0
      %1387 = vmatmul.mubr.f32.gmra.mrb[0].mxu0 %v1302
      %v1388 = vpop.f32.mrb[0].mxu0
      %v1389 = vadd.f32 0.0, %v1388
      %v1390 = vpop.f32.mrb[0].mxu0
      %1391 = vdwg.mxu0
      %v1392 = vadd.f32 %v1281, %v1374
      %v1393 = vadd.f32 %v1282, %v1379
      %v1394 = vadd.f32 %v1283, %v1384
      %v1395 = vadd.f32 %v1284, %v1389
      %s1396 = scalar_lea.vmem %s5, 28
      %v1397 = vld [vmem:[%s1396] sm:$0xf]
      %v1399 = vsel %vm658, %v1397, 0
      %1401 = vmatprep.subr.mxu0 0.0
      %1402 = vmatpush1.msra.mxu0 %v1399
      %1403 = vmatprep.subr.mxu0 0.0
      %1404 = vmatpush1.msra.mxu0 0.0
      %1405 = vmatprep.subr.mxu0 0.0
      %1406 = vmatpush1.msra.mxu0 0.0
      %1407 = vmatprep.subr.mxu0 0.0
      %1408 = vmatpush1.msra.mxu0 0.0
      %1409 = vmatprep.subr.mxu0 0.0
      %1410 = vmatpush1.msra.mxu0 0.0
      %1411 = vmatprep.subr.mxu0 0.0
      %1412 = vmatpush1.msra.mxu0 0.0
      %1413 = vmatprep.subr.mxu0 0.0
      %1414 = vmatpush1.msra.mxu0 0.0
      %1415 = vmatprep.subr.mxu0 0.0
      %1416 = vmatpush1.msra.mxu0 0.0
      %1417 = vmatprep.subr.mxu0 0.0
      %1418 = vmatpush1.msra.mxu0 0.0
      %1419 = vmatprep.subr.mxu0 0.0
      %1420 = vmatpush1.msra.mxu0 0.0
      %1421 = vmatprep.subr.mxu0 0.0
      %1422 = vmatpush1.msra.mxu0 0.0
      %1423 = vmatprep.subr.mxu0 0.0
      %1424 = vmatpush1.msra.mxu0 0.0
      %1425 = vmatprep.subr.mxu0 0.0
      %1426 = vmatpush1.msra.mxu0 0.0
      %1427 = vmatprep.subr.mxu0 0.0
      %1428 = vmatpush1.msra.mxu0 0.0
      %1429 = vmatprep.subr.mxu0 0.0
      %1430 = vmatpush1.msra.mxu0 0.0
      %1431 = vmatprep.subr.mxu0 0.0
      %1432 = vmatpush1.msra.mxu0 0.0
      %1433 = vmatprep.subr.mxu0 0.0
      %1434 = vmatpush1.msra.mxu0 0.0
      %1435 = vmatprep.subr.mxu0 0.0
      %1436 = vmatpush1.msra.mxu0 0.0
      %1437 = vmatprep.subr.mxu0 0.0
      %1438 = vmatpush1.msra.mxu0 0.0
      %1439 = vmatprep.subr.mxu0 0.0
      %1440 = vmatpush1.msra.mxu0 0.0
      %1441 = vmatprep.subr.mxu0 0.0
      %1442 = vmatpush1.msra.mxu0 0.0
      %1443 = vmatprep.subr.mxu0 0.0
      %1444 = vmatpush1.msra.mxu0 0.0
      %1445 = vmatprep.subr.mxu0 0.0
      %1446 = vmatpush1.msra.mxu0 0.0
      %1447 = vmatprep.subr.mxu0 0.0
      %1448 = vmatpush1.msra.mxu0 0.0
      %1449 = vmatprep.subr.mxu0 0.0
      %1450 = vmatpush1.msra.mxu0 0.0
      %1451 = vmatprep.subr.mxu0 0.0
      %1452 = vmatpush1.msra.mxu0 0.0
      %1453 = vmatprep.subr.mxu0 0.0
      %1454 = vmatpush1.msra.mxu0 0.0
      %1455 = vmatprep.subr.mxu0 0.0
      %1456 = vmatpush1.msra.mxu0 0.0
      %1457 = vmatprep.subr.mxu0 0.0
      %1458 = vmatpush1.msra.mxu0 0.0
      %1459 = vmatprep.subr.mxu0 0.0
      %1460 = vmatpush1.msra.mxu0 0.0
      %1461 = vmatprep.subr.mxu0 0.0
      %1462 = vmatpush1.msra.mxu0 0.0
      %1463 = vmatprep.subr.mxu0 0.0
      %1464 = vmatpush1.msra.mxu0 0.0
      %1465 = vmatprep.mubr.f32.mxu0 0.0
      %1466 = vmatmul.mubr.f32.gmra.mrb[0].mxu0 %v1293
      %v1467 = vpop.f32.mrb[0].mxu0
      %v1468 = vadd.f32 0.0, %v1467
      %v1469 = vpop.f32.mrb[0].mxu0
      %1470 = vmatprep.mubr.f32.mxu0 0.0
      %1471 = vmatmul.mubr.f32.gmra.mrb[0].mxu0 %v1296
      %v1472 = vpop.f32.mrb[0].mxu0
      %v1473 = vadd.f32 0.0, %v1472
      %v1474 = vpop.f32.mrb[0].mxu0
      %1475 = vmatprep.mubr.f32.mxu0 0.0
      %1476 = vmatmul.mubr.f32.gmra.mrb[0].mxu0 %v1299
      %v1477 = vpop.f32.mrb[0].mxu0
      %v1478 = vadd.f32 0.0, %v1477
      %v1479 = vpop.f32.mrb[0].mxu0
      %1480 = vmatprep.mubr.f32.mxu0 0.0
      %1481 = vmatmul.mubr.f32.gmra.mrb[0].mxu0 %v1302
      %v1482 = vpop.f32.mrb[0].mxu0
      %v1483 = vadd.f32 0.0, %v1482
      %v1484 = vpop.f32.mrb[0].mxu0
      %1485 = vdwg.mxu0
      %v1490 = vrot.slane %v1468, 1
      %v1491 = vrot.slane %v1473, 1
      %v1492 = vrot.slane %v1478, 1
      %v1493 = vrot.slane %v1483, 1
      %v1498 = vadd.f32 %v1392, %v1490
      %v1499 = vadd.f32 %v1393, %v1491
      %v1500 = vadd.f32 %v1394, %v1492
      %v1501 = vadd.f32 %v1395, %v1493
      %s1502 = scalar_lea.vmem %s5, 32
      %v1503 = vld [vmem:[%s1502] sm:$0xf]
      %v1505 = vsel %vm658, %v1503, 0
      %1507 = vmatprep.subr.mxu0 0.0
      %1508 = vmatpush1.msra.mxu0 %v1505
      %1509 = vmatprep.subr.mxu0 0.0
      %1510 = vmatpush1.msra.mxu0 0.0
      %1511 = vmatprep.subr.mxu0 0.0
      %1512 = vmatpush1.msra.mxu0 0.0
      %1513 = vmatprep.subr.mxu0 0.0
      %1514 = vmatpush1.msra.mxu0 0.0
      %1515 = vmatprep.subr.mxu0 0.0
      %1516 = vmatpush1.msra.mxu0 0.0
      %1517 = vmatprep.subr.mxu0 0.0
      %1518 = vmatpush1.msra.mxu0 0.0
      %1519 = vmatprep.subr.mxu0 0.0
      %1520 = vmatpush1.msra.mxu0 0.0
      %1521 = vmatprep.subr.mxu0 0.0
      %1522 = vmatpush1.msra.mxu0 0.0
      %1523 = vmatprep.subr.mxu0 0.0
      %1524 = vmatpush1.msra.mxu0 0.0
      %1525 = vmatprep.subr.mxu0 0.0
      %1526 = vmatpush1.msra.mxu0 0.0
      %1527 = vmatprep.subr.mxu0 0.0
      %1528 = vmatpush1.msra.mxu0 0.0
      %1529 = vmatprep.subr.mxu0 0.0
      %1530 = vmatpush1.msra.mxu0 0.0
      %1531 = vmatprep.subr.mxu0 0.0
      %1532 = vmatpush1.msra.mxu0 0.0
      %1533 = vmatprep.subr.mxu0 0.0
      %1534 = vmatpush1.msra.mxu0 0.0
      %1535 = vmatprep.subr.mxu0 0.0
      %1536 = vmatpush1.msra.mxu0 0.0
      %1537 = vmatprep.subr.mxu0 0.0
      %1538 = vmatpush1.msra.mxu0 0.0
      %1539 = vmatprep.subr.mxu0 0.0
      %1540 = vmatpush1.msra.mxu0 0.0
      %1541 = vmatprep.subr.mxu0 0.0
      %1542 = vmatpush1.msra.mxu0 0.0
      %1543 = vmatprep.subr.mxu0 0.0
      %1544 = vmatpush1.msra.mxu0 0.0
      %1545 = vmatprep.subr.mxu0 0.0
      %1546 = vmatpush1.msra.mxu0 0.0
      %1547 = vmatprep.subr.mxu0 0.0
      %1548 = vmatpush1.msra.mxu0 0.0
      %1549 = vmatprep.subr.mxu0 0.0
      %1550 = vmatpush1.msra.mxu0 0.0
      %1551 = vmatprep.subr.mxu0 0.0
      %1552 = vmatpush1.msra.mxu0 0.0
      %1553 = vmatprep.subr.mxu0 0.0
      %1554 = vmatpush1.msra.mxu0 0.0
      %1555 = vmatprep.subr.mxu0 0.0
      %1556 = vmatpush1.msra.mxu0 0.0
      %1557 = vmatprep.subr.mxu0 0.0
      %1558 = vmatpush1.msra.mxu0 0.0
      %1559 = vmatprep.subr.mxu0 0.0
      %1560 = vmatpush1.msra.mxu0 0.0
      %1561 = vmatprep.subr.mxu0 0.0
      %1562 = vmatpush1.msra.mxu0 0.0
      %1563 = vmatprep.subr.mxu0 0.0
      %1564 = vmatpush1.msra.mxu0 0.0
      %1565 = vmatprep.subr.mxu0 0.0
      %1566 = vmatpush1.msra.mxu0 0.0
      %1567 = vmatprep.subr.mxu0 0.0
      %1568 = vmatpush1.msra.mxu0 0.0
      %1569 = vmatprep.subr.mxu0 0.0
      %1570 = vmatpush1.msra.mxu0 0.0
      %1571 = vmatprep.mubr.f32.mxu0 0.0
      %1572 = vmatmul.mubr.f32.gmra.mrb[0].mxu0 %v1293
      %v1573 = vpop.f32.mrb[0].mxu0
      %v1574 = vadd.f32 0.0, %v1573
      %v1575 = vpop.f32.mrb[0].mxu0
      %1576 = vmatprep.mubr.f32.mxu0 0.0
      %1577 = vmatmul.mubr.f32.gmra.mrb[0].mxu0 %v1296
      %v1578 = vpop.f32.mrb[0].mxu0
      %v1579 = vadd.f32 0.0, %v1578
      %v1580 = vpop.f32.mrb[0].mxu0
      %1581 = vmatprep.mubr.f32.mxu0 0.0
      %1582 = vmatmul.mubr.f32.gmra.mrb[0].mxu0 %v1299
      %v1583 = vpop.f32.mrb[0].mxu0
      %v1584 = vadd.f32 0.0, %v1583
      %v1585 = vpop.f32.mrb[0].mxu0
      %1586 = vmatprep.mubr.f32.mxu0 0.0
      %1587 = vmatmul.mubr.f32.gmra.mrb[0].mxu0 %v1302
      %v1588 = vpop.f32.mrb[0].mxu0
      %v1589 = vadd.f32 0.0, %v1588
      %v1590 = vpop.f32.mrb[0].mxu0
      %1591 = vdwg.mxu0
      %v1596 = vrot.slane %v1574, 2
      %v1597 = vrot.slane %v1579, 2
      %v1598 = vrot.slane %v1584, 2
      %v1599 = vrot.slane %v1589, 2
      %v1604 = vadd.f32 %v1498, %v1596
      %v1605 = vadd.f32 %v1499, %v1597
      %v1606 = vadd.f32 %v1500, %v1598
      %v1607 = vadd.f32 %v1501, %v1599
      %s1608 = scalar_lea.vmem [#allocation2], 48
      %v1609 = vld [vmem:[%s1608] sm:$0xff]
      %v1610 = vld [vmem:[%s1608 + $0x8] sm:$0xff]
      %v1611 = vld [vmem:[%s1608 + $0x10] sm:$0xff]
      %v1612 = vld [vmem:[%s1608 + $0x18] sm:$0xff]
      %s1613 = scalar_lea.vmem %s5, 36
      %v1614 = vld [vmem:[%s1613] sm:$0xf]
      %v1616 = vsel %vm645, %v1609, 0
      %v1619 = vsel %vm645, %v1610, 0
      %v1622 = vsel %vm645, %v1611, 0
      %v1625 = vsel %vm645, %v1612, 0
      %v1628 = vsel %vm658, %v1614, 0
      %1630 = vmatprep.subr.mxu0 0.0
      %1631 = vmatpush1.msra.mxu0 %v1628
      %1632 = vmatprep.subr.mxu0 0.0
      %1633 = vmatpush1.msra.mxu0 0.0
      %1634 = vmatprep.subr.mxu0 0.0
      %1635 = vmatpush1.msra.mxu0 0.0
      %1636 = vmatprep.subr.mxu0 0.0
      %1637 = vmatpush1.msra.mxu0 0.0
      %1638 = vmatprep.subr.mxu0 0.0
      %1639 = vmatpush1.msra.mxu0 0.0
      %1640 = vmatprep.subr.mxu0 0.0
      %1641 = vmatpush1.msra.mxu0 0.0
      %1642 = vmatprep.subr.mxu0 0.0
      %1643 = vmatpush1.msra.mxu0 0.0
      %1644 = vmatprep.subr.mxu0 0.0
      %1645 = vmatpush1.msra.mxu0 0.0
      %1646 = vmatprep.subr.mxu0 0.0
      %1647 = vmatpush1.msra.mxu0 0.0
      %1648 = vmatprep.subr.mxu0 0.0
      %1649 = vmatpush1.msra.mxu0 0.0
      %1650 = vmatprep.subr.mxu0 0.0
      %1651 = vmatpush1.msra.mxu0 0.0
      %1652 = vmatprep.subr.mxu0 0.0
      %1653 = vmatpush1.msra.mxu0 0.0
      %1654 = vmatprep.subr.mxu0 0.0
      %1655 = vmatpush1.msra.mxu0 0.0
      %1656 = vmatprep.subr.mxu0 0.0
      %1657 = vmatpush1.msra.mxu0 0.0
      %1658 = vmatprep.subr.mxu0 0.0
      %1659 = vmatpush1.msra.mxu0 0.0
      %1660 = vmatprep.subr.mxu0 0.0
      %1661 = vmatpush1.msra.mxu0 0.0
      %1662 = vmatprep.subr.mxu0 0.0
      %1663 = vmatpush1.msra.mxu0 0.0
      %1664 = vmatprep.subr.mxu0 0.0
      %1665 = vmatpush1.msra.mxu0 0.0
      %1666 = vmatprep.subr.mxu0 0.0
      %1667 = vmatpush1.msra.mxu0 0.0
      %1668 = vmatprep.subr.mxu0 0.0
      %1669 = vmatpush1.msra.mxu0 0.0
      %1670 = vmatprep.subr.mxu0 0.0
      %1671 = vmatpush1.msra.mxu0 0.0
      %1672 = vmatprep.subr.mxu0 0.0
      %1673 = vmatpush1.msra.mxu0 0.0
      %1674 = vmatprep.subr.mxu0 0.0
      %1675 = vmatpush1.msra.mxu0 0.0
      %1676 = vmatprep.subr.mxu0 0.0
      %1677 = vmatpush1.msra.mxu0 0.0
      %1678 = vmatprep.subr.mxu0 0.0
      %1679 = vmatpush1.msra.mxu0 0.0
      %1680 = vmatprep.subr.mxu0 0.0
      %1681 = vmatpush1.msra.mxu0 0.0
      %1682 = vmatprep.subr.mxu0 0.0
      %1683 = vmatpush1.msra.mxu0 0.0
      %1684 = vmatprep.subr.mxu0 0.0
      %1685 = vmatpush1.msra.mxu0 0.0
      %1686 = vmatprep.subr.mxu0 0.0
      %1687 = vmatpush1.msra.mxu0 0.0
      %1688 = vmatprep.subr.mxu0 0.0
      %1689 = vmatpush1.msra.mxu0 0.0
      %1690 = vmatprep.subr.mxu0 0.0
      %1691 = vmatpush1.msra.mxu0 0.0
      %1692 = vmatprep.subr.mxu0 0.0
      %1693 = vmatpush1.msra.mxu0 0.0
      %1694 = vmatprep.mubr.f32.mxu0 0.0
      %1695 = vmatmul.mubr.f32.gmra.mrb[0].mxu0 %v1616
      %v1696 = vpop.f32.mrb[0].mxu0
      %v1697 = vadd.f32 0.0, %v1696
      %v1698 = vpop.f32.mrb[0].mxu0
      %1699 = vmatprep.mubr.f32.mxu0 0.0
      %1700 = vmatmul.mubr.f32.gmra.mrb[0].mxu0 %v1619
      %v1701 = vpop.f32.mrb[0].mxu0
      %v1702 = vadd.f32 0.0, %v1701
      %v1703 = vpop.f32.mrb[0].mxu0
      %1704 = vmatprep.mubr.f32.mxu0 0.0
      %1705 = vmatmul.mubr.f32.gmra.mrb[0].mxu0 %v1622
      %v1706 = vpop.f32.mrb[0].mxu0
      %v1707 = vadd.f32 0.0, %v1706
      %v1708 = vpop.f32.mrb[0].mxu0
      %1709 = vmatprep.mubr.f32.mxu0 0.0
      %1710 = vmatmul.mubr.f32.gmra.mrb[0].mxu0 %v1625
      %v1711 = vpop.f32.mrb[0].mxu0
      %v1712 = vadd.f32 0.0, %v1711
      %v1713 = vpop.f32.mrb[0].mxu0
      %1714 = vdwg.mxu0
      %v1715 = vadd.f32 %v1604, %v1697
      %v1716 = vadd.f32 %v1605, %v1702
      %v1717 = vadd.f32 %v1606, %v1707
      %v1718 = vadd.f32 %v1607, %v1712
      %s1719 = scalar_lea.vmem %s5, 40
      %v1720 = vld [vmem:[%s1719] sm:$0xf]
      %v1722 = vsel %vm658, %v1720, 0
      %1724 = vmatprep.subr.mxu0 0.0
      %1725 = vmatpush1.msra.mxu0 %v1722
      %1726 = vmatprep.subr.mxu0 0.0
      %1727 = vmatpush1.msra.mxu0 0.0
      %1728 = vmatprep.subr.mxu0 0.0
      %1729 = vmatpush1.msra.mxu0 0.0
      %1730 = vmatprep.subr.mxu0 0.0
      %1731 = vmatpush1.msra.mxu0 0.0
      %1732 = vmatprep.subr.mxu0 0.0
      %1733 = vmatpush1.msra.mxu0 0.0
      %1734 = vmatprep.subr.mxu0 0.0
      %1735 = vmatpush1.msra.mxu0 0.0
      %1736 = vmatprep.subr.mxu0 0.0
      %1737 = vmatpush1.msra.mxu0 0.0
      %1738 = vmatprep.subr.mxu0 0.0
      %1739 = vmatpush1.msra.mxu0 0.0
      %1740 = vmatprep.subr.mxu0 0.0
      %1741 = vmatpush1.msra.mxu0 0.0
      %1742 = vmatprep.subr.mxu0 0.0
      %1743 = vmatpush1.msra.mxu0 0.0
      %1744 = vmatprep.subr.mxu0 0.0
      %1745 = vmatpush1.msra.mxu0 0.0
      %1746 = vmatprep.subr.mxu0 0.0
      %1747 = vmatpush1.msra.mxu0 0.0
      %1748 = vmatprep.subr.mxu0 0.0
      %1749 = vmatpush1.msra.mxu0 0.0
      %1750 = vmatprep.subr.mxu0 0.0
      %1751 = vmatpush1.msra.mxu0 0.0
      %1752 = vmatprep.subr.mxu0 0.0
      %1753 = vmatpush1.msra.mxu0 0.0
      %1754 = vmatprep.subr.mxu0 0.0
      %1755 = vmatpush1.msra.mxu0 0.0
      %1756 = vmatprep.subr.mxu0 0.0
      %1757 = vmatpush1.msra.mxu0 0.0
      %1758 = vmatprep.subr.mxu0 0.0
      %1759 = vmatpush1.msra.mxu0 0.0
      %1760 = vmatprep.subr.mxu0 0.0
      %1761 = vmatpush1.msra.mxu0 0.0
      %1762 = vmatprep.subr.mxu0 0.0
      %1763 = vmatpush1.msra.mxu0 0.0
      %1764 = vmatprep.subr.mxu0 0.0
      %1765 = vmatpush1.msra.mxu0 0.0
      %1766 = vmatprep.subr.mxu0 0.0
      %1767 = vmatpush1.msra.mxu0 0.0
      %1768 = vmatprep.subr.mxu0 0.0
      %1769 = vmatpush1.msra.mxu0 0.0
      %1770 = vmatprep.subr.mxu0 0.0
      %1771 = vmatpush1.msra.mxu0 0.0
      %1772 = vmatprep.subr.mxu0 0.0
      %1773 = vmatpush1.msra.mxu0 0.0
      %1774 = vmatprep.subr.mxu0 0.0
      %1775 = vmatpush1.msra.mxu0 0.0
      %1776 = vmatprep.subr.mxu0 0.0
      %1777 = vmatpush1.msra.mxu0 0.0
      %1778 = vmatprep.subr.mxu0 0.0
      %1779 = vmatpush1.msra.mxu0 0.0
      %1780 = vmatprep.subr.mxu0 0.0
      %1781 = vmatpush1.msra.mxu0 0.0
      %1782 = vmatprep.subr.mxu0 0.0
      %1783 = vmatpush1.msra.mxu0 0.0
      %1784 = vmatprep.subr.mxu0 0.0
      %1785 = vmatpush1.msra.mxu0 0.0
      %1786 = vmatprep.subr.mxu0 0.0
      %1787 = vmatpush1.msra.mxu0 0.0
      %1788 = vmatprep.mubr.f32.mxu0 0.0
      %1789 = vmatmul.mubr.f32.gmra.mrb[0].mxu0 %v1616
      %v1790 = vpop.f32.mrb[0].mxu0
      %v1791 = vadd.f32 0.0, %v1790
      %v1792 = vpop.f32.mrb[0].mxu0
      %1793 = vmatprep.mubr.f32.mxu0 0.0
      %1794 = vmatmul.mubr.f32.gmra.mrb[0].mxu0 %v1619
      %v1795 = vpop.f32.mrb[0].mxu0
      %v1796 = vadd.f32 0.0, %v1795
      %v1797 = vpop.f32.mrb[0].mxu0
      %1798 = vmatprep.mubr.f32.mxu0 0.0
      %1799 = vmatmul.mubr.f32.gmra.mrb[0].mxu0 %v1622
      %v1800 = vpop.f32.mrb[0].mxu0
      %v1801 = vadd.f32 0.0, %v1800
      %v1802 = vpop.f32.mrb[0].mxu0
      %1803 = vmatprep.mubr.f32.mxu0 0.0
      %1804 = vmatmul.mubr.f32.gmra.mrb[0].mxu0 %v1625
      %v1805 = vpop.f32.mrb[0].mxu0
      %v1806 = vadd.f32 0.0, %v1805
      %v1807 = vpop.f32.mrb[0].mxu0
      %1808 = vdwg.mxu0
      %v1813 = vrot.slane %v1791, 1
      %v1814 = vrot.slane %v1796, 1
      %v1815 = vrot.slane %v1801, 1
      %v1816 = vrot.slane %v1806, 1
      %v1821 = vadd.f32 %v1715, %v1813
      %v1822 = vadd.f32 %v1716, %v1814
      %v1823 = vadd.f32 %v1717, %v1815
      %v1824 = vadd.f32 %v1718, %v1816
      %s1825 = scalar_lea.vmem %s5, 44
      %v1826 = vld [vmem:[%s1825] sm:$0xf]
      %v1828 = vsel %vm658, %v1826, 0
      %1830 = vmatprep.subr.mxu0 0.0
      %1831 = vmatpush1.msra.mxu0 %v1828
      %1832 = vmatprep.subr.mxu0 0.0
      %1833 = vmatpush1.msra.mxu0 0.0
      %1834 = vmatprep.subr.mxu0 0.0
      %1835 = vmatpush1.msra.mxu0 0.0
      %1836 = vmatprep.subr.mxu0 0.0
      %1837 = vmatpush1.msra.mxu0 0.0
      %1838 = vmatprep.subr.mxu0 0.0
      %1839 = vmatpush1.msra.mxu0 0.0
      %1840 = vmatprep.subr.mxu0 0.0
      %1841 = vmatpush1.msra.mxu0 0.0
      %1842 = vmatprep.subr.mxu0 0.0
      %1843 = vmatpush1.msra.mxu0 0.0
      %1844 = vmatprep.subr.mxu0 0.0
      %1845 = vmatpush1.msra.mxu0 0.0
      %1846 = vmatprep.subr.mxu0 0.0
      %1847 = vmatpush1.msra.mxu0 0.0
      %1848 = vmatprep.subr.mxu0 0.0
      %1849 = vmatpush1.msra.mxu0 0.0
      %1850 = vmatprep.subr.mxu0 0.0
      %1851 = vmatpush1.msra.mxu0 0.0
      %1852 = vmatprep.subr.mxu0 0.0
      %1853 = vmatpush1.msra.mxu0 0.0
      %1854 = vmatprep.subr.mxu0 0.0
      %1855 = vmatpush1.msra.mxu0 0.0
      %1856 = vmatprep.subr.mxu0 0.0
      %1857 = vmatpush1.msra.mxu0 0.0
      %1858 = vmatprep.subr.mxu0 0.0
      %1859 = vmatpush1.msra.mxu0 0.0
      %1860 = vmatprep.subr.mxu0 0.0
      %1861 = vmatpush1.msra.mxu0 0.0
      %1862 = vmatprep.subr.mxu0 0.0
      %1863 = vmatpush1.msra.mxu0 0.0
      %1864 = vmatprep.subr.mxu0 0.0
      %1865 = vmatpush1.msra.mxu0 0.0
      %1866 = vmatprep.subr.mxu0 0.0
      %1867 = vmatpush1.msra.mxu0 0.0
      %1868 = vmatprep.subr.mxu0 0.0
      %1869 = vmatpush1.msra.mxu0 0.0
      %1870 = vmatprep.subr.mxu0 0.0
      %1871 = vmatpush1.msra.mxu0 0.0
      %1872 = vmatprep.subr.mxu0 0.0
      %1873 = vmatpush1.msra.mxu0 0.0
      %1874 = vmatprep.subr.mxu0 0.0
      %1875 = vmatpush1.msra.mxu0 0.0
      %1876 = vmatprep.subr.mxu0 0.0
      %1877 = vmatpush1.msra.mxu0 0.0
      %1878 = vmatprep.subr.mxu0 0.0
      %1879 = vmatpush1.msra.mxu0 0.0
      %1880 = vmatprep.subr.mxu0 0.0
      %1881 = vmatpush1.msra.mxu0 0.0
      %1882 = vmatprep.subr.mxu0 0.0
      %1883 = vmatpush1.msra.mxu0 0.0
      %1884 = vmatprep.subr.mxu0 0.0
      %1885 = vmatpush1.msra.mxu0 0.0
      %1886 = vmatprep.subr.mxu0 0.0
      %1887 = vmatpush1.msra.mxu0 0.0
      %1888 = vmatprep.subr.mxu0 0.0
      %1889 = vmatpush1.msra.mxu0 0.0
      %1890 = vmatprep.subr.mxu0 0.0
      %1891 = vmatpush1.msra.mxu0 0.0
      %1892 = vmatprep.subr.mxu0 0.0
      %1893 = vmatpush1.msra.mxu0 0.0
      %1894 = vmatprep.mubr.f32.mxu0 0.0
      %1895 = vmatmul.mubr.f32.gmra.mrb[0].mxu0 %v1616
      %v1896 = vpop.f32.mrb[0].mxu0
      %v1897 = vadd.f32 0.0, %v1896
      %v1898 = vpop.f32.mrb[0].mxu0
      %1899 = vmatprep.mubr.f32.mxu0 0.0
      %1900 = vmatmul.mubr.f32.gmra.mrb[0].mxu0 %v1619
      %v1901 = vpop.f32.mrb[0].mxu0
      %v1902 = vadd.f32 0.0, %v1901
      %v1903 = vpop.f32.mrb[0].mxu0
      %1904 = vmatprep.mubr.f32.mxu0 0.0
      %1905 = vmatmul.mubr.f32.gmra.mrb[0].mxu0 %v1622
      %v1906 = vpop.f32.mrb[0].mxu0
      %v1907 = vadd.f32 0.0, %v1906
      %v1908 = vpop.f32.mrb[0].mxu0
      %1909 = vmatprep.mubr.f32.mxu0 0.0
      %1910 = vmatmul.mubr.f32.gmra.mrb[0].mxu0 %v1625
      %v1911 = vpop.f32.mrb[0].mxu0
      %v1912 = vadd.f32 0.0, %v1911
      %v1913 = vpop.f32.mrb[0].mxu0
      %1914 = vdwg.mxu0
      %v1919 = vrot.slane %v1897, 2
      %v1920 = vrot.slane %v1902, 2
      %v1921 = vrot.slane %v1907, 2
      %v1922 = vrot.slane %v1912, 2
      %v1927 = vadd.f32 %v1821, %v1919
      %v1928 = vadd.f32 %v1822, %v1920
      %v1929 = vadd.f32 %v1823, %v1921
      %v1930 = vadd.f32 %v1824, %v1922
      %v1931 = vld [vmem:[%s614] sm:$0xff]
      %v1932 = vld [vmem:[%s614 + $0x8] sm:$0xff]
      %v1933 = vld [vmem:[%s614 + $0x10] sm:$0xff]
      %v1934 = vld [vmem:[%s614 + $0x18] sm:$0xff]
      %s1935 = scalar_lea.vmem %s5, 48
      %v1936 = vld [vmem:[%s1935] sm:$0xf]
      %v1938 = vsel %vm645, %v1931, 0
      %v1941 = vsel %vm645, %v1932, 0
      %v1944 = vsel %vm645, %v1933, 0
      %v1947 = vsel %vm645, %v1934, 0
      %v1950 = vsel %vm658, %v1936, 0
      %1952 = vmatprep.subr.mxu0 0.0
      %1953 = vmatpush1.msra.mxu0 %v1950
      %1954 = vmatprep.subr.mxu0 0.0
      %1955 = vmatpush1.msra.mxu0 0.0
      %1956 = vmatprep.subr.mxu0 0.0
      %1957 = vmatpush1.msra.mxu0 0.0
      %1958 = vmatprep.subr.mxu0 0.0
      %1959 = vmatpush1.msra.mxu0 0.0
      %1960 = vmatprep.subr.mxu0 0.0
      %1961 = vmatpush1.msra.mxu0 0.0
      %1962 = vmatprep.subr.mxu0 0.0
      %1963 = vmatpush1.msra.mxu0 0.0
      %1964 = vmatprep.subr.mxu0 0.0
      %1965 = vmatpush1.msra.mxu0 0.0
      %1966 = vmatprep.subr.mxu0 0.0
      %1967 = vmatpush1.msra.mxu0 0.0
      %1968 = vmatprep.subr.mxu0 0.0
      %1969 = vmatpush1.msra.mxu0 0.0
      %1970 = vmatprep.subr.mxu0 0.0
      %1971 = vmatpush1.msra.mxu0 0.0
      %1972 = vmatprep.subr.mxu0 0.0
      %1973 = vmatpush1.msra.mxu0 0.0
      %1974 = vmatprep.subr.mxu0 0.0
      %1975 = vmatpush1.msra.mxu0 0.0
      %1976 = vmatprep.subr.mxu0 0.0
      %1977 = vmatpush1.msra.mxu0 0.0
      %1978 = vmatprep.subr.mxu0 0.0
      %1979 = vmatpush1.msra.mxu0 0.0
      %1980 = vmatprep.subr.mxu0 0.0
      %1981 = vmatpush1.msra.mxu0 0.0
      %1982 = vmatprep.subr.mxu0 0.0
      %1983 = vmatpush1.msra.mxu0 0.0
      %1984 = vmatprep.subr.mxu0 0.0
      %1985 = vmatpush1.msra.mxu0 0.0
      %1986 = vmatprep.subr.mxu0 0.0
      %1987 = vmatpush1.msra.mxu0 0.0
      %1988 = vmatprep.subr.mxu0 0.0
      %1989 = vmatpush1.msra.mxu0 0.0
      %1990 = vmatprep.subr.mxu0 0.0
      %1991 = vmatpush1.msra.mxu0 0.0
      %1992 = vmatprep.subr.mxu0 0.0
      %1993 = vmatpush1.msra.mxu0 0.0
      %1994 = vmatprep.subr.mxu0 0.0
      %1995 = vmatpush1.msra.mxu0 0.0
      %1996 = vmatprep.subr.mxu0 0.0
      %1997 = vmatpush1.msra.mxu0 0.0
      %1998 = vmatprep.subr.mxu0 0.0
      %1999 = vmatpush1.msra.mxu0 0.0
      %2000 = vmatprep.subr.mxu0 0.0
      %2001 = vmatpush1.msra.mxu0 0.0
      %2002 = vmatprep.subr.mxu0 0.0
      %2003 = vmatpush1.msra.mxu0 0.0
      %2004 = vmatprep.subr.mxu0 0.0
      %2005 = vmatpush1.msra.mxu0 0.0
      %2006 = vmatprep.subr.mxu0 0.0
      %2007 = vmatpush1.msra.mxu0 0.0
      %2008 = vmatprep.subr.mxu0 0.0
      %2009 = vmatpush1.msra.mxu0 0.0
      %2010 = vmatprep.subr.mxu0 0.0
      %2011 = vmatpush1.msra.mxu0 0.0
      %2012 = vmatprep.subr.mxu0 0.0
      %2013 = vmatpush1.msra.mxu0 0.0
      %2014 = vmatprep.subr.mxu0 0.0
      %2015 = vmatpush1.msra.mxu0 0.0
      %2016 = vmatprep.mubr.f32.mxu0 0.0
      %2017 = vmatmul.mubr.f32.gmra.mrb[0].mxu0 %v1938
      %v2018 = vpop.f32.mrb[0].mxu0
      %v2019 = vadd.f32 0.0, %v2018
      %v2020 = vpop.f32.mrb[0].mxu0
      %2021 = vmatprep.mubr.f32.mxu0 0.0
      %2022 = vmatmul.mubr.f32.gmra.mrb[0].mxu0 %v1941
      %v2023 = vpop.f32.mrb[0].mxu0
      %v2024 = vadd.f32 0.0, %v2023
      %v2025 = vpop.f32.mrb[0].mxu0
      %2026 = vmatprep.mubr.f32.mxu0 0.0
      %2027 = vmatmul.mubr.f32.gmra.mrb[0].mxu0 %v1944
      %v2028 = vpop.f32.mrb[0].mxu0
      %v2029 = vadd.f32 0.0, %v2028
      %v2030 = vpop.f32.mrb[0].mxu0
      %2031 = vmatprep.mubr.f32.mxu0 0.0
      %2032 = vmatmul.mubr.f32.gmra.mrb[0].mxu0 %v1947
      %v2033 = vpop.f32.mrb[0].mxu0
      %v2034 = vadd.f32 0.0, %v2033
      %v2035 = vpop.f32.mrb[0].mxu0
      %2036 = vdwg.mxu0
      %v2037 = vadd.f32 %v1927, %v2019
      %v2038 = vadd.f32 %v1928, %v2024
      %v2039 = vadd.f32 %v1929, %v2029
      %v2040 = vadd.f32 %v1930, %v2034
      %s2041 = scalar_lea.vmem %s5, 52
      %v2042 = vld [vmem:[%s2041] sm:$0xf]
      %v2044 = vsel %vm658, %v2042, 0
      %2046 = vmatprep.subr.mxu0 0.0
      %2047 = vmatpush1.msra.mxu0 %v2044
      %2048 = vmatprep.subr.mxu0 0.0
      %2049 = vmatpush1.msra.mxu0 0.0
      %2050 = vmatprep.subr.mxu0 0.0
      %2051 = vmatpush1.msra.mxu0 0.0
      %2052 = vmatprep.subr.mxu0 0.0
      %2053 = vmatpush1.msra.mxu0 0.0
      %2054 = vmatprep.subr.mxu0 0.0
      %2055 = vmatpush1.msra.mxu0 0.0
      %2056 = vmatprep.subr.mxu0 0.0
      %2057 = vmatpush1.msra.mxu0 0.0
      %2058 = vmatprep.subr.mxu0 0.0
      %2059 = vmatpush1.msra.mxu0 0.0
      %2060 = vmatprep.subr.mxu0 0.0
      %2061 = vmatpush1.msra.mxu0 0.0
      %2062 = vmatprep.subr.mxu0 0.0
      %2063 = vmatpush1.msra.mxu0 0.0
      %2064 = vmatprep.subr.mxu0 0.0
      %2065 = vmatpush1.msra.mxu0 0.0
      %2066 = vmatprep.subr.mxu0 0.0
      %2067 = vmatpush1.msra.mxu0 0.0
      %2068 = vmatprep.subr.mxu0 0.0
      %2069 = vmatpush1.msra.mxu0 0.0
      %2070 = vmatprep.subr.mxu0 0.0
      %2071 = vmatpush1.msra.mxu0 0.0
      %2072 = vmatprep.subr.mxu0 0.0
      %2073 = vmatpush1.msra.mxu0 0.0
      %2074 = vmatprep.subr.mxu0 0.0
      %2075 = vmatpush1.msra.mxu0 0.0
      %2076 = vmatprep.subr.mxu0 0.0
      %2077 = vmatpush1.msra.mxu0 0.0
      %2078 = vmatprep.subr.mxu0 0.0
      %2079 = vmatpush1.msra.mxu0 0.0
      %2080 = vmatprep.subr.mxu0 0.0
      %2081 = vmatpush1.msra.mxu0 0.0
      %2082 = vmatprep.subr.mxu0 0.0
      %2083 = vmatpush1.msra.mxu0 0.0
      %2084 = vmatprep.subr.mxu0 0.0
      %2085 = vmatpush1.msra.mxu0 0.0
      %2086 = vmatprep.subr.mxu0 0.0
      %2087 = vmatpush1.msra.mxu0 0.0
      %2088 = vmatprep.subr.mxu0 0.0
      %2089 = vmatpush1.msra.mxu0 0.0
      %2090 = vmatprep.subr.mxu0 0.0
      %2091 = vmatpush1.msra.mxu0 0.0
      %2092 = vmatprep.subr.mxu0 0.0
      %2093 = vmatpush1.msra.mxu0 0.0
      %2094 = vmatprep.subr.mxu0 0.0
      %2095 = vmatpush1.msra.mxu0 0.0
      %2096 = vmatprep.subr.mxu0 0.0
      %2097 = vmatpush1.msra.mxu0 0.0
      %2098 = vmatprep.subr.mxu0 0.0
      %2099 = vmatpush1.msra.mxu0 0.0
      %2100 = vmatprep.subr.mxu0 0.0
      %2101 = vmatpush1.msra.mxu0 0.0
      %2102 = vmatprep.subr.mxu0 0.0
      %2103 = vmatpush1.msra.mxu0 0.0
      %2104 = vmatprep.subr.mxu0 0.0
      %2105 = vmatpush1.msra.mxu0 0.0
      %2106 = vmatprep.subr.mxu0 0.0
      %2107 = vmatpush1.msra.mxu0 0.0
      %2108 = vmatprep.subr.mxu0 0.0
      %2109 = vmatpush1.msra.mxu0 0.0
      %2110 = vmatprep.mubr.f32.mxu0 0.0
      %2111 = vmatmul.mubr.f32.gmra.mrb[0].mxu0 %v1938
      %v2112 = vpop.f32.mrb[0].mxu0
      %v2113 = vadd.f32 0.0, %v2112
      %v2114 = vpop.f32.mrb[0].mxu0
      %2115 = vmatprep.mubr.f32.mxu0 0.0
      %2116 = vmatmul.mubr.f32.gmra.mrb[0].mxu0 %v1941
      %v2117 = vpop.f32.mrb[0].mxu0
      %v2118 = vadd.f32 0.0, %v2117
      %v2119 = vpop.f32.mrb[0].mxu0
      %2120 = vmatprep.mubr.f32.mxu0 0.0
      %2121 = vmatmul.mubr.f32.gmra.mrb[0].mxu0 %v1944
      %v2122 = vpop.f32.mrb[0].mxu0
      %v2123 = vadd.f32 0.0, %v2122
      %v2124 = vpop.f32.mrb[0].mxu0
      %2125 = vmatprep.mubr.f32.mxu0 0.0
      %2126 = vmatmul.mubr.f32.gmra.mrb[0].mxu0 %v1947
      %v2127 = vpop.f32.mrb[0].mxu0
      %v2128 = vadd.f32 0.0, %v2127
      %v2129 = vpop.f32.mrb[0].mxu0
      %2130 = vdwg.mxu0
      %v2135 = vrot.slane %v2113, 1
      %v2136 = vrot.slane %v2118, 1
      %v2137 = vrot.slane %v2123, 1
      %v2138 = vrot.slane %v2128, 1
      %v2143 = vadd.f32 %v2037, %v2135
      %v2144 = vadd.f32 %v2038, %v2136
      %v2145 = vadd.f32 %v2039, %v2137
      %v2146 = vadd.f32 %v2040, %v2138
      %s2147 = scalar_lea.vmem %s5, 56
      %v2148 = vld [vmem:[%s2147] sm:$0xf]
      %v2150 = vsel %vm658, %v2148, 0
      %2152 = vmatprep.subr.mxu0 0.0
      %2153 = vmatpush1.msra.mxu0 %v2150
      %2154 = vmatprep.subr.mxu0 0.0
      %2155 = vmatpush1.msra.mxu0 0.0
      %2156 = vmatprep.subr.mxu0 0.0
      %2157 = vmatpush1.msra.mxu0 0.0
      %2158 = vmatprep.subr.mxu0 0.0
      %2159 = vmatpush1.msra.mxu0 0.0
      %2160 = vmatprep.subr.mxu0 0.0
      %2161 = vmatpush1.msra.mxu0 0.0
      %2162 = vmatprep.subr.mxu0 0.0
      %2163 = vmatpush1.msra.mxu0 0.0
      %2164 = vmatprep.subr.mxu0 0.0
      %2165 = vmatpush1.msra.mxu0 0.0
      %2166 = vmatprep.subr.mxu0 0.0
      %2167 = vmatpush1.msra.mxu0 0.0
      %2168 = vmatprep.subr.mxu0 0.0
      %2169 = vmatpush1.msra.mxu0 0.0
      %2170 = vmatprep.subr.mxu0 0.0
      %2171 = vmatpush1.msra.mxu0 0.0
      %2172 = vmatprep.subr.mxu0 0.0
      %2173 = vmatpush1.msra.mxu0 0.0
      %2174 = vmatprep.subr.mxu0 0.0
      %2175 = vmatpush1.msra.mxu0 0.0
      %2176 = vmatprep.subr.mxu0 0.0
      %2177 = vmatpush1.msra.mxu0 0.0
      %2178 = vmatprep.subr.mxu0 0.0
      %2179 = vmatpush1.msra.mxu0 0.0
      %2180 = vmatprep.subr.mxu0 0.0
      %2181 = vmatpush1.msra.mxu0 0.0
      %2182 = vmatprep.subr.mxu0 0.0
      %2183 = vmatpush1.msra.mxu0 0.0
      %2184 = vmatprep.subr.mxu0 0.0
      %2185 = vmatpush1.msra.mxu0 0.0
      %2186 = vmatprep.subr.mxu0 0.0
      %2187 = vmatpush1.msra.mxu0 0.0
      %2188 = vmatprep.subr.mxu0 0.0
      %2189 = vmatpush1.msra.mxu0 0.0
      %2190 = vmatprep.subr.mxu0 0.0
      %2191 = vmatpush1.msra.mxu0 0.0
      %2192 = vmatprep.subr.mxu0 0.0
      %2193 = vmatpush1.msra.mxu0 0.0
      %2194 = vmatprep.subr.mxu0 0.0
      %2195 = vmatpush1.msra.mxu0 0.0
      %2196 = vmatprep.subr.mxu0 0.0
      %2197 = vmatpush1.msra.mxu0 0.0
      %2198 = vmatprep.subr.mxu0 0.0
      %2199 = vmatpush1.msra.mxu0 0.0
      %2200 = vmatprep.subr.mxu0 0.0
      %2201 = vmatpush1.msra.mxu0 0.0
      %2202 = vmatprep.subr.mxu0 0.0
      %2203 = vmatpush1.msra.mxu0 0.0
      %2204 = vmatprep.subr.mxu0 0.0
      %2205 = vmatpush1.msra.mxu0 0.0
      %2206 = vmatprep.subr.mxu0 0.0
      %2207 = vmatpush1.msra.mxu0 0.0
      %2208 = vmatprep.subr.mxu0 0.0
      %2209 = vmatpush1.msra.mxu0 0.0
      %2210 = vmatprep.subr.mxu0 0.0
      %2211 = vmatpush1.msra.mxu0 0.0
      %2212 = vmatprep.subr.mxu0 0.0
      %2213 = vmatpush1.msra.mxu0 0.0
      %2214 = vmatprep.subr.mxu0 0.0
      %2215 = vmatpush1.msra.mxu0 0.0
      %2216 = vmatprep.mubr.f32.mxu0 0.0
      %2217 = vmatmul.mubr.f32.gmra.mrb[0].mxu0 %v1938
      %v2218 = vpop.f32.mrb[0].mxu0
      %v2219 = vadd.f32 0.0, %v2218
      %v2220 = vpop.f32.mrb[0].mxu0
      %2221 = vmatprep.mubr.f32.mxu0 0.0
      %2222 = vmatmul.mubr.f32.gmra.mrb[0].mxu0 %v1941
      %v2223 = vpop.f32.mrb[0].mxu0
      %v2224 = vadd.f32 0.0, %v2223
      %v2225 = vpop.f32.mrb[0].mxu0
      %2226 = vmatprep.mubr.f32.mxu0 0.0
      %2227 = vmatmul.mubr.f32.gmra.mrb[0].mxu0 %v1944
      %v2228 = vpop.f32.mrb[0].mxu0
      %v2229 = vadd.f32 0.0, %v2228
      %v2230 = vpop.f32.mrb[0].mxu0
      %2231 = vmatprep.mubr.f32.mxu0 0.0
      %2232 = vmatmul.mubr.f32.gmra.mrb[0].mxu0 %v1947
      %v2233 = vpop.f32.mrb[0].mxu0
      %v2234 = vadd.f32 0.0, %v2233
      %v2235 = vpop.f32.mrb[0].mxu0
      %2236 = vdwg.mxu0
      %v2241 = vrot.slane %v2219, 2
      %v2242 = vrot.slane %v2224, 2
      %v2243 = vrot.slane %v2229, 2
      %v2244 = vrot.slane %v2234, 2
      %v2249 = vadd.f32 %v2143, %v2241
      %v2250 = vadd.f32 %v2144, %v2242
      %v2251 = vadd.f32 %v2145, %v2243
      %v2252 = vadd.f32 %v2146, %v2244
      %s2253 = scalar_lea.vmem [#allocation2], 64
      %v2254 = vld [vmem:[%s2253] sm:$0xff]
      %v2255 = vld [vmem:[%s2253 + $0x8] sm:$0xff]
      %v2256 = vld [vmem:[%s2253 + $0x10] sm:$0xff]
      %v2257 = vld [vmem:[%s2253 + $0x18] sm:$0xff]
      %s2258 = scalar_lea.vmem %s5, 60
      %v2259 = vld [vmem:[%s2258] sm:$0xf]
      %v2261 = vsel %vm645, %v2254, 0
      %v2264 = vsel %vm645, %v2255, 0
      %v2267 = vsel %vm645, %v2256, 0
      %v2270 = vsel %vm645, %v2257, 0
      %v2273 = vsel %vm658, %v2259, 0
      %2275 = vmatprep.subr.mxu0 0.0
      %2276 = vmatpush1.msra.mxu0 %v2273
      %2277 = vmatprep.subr.mxu0 0.0
      %2278 = vmatpush1.msra.mxu0 0.0
      %2279 = vmatprep.subr.mxu0 0.0
      %2280 = vmatpush1.msra.mxu0 0.0
      %2281 = vmatprep.subr.mxu0 0.0
      %2282 = vmatpush1.msra.mxu0 0.0
      %2283 = vmatprep.subr.mxu0 0.0
      %2284 = vmatpush1.msra.mxu0 0.0
      %2285 = vmatprep.subr.mxu0 0.0
      %2286 = vmatpush1.msra.mxu0 0.0
      %2287 = vmatprep.subr.mxu0 0.0
      %2288 = vmatpush1.msra.mxu0 0.0
      %2289 = vmatprep.subr.mxu0 0.0
      %2290 = vmatpush1.msra.mxu0 0.0
      %2291 = vmatprep.subr.mxu0 0.0
      %2292 = vmatpush1.msra.mxu0 0.0
      %2293 = vmatprep.subr.mxu0 0.0
      %2294 = vmatpush1.msra.mxu0 0.0
      %2295 = vmatprep.subr.mxu0 0.0
      %2296 = vmatpush1.msra.mxu0 0.0
      %2297 = vmatprep.subr.mxu0 0.0
      %2298 = vmatpush1.msra.mxu0 0.0
      %2299 = vmatprep.subr.mxu0 0.0
      %2300 = vmatpush1.msra.mxu0 0.0
      %2301 = vmatprep.subr.mxu0 0.0
      %2302 = vmatpush1.msra.mxu0 0.0
      %2303 = vmatprep.subr.mxu0 0.0
      %2304 = vmatpush1.msra.mxu0 0.0
      %2305 = vmatprep.subr.mxu0 0.0
      %2306 = vmatpush1.msra.mxu0 0.0
      %2307 = vmatprep.subr.mxu0 0.0
      %2308 = vmatpush1.msra.mxu0 0.0
      %2309 = vmatprep.subr.mxu0 0.0
      %2310 = vmatpush1.msra.mxu0 0.0
      %2311 = vmatprep.subr.mxu0 0.0
      %2312 = vmatpush1.msra.mxu0 0.0
      %2313 = vmatprep.subr.mxu0 0.0
      %2314 = vmatpush1.msra.mxu0 0.0
      %2315 = vmatprep.subr.mxu0 0.0
      %2316 = vmatpush1.msra.mxu0 0.0
      %2317 = vmatprep.subr.mxu0 0.0
      %2318 = vmatpush1.msra.mxu0 0.0
      %2319 = vmatprep.subr.mxu0 0.0
      %2320 = vmatpush1.msra.mxu0 0.0
      %2321 = vmatprep.subr.mxu0 0.0
      %2322 = vmatpush1.msra.mxu0 0.0
      %2323 = vmatprep.subr.mxu0 0.0
      %2324 = vmatpush1.msra.mxu0 0.0
      %2325 = vmatprep.subr.mxu0 0.0
      %2326 = vmatpush1.msra.mxu0 0.0
      %2327 = vmatprep.subr.mxu0 0.0
      %2328 = vmatpush1.msra.mxu0 0.0
      %2329 = vmatprep.subr.mxu0 0.0
      %2330 = vmatpush1.msra.mxu0 0.0
      %2331 = vmatprep.subr.mxu0 0.0
      %2332 = vmatpush1.msra.mxu0 0.0
      %2333 = vmatprep.subr.mxu0 0.0
      %2334 = vmatpush1.msra.mxu0 0.0
      %2335 = vmatprep.subr.mxu0 0.0
      %2336 = vmatpush1.msra.mxu0 0.0
      %2337 = vmatprep.subr.mxu0 0.0
      %2338 = vmatpush1.msra.mxu0 0.0
      %2339 = vmatprep.mubr.f32.mxu0 0.0
      %2340 = vmatmul.mubr.f32.gmra.mrb[0].mxu0 %v2261
      %v2341 = vpop.f32.mrb[0].mxu0
      %v2342 = vadd.f32 0.0, %v2341
      %v2343 = vpop.f32.mrb[0].mxu0
      %2344 = vmatprep.mubr.f32.mxu0 0.0
      %2345 = vmatmul.mubr.f32.gmra.mrb[0].mxu0 %v2264
      %v2346 = vpop.f32.mrb[0].mxu0
      %v2347 = vadd.f32 0.0, %v2346
      %v2348 = vpop.f32.mrb[0].mxu0
      %2349 = vmatprep.mubr.f32.mxu0 0.0
      %2350 = vmatmul.mubr.f32.gmra.mrb[0].mxu0 %v2267
      %v2351 = vpop.f32.mrb[0].mxu0
      %v2352 = vadd.f32 0.0, %v2351
      %v2353 = vpop.f32.mrb[0].mxu0
      %2354 = vmatprep.mubr.f32.mxu0 0.0
      %2355 = vmatmul.mubr.f32.gmra.mrb[0].mxu0 %v2270
      %v2356 = vpop.f32.mrb[0].mxu0
      %v2357 = vadd.f32 0.0, %v2356
      %v2358 = vpop.f32.mrb[0].mxu0
      %2359 = vdwg.mxu0
      %v2360 = vadd.f32 %v2249, %v2342
      %v2361 = vadd.f32 %v2250, %v2347
      %v2362 = vadd.f32 %v2251, %v2352
      %v2363 = vadd.f32 %v2252, %v2357
      %s2364 = scalar_lea.vmem %s5, 64
      %v2365 = vld [vmem:[%s2364] sm:$0xf]
      %v2367 = vsel %vm658, %v2365, 0
      %2369 = vmatprep.subr.mxu0 0.0
      %2370 = vmatpush1.msra.mxu0 %v2367
      %2371 = vmatprep.subr.mxu0 0.0
      %2372 = vmatpush1.msra.mxu0 0.0
      %2373 = vmatprep.subr.mxu0 0.0
      %2374 = vmatpush1.msra.mxu0 0.0
      %2375 = vmatprep.subr.mxu0 0.0
      %2376 = vmatpush1.msra.mxu0 0.0
      %2377 = vmatprep.subr.mxu0 0.0
      %2378 = vmatpush1.msra.mxu0 0.0
      %2379 = vmatprep.subr.mxu0 0.0
      %2380 = vmatpush1.msra.mxu0 0.0
      %2381 = vmatprep.subr.mxu0 0.0
      %2382 = vmatpush1.msra.mxu0 0.0
      %2383 = vmatprep.subr.mxu0 0.0
      %2384 = vmatpush1.msra.mxu0 0.0
      %2385 = vmatprep.subr.mxu0 0.0
      %2386 = vmatpush1.msra.mxu0 0.0
      %2387 = vmatprep.subr.mxu0 0.0
      %2388 = vmatpush1.msra.mxu0 0.0
      %2389 = vmatprep.subr.mxu0 0.0
      %2390 = vmatpush1.msra.mxu0 0.0
      %2391 = vmatprep.subr.mxu0 0.0
      %2392 = vmatpush1.msra.mxu0 0.0
      %2393 = vmatprep.subr.mxu0 0.0
      %2394 = vmatpush1.msra.mxu0 0.0
      %2395 = vmatprep.subr.mxu0 0.0
      %2396 = vmatpush1.msra.mxu0 0.0
      %2397 = vmatprep.subr.mxu0 0.0
      %2398 = vmatpush1.msra.mxu0 0.0
      %2399 = vmatprep.subr.mxu0 0.0
      %2400 = vmatpush1.msra.mxu0 0.0
      %2401 = vmatprep.subr.mxu0 0.0
      %2402 = vmatpush1.msra.mxu0 0.0
      %2403 = vmatprep.subr.mxu0 0.0
      %2404 = vmatpush1.msra.mxu0 0.0
      %2405 = vmatprep.subr.mxu0 0.0
      %2406 = vmatpush1.msra.mxu0 0.0
      %2407 = vmatprep.subr.mxu0 0.0
      %2408 = vmatpush1.msra.mxu0 0.0
      %2409 = vmatprep.subr.mxu0 0.0
      %2410 = vmatpush1.msra.mxu0 0.0
      %2411 = vmatprep.subr.mxu0 0.0
      %2412 = vmatpush1.msra.mxu0 0.0
      %2413 = vmatprep.subr.mxu0 0.0
      %2414 = vmatpush1.msra.mxu0 0.0
      %2415 = vmatprep.subr.mxu0 0.0
      %2416 = vmatpush1.msra.mxu0 0.0
      %2417 = vmatprep.subr.mxu0 0.0
      %2418 = vmatpush1.msra.mxu0 0.0
      %2419 = vmatprep.subr.mxu0 0.0
      %2420 = vmatpush1.msra.mxu0 0.0
      %2421 = vmatprep.subr.mxu0 0.0
      %2422 = vmatpush1.msra.mxu0 0.0
      %2423 = vmatprep.subr.mxu0 0.0
      %2424 = vmatpush1.msra.mxu0 0.0
      %2425 = vmatprep.subr.mxu0 0.0
      %2426 = vmatpush1.msra.mxu0 0.0
      %2427 = vmatprep.subr.mxu0 0.0
      %2428 = vmatpush1.msra.mxu0 0.0
      %2429 = vmatprep.subr.mxu0 0.0
      %2430 = vmatpush1.msra.mxu0 0.0
      %2431 = vmatprep.subr.mxu0 0.0
      %2432 = vmatpush1.msra.mxu0 0.0
      %2433 = vmatprep.mubr.f32.mxu0 0.0
      %2434 = vmatmul.mubr.f32.gmra.mrb[0].mxu0 %v2261
      %v2435 = vpop.f32.mrb[0].mxu0
      %v2436 = vadd.f32 0.0, %v2435
      %v2437 = vpop.f32.mrb[0].mxu0
      %2438 = vmatprep.mubr.f32.mxu0 0.0
      %2439 = vmatmul.mubr.f32.gmra.mrb[0].mxu0 %v2264
      %v2440 = vpop.f32.mrb[0].mxu0
      %v2441 = vadd.f32 0.0, %v2440
      %v2442 = vpop.f32.mrb[0].mxu0
      %2443 = vmatprep.mubr.f32.mxu0 0.0
      %2444 = vmatmul.mubr.f32.gmra.mrb[0].mxu0 %v2267
      %v2445 = vpop.f32.mrb[0].mxu0
      %v2446 = vadd.f32 0.0, %v2445
      %v2447 = vpop.f32.mrb[0].mxu0
      %2448 = vmatprep.mubr.f32.mxu0 0.0
      %2449 = vmatmul.mubr.f32.gmra.mrb[0].mxu0 %v2270
      %v2450 = vpop.f32.mrb[0].mxu0
      %v2451 = vadd.f32 0.0, %v2450
      %v2452 = vpop.f32.mrb[0].mxu0
      %2453 = vdwg.mxu0
      %v2458 = vrot.slane %v2436, 1
      %v2459 = vrot.slane %v2441, 1
      %v2460 = vrot.slane %v2446, 1
      %v2461 = vrot.slane %v2451, 1
      %v2466 = vadd.f32 %v2360, %v2458
      %v2467 = vadd.f32 %v2361, %v2459
      %v2468 = vadd.f32 %v2362, %v2460
      %v2469 = vadd.f32 %v2363, %v2461
      %s2470 = scalar_lea.vmem %s5, 68
      %v2471 = vld [vmem:[%s2470] sm:$0xf]
      %v2473 = vsel %vm658, %v2471, 0
      %2475 = vmatprep.subr.mxu0 0.0
      %2476 = vmatpush1.msra.mxu0 %v2473
      %2477 = vmatprep.subr.mxu0 0.0
      %2478 = vmatpush1.msra.mxu0 0.0
      %2479 = vmatprep.subr.mxu0 0.0
      %2480 = vmatpush1.msra.mxu0 0.0
      %2481 = vmatprep.subr.mxu0 0.0
      %2482 = vmatpush1.msra.mxu0 0.0
      %2483 = vmatprep.subr.mxu0 0.0
      %2484 = vmatpush1.msra.mxu0 0.0
      %2485 = vmatprep.subr.mxu0 0.0
      %2486 = vmatpush1.msra.mxu0 0.0
      %2487 = vmatprep.subr.mxu0 0.0
      %2488 = vmatpush1.msra.mxu0 0.0
      %2489 = vmatprep.subr.mxu0 0.0
      %2490 = vmatpush1.msra.mxu0 0.0
      %2491 = vmatprep.subr.mxu0 0.0
      %2492 = vmatpush1.msra.mxu0 0.0
      %2493 = vmatprep.subr.mxu0 0.0
      %2494 = vmatpush1.msra.mxu0 0.0
      %2495 = vmatprep.subr.mxu0 0.0
      %2496 = vmatpush1.msra.mxu0 0.0
      %2497 = vmatprep.subr.mxu0 0.0
      %2498 = vmatpush1.msra.mxu0 0.0
      %2499 = vmatprep.subr.mxu0 0.0
      %2500 = vmatpush1.msra.mxu0 0.0
      %2501 = vmatprep.subr.mxu0 0.0
      %2502 = vmatpush1.msra.mxu0 0.0
      %2503 = vmatprep.subr.mxu0 0.0
      %2504 = vmatpush1.msra.mxu0 0.0
      %2505 = vmatprep.subr.mxu0 0.0
      %2506 = vmatpush1.msra.mxu0 0.0
      %2507 = vmatprep.subr.mxu0 0.0
      %2508 = vmatpush1.msra.mxu0 0.0
      %2509 = vmatprep.subr.mxu0 0.0
      %2510 = vmatpush1.msra.mxu0 0.0
      %2511 = vmatprep.subr.mxu0 0.0
      %2512 = vmatpush1.msra.mxu0 0.0
      %2513 = vmatprep.subr.mxu0 0.0
      %2514 = vmatpush1.msra.mxu0 0.0
      %2515 = vmatprep.subr.mxu0 0.0
      %2516 = vmatpush1.msra.mxu0 0.0
      %2517 = vmatprep.subr.mxu0 0.0
      %2518 = vmatpush1.msra.mxu0 0.0
      %2519 = vmatprep.subr.mxu0 0.0
      %2520 = vmatpush1.msra.mxu0 0.0
      %2521 = vmatprep.subr.mxu0 0.0
      %2522 = vmatpush1.msra.mxu0 0.0
      %2523 = vmatprep.subr.mxu0 0.0
      %2524 = vmatpush1.msra.mxu0 0.0
      %2525 = vmatprep.subr.mxu0 0.0
      %2526 = vmatpush1.msra.mxu0 0.0
      %2527 = vmatprep.subr.mxu0 0.0
      %2528 = vmatpush1.msra.mxu0 0.0
      %2529 = vmatprep.subr.mxu0 0.0
      %2530 = vmatpush1.msra.mxu0 0.0
      %2531 = vmatprep.subr.mxu0 0.0
      %2532 = vmatpush1.msra.mxu0 0.0
      %2533 = vmatprep.subr.mxu0 0.0
      %2534 = vmatpush1.msra.mxu0 0.0
      %2535 = vmatprep.subr.mxu0 0.0
      %2536 = vmatpush1.msra.mxu0 0.0
      %2537 = vmatprep.subr.mxu0 0.0
      %2538 = vmatpush1.msra.mxu0 0.0
      %2539 = vmatprep.mubr.f32.mxu0 0.0
      %2540 = vmatmul.mubr.f32.gmra.mrb[0].mxu0 %v2261
      %v2541 = vpop.f32.mrb[0].mxu0
      %v2542 = vadd.f32 0.0, %v2541
      %v2543 = vpop.f32.mrb[0].mxu0
      %2544 = vmatprep.mubr.f32.mxu0 0.0
      %2545 = vmatmul.mubr.f32.gmra.mrb[0].mxu0 %v2264
      %v2546 = vpop.f32.mrb[0].mxu0
      %v2547 = vadd.f32 0.0, %v2546
      %v2548 = vpop.f32.mrb[0].mxu0
      %2549 = vmatprep.mubr.f32.mxu0 0.0
      %2550 = vmatmul.mubr.f32.gmra.mrb[0].mxu0 %v2267
      %v2551 = vpop.f32.mrb[0].mxu0
      %v2552 = vadd.f32 0.0, %v2551
      %v2553 = vpop.f32.mrb[0].mxu0
      %2554 = vmatprep.mubr.f32.mxu0 0.0
      %2555 = vmatmul.mubr.f32.gmra.mrb[0].mxu0 %v2270
      %v2556 = vpop.f32.mrb[0].mxu0
      %v2557 = vadd.f32 0.0, %v2556
      %v2558 = vpop.f32.mrb[0].mxu0
      %2559 = vdwg.mxu0
      %v2564 = vrot.slane %v2542, 2
      %v2565 = vrot.slane %v2547, 2
      %v2566 = vrot.slane %v2552, 2
      %v2567 = vrot.slane %v2557, 2
      %v2572 = vadd.f32 %v2466, %v2564
      %v2573 = vadd.f32 %v2467, %v2565
      %v2574 = vadd.f32 %v2468, %v2566
      %v2575 = vadd.f32 %v2469, %v2567
      %s2576 = scalar_lea.vmem [#allocation2], 96
      %v2577 = vld [vmem:[%s2576] sm:$0xff]
      %v2578 = vld [vmem:[%s2576 + $0x8] sm:$0xff]
      %v2579 = vld [vmem:[%s2576 + $0x10] sm:$0xff]
      %v2580 = vld [vmem:[%s2576 + $0x18] sm:$0xff]
      %s2581 = scalar_lea.vmem %s5, 72
      %v2582 = vld [vmem:[%s2581] sm:$0xf]
      %v2584 = vsel %vm645, %v2577, 0
      %v2587 = vsel %vm645, %v2578, 0
      %v2590 = vsel %vm645, %v2579, 0
      %v2593 = vsel %vm645, %v2580, 0
      %v2596 = vsel %vm658, %v2582, 0
      %2598 = vmatprep.subr.mxu0 0.0
      %2599 = vmatpush1.msra.mxu0 %v2596
      %2600 = vmatprep.subr.mxu0 0.0
      %2601 = vmatpush1.msra.mxu0 0.0
      %2602 = vmatprep.subr.mxu0 0.0
      %2603 = vmatpush1.msra.mxu0 0.0
      %2604 = vmatprep.subr.mxu0 0.0
      %2605 = vmatpush1.msra.mxu0 0.0
      %2606 = vmatprep.subr.mxu0 0.0
      %2607 = vmatpush1.msra.mxu0 0.0
      %2608 = vmatprep.subr.mxu0 0.0
      %2609 = vmatpush1.msra.mxu0 0.0
      %2610 = vmatprep.subr.mxu0 0.0
      %2611 = vmatpush1.msra.mxu0 0.0
      %2612 = vmatprep.subr.mxu0 0.0
      %2613 = vmatpush1.msra.mxu0 0.0
      %2614 = vmatprep.subr.mxu0 0.0
      %2615 = vmatpush1.msra.mxu0 0.0
      %2616 = vmatprep.subr.mxu0 0.0
      %2617 = vmatpush1.msra.mxu0 0.0
      %2618 = vmatprep.subr.mxu0 0.0
      %2619 = vmatpush1.msra.mxu0 0.0
      %2620 = vmatprep.subr.mxu0 0.0
      %2621 = vmatpush1.msra.mxu0 0.0
      %2622 = vmatprep.subr.mxu0 0.0
      %2623 = vmatpush1.msra.mxu0 0.0
      %2624 = vmatprep.subr.mxu0 0.0
      %2625 = vmatpush1.msra.mxu0 0.0
      %2626 = vmatprep.subr.mxu0 0.0
      %2627 = vmatpush1.msra.mxu0 0.0
      %2628 = vmatprep.subr.mxu0 0.0
      %2629 = vmatpush1.msra.mxu0 0.0
      %2630 = vmatprep.subr.mxu0 0.0
      %2631 = vmatpush1.msra.mxu0 0.0
      %2632 = vmatprep.subr.mxu0 0.0
      %2633 = vmatpush1.msra.mxu0 0.0
      %2634 = vmatprep.subr.mxu0 0.0
      %2635 = vmatpush1.msra.mxu0 0.0
      %2636 = vmatprep.subr.mxu0 0.0
      %2637 = vmatpush1.msra.mxu0 0.0
      %2638 = vmatprep.subr.mxu0 0.0
      %2639 = vmatpush1.msra.mxu0 0.0
      %2640 = vmatprep.subr.mxu0 0.0
      %2641 = vmatpush1.msra.mxu0 0.0
      %2642 = vmatprep.subr.mxu0 0.0
      %2643 = vmatpush1.msra.mxu0 0.0
      %2644 = vmatprep.subr.mxu0 0.0
      %2645 = vmatpush1.msra.mxu0 0.0
      %2646 = vmatprep.subr.mxu0 0.0
      %2647 = vmatpush1.msra.mxu0 0.0
      %2648 = vmatprep.subr.mxu0 0.0
      %2649 = vmatpush1.msra.mxu0 0.0
      %2650 = vmatprep.subr.mxu0 0.0
      %2651 = vmatpush1.msra.mxu0 0.0
      %2652 = vmatprep.subr.mxu0 0.0
      %2653 = vmatpush1.msra.mxu0 0.0
      %2654 = vmatprep.subr.mxu0 0.0
      %2655 = vmatpush1.msra.mxu0 0.0
      %2656 = vmatprep.subr.mxu0 0.0
      %2657 = vmatpush1.msra.mxu0 0.0
      %2658 = vmatprep.subr.mxu0 0.0
      %2659 = vmatpush1.msra.mxu0 0.0
      %2660 = vmatprep.subr.mxu0 0.0
      %2661 = vmatpush1.msra.mxu0 0.0
      %2662 = vmatprep.mubr.f32.mxu0 0.0
      %2663 = vmatmul.mubr.f32.gmra.mrb[0].mxu0 %v2584
      %v2664 = vpop.f32.mrb[0].mxu0
      %v2665 = vadd.f32 0.0, %v2664
      %v2666 = vpop.f32.mrb[0].mxu0
      %2667 = vmatprep.mubr.f32.mxu0 0.0
      %2668 = vmatmul.mubr.f32.gmra.mrb[0].mxu0 %v2587
      %v2669 = vpop.f32.mrb[0].mxu0
      %v2670 = vadd.f32 0.0, %v2669
      %v2671 = vpop.f32.mrb[0].mxu0
      %2672 = vmatprep.mubr.f32.mxu0 0.0
      %2673 = vmatmul.mubr.f32.gmra.mrb[0].mxu0 %v2590
      %v2674 = vpop.f32.mrb[0].mxu0
      %v2675 = vadd.f32 0.0, %v2674
      %v2676 = vpop.f32.mrb[0].mxu0
      %2677 = vmatprep.mubr.f32.mxu0 0.0
      %2678 = vmatmul.mubr.f32.gmra.mrb[0].mxu0 %v2593
      %v2679 = vpop.f32.mrb[0].mxu0
      %v2680 = vadd.f32 0.0, %v2679
      %v2681 = vpop.f32.mrb[0].mxu0
      %2682 = vdwg.mxu0
      %v2683 = vadd.f32 %v2572, %v2665
      %v2684 = vadd.f32 %v2573, %v2670
      %v2685 = vadd.f32 %v2574, %v2675
      %v2686 = vadd.f32 %v2575, %v2680
      %s2687 = scalar_lea.vmem %s5, 76
      %v2688 = vld [vmem:[%s2687] sm:$0xf]
      %v2690 = vsel %vm658, %v2688, 0
      %2692 = vmatprep.subr.mxu0 0.0
      %2693 = vmatpush1.msra.mxu0 %v2690
      %2694 = vmatprep.subr.mxu0 0.0
      %2695 = vmatpush1.msra.mxu0 0.0
      %2696 = vmatprep.subr.mxu0 0.0
      %2697 = vmatpush1.msra.mxu0 0.0
      %2698 = vmatprep.subr.mxu0 0.0
      %2699 = vmatpush1.msra.mxu0 0.0
      %2700 = vmatprep.subr.mxu0 0.0
      %2701 = vmatpush1.msra.mxu0 0.0
      %2702 = vmatprep.subr.mxu0 0.0
      %2703 = vmatpush1.msra.mxu0 0.0
      %2704 = vmatprep.subr.mxu0 0.0
      %2705 = vmatpush1.msra.mxu0 0.0
      %2706 = vmatprep.subr.mxu0 0.0
      %2707 = vmatpush1.msra.mxu0 0.0
      %2708 = vmatprep.subr.mxu0 0.0
      %2709 = vmatpush1.msra.mxu0 0.0
      %2710 = vmatprep.subr.mxu0 0.0
      %2711 = vmatpush1.msra.mxu0 0.0
      %2712 = vmatprep.subr.mxu0 0.0
      %2713 = vmatpush1.msra.mxu0 0.0
      %2714 = vmatprep.subr.mxu0 0.0
      %2715 = vmatpush1.msra.mxu0 0.0
      %2716 = vmatprep.subr.mxu0 0.0
      %2717 = vmatpush1.msra.mxu0 0.0
      %2718 = vmatprep.subr.mxu0 0.0
      %2719 = vmatpush1.msra.mxu0 0.0
      %2720 = vmatprep.subr.mxu0 0.0
      %2721 = vmatpush1.msra.mxu0 0.0
      %2722 = vmatprep.subr.mxu0 0.0
      %2723 = vmatpush1.msra.mxu0 0.0
      %2724 = vmatprep.subr.mxu0 0.0
      %2725 = vmatpush1.msra.mxu0 0.0
      %2726 = vmatprep.subr.mxu0 0.0
      %2727 = vmatpush1.msra.mxu0 0.0
      %2728 = vmatprep.subr.mxu0 0.0
      %2729 = vmatpush1.msra.mxu0 0.0
      %2730 = vmatprep.subr.mxu0 0.0
      %2731 = vmatpush1.msra.mxu0 0.0
      %2732 = vmatprep.subr.mxu0 0.0
      %2733 = vmatpush1.msra.mxu0 0.0
      %2734 = vmatprep.subr.mxu0 0.0
      %2735 = vmatpush1.msra.mxu0 0.0
      %2736 = vmatprep.subr.mxu0 0.0
      %2737 = vmatpush1.msra.mxu0 0.0
      %2738 = vmatprep.subr.mxu0 0.0
      %2739 = vmatpush1.msra.mxu0 0.0
      %2740 = vmatprep.subr.mxu0 0.0
      %2741 = vmatpush1.msra.mxu0 0.0
      %2742 = vmatprep.subr.mxu0 0.0
      %2743 = vmatpush1.msra.mxu0 0.0
      %2744 = vmatprep.subr.mxu0 0.0
      %2745 = vmatpush1.msra.mxu0 0.0
      %2746 = vmatprep.subr.mxu0 0.0
      %2747 = vmatpush1.msra.mxu0 0.0
      %2748 = vmatprep.subr.mxu0 0.0
      %2749 = vmatpush1.msra.mxu0 0.0
      %2750 = vmatprep.subr.mxu0 0.0
      %2751 = vmatpush1.msra.mxu0 0.0
      %2752 = vmatprep.subr.mxu0 0.0
      %2753 = vmatpush1.msra.mxu0 0.0
      %2754 = vmatprep.subr.mxu0 0.0
      %2755 = vmatpush1.msra.mxu0 0.0
      %2756 = vmatprep.mubr.f32.mxu0 0.0
      %2757 = vmatmul.mubr.f32.gmra.mrb[0].mxu0 %v2584
      %v2758 = vpop.f32.mrb[0].mxu0
      %v2759 = vadd.f32 0.0, %v2758
      %v2760 = vpop.f32.mrb[0].mxu0
      %2761 = vmatprep.mubr.f32.mxu0 0.0
      %2762 = vmatmul.mubr.f32.gmra.mrb[0].mxu0 %v2587
      %v2763 = vpop.f32.mrb[0].mxu0
      %v2764 = vadd.f32 0.0, %v2763
      %v2765 = vpop.f32.mrb[0].mxu0
      %2766 = vmatprep.mubr.f32.mxu0 0.0
      %2767 = vmatmul.mubr.f32.gmra.mrb[0].mxu0 %v2590
      %v2768 = vpop.f32.mrb[0].mxu0
      %v2769 = vadd.f32 0.0, %v2768
      %v2770 = vpop.f32.mrb[0].mxu0
      %2771 = vmatprep.mubr.f32.mxu0 0.0
      %2772 = vmatmul.mubr.f32.gmra.mrb[0].mxu0 %v2593
      %v2773 = vpop.f32.mrb[0].mxu0
      %v2774 = vadd.f32 0.0, %v2773
      %v2775 = vpop.f32.mrb[0].mxu0
      %2776 = vdwg.mxu0
      %v2781 = vrot.slane %v2759, 1
      %v2782 = vrot.slane %v2764, 1
      %v2783 = vrot.slane %v2769, 1
      %v2784 = vrot.slane %v2774, 1
      %v2789 = vadd.f32 %v2683, %v2781
      %v2790 = vadd.f32 %v2684, %v2782
      %v2791 = vadd.f32 %v2685, %v2783
      %v2792 = vadd.f32 %v2686, %v2784
      %s2793 = scalar_lea.vmem %s5, 80
      %v2794 = vld [vmem:[%s2793] sm:$0xf]
      %v2796 = vsel %vm658, %v2794, 0
      %2798 = vmatprep.subr.mxu0 0.0
      %2799 = vmatpush1.msra.mxu0 %v2796
      %2800 = vmatprep.subr.mxu0 0.0
      %2801 = vmatpush1.msra.mxu0 0.0
      %2802 = vmatprep.subr.mxu0 0.0
      %2803 = vmatpush1.msra.mxu0 0.0
      %2804 = vmatprep.subr.mxu0 0.0
      %2805 = vmatpush1.msra.mxu0 0.0
      %2806 = vmatprep.subr.mxu0 0.0
      %2807 = vmatpush1.msra.mxu0 0.0
      %2808 = vmatprep.subr.mxu0 0.0
      %2809 = vmatpush1.msra.mxu0 0.0
      %2810 = vmatprep.subr.mxu0 0.0
      %2811 = vmatpush1.msra.mxu0 0.0
      %2812 = vmatprep.subr.mxu0 0.0
      %2813 = vmatpush1.msra.mxu0 0.0
      %2814 = vmatprep.subr.mxu0 0.0
      %2815 = vmatpush1.msra.mxu0 0.0
      %2816 = vmatprep.subr.mxu0 0.0
      %2817 = vmatpush1.msra.mxu0 0.0
      %2818 = vmatprep.subr.mxu0 0.0
      %2819 = vmatpush1.msra.mxu0 0.0
      %2820 = vmatprep.subr.mxu0 0.0
      %2821 = vmatpush1.msra.mxu0 0.0
      %2822 = vmatprep.subr.mxu0 0.0
      %2823 = vmatpush1.msra.mxu0 0.0
      %2824 = vmatprep.subr.mxu0 0.0
      %2825 = vmatpush1.msra.mxu0 0.0
      %2826 = vmatprep.subr.mxu0 0.0
      %2827 = vmatpush1.msra.mxu0 0.0
      %2828 = vmatprep.subr.mxu0 0.0
      %2829 = vmatpush1.msra.mxu0 0.0
      %2830 = vmatprep.subr.mxu0 0.0
      %2831 = vmatpush1.msra.mxu0 0.0
      %2832 = vmatprep.subr.mxu0 0.0
      %2833 = vmatpush1.msra.mxu0 0.0
      %2834 = vmatprep.subr.mxu0 0.0
      %2835 = vmatpush1.msra.mxu0 0.0
      %2836 = vmatprep.subr.mxu0 0.0
      %2837 = vmatpush1.msra.mxu0 0.0
      %2838 = vmatprep.subr.mxu0 0.0
      %2839 = vmatpush1.msra.mxu0 0.0
      %2840 = vmatprep.subr.mxu0 0.0
      %2841 = vmatpush1.msra.mxu0 0.0
      %2842 = vmatprep.subr.mxu0 0.0
      %2843 = vmatpush1.msra.mxu0 0.0
      %2844 = vmatprep.subr.mxu0 0.0
      %2845 = vmatpush1.msra.mxu0 0.0
      %2846 = vmatprep.subr.mxu0 0.0
      %2847 = vmatpush1.msra.mxu0 0.0
      %2848 = vmatprep.subr.mxu0 0.0
      %2849 = vmatpush1.msra.mxu0 0.0
      %2850 = vmatprep.subr.mxu0 0.0
      %2851 = vmatpush1.msra.mxu0 0.0
      %2852 = vmatprep.subr.mxu0 0.0
      %2853 = vmatpush1.msra.mxu0 0.0
      %2854 = vmatprep.subr.mxu0 0.0
      %2855 = vmatpush1.msra.mxu0 0.0
      %2856 = vmatprep.subr.mxu0 0.0
      %2857 = vmatpush1.msra.mxu0 0.0
      %2858 = vmatprep.subr.mxu0 0.0
      %2859 = vmatpush1.msra.mxu0 0.0
      %2860 = vmatprep.subr.mxu0 0.0
      %2861 = vmatpush1.msra.mxu0 0.0
      %2862 = vmatprep.mubr.f32.mxu0 0.0
      %2863 = vmatmul.mubr.f32.gmra.mrb[0].mxu0 %v2584
      %v2864 = vpop.f32.mrb[0].mxu0
      %v2865 = vadd.f32 0.0, %v2864
      %v2866 = vpop.f32.mrb[0].mxu0
      %2867 = vmatprep.mubr.f32.mxu0 0.0
      %2868 = vmatmul.mubr.f32.gmra.mrb[0].mxu0 %v2587
      %v2869 = vpop.f32.mrb[0].mxu0
      %v2870 = vadd.f32 0.0, %v2869
      %v2871 = vpop.f32.mrb[0].mxu0
      %2872 = vmatprep.mubr.f32.mxu0 0.0
      %2873 = vmatmul.mubr.f32.gmra.mrb[0].mxu0 %v2590
      %v2874 = vpop.f32.mrb[0].mxu0
      %v2875 = vadd.f32 0.0, %v2874
      %v2876 = vpop.f32.mrb[0].mxu0
      %2877 = vmatprep.mubr.f32.mxu0 0.0
      %2878 = vmatmul.mubr.f32.gmra.mrb[0].mxu0 %v2593
      %v2879 = vpop.f32.mrb[0].mxu0
      %v2880 = vadd.f32 0.0, %v2879
      %v2881 = vpop.f32.mrb[0].mxu0
      %2882 = vdwg.mxu0
      %v2887 = vrot.slane %v2865, 2
      %v2888 = vrot.slane %v2870, 2
      %v2889 = vrot.slane %v2875, 2
      %v2890 = vrot.slane %v2880, 2
      %v2895 = vadd.f32 %v2789, %v2887
      %v2896 = vadd.f32 %v2790, %v2888
      %v2897 = vadd.f32 %v2791, %v2889
      %v2898 = vadd.f32 %v2792, %v2890
      %v2899 = vld [vmem:[%s635] sm:$0xff]
      %v2900 = vld [vmem:[%s635 + $0x8] sm:$0xff]
      %v2901 = vld [vmem:[%s635 + $0x10] sm:$0xff]
      %v2902 = vld [vmem:[%s635 + $0x18] sm:$0xff]
      %s2903 = scalar_lea.vmem %s5, 84
      %v2904 = vld [vmem:[%s2903] sm:$0xf]
      %v2906 = vsel %vm645, %v2899, 0
      %v2909 = vsel %vm645, %v2900, 0
      %v2912 = vsel %vm645, %v2901, 0
      %v2915 = vsel %vm645, %v2902, 0
      %v2918 = vsel %vm658, %v2904, 0
      %2920 = vmatprep.subr.mxu0 0.0
      %2921 = vmatpush1.msra.mxu0 %v2918
      %2922 = vmatprep.subr.mxu0 0.0
      %2923 = vmatpush1.msra.mxu0 0.0
      %2924 = vmatprep.subr.mxu0 0.0
      %2925 = vmatpush1.msra.mxu0 0.0
      %2926 = vmatprep.subr.mxu0 0.0
      %2927 = vmatpush1.msra.mxu0 0.0
      %2928 = vmatprep.subr.mxu0 0.0
      %2929 = vmatpush1.msra.mxu0 0.0
      %2930 = vmatprep.subr.mxu0 0.0
      %2931 = vmatpush1.msra.mxu0 0.0
      %2932 = vmatprep.subr.mxu0 0.0
      %2933 = vmatpush1.msra.mxu0 0.0
      %2934 = vmatprep.subr.mxu0 0.0
      %2935 = vmatpush1.msra.mxu0 0.0
      %2936 = vmatprep.subr.mxu0 0.0
      %2937 = vmatpush1.msra.mxu0 0.0
      %2938 = vmatprep.subr.mxu0 0.0
      %2939 = vmatpush1.msra.mxu0 0.0
      %2940 = vmatprep.subr.mxu0 0.0
      %2941 = vmatpush1.msra.mxu0 0.0
      %2942 = vmatprep.subr.mxu0 0.0
      %2943 = vmatpush1.msra.mxu0 0.0
      %2944 = vmatprep.subr.mxu0 0.0
      %2945 = vmatpush1.msra.mxu0 0.0
      %2946 = vmatprep.subr.mxu0 0.0
      %2947 = vmatpush1.msra.mxu0 0.0
      %2948 = vmatprep.subr.mxu0 0.0
      %2949 = vmatpush1.msra.mxu0 0.0
      %2950 = vmatprep.subr.mxu0 0.0
      %2951 = vmatpush1.msra.mxu0 0.0
      %2952 = vmatprep.subr.mxu0 0.0
      %2953 = vmatpush1.msra.mxu0 0.0
      %2954 = vmatprep.subr.mxu0 0.0
      %2955 = vmatpush1.msra.mxu0 0.0
      %2956 = vmatprep.subr.mxu0 0.0
      %2957 = vmatpush1.msra.mxu0 0.0
      %2958 = vmatprep.subr.mxu0 0.0
      %2959 = vmatpush1.msra.mxu0 0.0
      %2960 = vmatprep.subr.mxu0 0.0
      %2961 = vmatpush1.msra.mxu0 0.0
      %2962 = vmatprep.subr.mxu0 0.0
      %2963 = vmatpush1.msra.mxu0 0.0
      %2964 = vmatprep.subr.mxu0 0.0
      %2965 = vmatpush1.msra.mxu0 0.0
      %2966 = vmatprep.subr.mxu0 0.0
      %2967 = vmatpush1.msra.mxu0 0.0
      %2968 = vmatprep.subr.mxu0 0.0
      %2969 = vmatpush1.msra.mxu0 0.0
      %2970 = vmatprep.subr.mxu0 0.0
      %2971 = vmatpush1.msra.mxu0 0.0
      %2972 = vmatprep.subr.mxu0 0.0
      %2973 = vmatpush1.msra.mxu0 0.0
      %2974 = vmatprep.subr.mxu0 0.0
      %2975 = vmatpush1.msra.mxu0 0.0
      %2976 = vmatprep.subr.mxu0 0.0
      %2977 = vmatpush1.msra.mxu0 0.0
      %2978 = vmatprep.subr.mxu0 0.0
      %2979 = vmatpush1.msra.mxu0 0.0
      %2980 = vmatprep.subr.mxu0 0.0
      %2981 = vmatpush1.msra.mxu0 0.0
      %2982 = vmatprep.subr.mxu0 0.0
      %2983 = vmatpush1.msra.mxu0 0.0
      %2984 = vmatprep.mubr.f32.mxu0 0.0
      %2985 = vmatmul.mubr.f32.gmra.mrb[0].mxu0 %v2906
      %v2986 = vpop.f32.mrb[0].mxu0
      %v2987 = vadd.f32 0.0, %v2986
      %v2988 = vpop.f32.mrb[0].mxu0
      %2989 = vmatprep.mubr.f32.mxu0 0.0
      %2990 = vmatmul.mubr.f32.gmra.mrb[0].mxu0 %v2909
      %v2991 = vpop.f32.mrb[0].mxu0
      %v2992 = vadd.f32 0.0, %v2991
      %v2993 = vpop.f32.mrb[0].mxu0
      %2994 = vmatprep.mubr.f32.mxu0 0.0
      %2995 = vmatmul.mubr.f32.gmra.mrb[0].mxu0 %v2912
      %v2996 = vpop.f32.mrb[0].mxu0
      %v2997 = vadd.f32 0.0, %v2996
      %v2998 = vpop.f32.mrb[0].mxu0
      %2999 = vmatprep.mubr.f32.mxu0 0.0
      %3000 = vmatmul.mubr.f32.gmra.mrb[0].mxu0 %v2915
      %v3001 = vpop.f32.mrb[0].mxu0
      %v3002 = vadd.f32 0.0, %v3001
      %v3003 = vpop.f32.mrb[0].mxu0
      %3004 = vdwg.mxu0
      %v3005 = vadd.f32 %v2895, %v2987
      %v3006 = vadd.f32 %v2896, %v2992
      %v3007 = vadd.f32 %v2897, %v2997
      %v3008 = vadd.f32 %v2898, %v3002
      %s3009 = scalar_lea.vmem %s5, 88
      %v3010 = vld [vmem:[%s3009] sm:$0xf]
      %v3012 = vsel %vm658, %v3010, 0
      %3014 = vmatprep.subr.mxu0 0.0
      %3015 = vmatpush1.msra.mxu0 %v3012
      %3016 = vmatprep.subr.mxu0 0.0
      %3017 = vmatpush1.msra.mxu0 0.0
      %3018 = vmatprep.subr.mxu0 0.0
      %3019 = vmatpush1.msra.mxu0 0.0
      %3020 = vmatprep.subr.mxu0 0.0
      %3021 = vmatpush1.msra.mxu0 0.0
      %3022 = vmatprep.subr.mxu0 0.0
      %3023 = vmatpush1.msra.mxu0 0.0
      %3024 = vmatprep.subr.mxu0 0.0
      %3025 = vmatpush1.msra.mxu0 0.0
      %3026 = vmatprep.subr.mxu0 0.0
      %3027 = vmatpush1.msra.mxu0 0.0
      %3028 = vmatprep.subr.mxu0 0.0
      %3029 = vmatpush1.msra.mxu0 0.0
      %3030 = vmatprep.subr.mxu0 0.0
      %3031 = vmatpush1.msra.mxu0 0.0
      %3032 = vmatprep.subr.mxu0 0.0
      %3033 = vmatpush1.msra.mxu0 0.0
      %3034 = vmatprep.subr.mxu0 0.0
      %3035 = vmatpush1.msra.mxu0 0.0
      %3036 = vmatprep.subr.mxu0 0.0
      %3037 = vmatpush1.msra.mxu0 0.0
      %3038 = vmatprep.subr.mxu0 0.0
      %3039 = vmatpush1.msra.mxu0 0.0
      %3040 = vmatprep.subr.mxu0 0.0
      %3041 = vmatpush1.msra.mxu0 0.0
      %3042 = vmatprep.subr.mxu0 0.0
      %3043 = vmatpush1.msra.mxu0 0.0
      %3044 = vmatprep.subr.mxu0 0.0
      %3045 = vmatpush1.msra.mxu0 0.0
      %3046 = vmatprep.subr.mxu0 0.0
      %3047 = vmatpush1.msra.mxu0 0.0
      %3048 = vmatprep.subr.mxu0 0.0
      %3049 = vmatpush1.msra.mxu0 0.0
      %3050 = vmatprep.subr.mxu0 0.0
      %3051 = vmatpush1.msra.mxu0 0.0
      %3052 = vmatprep.subr.mxu0 0.0
      %3053 = vmatpush1.msra.mxu0 0.0
      %3054 = vmatprep.subr.mxu0 0.0
      %3055 = vmatpush1.msra.mxu0 0.0
      %3056 = vmatprep.subr.mxu0 0.0
      %3057 = vmatpush1.msra.mxu0 0.0
      %3058 = vmatprep.subr.mxu0 0.0
      %3059 = vmatpush1.msra.mxu0 0.0
      %3060 = vmatprep.subr.mxu0 0.0
      %3061 = vmatpush1.msra.mxu0 0.0
      %3062 = vmatprep.subr.mxu0 0.0
      %3063 = vmatpush1.msra.mxu0 0.0
      %3064 = vmatprep.subr.mxu0 0.0
      %3065 = vmatpush1.msra.mxu0 0.0
      %3066 = vmatprep.subr.mxu0 0.0
      %3067 = vmatpush1.msra.mxu0 0.0
      %3068 = vmatprep.subr.mxu0 0.0
      %3069 = vmatpush1.msra.mxu0 0.0
      %3070 = vmatprep.subr.mxu0 0.0
      %3071 = vmatpush1.msra.mxu0 0.0
      %3072 = vmatprep.subr.mxu0 0.0
      %3073 = vmatpush1.msra.mxu0 0.0
      %3074 = vmatprep.subr.mxu0 0.0
      %3075 = vmatpush1.msra.mxu0 0.0
      %3076 = vmatprep.subr.mxu0 0.0
      %3077 = vmatpush1.msra.mxu0 0.0
      %3078 = vmatprep.mubr.f32.mxu0 0.0
      %3079 = vmatmul.mubr.f32.gmra.mrb[0].mxu0 %v2906
      %v3080 = vpop.f32.mrb[0].mxu0
      %v3081 = vadd.f32 0.0, %v3080
      %v3082 = vpop.f32.mrb[0].mxu0
      %3083 = vmatprep.mubr.f32.mxu0 0.0
      %3084 = vmatmul.mubr.f32.gmra.mrb[0].mxu0 %v2909
      %v3085 = vpop.f32.mrb[0].mxu0
      %v3086 = vadd.f32 0.0, %v3085
      %v3087 = vpop.f32.mrb[0].mxu0
      %3088 = vmatprep.mubr.f32.mxu0 0.0
      %3089 = vmatmul.mubr.f32.gmra.mrb[0].mxu0 %v2912
      %v3090 = vpop.f32.mrb[0].mxu0
      %v3091 = vadd.f32 0.0, %v3090
      %v3092 = vpop.f32.mrb[0].mxu0
      %3093 = vmatprep.mubr.f32.mxu0 0.0
      %3094 = vmatmul.mubr.f32.gmra.mrb[0].mxu0 %v2915
      %v3095 = vpop.f32.mrb[0].mxu0
      %v3096 = vadd.f32 0.0, %v3095
      %v3097 = vpop.f32.mrb[0].mxu0
      %3098 = vdwg.mxu0
      %v3103 = vrot.slane %v3081, 1
      %v3104 = vrot.slane %v3086, 1
      %v3105 = vrot.slane %v3091, 1
      %v3106 = vrot.slane %v3096, 1
      %v3111 = vadd.f32 %v3005, %v3103
      %v3112 = vadd.f32 %v3006, %v3104
      %v3113 = vadd.f32 %v3007, %v3105
      %v3114 = vadd.f32 %v3008, %v3106
      %s3115 = scalar_lea.vmem %s5, 92
      %v3116 = vld [vmem:[%s3115] sm:$0xf]
      %v3118 = vsel %vm658, %v3116, 0
      %3120 = vmatprep.subr.mxu0 0.0
      %3121 = vmatpush1.msra.mxu0 %v3118
      %3122 = vmatprep.subr.mxu0 0.0
      %3123 = vmatpush1.msra.mxu0 0.0
      %3124 = vmatprep.subr.mxu0 0.0
      %3125 = vmatpush1.msra.mxu0 0.0
      %3126 = vmatprep.subr.mxu0 0.0
      %3127 = vmatpush1.msra.mxu0 0.0
      %3128 = vmatprep.subr.mxu0 0.0
      %3129 = vmatpush1.msra.mxu0 0.0
      %3130 = vmatprep.subr.mxu0 0.0
      %3131 = vmatpush1.msra.mxu0 0.0
      %3132 = vmatprep.subr.mxu0 0.0
      %3133 = vmatpush1.msra.mxu0 0.0
      %3134 = vmatprep.subr.mxu0 0.0
      %3135 = vmatpush1.msra.mxu0 0.0
      %3136 = vmatprep.subr.mxu0 0.0
      %3137 = vmatpush1.msra.mxu0 0.0
      %3138 = vmatprep.subr.mxu0 0.0
      %3139 = vmatpush1.msra.mxu0 0.0
      %3140 = vmatprep.subr.mxu0 0.0
      %3141 = vmatpush1.msra.mxu0 0.0
      %3142 = vmatprep.subr.mxu0 0.0
      %3143 = vmatpush1.msra.mxu0 0.0
      %3144 = vmatprep.subr.mxu0 0.0
      %3145 = vmatpush1.msra.mxu0 0.0
      %3146 = vmatprep.subr.mxu0 0.0
      %3147 = vmatpush1.msra.mxu0 0.0
      %3148 = vmatprep.subr.mxu0 0.0
      %3149 = vmatpush1.msra.mxu0 0.0
      %3150 = vmatprep.subr.mxu0 0.0
      %3151 = vmatpush1.msra.mxu0 0.0
      %3152 = vmatprep.subr.mxu0 0.0
      %3153 = vmatpush1.msra.mxu0 0.0
      %3154 = vmatprep.subr.mxu0 0.0
      %3155 = vmatpush1.msra.mxu0 0.0
      %3156 = vmatprep.subr.mxu0 0.0
      %3157 = vmatpush1.msra.mxu0 0.0
      %3158 = vmatprep.subr.mxu0 0.0
      %3159 = vmatpush1.msra.mxu0 0.0
      %3160 = vmatprep.subr.mxu0 0.0
      %3161 = vmatpush1.msra.mxu0 0.0
      %3162 = vmatprep.subr.mxu0 0.0
      %3163 = vmatpush1.msra.mxu0 0.0
      %3164 = vmatprep.subr.mxu0 0.0
      %3165 = vmatpush1.msra.mxu0 0.0
      %3166 = vmatprep.subr.mxu0 0.0
      %3167 = vmatpush1.msra.mxu0 0.0
      %3168 = vmatprep.subr.mxu0 0.0
      %3169 = vmatpush1.msra.mxu0 0.0
      %3170 = vmatprep.subr.mxu0 0.0
      %3171 = vmatpush1.msra.mxu0 0.0
      %3172 = vmatprep.subr.mxu0 0.0
      %3173 = vmatpush1.msra.mxu0 0.0
      %3174 = vmatprep.subr.mxu0 0.0
      %3175 = vmatpush1.msra.mxu0 0.0
      %3176 = vmatprep.subr.mxu0 0.0
      %3177 = vmatpush1.msra.mxu0 0.0
      %3178 = vmatprep.subr.mxu0 0.0
      %3179 = vmatpush1.msra.mxu0 0.0
      %3180 = vmatprep.subr.mxu0 0.0
      %3181 = vmatpush1.msra.mxu0 0.0
      %3182 = vmatprep.subr.mxu0 0.0
      %3183 = vmatpush1.msra.mxu0 0.0
      %3184 = vmatprep.mubr.f32.mxu0 0.0
      %3185 = vmatmul.mubr.f32.gmra.mrb[0].mxu0 %v2906
      %v3186 = vpop.f32.mrb[0].mxu0
      %v3187 = vadd.f32 0.0, %v3186
      %v3188 = vpop.f32.mrb[0].mxu0
      %3189 = vmatprep.mubr.f32.mxu0 0.0
      %3190 = vmatmul.mubr.f32.gmra.mrb[0].mxu0 %v2909
      %v3191 = vpop.f32.mrb[0].mxu0
      %v3192 = vadd.f32 0.0, %v3191
      %v3193 = vpop.f32.mrb[0].mxu0
      %3194 = vmatprep.mubr.f32.mxu0 0.0
      %3195 = vmatmul.mubr.f32.gmra.mrb[0].mxu0 %v2912
      %v3196 = vpop.f32.mrb[0].mxu0
      %v3197 = vadd.f32 0.0, %v3196
      %v3198 = vpop.f32.mrb[0].mxu0
      %3199 = vmatprep.mubr.f32.mxu0 0.0
      %3200 = vmatmul.mubr.f32.gmra.mrb[0].mxu0 %v2915
      %v3201 = vpop.f32.mrb[0].mxu0
      %v3202 = vadd.f32 0.0, %v3201
      %v3203 = vpop.f32.mrb[0].mxu0
      %3204 = vdwg.mxu0
      %v3209 = vrot.slane %v3187, 2
      %v3210 = vrot.slane %v3192, 2
      %v3211 = vrot.slane %v3197, 2
      %v3212 = vrot.slane %v3202, 2
      %v3217 = vadd.f32 %v3111, %v3209
      %v3218 = vadd.f32 %v3112, %v3210
      %v3219 = vadd.f32 %v3113, %v3211
      %v3220 = vadd.f32 %v3114, %v3212
      %s3221 = scalar_lea.vmem [#allocation2], 112
      %v3222 = vld [vmem:[%s3221] sm:$0xff]
      %v3223 = vld [vmem:[%s3221 + $0x8] sm:$0xff]
      %v3224 = vld [vmem:[%s3221 + $0x10] sm:$0xff]
      %v3225 = vld [vmem:[%s3221 + $0x18] sm:$0xff]
      %s3226 = scalar_lea.vmem %s5, 96
      %v3227 = vld [vmem:[%s3226] sm:$0xf]
      %v3229 = vsel %vm645, %v3222, 0
      %v3232 = vsel %vm645, %v3223, 0
      %v3235 = vsel %vm645, %v3224, 0
      %v3238 = vsel %vm645, %v3225, 0
      %v3241 = vsel %vm658, %v3227, 0
      %3243 = vmatprep.subr.mxu0 0.0
      %3244 = vmatpush1.msra.mxu0 %v3241
      %3245 = vmatprep.subr.mxu0 0.0
      %3246 = vmatpush1.msra.mxu0 0.0
      %3247 = vmatprep.subr.mxu0 0.0
      %3248 = vmatpush1.msra.mxu0 0.0
      %3249 = vmatprep.subr.mxu0 0.0
      %3250 = vmatpush1.msra.mxu0 0.0
      %3251 = vmatprep.subr.mxu0 0.0
      %3252 = vmatpush1.msra.mxu0 0.0
      %3253 = vmatprep.subr.mxu0 0.0
      %3254 = vmatpush1.msra.mxu0 0.0
      %3255 = vmatprep.subr.mxu0 0.0
      %3256 = vmatpush1.msra.mxu0 0.0
      %3257 = vmatprep.subr.mxu0 0.0
      %3258 = vmatpush1.msra.mxu0 0.0
      %3259 = vmatprep.subr.mxu0 0.0
      %3260 = vmatpush1.msra.mxu0 0.0
      %3261 = vmatprep.subr.mxu0 0.0
      %3262 = vmatpush1.msra.mxu0 0.0
      %3263 = vmatprep.subr.mxu0 0.0
      %3264 = vmatpush1.msra.mxu0 0.0
      %3265 = vmatprep.subr.mxu0 0.0
      %3266 = vmatpush1.msra.mxu0 0.0
      %3267 = vmatprep.subr.mxu0 0.0
      %3268 = vmatpush1.msra.mxu0 0.0
      %3269 = vmatprep.subr.mxu0 0.0
      %3270 = vmatpush1.msra.mxu0 0.0
      %3271 = vmatprep.subr.mxu0 0.0
      %3272 = vmatpush1.msra.mxu0 0.0
      %3273 = vmatprep.subr.mxu0 0.0
      %3274 = vmatpush1.msra.mxu0 0.0
      %3275 = vmatprep.subr.mxu0 0.0
      %3276 = vmatpush1.msra.mxu0 0.0
      %3277 = vmatprep.subr.mxu0 0.0
      %3278 = vmatpush1.msra.mxu0 0.0
      %3279 = vmatprep.subr.mxu0 0.0
      %3280 = vmatpush1.msra.mxu0 0.0
      %3281 = vmatprep.subr.mxu0 0.0
      %3282 = vmatpush1.msra.mxu0 0.0
      %3283 = vmatprep.subr.mxu0 0.0
      %3284 = vmatpush1.msra.mxu0 0.0
      %3285 = vmatprep.subr.mxu0 0.0
      %3286 = vmatpush1.msra.mxu0 0.0
      %3287 = vmatprep.subr.mxu0 0.0
      %3288 = vmatpush1.msra.mxu0 0.0
      %3289 = vmatprep.subr.mxu0 0.0
      %3290 = vmatpush1.msra.mxu0 0.0
      %3291 = vmatprep.subr.mxu0 0.0
      %3292 = vmatpush1.msra.mxu0 0.0
      %3293 = vmatprep.subr.mxu0 0.0
      %3294 = vmatpush1.msra.mxu0 0.0
      %3295 = vmatprep.subr.mxu0 0.0
      %3296 = vmatpush1.msra.mxu0 0.0
      %3297 = vmatprep.subr.mxu0 0.0
      %3298 = vmatpush1.msra.mxu0 0.0
      %3299 = vmatprep.subr.mxu0 0.0
      %3300 = vmatpush1.msra.mxu0 0.0
      %3301 = vmatprep.subr.mxu0 0.0
      %3302 = vmatpush1.msra.mxu0 0.0
      %3303 = vmatprep.subr.mxu0 0.0
      %3304 = vmatpush1.msra.mxu0 0.0
      %3305 = vmatprep.subr.mxu0 0.0
      %3306 = vmatpush1.msra.mxu0 0.0
      %3307 = vmatprep.mubr.f32.mxu0 0.0
      %3308 = vmatmul.mubr.f32.gmra.mrb[0].mxu0 %v3229
      %v3309 = vpop.f32.mrb[0].mxu0
      %v3310 = vadd.f32 0.0, %v3309
      %v3311 = vpop.f32.mrb[0].mxu0
      %3312 = vmatprep.mubr.f32.mxu0 0.0
      %3313 = vmatmul.mubr.f32.gmra.mrb[0].mxu0 %v3232
      %v3314 = vpop.f32.mrb[0].mxu0
      %v3315 = vadd.f32 0.0, %v3314
      %v3316 = vpop.f32.mrb[0].mxu0
      %3317 = vmatprep.mubr.f32.mxu0 0.0
      %3318 = vmatmul.mubr.f32.gmra.mrb[0].mxu0 %v3235
      %v3319 = vpop.f32.mrb[0].mxu0
      %v3320 = vadd.f32 0.0, %v3319
      %v3321 = vpop.f32.mrb[0].mxu0
      %3322 = vmatprep.mubr.f32.mxu0 0.0
      %3323 = vmatmul.mubr.f32.gmra.mrb[0].mxu0 %v3238
      %v3324 = vpop.f32.mrb[0].mxu0
      %v3325 = vadd.f32 0.0, %v3324
      %v3326 = vpop.f32.mrb[0].mxu0
      %3327 = vdwg.mxu0
      %v3328 = vadd.f32 %v3217, %v3310
      %v3329 = vadd.f32 %v3218, %v3315
      %v3330 = vadd.f32 %v3219, %v3320
      %v3331 = vadd.f32 %v3220, %v3325
      %s3332 = scalar_lea.vmem %s5, 100
      %v3333 = vld [vmem:[%s3332] sm:$0xf]
      %v3335 = vsel %vm658, %v3333, 0
      %3337 = vmatprep.subr.mxu0 0.0
      %3338 = vmatpush1.msra.mxu0 %v3335
      %3339 = vmatprep.subr.mxu0 0.0
      %3340 = vmatpush1.msra.mxu0 0.0
      %3341 = vmatprep.subr.mxu0 0.0
      %3342 = vmatpush1.msra.mxu0 0.0
      %3343 = vmatprep.subr.mxu0 0.0
      %3344 = vmatpush1.msra.mxu0 0.0
      %3345 = vmatprep.subr.mxu0 0.0
      %3346 = vmatpush1.msra.mxu0 0.0
      %3347 = vmatprep.subr.mxu0 0.0
      %3348 = vmatpush1.msra.mxu0 0.0
      %3349 = vmatprep.subr.mxu0 0.0
      %3350 = vmatpush1.msra.mxu0 0.0
      %3351 = vmatprep.subr.mxu0 0.0
      %3352 = vmatpush1.msra.mxu0 0.0
      %3353 = vmatprep.subr.mxu0 0.0
      %3354 = vmatpush1.msra.mxu0 0.0
      %3355 = vmatprep.subr.mxu0 0.0
      %3356 = vmatpush1.msra.mxu0 0.0
      %3357 = vmatprep.subr.mxu0 0.0
      %3358 = vmatpush1.msra.mxu0 0.0
      %3359 = vmatprep.subr.mxu0 0.0
      %3360 = vmatpush1.msra.mxu0 0.0
      %3361 = vmatprep.subr.mxu0 0.0
      %3362 = vmatpush1.msra.mxu0 0.0
      %3363 = vmatprep.subr.mxu0 0.0
      %3364 = vmatpush1.msra.mxu0 0.0
      %3365 = vmatprep.subr.mxu0 0.0
      %3366 = vmatpush1.msra.mxu0 0.0
      %3367 = vmatprep.subr.mxu0 0.0
      %3368 = vmatpush1.msra.mxu0 0.0
      %3369 = vmatprep.subr.mxu0 0.0
      %3370 = vmatpush1.msra.mxu0 0.0
      %3371 = vmatprep.subr.mxu0 0.0
      %3372 = vmatpush1.msra.mxu0 0.0
      %3373 = vmatprep.subr.mxu0 0.0
      %3374 = vmatpush1.msra.mxu0 0.0
      %3375 = vmatprep.subr.mxu0 0.0
      %3376 = vmatpush1.msra.mxu0 0.0
      %3377 = vmatprep.subr.mxu0 0.0
      %3378 = vmatpush1.msra.mxu0 0.0
      %3379 = vmatprep.subr.mxu0 0.0
      %3380 = vmatpush1.msra.mxu0 0.0
      %3381 = vmatprep.subr.mxu0 0.0
      %3382 = vmatpush1.msra.mxu0 0.0
      %3383 = vmatprep.subr.mxu0 0.0
      %3384 = vmatpush1.msra.mxu0 0.0
      %3385 = vmatprep.subr.mxu0 0.0
      %3386 = vmatpush1.msra.mxu0 0.0
      %3387 = vmatprep.subr.mxu0 0.0
      %3388 = vmatpush1.msra.mxu0 0.0
      %3389 = vmatprep.subr.mxu0 0.0
      %3390 = vmatpush1.msra.mxu0 0.0
      %3391 = vmatprep.subr.mxu0 0.0
      %3392 = vmatpush1.msra.mxu0 0.0
      %3393 = vmatprep.subr.mxu0 0.0
      %3394 = vmatpush1.msra.mxu0 0.0
      %3395 = vmatprep.subr.mxu0 0.0
      %3396 = vmatpush1.msra.mxu0 0.0
      %3397 = vmatprep.subr.mxu0 0.0
      %3398 = vmatpush1.msra.mxu0 0.0
      %3399 = vmatprep.subr.mxu0 0.0
      %3400 = vmatpush1.msra.mxu0 0.0
      %3401 = vmatprep.mubr.f32.mxu0 0.0
      %3402 = vmatmul.mubr.f32.gmra.mrb[0].mxu0 %v3229
      %v3403 = vpop.f32.mrb[0].mxu0
      %v3404 = vadd.f32 0.0, %v3403
      %v3405 = vpop.f32.mrb[0].mxu0
      %3406 = vmatprep.mubr.f32.mxu0 0.0
      %3407 = vmatmul.mubr.f32.gmra.mrb[0].mxu0 %v3232
      %v3408 = vpop.f32.mrb[0].mxu0
      %v3409 = vadd.f32 0.0, %v3408
      %v3410 = vpop.f32.mrb[0].mxu0
      %3411 = vmatprep.mubr.f32.mxu0 0.0
      %3412 = vmatmul.mubr.f32.gmra.mrb[0].mxu0 %v3235
      %v3413 = vpop.f32.mrb[0].mxu0
      %v3414 = vadd.f32 0.0, %v3413
      %v3415 = vpop.f32.mrb[0].mxu0
      %3416 = vmatprep.mubr.f32.mxu0 0.0
      %3417 = vmatmul.mubr.f32.gmra.mrb[0].mxu0 %v3238
      %v3418 = vpop.f32.mrb[0].mxu0
      %v3419 = vadd.f32 0.0, %v3418
      %v3420 = vpop.f32.mrb[0].mxu0
      %3421 = vdwg.mxu0
      %v3426 = vrot.slane %v3404, 1
      %v3427 = vrot.slane %v3409, 1
      %v3428 = vrot.slane %v3414, 1
      %v3429 = vrot.slane %v3419, 1
      %v3434 = vadd.f32 %v3328, %v3426
      %v3435 = vadd.f32 %v3329, %v3427
      %v3436 = vadd.f32 %v3330, %v3428
      %v3437 = vadd.f32 %v3331, %v3429
      %s3438 = scalar_lea.vmem %s5, 104
      %v3439 = vld [vmem:[%s3438] sm:$0xf]
      %v3441 = vsel %vm658, %v3439, 0
      %3443 = vmatprep.subr.mxu0 0.0
      %3444 = vmatpush1.msra.mxu0 %v3441
      %3445 = vmatprep.subr.mxu0 0.0
      %3446 = vmatpush1.msra.mxu0 0.0
      %3447 = vmatprep.subr.mxu0 0.0
      %3448 = vmatpush1.msra.mxu0 0.0
      %3449 = vmatprep.subr.mxu0 0.0
      %3450 = vmatpush1.msra.mxu0 0.0
      %3451 = vmatprep.subr.mxu0 0.0
      %3452 = vmatpush1.msra.mxu0 0.0
      %3453 = vmatprep.subr.mxu0 0.0
      %3454 = vmatpush1.msra.mxu0 0.0
      %3455 = vmatprep.subr.mxu0 0.0
      %3456 = vmatpush1.msra.mxu0 0.0
      %3457 = vmatprep.subr.mxu0 0.0
      %3458 = vmatpush1.msra.mxu0 0.0
      %3459 = vmatprep.subr.mxu0 0.0
      %3460 = vmatpush1.msra.mxu0 0.0
      %3461 = vmatprep.subr.mxu0 0.0
      %3462 = vmatpush1.msra.mxu0 0.0
      %3463 = vmatprep.subr.mxu0 0.0
      %3464 = vmatpush1.msra.mxu0 0.0
      %3465 = vmatprep.subr.mxu0 0.0
      %3466 = vmatpush1.msra.mxu0 0.0
      %3467 = vmatprep.subr.mxu0 0.0
      %3468 = vmatpush1.msra.mxu0 0.0
      %3469 = vmatprep.subr.mxu0 0.0
      %3470 = vmatpush1.msra.mxu0 0.0
      %3471 = vmatprep.subr.mxu0 0.0
      %3472 = vmatpush1.msra.mxu0 0.0
      %3473 = vmatprep.subr.mxu0 0.0
      %3474 = vmatpush1.msra.mxu0 0.0
      %3475 = vmatprep.subr.mxu0 0.0
      %3476 = vmatpush1.msra.mxu0 0.0
      %3477 = vmatprep.subr.mxu0 0.0
      %3478 = vmatpush1.msra.mxu0 0.0
      %3479 = vmatprep.subr.mxu0 0.0
      %3480 = vmatpush1.msra.mxu0 0.0
      %3481 = vmatprep.subr.mxu0 0.0
      %3482 = vmatpush1.msra.mxu0 0.0
      %3483 = vmatprep.subr.mxu0 0.0
      %3484 = vmatpush1.msra.mxu0 0.0
      %3485 = vmatprep.subr.mxu0 0.0
      %3486 = vmatpush1.msra.mxu0 0.0
      %3487 = vmatprep.subr.mxu0 0.0
      %3488 = vmatpush1.msra.mxu0 0.0
      %3489 = vmatprep.subr.mxu0 0.0
      %3490 = vmatpush1.msra.mxu0 0.0
      %3491 = vmatprep.subr.mxu0 0.0
      %3492 = vmatpush1.msra.mxu0 0.0
      %3493 = vmatprep.subr.mxu0 0.0
      %3494 = vmatpush1.msra.mxu0 0.0
      %3495 = vmatprep.subr.mxu0 0.0
      %3496 = vmatpush1.msra.mxu0 0.0
      %3497 = vmatprep.subr.mxu0 0.0
      %3498 = vmatpush1.msra.mxu0 0.0
      %3499 = vmatprep.subr.mxu0 0.0
      %3500 = vmatpush1.msra.mxu0 0.0
      %3501 = vmatprep.subr.mxu0 0.0
      %3502 = vmatpush1.msra.mxu0 0.0
      %3503 = vmatprep.subr.mxu0 0.0
      %3504 = vmatpush1.msra.mxu0 0.0
      %3505 = vmatprep.subr.mxu0 0.0
      %3506 = vmatpush1.msra.mxu0 0.0
      %3507 = vmatprep.mubr.f32.mxu0 0.0
      %3508 = vmatmul.mubr.f32.gmra.mrb[0].mxu0 %v3229
      %v3509 = vpop.f32.mrb[0].mxu0
      %v3510 = vadd.f32 0.0, %v3509
      %v3511 = vpop.f32.mrb[0].mxu0
      %3512 = vmatprep.mubr.f32.mxu0 0.0
      %3513 = vmatmul.mubr.f32.gmra.mrb[0].mxu0 %v3232
      %v3514 = vpop.f32.mrb[0].mxu0
      %v3515 = vadd.f32 0.0, %v3514
      %v3516 = vpop.f32.mrb[0].mxu0
      %3517 = vmatprep.mubr.f32.mxu0 0.0
      %3518 = vmatmul.mubr.f32.gmra.mrb[0].mxu0 %v3235
      %v3519 = vpop.f32.mrb[0].mxu0
      %v3520 = vadd.f32 0.0, %v3519
      %v3521 = vpop.f32.mrb[0].mxu0
      %3522 = vmatprep.mubr.f32.mxu0 0.0
      %3523 = vmatmul.mubr.f32.gmra.mrb[0].mxu0 %v3238
      %v3524 = vpop.f32.mrb[0].mxu0
      %v3525 = vadd.f32 0.0, %v3524
      %v3526 = vpop.f32.mrb[0].mxu0
      %3527 = vdwg.mxu0
      %v3532 = vrot.slane %v3510, 2
      %v3533 = vrot.slane %v3515, 2
      %v3534 = vrot.slane %v3520, 2
      %v3535 = vrot.slane %v3525, 2
      %v3540 = vadd.f32 %v3434, %v3532
      %v3541 = vadd.f32 %v3435, %v3533
      %v3542 = vadd.f32 %v3436, %v3534
      %v3543 = vadd.f32 %v3437, %v3535
      %v3544 = vld [vmem:[%s6] sm:$0x1]
      %v3546 = vlaneseq
      %v3547 = vshrl.u32 %v3546, 7
      %v3548 = vsub.s32 0, %v3547
      %v3549 = vrot.slane %v3544, %v3548
      %v3551 = vadd.f32 %v3540, %v3549
      %v3552 = vadd.f32 %v3541, %v3549
      %v3553 = vadd.f32 %v3542, %v3549
      %v3554 = vadd.f32 %v3543, %v3549
      %3555 = vst [vmem:[%s545] sm:$0xf] %v3551
      %3556 = vst [vmem:[%s545 + $0x4] sm:$0xf] %v3552
      %3557 = vst [vmem:[%s545 + $0x8] sm:$0xf] %v3553
      %3558 = vst [vmem:[%s545 + $0xc] sm:$0xf] %v3554
      %v3559 = vld [vmem:[%s548] sm:$0x1]
      %v3560 = vsel %vm658, %v3551, 0.0
      %v3561 = vsel %vm658, %v3552, 0.0
      %v3562 = vadd.f32 %v3560, %v3561
      %v3563 = vsel %vm658, %v3553, 0.0
      %v3564 = vadd.f32 %v3562, %v3563
      %v3565 = vsel %vm658, %v3554, 0.0
      %v3566 = vadd.f32 %v3564, %v3565
      %v3567 = vrot.slane %v3566, 4
      %v3568 = vadd.f32 %v3566, %v3567
      %v3569 = vrot.slane %v3568, 2
      %v3570 = vadd.f32 %v3568, %v3569
      %v3571 = vrot.slane %v3570, 1
      %v3572 = vadd.f32 %v3570, %v3571
      %v3573 = vadd.f32 %v3559, %v3572
      %3574 = vst [vmem:[%s548] sm:$0x1] %v3573
      %v3575 = vld [vmem:[%s551] sm:$0x1]
      %v3576 = vmul.f32 %v3551, %v3551
      %v3577 = vmul.f32 %v3552, %v3552
      %v3578 = vmul.f32 %v3553, %v3553
      %v3579 = vmul.f32 %v3554, %v3554
      %v3580 = vsel %vm658, %v3576, 0.0
      %v3581 = vsel %vm658, %v3577, 0.0
      %v3582 = vadd.f32 %v3580, %v3581
      %v3583 = vsel %vm658, %v3578, 0.0
      %v3584 = vadd.f32 %v3582, %v3583
      %v3585 = vsel %vm658, %v3579, 0.0
      %v3586 = vadd.f32 %v3584, %v3585
      %v3587 = vrot.slane %v3586, 4
      %v3588 = vadd.f32 %v3586, %v3587
      %v3589 = vrot.slane %v3588, 2
      %v3590 = vadd.f32 %v3588, %v3589
      %v3591 = vrot.slane %v3590, 1
      %v3592 = vadd.f32 %v3590, %v3591
      %v3593 = vadd.f32 %v3575, %v3592
      %3594 = vst [vmem:[%s551] sm:$0x1] %v3593
      %p3595 = scmp.lt.s32.totalorder %s25, 1
      %s3596 = scalar_select %p3595, %s25, 1
      %p3597 = scmp.lt.s32.totalorder %s26, 3
      %s3598 = scalar_select %p3597, %s26, 3
      %s3599 = smul.addr %s3598, 4
      %s3600 = smul.addr %s3596, 16
      %s3601 = sadd.s32 %s3599, %s3600
      %s3602 = smul.addr %s3601, 4
      %s3603 = scalar_lea.vmem %s7, %s3602
      %p3604 = scmp.lt.s32.totalorder %s25, 1
      %s3605 = scalar_select %p3604, %s25, 1
      %s3606 = scalar_lea.vmem %s8, %s3605
      %p3607 = scmp.lt.s32.totalorder %s25, 1
      %s3608 = scalar_select %p3607, %s25, 1
      %s3609 = scalar_lea.vmem %s9, %s3608
      // Predicated region
      $region53: #{down_forward.4} parent=47 // pred_check
        %p3610 = pneg %p249
      $region54: #{down_forward.4} parent=47 // pred_check_branch
        %3612 = sbr.rel (%p3610) target = $region56
      $region55: #{down_forward.4} parent=47 // pred_region
        _
      $region56: #{down_forward.4} parent=47 // pred_fallthru
        _
      // Predicated region
      $region57: #{down_forward.4} parent=47 // pred_check
        %p3613 = pneg %p275
      $region58: #{down_forward.4} parent=47 // pred_check_branch
        %3615 = sbr.rel (%p3613) target = $region60
      $region59: #{down_forward.4} parent=47 // pred_region
        _
      $region60: #{down_forward.4} parent=47 // pred_fallthru
        _
      // Predicated region
      $region61: #{down_forward.4} parent=47 // pred_check
        %p3616 = pneg %p301
      $region62: #{down_forward.4} parent=47 // pred_check_branch
        %3618 = sbr.rel (%p3616) target = $region64
      $region63: #{down_forward.4} parent=47 // pred_region
        _
      $region64: #{down_forward.4} parent=47 // pred_fallthru
        _
    $region48: #{down_forward.4} parent=5 // pred_fallthru
      _
    %p3619 = scmp.le.s32.totalorder 2, %s16
    // Predicated region
    $region65: #{down_forward.4} parent=5 // pred_check
      %p3620 = pneg %p3619
    $region66: #{down_forward.4} parent=5 // pred_check_branch
      %3622 = sbr.rel (%p3620) target = $region68
    $region67: #{down_forward.4} parent=5 // pred_region
      %s3623 = ssub.s32 %s16, 2
      // Predicated region
      $region69: #{down_forward.4} parent=67 // pred_check
        %p3624 = pneg %p255
      $region70: #{down_forward.4} parent=67 // pred_check_branch
        %3626 = sbr.rel (%p3624) target = $region72
      $region71: #{down_forward.4} parent=67 // pred_region
        %p3627 = scmp.lt.s32.totalorder %s27, 1
        %s3628 = scalar_select %p3627, %s27, 1
        %p3629 = scmp.lt.s32.totalorder %s28, 3
        %s3630 = scalar_select %p3629, %s28, 3
        %s3631 = smul.addr %s3630, 4
        %s3632 = smul.addr %s3628, 16
        %s3633 = sadd.s32 %s3631, %s3632
        %s3634 = smul.addr %s3633, 4
        %s3635 = scalar_lea.vmem %s7, %s3634
      $region72: #{down_forward.4} parent=67 // pred_fallthru
        _
      // Predicated region
      $region73: #{down_forward.4} parent=67 // pred_check
        %p3636 = pneg %p281
      $region74: #{down_forward.4} parent=67 // pred_check_branch
        %3638 = sbr.rel (%p3636) target = $region76
      $region75: #{down_forward.4} parent=67 // pred_region
        %p3639 = scmp.lt.s32.totalorder %s27, 1
        %s3640 = scalar_select %p3639, %s27, 1
        %s3641 = scalar_lea.vmem %s8, %s3640
      $region76: #{down_forward.4} parent=67 // pred_fallthru
        _
      // Predicated region
      $region77: #{down_forward.4} parent=67 // pred_check
        %p3642 = pneg %p307
      $region78: #{down_forward.4} parent=67 // pred_check_branch
        %3644 = sbr.rel (%p3642) target = $region80
      $region79: #{down_forward.4} parent=67 // pred_region
        %p3645 = scmp.lt.s32.totalorder %s27, 1
        %s3646 = scalar_select %p3645, %s27, 1
        %s3647 = scalar_lea.vmem %s9, %s3646
      $region80: #{down_forward.4} parent=67 // pred_fallthru
        _
    $region68: #{down_forward.4} parent=5 // pred_fallthru
      _
  $region6: #{down_forward.4} parent=0 // loop_footer
    %s20 = sadd.s32 1, %s16
  $region7: #{down_forward.4} parent=0 // loop_footer_branch
    %15 = sbr.rel target = $region3
  $region8: #{down_forward.4} parent=0 // loop_exit
    _

// kernel: down_forward.5
$region0: #{down_forward.5}
  #allocation0 [shape = 'u32[]', space=smem, size = 0x4, offset = 0x4, fixed_abs, tag = 'smem constant byte address 0x4 - core index']
  #allocation1 [shape = 'u32[144,128]{1,0:T(1,128)}', space=vmem, size = 0x12000, scoped, tag = 'internal scratch']
  #allocation2 [shape = 'f32[3,6,8,128]{3,2,1,0:T(8,128)}', space=vmem, size = 0x12000, scoped, tag = 'scratch operand']
  %s0 = inlined_call_operand.vmem [shape: f32[2,4,4,4,128], index: 0, kind: input, shape index: {}, may-alias: {0,1,2}]
  %s1 = inlined_call_operand.vmem [shape: f32[2,4,4,4,128], index: 1, kind: input, shape index: {}, may-alias: {0,1,2}]
  %s2 = inlined_call_operand.vmem [shape: f32[2,4,4,4,128], index: 2, kind: input, shape index: {}, may-alias: {0,1,2}]
  %s3 = inlined_call_operand.vmem [shape: f32[1,128], index: 3, kind: input, shape index: {}]
  %s4 = inlined_call_operand.vmem [shape: f32[1,128], index: 4, kind: input, shape index: {}]
  %s5 = inlined_call_operand.vmem [shape: f32[3,3,3,128,128], index: 5, kind: input, shape index: {}]
  %s6 = inlined_call_operand.vmem [shape: f32[1,128], index: 6, kind: input, shape index: {}]
  %s7 = inlined_call_operand.vmem [shape: f32[2,4,4,4,128], index: 7, kind: output, shape index: {0}]
  %s8 = inlined_call_operand.vmem [shape: f32[2,1,128], index: 8, kind: output, shape index: {1}]
  %s9 = inlined_call_operand.vmem [shape: f32[2,1,128], index: 9, kind: output, shape index: {2}]
  %10 = xla_tuple %s7, %s8, %s9
  %s11 = sld [smem:[#allocation0]]
  $region81: #{down_forward.5} parent=0
    _
  %s13 = ssub.s32 1, %s11
  %s14 = scalar_select 0, %s13, %s11
  loop: start=0, step=1, limit=10
  $region2: #{down_forward.5} parent=0 // loop_pre_header
    _
  $region3: #{down_forward.5} parent=0 // loop_header
    %s16 = sphi 0, %s20
    %p17 = scmp.ge.s32.totalorder %s16, 10
    %s23 = sphi 0, %s35
    %s24 = sphi 0, %s31
    %s25 = sphi 0, %s23
    %s26 = sphi 0, %s24
    %s27 = sphi 0, %s25
    %s28 = sphi 0, %s26
    %s50 = sphi 0, %s52
    %s53 = sphi 0, %s50
    %s54 = sphi 0, %s53
    %s70 = sphi 0, %s54
    %s86 = sphi 0, %s88
    %s89 = sphi 0, %s86
    %s90 = sphi 0, %s89
    %s106 = sphi 0, %s90
    %s124 = sphi 0, %s126
    %s127 = sphi 0, %s124
    %s128 = sphi 0, %s127
    %s144 = sphi 0, %s128
    %s148 = sphi 0, %s148
    %s150 = sphi 0, %s148
    %s151 = sphi 0, %s150
    %s165 = sphi 0, %s151
    %s169 = sphi 0, %s169
    %s171 = sphi 0, %s169
    %s172 = sphi 0, %s171
    %s186 = sphi 0, %s172
    %s190 = sphi 0, %s190
    %s192 = sphi 0, %s190
    %s193 = sphi 0, %s192
    %s207 = sphi 0, %s193
    %s211 = sphi 0, %s211
    %s213 = sphi 0, %s211
    %s214 = sphi 0, %s213
    %s228 = sphi 0, %s214
    %s236 = sphi 0, %s238
    %s239 = sphi 0, %s236
    %s240 = sphi 0, %s239
    %s256 = sphi 0, %s240
    %s262 = sphi 0, %s264
    %s265 = sphi 0, %s262
    %s266 = sphi 0, %s265
    %s282 = sphi 0, %s266
    %s288 = sphi 0, %s290
    %s291 = sphi 0, %s288
    %s292 = sphi 0, %s291
    %s308 = sphi 0, %s292
  $region4: #{down_forward.5} parent=0 // loop_header_branch
    %19 = sbr.rel (%p17) target = $region8
  $region5: #{down_forward.5} parent=0 // loop_body
    %s21 = ssub.s32 %s16, 1
    %s22 = ssub.s32 %s16, 2
    %s29 = sadd.s32 1, %s24
    %p30 = scmp.ge.s32.totalorder %s29, 4
    %s31 = scalar_select %p30, 0, %s29
    %s32 = sadd.s32 1, %s23
    %s33 = scalar_select %p30, %s32, %s23
    %p34 = scmp.ge.s32.totalorder %s33, 2
    %s35 = scalar_select %p34, 0, %s33
    %s36 = sadd.s32 %s24, 4294967295
    %p37 = scmp.gt.s32.totalorder %s36, 0
    %s38 = scalar_select %p37, %s36, 0
    %p39 = scmp.lt.s32.totalorder %s38, 3
    %s40 = scalar_select %p39, %s38, 3
    %s41 = sadd.s32 %s31, 4294967295
    %p42 = scmp.gt.s32.totalorder %s41, 0
    %s43 = scalar_select %p42, %s41, 0
    %p44 = scmp.lt.s32.totalorder %s43, 3
    %s45 = scalar_select %p44, %s43, 3
    %s46 = ssub.s32 %s23, %s35
    %s47 = ssub.s32 %s40, %s45
    %s48 = sor.u32 %s46, %s47
    %p49 = scmp.eq.s32.totalorder %s48, 0
    %s51 = sadd.s32 %s50, 1
    %s52 = scalar_select %p49, %s50, %s51
    %p55 = pneg %p49
    %p56 = scmp.eq.s32.totalorder %s16, 7
    %p57 = por %p55, %p56
    %p58 = scmp.ne.s32.totalorder %s50, %s53
    %p59 = scmp.eq.s32.totalorder %s16, 0
    %p60 = por %p58, %p59
    %p61 = scmp.ne.s32.totalorder %s50, %s53
    %p62 = scmp.eq.s32.totalorder %s21, 7
    %p63 = por %p61, %p62
    %p64 = scmp.ne.s32.totalorder %s53, %s54
    %p65 = scmp.eq.s32.totalorder %s21, 0
    %p66 = por %p64, %p65
    %p67 = scmp.ne.s32.totalorder %s53, %s54
    %p68 = scmp.eq.s32.totalorder %s22, 7
    %p69 = por %p67, %p68
    %p71 = scmp.ne.s32.totalorder %s54, %s70
    %p72 = scmp.eq.s32.totalorder %s22, 0
    %p73 = por %p71, %p72
    %p74 = scmp.gt.s32.totalorder %s24, 0
    %s75 = scalar_select %p74, %s24, 0
    %p76 = scmp.lt.s32.totalorder %s75, 3
    %s77 = scalar_select %p76, %s75, 3
    %p78 = scmp.gt.s32.totalorder %s31, 0
    %s79 = scalar_select %p78, %s31, 0
    %p80 = scmp.lt.s32.totalorder %s79, 3
    %s81 = scalar_select %p80, %s79, 3
    %s82 = ssub.s32 %s23, %s35
    %s83 = ssub.s32 %s77, %s81
    %s84 = sor.u32 %s82, %s83
    %p85 = scmp.eq.s32.totalorder %s84, 0
    %s87 = sadd.s32 %s86, 1
    %s88 = scalar_select %p85, %s86, %s87
    %p91 = pneg %p85
    %p92 = scmp.eq.s32.totalorder %s16, 7
    %p93 = por %p91, %p92
    %p94 = scmp.ne.s32.totalorder %s86, %s89
    %p95 = scmp.eq.s32.totalorder %s16, 0
    %p96 = por %p94, %p95
    %p97 = scmp.ne.s32.totalorder %s86, %s89
    %p98 = scmp.eq.s32.totalorder %s21, 7
    %p99 = por %p97, %p98
    %p100 = scmp.ne.s32.totalorder %s89, %s90
    %p101 = scmp.eq.s32.totalorder %s21, 0
    %p102 = por %p100, %p101
    %p103 = scmp.ne.s32.totalorder %s89, %s90
    %p104 = scmp.eq.s32.totalorder %s22, 7
    %p105 = por %p103, %p104
    %p107 = scmp.ne.s32.totalorder %s90, %s106
    %p108 = scmp.eq.s32.totalorder %s22, 0
    %p109 = por %p107, %p108
    %s110 = sadd.s32 %s24, 1
    %p111 = scmp.gt.s32.totalorder %s110, 0
    %s112 = scalar_select %p111, %s110, 0
    %p113 = scmp.lt.s32.totalorder %s112, 3
    %s114 = scalar_select %p113, %s112, 3
    %s115 = sadd.s32 %s31, 1
    %p116 = scmp.gt.s32.totalorder %s115, 0
    %s117 = scalar_select %p116, %s115, 0
    %p118 = scmp.lt.s32.totalorder %s117, 3
    %s119 = scalar_select %p118, %s117, 3
    %s120 = ssub.s32 %s23, %s35
    %s121 = ssub.s32 %s114, %s119
    %s122 = sor.u32 %s120, %s121
    %p123 = scmp.eq.s32.totalorder %s122, 0
    %s125 = sadd.s32 %s124, 1
    %s126 = scalar_select %p123, %s124, %s125
    %p129 = pneg %p123
    %p130 = scmp.eq.s32.totalorder %s16, 7
    %p131 = por %p129, %p130
    %p132 = scmp.ne.s32.totalorder %s124, %s127
    %p133 = scmp.eq.s32.totalorder %s16, 0
    %p134 = por %p132, %p133
    %p135 = scmp.ne.s32.totalorder %s124, %s127
    %p136 = scmp.eq.s32.totalorder %s21, 7
    %p137 = por %p135, %p136
    %p138 = scmp.ne.s32.totalorder %s127, %s128
    %p139 = scmp.eq.s32.totalorder %s21, 0
    %p140 = por %p138, %p139
    %p141 = scmp.ne.s32.totalorder %s127, %s128
    %p142 = scmp.eq.s32.totalorder %s22, 7
    %p143 = por %p141, %p142
    %p145 = scmp.ne.s32.totalorder %s128, %s144
    %p146 = scmp.eq.s32.totalorder %s22, 0
    %p147 = por %p145, %p146
    %s149 = sadd.s32 %s148, 1
    %p152 = scmp.eq.s32.totalorder %s16, 7
    %p153 = scmp.ne.s32.totalorder %s148, %s150
    %p154 = scmp.eq.s32.totalorder %s16, 0
    %p155 = por %p153, %p154
    %p156 = scmp.ne.s32.totalorder %s148, %s150
    %p157 = scmp.eq.s32.totalorder %s21, 7
    %p158 = por %p156, %p157
    %p159 = scmp.ne.s32.totalorder %s150, %s151
    %p160 = scmp.eq.s32.totalorder %s21, 0
    %p161 = por %p159, %p160
    %p162 = scmp.ne.s32.totalorder %s150, %s151
    %p163 = scmp.eq.s32.totalorder %s22, 7
    %p164 = por %p162, %p163
    %p166 = scmp.ne.s32.totalorder %s151, %s165
    %p167 = scmp.eq.s32.totalorder %s22, 0
    %p168 = por %p166, %p167
    %s170 = sadd.s32 %s169, 1
    %p173 = scmp.eq.s32.totalorder %s16, 7
    %p174 = scmp.ne.s32.totalorder %s169, %s171
    %p175 = scmp.eq.s32.totalorder %s16, 0
    %p176 = por %p174, %p175
    %p177 = scmp.ne.s32.totalorder %s169, %s171
    %p178 = scmp.eq.s32.totalorder %s21, 7
    %p179 = por %p177, %p178
    %p180 = scmp.ne.s32.totalorder %s171, %s172
    %p181 = scmp.eq.s32.totalorder %s21, 0
    %p182 = por %p180, %p181
    %p183 = scmp.ne.s32.totalorder %s171, %s172
    %p184 = scmp.eq.s32.totalorder %s22, 7
    %p185 = por %p183, %p184
    %p187 = scmp.ne.s32.totalorder %s172, %s186
    %p188 = scmp.eq.s32.totalorder %s22, 0
    %p189 = por %p187, %p188
    %s191 = sadd.s32 %s190, 1
    %p194 = scmp.eq.s32.totalorder %s16, 7
    %p195 = scmp.ne.s32.totalorder %s190, %s192
    %p196 = scmp.eq.s32.totalorder %s16, 0
    %p197 = por %p195, %p196
    %p198 = scmp.ne.s32.totalorder %s190, %s192
    %p199 = scmp.eq.s32.totalorder %s21, 7
    %p200 = por %p198, %p199
    %p201 = scmp.ne.s32.totalorder %s192, %s193
    %p202 = scmp.eq.s32.totalorder %s21, 0
    %p203 = por %p201, %p202
    %p204 = scmp.ne.s32.totalorder %s192, %s193
    %p205 = scmp.eq.s32.totalorder %s22, 7
    %p206 = por %p204, %p205
    %p208 = scmp.ne.s32.totalorder %s193, %s207
    %p209 = scmp.eq.s32.totalorder %s22, 0
    %p210 = por %p208, %p209
    %s212 = sadd.s32 %s211, 1
    %p215 = scmp.eq.s32.totalorder %s16, 7
    %p216 = scmp.ne.s32.totalorder %s211, %s213
    %p217 = scmp.eq.s32.totalorder %s16, 0
    %p218 = por %p216, %p217
    %p219 = scmp.ne.s32.totalorder %s211, %s213
    %p220 = scmp.eq.s32.totalorder %s21, 7
    %p221 = por %p219, %p220
    %p222 = scmp.ne.s32.totalorder %s213, %s214
    %p223 = scmp.eq.s32.totalorder %s21, 0
    %p224 = por %p222, %p223
    %p225 = scmp.ne.s32.totalorder %s213, %s214
    %p226 = scmp.eq.s32.totalorder %s22, 7
    %p227 = por %p225, %p226
    %p229 = scmp.ne.s32.totalorder %s214, %s228
    %p230 = scmp.eq.s32.totalorder %s22, 0
    %p231 = por %p229, %p230
    %s232 = ssub.s32 %s23, %s35
    %s233 = ssub.s32 %s24, %s31
    %s234 = sor.u32 %s232, %s233
    %p235 = scmp.eq.s32.totalorder %s234, 0
    %s237 = sadd.s32 %s236, 1
    %s238 = scalar_select %p235, %s236, %s237
    %p241 = pneg %p235
    %p242 = scmp.eq.s32.totalorder %s16, 7
    %p243 = por %p241, %p242
    %p244 = scmp.ne.s32.totalorder %s236, %s239
    %p245 = scmp.eq.s32.totalorder %s16, 0
    %p246 = por %p244, %p245
    %p247 = scmp.ne.s32.totalorder %s236, %s239
    %p248 = scmp.eq.s32.totalorder %s21, 7
    %p249 = por %p247, %p248
    %p250 = scmp.ne.s32.totalorder %s239, %s240
    %p251 = scmp.eq.s32.totalorder %s21, 0
    %p252 = por %p250, %p251
    %p253 = scmp.ne.s32.totalorder %s239, %s240
    %p254 = scmp.eq.s32.totalorder %s22, 7
    %p255 = por %p253, %p254
    %p257 = scmp.ne.s32.totalorder %s240, %s256
    %p258 = scmp.eq.s32.totalorder %s22, 0
    %p259 = por %p257, %p258
    %s260 = ssub.s32 %s23, %s35
    %p261 = scmp.eq.s32.totalorder %s260, 0
    %s263 = sadd.s32 %s262, 1
    %s264 = scalar_select %p261, %s262, %s263
    %p267 = pneg %p261
    %p268 = scmp.eq.s32.totalorder %s16, 7
    %p269 = por %p267, %p268
    %p270 = scmp.ne.s32.totalorder %s262, %s265
    %p271 = scmp.eq.s32.totalorder %s16, 0
    %p272 = por %p270, %p271
    %p273 = scmp.ne.s32.totalorder %s262, %s265
    %p274 = scmp.eq.s32.totalorder %s21, 7
    %p275 = por %p273, %p274
    %p276 = scmp.ne.s32.totalorder %s265, %s266
    %p277 = scmp.eq.s32.totalorder %s21, 0
    %p278 = por %p276, %p277
    %p279 = scmp.ne.s32.totalorder %s265, %s266
    %p280 = scmp.eq.s32.totalorder %s22, 7
    %p281 = por %p279, %p280
    %p283 = scmp.ne.s32.totalorder %s266, %s282
    %p284 = scmp.eq.s32.totalorder %s22, 0
    %p285 = por %p283, %p284
    %s286 = ssub.s32 %s23, %s35
    %p287 = scmp.eq.s32.totalorder %s286, 0
    %s289 = sadd.s32 %s288, 1
    %s290 = scalar_select %p287, %s288, %s289
    %p293 = pneg %p287
    %p294 = scmp.eq.s32.totalorder %s16, 7
    %p295 = por %p293, %p294
    %p296 = scmp.ne.s32.totalorder %s288, %s291
    %p297 = scmp.eq.s32.totalorder %s16, 0
    %p298 = por %p296, %p297
    %p299 = scmp.ne.s32.totalorder %s288, %s291
    %p300 = scmp.eq.s32.totalorder %s21, 7
    %p301 = por %p299, %p300
    %p302 = scmp.ne.s32.totalorder %s291, %s292
    %p303 = scmp.eq.s32.totalorder %s21, 0
    %p304 = por %p302, %p303
    %p305 = scmp.ne.s32.totalorder %s291, %s292
    %p306 = scmp.eq.s32.totalorder %s22, 7
    %p307 = por %p305, %p306
    %p309 = scmp.ne.s32.totalorder %s292, %s308
    %p310 = scmp.eq.s32.totalorder %s22, 0
    %p311 = por %p309, %p310
    %p312 = scmp.le.s32.totalorder 1, %s16
    %p313 = scmp.lt.s32.totalorder %s16, 9
    %p314 = pnand %p312, %p313
    %p315 = pneg %p314
    // Predicated region
    $region9: #{down_forward.5} parent=5 // pred_check
      _
    $region10: #{down_forward.5} parent=5 // pred_check_branch
      %317 = sbr.rel (%p314) target = $region12
    $region11: #{down_forward.5} parent=5 // pred_region
      %s318 = ssub.s32 %s16, 1
      // Predicated region
      $region13: #{down_forward.5} parent=11 // pred_check
        %p319 = pneg %p161
      $region14: #{down_forward.5} parent=11 // pred_check_branch
        %321 = sbr.rel (%p319) target = $region16
      $region15: #{down_forward.5} parent=11 // pred_region
        _
      $region16: #{down_forward.5} parent=11 // pred_fallthru
        _
      // Predicated region
      $region17: #{down_forward.5} parent=11 // pred_check
        %p322 = pneg %p182
      $region18: #{down_forward.5} parent=11 // pred_check_branch
        %324 = sbr.rel (%p322) target = $region20
      $region19: #{down_forward.5} parent=11 // pred_region
        _
      $region20: #{down_forward.5} parent=11 // pred_fallthru
        _
      // Predicated region
      $region21: #{down_forward.5} parent=11 // pred_check
        %p325 = pneg %p203
      $region22: #{down_forward.5} parent=11 // pred_check_branch
        %327 = sbr.rel (%p325) target = $region24
      $region23: #{down_forward.5} parent=11 // pred_region
        _
      $region24: #{down_forward.5} parent=11 // pred_fallthru
        _
      // Predicated region
      $region25: #{down_forward.5} parent=11 // pred_check
        %p328 = pneg %p224
      $region26: #{down_forward.5} parent=11 // pred_check_branch
        %330 = sbr.rel (%p328) target = $region28
      $region27: #{down_forward.5} parent=11 // pred_region
        _
      $region28: #{down_forward.5} parent=11 // pred_fallthru
        _
    $region12: #{down_forward.5} parent=5 // pred_fallthru
      _
    %p331 = scmp.lt.s32.totalorder %s16, 8
    // Predicated region
    $region29: #{down_forward.5} parent=5 // pred_check
      %p332 = pneg %p331
    $region30: #{down_forward.5} parent=5 // pred_check_branch
      %334 = sbr.rel (%p332) target = $region32
    $region31: #{down_forward.5} parent=5 // pred_region
      // Predicated region
      $region33: #{down_forward.5} parent=31 // pred_check
        %p335 = pneg %p60
      $region34: #{down_forward.5} parent=31 // pred_check_branch
        %337 = sbr.rel (%p335) target = $region36
      $region35: #{down_forward.5} parent=31 // pred_region
        %s338 = sadd.s32 %s24, 4294967295
        %p339 = scmp.gt.s32.totalorder %s338, 0
        %s340 = scalar_select %p339, %s338, 0
        %p341 = scmp.lt.s32.totalorder %s340, 3
        %s342 = scalar_select %p341, %s340, 3
        %p343 = scmp.lt.s32.totalorder %s23, 1
        %s344 = scalar_select %p343, %s23, 1
        %p345 = scmp.lt.s32.totalorder %s342, 3
        %s346 = scalar_select %p345, %s342, 3
        %s347 = smul.addr %s346, 4
        %s348 = smul.addr %s344, 16
        %s349 = sadd.s32 %s347, %s348
        %s350 = smul.addr %s349, 4
        %s351 = scalar_lea.vmem %s0, %s350
        %s352 = sadd.s32 %s24, 4294967295
        %p353 = scmp.gt.s32.totalorder %s352, 0
        %s354 = scalar_select %p353, %s352, 0
        %p355 = scmp.lt.s32.totalorder %s354, 3
        %s356 = scalar_select %p355, %s354, 3
      $region36: #{down_forward.5} parent=31 // pred_fallthru
        _
      // Predicated region
      $region37: #{down_forward.5} parent=31 // pred_check
        %p357 = pneg %p96
      $region38: #{down_forward.5} parent=31 // pred_check_branch
        %359 = sbr.rel (%p357) target = $region40
      $region39: #{down_forward.5} parent=31 // pred_region
        %p360 = scmp.gt.s32.totalorder %s24, 0
        %s361 = scalar_select %p360, %s24, 0
        %p362 = scmp.lt.s32.totalorder %s361, 3
        %s363 = scalar_select %p362, %s361, 3
        %p364 = scmp.lt.s32.totalorder %s23, 1
        %s365 = scalar_select %p364, %s23, 1
        %p366 = scmp.lt.s32.totalorder %s363, 3
        %s367 = scalar_select %p366, %s363, 3
        %s368 = smul.addr %s367, 4
        %s369 = smul.addr %s365, 16
        %s370 = sadd.s32 %s368, %s369
        %s371 = smul.addr %s370, 4
        %s372 = scalar_lea.vmem %s1, %s371
        %p373 = scmp.gt.s32.totalorder %s24, 0
        %s374 = scalar_select %p373, %s24, 0
        %p375 = scmp.lt.s32.totalorder %s374, 3
        %s376 = scalar_select %p375, %s374, 3
      $region40: #{down_forward.5} parent=31 // pred_fallthru
        _
      // Predicated region
      $region41: #{down_forward.5} parent=31 // pred_check
        %p377 = pneg %p134
      $region42: #{down_forward.5} parent=31 // pred_check_branch
        %379 = sbr.rel (%p377) target = $region44
      $region43: #{down_forward.5} parent=31 // pred_region
        %s380 = sadd.s32 %s24, 1
        %p381 = scmp.gt.s32.totalorder %s380, 0
        %s382 = scalar_select %p381, %s380, 0
        %p383 = scmp.lt.s32.totalorder %s382, 3
        %s384 = scalar_select %p383, %s382, 3
        %p385 = scmp.lt.s32.totalorder %s23, 1
        %s386 = scalar_select %p385, %s23, 1
        %p387 = scmp.lt.s32.totalorder %s384, 3
        %s388 = scalar_select %p387, %s384, 3
        %s389 = smul.addr %s388, 4
        %s390 = smul.addr %s386, 16
        %s391 = sadd.s32 %s389, %s390
        %s392 = smul.addr %s391, 4
        %s393 = scalar_lea.vmem %s2, %s392
        %s394 = sadd.s32 %s24, 1
        %p395 = scmp.gt.s32.totalorder %s394, 0
        %s396 = scalar_select %p395, %s394, 0
        %p397 = scmp.lt.s32.totalorder %s396, 3
        %s398 = scalar_select %p397, %s396, 3
      $region44: #{down_forward.5} parent=31 // pred_fallthru
        _
    $region32: #{down_forward.5} parent=5 // pred_fallthru
      _
    %p399 = scmp.le.s32.totalorder 1, %s16
    %p400 = scmp.lt.s32.totalorder %s16, 9
    %p401 = pnand %p399, %p400
    %p402 = pneg %p401
    // Predicated region
    $region45: #{down_forward.5} parent=5 // pred_check
      _
    $region46: #{down_forward.5} parent=5 // pred_check_branch
      %404 = sbr.rel (%p401) target = $region48
    $region47: #{down_forward.5} parent=5 // pred_region
      %s405 = ssub.s32 %s16, 1
      %s406 = sadd.s32 %s26, 4294967295
      %p407 = scmp.gt.s32.totalorder %s406, 0
      %s408 = scalar_select %p407, %s406, 0
      %p409 = scmp.lt.s32.totalorder %s408, 3
      %s410 = scalar_select %p409, %s408, 3
      %p411 = scmp.lt.s32.totalorder %s25, 1
      %s412 = scalar_select %p411, %s25, 1
      %p413 = scmp.lt.s32.totalorder %s410, 3
      %s414 = scalar_select %p413, %s410, 3
      %s415 = smul.addr %s414, 4
      %s416 = smul.addr %s412, 16
      %s417 = sadd.s32 %s415, %s416
      %s418 = smul.addr %s417, 4
      %s419 = scalar_lea.vmem %s0, %s418
      %p420 = pneg %p66
      %p421 = pneg %p63
      %p422 = scmp.gt.s32.totalorder %s26, 0
      %s423 = scalar_select %p422, %s26, 0
      %p424 = scmp.lt.s32.totalorder %s423, 3
      %s425 = scalar_select %p424, %s423, 3
      %p426 = scmp.lt.s32.totalorder %s25, 1
      %s427 = scalar_select %p426, %s25, 1
      %p428 = scmp.lt.s32.totalorder %s425, 3
      %s429 = scalar_select %p428, %s425, 3
      %s430 = smul.addr %s429, 4
      %s431 = smul.addr %s427, 16
      %s432 = sadd.s32 %s430, %s431
      %s433 = smul.addr %s432, 4
      %s434 = scalar_lea.vmem %s1, %s433
      %p435 = pneg %p102
      %p436 = pneg %p99
      %s437 = sadd.s32 %s26, 1
      %p438 = scmp.gt.s32.totalorder %s437, 0
      %s439 = scalar_select %p438, %s437, 0
      %p440 = scmp.lt.s32.totalorder %s439, 3
      %s441 = scalar_select %p440, %s439, 3
      %p442 = scmp.lt.s32.totalorder %s25, 1
      %s443 = scalar_select %p442, %s25, 1
      %p444 = scmp.lt.s32.totalorder %s441, 3
      %s445 = scalar_select %p444, %s441, 3
      %s446 = smul.addr %s445, 4
      %s447 = smul.addr %s443, 16
      %s448 = sadd.s32 %s446, %s447
      %s449 = smul.addr %s448, 4
      %s450 = scalar_lea.vmem %s2, %s449
      %p451 = pneg %p140
      %p452 = pneg %p137
      %p453 = pneg %p161
      %p454 = pneg %p158
      %p455 = pneg %p182
      %p456 = pneg %p179
      %p457 = pneg %p203
      %p458 = pneg %p200
      %p459 = pneg %p224
      %p460 = pneg %p221
      %p461 = pneg %p252
      %p462 = pneg %p249
      %p463 = scmp.lt.s32.totalorder %s25, 1
      %s464 = scalar_select %p463, %s25, 1
      %p465 = scmp.lt.s32.totalorder %s26, 3
      %s466 = scalar_select %p465, %s26, 3
      %s467 = smul.addr %s466, 4
      %s468 = smul.addr %s464, 16
      %s469 = sadd.s32 %s467, %s468
      %s470 = smul.addr %s469, 4
      %s471 = scalar_lea.vmem %s7, %s470
      %p472 = pneg %p278
      %p473 = pneg %p275
      %p474 = scmp.lt.s32.totalorder %s25, 1
      %s475 = scalar_select %p474, %s25, 1
      %s476 = scalar_lea.vmem %s8, %s475
      %p477 = pneg %p304
      %p478 = pneg %p301
      %p479 = scmp.lt.s32.totalorder %s25, 1
      %s480 = scalar_select %p479, %s25, 1
      %s481 = scalar_lea.vmem %s9, %s480
      %s482 = sadd.s32 %s26, 4294967295
      %p483 = scmp.gt.s32.totalorder %s482, 0
      %s484 = scalar_select %p483, %s482, 0
      %p485 = scmp.lt.s32.totalorder %s484, 3
      %s486 = scalar_select %p485, %s484, 3
      %p487 = scmp.lt.s32.totalorder %s25, 1
      %s488 = scalar_select %p487, %s25, 1
      %p489 = scmp.lt.s32.totalorder %s486, 3
      %s490 = scalar_select %p489, %s486, 3
      %s491 = smul.addr %s490, 4
      %s492 = smul.addr %s488, 16
      %s493 = sadd.s32 %s491, %s492
      %s494 = smul.addr %s493, 4
      %s495 = scalar_lea.vmem %s0, %s494
      %s496 = sadd.s32 %s26, 4294967295
      %p497 = scmp.gt.s32.totalorder %s496, 0
      %s498 = scalar_select %p497, %s496, 0
      %p499 = scmp.lt.s32.totalorder %s498, 3
      %s500 = scalar_select %p499, %s498, 3
      %p501 = scmp.gt.s32.totalorder %s26, 0
      %s502 = scalar_select %p501, %s26, 0
      %p503 = scmp.lt.s32.totalorder %s502, 3
      %s504 = scalar_select %p503, %s502, 3
      %p505 = scmp.lt.s32.totalorder %s25, 1
      %s506 = scalar_select %p505, %s25, 1
      %p507 = scmp.lt.s32.totalorder %s504, 3
      %s508 = scalar_select %p507, %s504, 3
      %s509 = smul.addr %s508, 4
      %s510 = smul.addr %s506, 16
      %s511 = sadd.s32 %s509, %s510
      %s512 = smul.addr %s511, 4
      %s513 = scalar_lea.vmem %s1, %s512
      %p514 = scmp.gt.s32.totalorder %s26, 0
      %s515 = scalar_select %p514, %s26, 0
      %p516 = scmp.lt.s32.totalorder %s515, 3
      %s517 = scalar_select %p516, %s515, 3
      %s518 = sadd.s32 %s26, 1
      %p519 = scmp.gt.s32.totalorder %s518, 0
      %s520 = scalar_select %p519, %s518, 0
      %p521 = scmp.lt.s32.totalorder %s520, 3
      %s522 = scalar_select %p521, %s520, 3
      %p523 = scmp.lt.s32.totalorder %s25, 1
      %s524 = scalar_select %p523, %s25, 1
      %p525 = scmp.lt.s32.totalorder %s522, 3
      %s526 = scalar_select %p525, %s522, 3
      %s527 = smul.addr %s526, 4
      %s528 = smul.addr %s524, 16
      %s529 = sadd.s32 %s527, %s528
      %s530 = smul.addr %s529, 4
      %s531 = scalar_lea.vmem %s2, %s530
      %s532 = sadd.s32 %s26, 1
      %p533 = scmp.gt.s32.totalorder %s532, 0
      %s534 = scalar_select %p533, %s532, 0
      %p535 = scmp.lt.s32.totalorder %s534, 3
      %s536 = scalar_select %p535, %s534, 3
      %p537 = scmp.lt.s32.totalorder %s25, 1
      %s538 = scalar_select %p537, %s25, 1
      %p539 = scmp.lt.s32.totalorder %s26, 3
      %s540 = scalar_select %p539, %s26, 3
      %s541 = smul.addr %s540, 4
      %s542 = smul.addr %s538, 16
      %s543 = sadd.s32 %s541, %s542
      %s544 = smul.addr %s543, 4
      %s545 = scalar_lea.vmem %s7, %s544
      %p546 = scmp.lt.s32.totalorder %s25, 1
      %s547 = scalar_select %p546, %s25, 1
      %s548 = scalar_lea.vmem %s8, %s547
      %p549 = scmp.lt.s32.totalorder %s25, 1
      %s550 = scalar_select %p549, %s25, 1
      %s551 = scalar_lea.vmem %s9, %s550
      %p552 = scmp.eq.s32.totalorder %s26, 0
      // Predicated region
      $region49: #{down_forward.5} parent=47 // pred_check
        %p553 = pneg %p552
      $region50: #{down_forward.5} parent=47 // pred_check_branch
        %555 = sbr.rel (%p553) target = $region52
      $region51: #{down_forward.5} parent=47 // pred_region
        %556 = vst [vmem:[#allocation2] sm:$0xff] 0.0
        %557 = vst [vmem:[#allocation2 + $0x8] sm:$0xff] 0.0
        %558 = vst [vmem:[#allocation2 + $0x10] sm:$0xff] 0.0
        %559 = vst [vmem:[#allocation2 + $0x18] sm:$0xff] 0.0
        %560 = vst [vmem:[#allocation2 + $0x20] sm:$0xff] 0.0
        %561 = vst [vmem:[#allocation2 + $0x28] sm:$0xff] 0.0
        %562 = vst [vmem:[#allocation2 + $0x30] sm:$0xff] 0.0
        %563 = vst [vmem:[#allocation2 + $0x38] sm:$0xff] 0.0
        %564 = vst [vmem:[#allocation2 + $0x40] sm:$0xff] 0.0
        %565 = vst [vmem:[#allocation2 + $0x48] sm:$0xff] 0.0
        %566 = vst [vmem:[#allocation2 + $0x50] sm:$0xff] 0.0
        %567 = vst [vmem:[#allocation2 + $0x58] sm:$0xff] 0.0
        %568 = vst [vmem:[#allocation2 + $0x60] sm:$0xff] 0.0
        %569 = vst [vmem:[#allocation2 + $0x68] sm:$0xff] 0.0
        %570 = vst [vmem:[#allocation2 + $0x70] sm:$0xff] 0.0
        %571 = vst [vmem:[#allocation2 + $0x78] sm:$0xff] 0.0
        %572 = vst [vmem:[#allocation2 + $0x80] sm:$0xff] 0.0
        %573 = vst [vmem:[#allocation2 + $0x88] sm:$0xff] 0.0
        %574 = vst [vmem:[%s548] sm:$0x1] 0.0
        %575 = vst [vmem:[%s551] sm:$0x1] 0.0
      $region52: #{down_forward.5} parent=47 // pred_fallthru
        _
      %v576 = vld [vmem:[%s495] sm:$0xf]
      %v577 = vld [vmem:[%s495 + $0x4] sm:$0xf]
      %v578 = vld [vmem:[%s495 + $0x8] sm:$0xf]
      %v579 = vld [vmem:[%s495 + $0xc] sm:$0xf]
      %v580 = vld [vmem:[%s3] sm:$0x1]
      %v582 = vlaneseq
      %v583 = vshrl.u32 %v582, 7
      %v584 = vsub.s32 0, %v583
      %v585 = vrot.slane %v580, %v584
      %v587 = vmul.f32 %v576, %v585
      %v588 = vmul.f32 %v577, %v585
      %v589 = vmul.f32 %v578, %v585
      %v590 = vmul.f32 %v579, %v585
      %v591 = vld [vmem:[%s4] sm:$0x1]
      %v593 = vlaneseq
      %v594 = vshrl.u32 %v593, 7
      %v595 = vsub.s32 0, %v594
      %v596 = vrot.slane %v591, %v595
      %v598 = vadd.f32 %v587, %v596
      %v599 = vadd.f32 %v588, %v596
      %v600 = vadd.f32 %v589, %v596
      %v601 = vadd.f32 %v590, %v596
      %v602 = vmax.f32 %v598, 0.0
      %v603 = vmax.f32 %v599, 0.0
      %v604 = vmax.f32 %v600, 0.0
      %v605 = vmax.f32 %v601, 0.0
      %s606 = sadd.s32 %s26, 4294967295
      %p607 = scmp.ge.s32.totalorder %s606, 0
      %p608 = scmp.lt.s32.totalorder %s606, 4
      %p609 = pnand %p607, %p608
      %p610 = pneg %p609
      %s611 = scalar_select %p610, 1, 0
      %s612 = scvt.s32.f32 %s611
      %v613 = vstv %s612
      %v614 = vmul.f32 %v602, %v613
      %v615 = vmul.f32 %v603, %v613
      %v616 = vmul.f32 %v604, %v613
      %v617 = vmul.f32 %v605, %v613
      %s618 = scalar_lea.vmem [#allocation2], 8
      %619 = vst [vmem:[%s618 + $0x1] sm:$0xf] %v614
      %620 = vst [vmem:[%s618 + $0x9] sm:$0xf] %v615
      %621 = vst [vmem:[%s618 + $0x11] sm:$0xf] %v616
      %622 = vst [vmem:[%s618 + $0x19] sm:$0xf] %v617
      %v623 = vld [vmem:[%s513] sm:$0xf]
      %v624 = vld [vmem:[%s513 + $0x4] sm:$0xf]
      %v625 = vld [vmem:[%s513 + $0x8] sm:$0xf]
      %v626 = vld [vmem:[%s513 + $0xc] sm:$0xf]
      %v627 = vld [vmem:[%s3] sm:$0x1]
      %v629 = vlaneseq
      %v630 = vshrl.u32 %v629, 7
      %v631 = vsub.s32 0, %v630
      %v632 = vrot.slane %v627, %v631
      %v634 = vmul.f32 %v623, %v632
      %v635 = vmul.f32 %v624, %v632
      %v636 = vmul.f32 %v625, %v632
      %v637 = vmul.f32 %v626, %v632
      %v638 = vld [vmem:[%s4] sm:$0x1]
      %v640 = vlaneseq
      %v641 = vshrl.u32 %v640, 7
      %v642 = vsub.s32 0, %v641
      %v643 = vrot.slane %v638, %v642
      %v645 = vadd.f32 %v634, %v643
      %v646 = vadd.f32 %v635, %v643
      %v647 = vadd.f32 %v636, %v643
      %v648 = vadd.f32 %v637, %v643
      %v649 = vmax.f32 %v645, 0.0
      %v650 = vmax.f32 %v646, 0.0
      %v651 = vmax.f32 %v647, 0.0
      %v652 = vmax.f32 %v648, 0.0
      %p653 = scmp.ge.s32.totalorder %s26, 0
      %p654 = scmp.lt.s32.totalorder %s26, 4
      %p655 = pnand %p653, %p654
      %p656 = pneg %p655
      %s657 = scalar_select %p656, 1, 0
      %s658 = scvt.s32.f32 %s657
      %v659 = vstv %s658
      %v660 = vmul.f32 %v649, %v659
      %v661 = vmul.f32 %v650, %v659
      %v662 = vmul.f32 %v651, %v659
      %v663 = vmul.f32 %v652, %v659
      %s664 = scalar_lea.vmem [#allocation2], 56
      %665 = vst [vmem:[%s664 + $0x1] sm:$0xf] %v660
      %666 = vst [vmem:[%s664 + $0x9] sm:$0xf] %v661
      %667 = vst [vmem:[%s664 + $0x11] sm:$0xf] %v662
      %668 = vst [vmem:[%s664 + $0x19] sm:$0xf] %v663
      %v669 = vld [vmem:[%s531] sm:$0xf]
      %v670 = vld [vmem:[%s531 + $0x4] sm:$0xf]
      %v671 = vld [vmem:[%s531 + $0x8] sm:$0xf]
      %v672 = vld [vmem:[%s531 + $0xc] sm:$0xf]
      %v673 = vld [vmem:[%s3] sm:$0x1]
      %v675 = vlaneseq
      %v676 = vshrl.u32 %v675, 7
      %v677 = vsub.s32 0, %v676
      %v678 = vrot.slane %v673, %v677
      %v680 = vmul.f32 %v669, %v678
      %v681 = vmul.f32 %v670, %v678
      %v682 = vmul.f32 %v671, %v678
      %v683 = vmul.f32 %v672, %v678
      %v684 = vld [vmem:[%s4] sm:$0x1]
      %v686 = vlaneseq
      %v687 = vshrl.u32 %v686, 7
      %v688 = vsub.s32 0, %v687
      %v689 = vrot.slane %v684, %v688
      %v691 = vadd.f32 %v680, %v689
      %v692 = vadd.f32 %v681, %v689
      %v693 = vadd.f32 %v682, %v689
      %v694 = vadd.f32 %v683, %v689
      %v695 = vmax.f32 %v691, 0.0
      %v696 = vmax.f32 %v692, 0.0
      %v697 = vmax.f32 %v693, 0.0
      %v698 = vmax.f32 %v694, 0.0
      %s699 = sadd.s32 %s26, 1
      %p700 = scmp.ge.s32.totalorder %s699, 0
      %p701 = scmp.lt.s32.totalorder %s699, 4
      %p702 = pnand %p700, %p701
      %p703 = pneg %p702
      %s704 = scalar_select %p703, 1, 0
      %s705 = scvt.s32.f32 %s704
      %v706 = vstv %s705
      %v707 = vmul.f32 %v695, %v706
      %v708 = vmul.f32 %v696, %v706
      %v709 = vmul.f32 %v697, %v706
      %v710 = vmul.f32 %v698, %v706
      %s711 = scalar_lea.vmem [#allocation2], 104
      %712 = vst [vmem:[%s711 + $0x1] sm:$0xf] %v707
      %713 = vst [vmem:[%s711 + $0x9] sm:$0xf] %v708
      %714 = vst [vmem:[%s711 + $0x11] sm:$0xf] %v709
      %715 = vst [vmem:[%s711 + $0x19] sm:$0xf] %v710
      %v716 = vld [vmem:[#allocation2] sm:$0xff]
      %v717 = vld [vmem:[#allocation2 + $0x8] sm:$0xff]
      %v718 = vld [vmem:[#allocation2 + $0x10] sm:$0xff]
      %v719 = vld [vmem:[#allocation2 + $0x18] sm:$0xff]
      %v720 = vld [vmem:[%s5] sm:$0xff]
      %v721 = vld [vmem:[%s5 + $0x8] sm:$0xff]
      %v722 = vld [vmem:[%s5 + $0x10] sm:$0xff]
      %v723 = vld [vmem:[%s5 + $0x18] sm:$0xff]
      %v724 = vld [vmem:[%s5 + $0x20] sm:$0xff]
      %v725 = vld [vmem:[%s5 + $0x28] sm:$0xff]
      %v726 = vld [vmem:[%s5 + $0x30] sm:$0xff]
      %v727 = vld [vmem:[%s5 + $0x38] sm:$0xff]
      %v728 = vld [vmem:[%s5 + $0x40] sm:$0xff]
      %v729 = vld [vmem:[%s5 + $0x48] sm:$0xff]
      %v730 = vld [vmem:[%s5 + $0x50] sm:$0xff]
      %v731 = vld [vmem:[%s5 + $0x58] sm:$0xff]
      %v732 = vld [vmem:[%s5 + $0x60] sm:$0xff]
      %v733 = vld [vmem:[%s5 + $0x68] sm:$0xff]
      %v734 = vld [vmem:[%s5 + $0x70] sm:$0xff]
      %v735 = vld [vmem:[%s5 + $0x78] sm:$0xff]
      %736 = vmatprep.subr.mxu0 0.0
      %737 = vmatpush1.msra.mxu0 %v720
      %738 = vmatprep.subr.mxu0 0.0
      %739 = vmatpush1.msra.mxu0 %v721
      %740 = vmatprep.subr.mxu0 0.0
      %741 = vmatpush1.msra.mxu0 %v722
      %742 = vmatprep.subr.mxu0 0.0
      %743 = vmatpush1.msra.mxu0 %v723
      %744 = vmatprep.subr.mxu0 0.0
      %745 = vmatpush1.msra.mxu0 %v724
      %746 = vmatprep.subr.mxu0 0.0
      %747 = vmatpush1.msra.mxu0 %v725
      %748 = vmatprep.subr.mxu0 0.0
      %749 = vmatpush1.msra.mxu0 %v726
      %750 = vmatprep.subr.mxu0 0.0
      %751 = vmatpush1.msra.mxu0 %v727
      %752 = vmatprep.subr.mxu0 0.0
      %753 = vmatpush1.msra.mxu0 %v728
      %754 = vmatprep.subr.mxu0 0.0
      %755 = vmatpush1.msra.mxu0 %v729
      %756 = vmatprep.subr.mxu0 0.0
      %757 = vmatpush1.msra.mxu0 %v730
      %758 = vmatprep.subr.mxu0 0.0
      %759 = vmatpush1.msra.mxu0 %v731
      %760 = vmatprep.subr.mxu0 0.0
      %761 = vmatpush1.msra.mxu0 %v732
      %762 = vmatprep.subr.mxu0 0.0
      %763 = vmatpush1.msra.mxu0 %v733
      %764 = vmatprep.subr.mxu0 0.0
      %765 = vmatpush1.msra.mxu0 %v734
      %766 = vmatprep.subr.mxu0 0.0
      %767 = vmatpush1.msra.mxu0 %v735
      %768 = vmatprep.subr.mxu0 0.0
      %769 = vmatpush1.msra.mxu0 0.0
      %770 = vmatprep.subr.mxu0 0.0
      %771 = vmatpush1.msra.mxu0 0.0
      %772 = vmatprep.subr.mxu0 0.0
      %773 = vmatpush1.msra.mxu0 0.0
      %774 = vmatprep.subr.mxu0 0.0
      %775 = vmatpush1.msra.mxu0 0.0
      %776 = vmatprep.subr.mxu0 0.0
      %777 = vmatpush1.msra.mxu0 0.0
      %778 = vmatprep.subr.mxu0 0.0
      %779 = vmatpush1.msra.mxu0 0.0
      %780 = vmatprep.subr.mxu0 0.0
      %781 = vmatpush1.msra.mxu0 0.0
      %782 = vmatprep.subr.mxu0 0.0
      %783 = vmatpush1.msra.mxu0 0.0
      %784 = vmatprep.subr.mxu0 0.0
      %785 = vmatpush1.msra.mxu0 0.0
      %786 = vmatprep.subr.mxu0 0.0
      %787 = vmatpush1.msra.mxu0 0.0
      %788 = vmatprep.subr.mxu0 0.0
      %789 = vmatpush1.msra.mxu0 0.0
      %790 = vmatprep.subr.mxu0 0.0
      %791 = vmatpush1.msra.mxu0 0.0
      %792 = vmatprep.subr.mxu0 0.0
      %793 = vmatpush1.msra.mxu0 0.0
      %794 = vmatprep.subr.mxu0 0.0
      %795 = vmatpush1.msra.mxu0 0.0
      %796 = vmatprep.subr.mxu0 0.0
      %797 = vmatpush1.msra.mxu0 0.0
      %798 = vmatprep.subr.mxu0 0.0
      %799 = vmatpush1.msra.mxu0 0.0
      %800 = vmatprep.mubr.f32.mxu0 0.0
      %801 = vmatmul.mubr.f32.gmra.mrb[0].mxu0 %v716
      %v802 = vpop.f32.mrb[0].mxu0
      %v803 = vadd.f32 0.0, %v802
      %v804 = vpop.f32.mrb[0].mxu0
      %805 = vmatprep.mubr.f32.mxu0 0.0
      %806 = vmatmul.mubr.f32.gmra.mrb[0].mxu0 %v717
      %v807 = vpop.f32.mrb[0].mxu0
      %v808 = vadd.f32 0.0, %v807
      %v809 = vpop.f32.mrb[0].mxu0
      %810 = vmatprep.mubr.f32.mxu0 0.0
      %811 = vmatmul.mubr.f32.gmra.mrb[0].mxu0 %v718
      %v812 = vpop.f32.mrb[0].mxu0
      %v813 = vadd.f32 0.0, %v812
      %v814 = vpop.f32.mrb[0].mxu0
      %815 = vmatprep.mubr.f32.mxu0 0.0
      %816 = vmatmul.mubr.f32.gmra.mrb[0].mxu0 %v719
      %v817 = vpop.f32.mrb[0].mxu0
      %v818 = vadd.f32 0.0, %v817
      %v819 = vpop.f32.mrb[0].mxu0
      %820 = vdwg.mxu0
      %v821 = vadd.f32 %v803, 0.0
      %v822 = vadd.f32 %v808, 0.0
      %v823 = vadd.f32 %v813, 0.0
      %v824 = vadd.f32 %v818, 0.0
      %s825 = scalar_lea.vmem %s5, 128
      %v826 = vld [vmem:[%s825] sm:$0xff]
      %v827 = vld [vmem:[%s825 + $0x8] sm:$0xff]
      %v828 = vld [vmem:[%s825 + $0x10] sm:$0xff]
      %v829 = vld [vmem:[%s825 + $0x18] sm:$0xff]
      %v830 = vld [vmem:[%s825 + $0x20] sm:$0xff]
      %v831 = vld [vmem:[%s825 + $0x28] sm:$0xff]
      %v832 = vld [vmem:[%s825 + $0x30] sm:$0xff]
      %v833 = vld [vmem:[%s825 + $0x38] sm:$0xff]
      %v834 = vld [vmem:[%s825 + $0x40] sm:$0xff]
      %v835 = vld [vmem:[%s825 + $0x48] sm:$0xff]
      %v836 = vld [vmem:[%s825 + $0x50] sm:$0xff]
      %v837 = vld [vmem:[%s825 + $0x58] sm:$0xff]
      %v838 = vld [vmem:[%s825 + $0x60] sm:$0xff]
      %v839 = vld [vmem:[%s825 + $0x68] sm:$0xff]
      %v840 = vld [vmem:[%s825 + $0x70] sm:$0xff]
      %v841 = vld [vmem:[%s825 + $0x78] sm:$0xff]
      %842 = vmatprep.subr.mxu0 0.0
      %843 = vmatpush1.msra.mxu0 %v826
      %844 = vmatprep.subr.mxu0 0.0
      %845 = vmatpush1.msra.mxu0 %v827
      %846 = vmatprep.subr.mxu0 0.0
      %847 = vmatpush1.msra.mxu0 %v828
      %848 = vmatprep.subr.mxu0 0.0
      %849 = vmatpush1.msra.mxu0 %v829
      %850 = vmatprep.subr.mxu0 0.0
      %851 = vmatpush1.msra.mxu0 %v830
      %852 = vmatprep.subr.mxu0 0.0
      %853 = vmatpush1.msra.mxu0 %v831
      %854 = vmatprep.subr.mxu0 0.0
      %855 = vmatpush1.msra.mxu0 %v832
      %856 = vmatprep.subr.mxu0 0.0
      %857 = vmatpush1.msra.mxu0 %v833
      %858 = vmatprep.subr.mxu0 0.0
      %859 = vmatpush1.msra.mxu0 %v834
      %860 = vmatprep.subr.mxu0 0.0
      %861 = vmatpush1.msra.mxu0 %v835
      %862 = vmatprep.subr.mxu0 0.0
      %863 = vmatpush1.msra.mxu0 %v836
      %864 = vmatprep.subr.mxu0 0.0
      %865 = vmatpush1.msra.mxu0 %v837
      %866 = vmatprep.subr.mxu0 0.0
      %867 = vmatpush1.msra.mxu0 %v838
      %868 = vmatprep.subr.mxu0 0.0
      %869 = vmatpush1.msra.mxu0 %v839
      %870 = vmatprep.subr.mxu0 0.0
      %871 = vmatpush1.msra.mxu0 %v840
      %872 = vmatprep.subr.mxu0 0.0
      %873 = vmatpush1.msra.mxu0 %v841
      %874 = vmatprep.subr.mxu0 0.0
      %875 = vmatpush1.msra.mxu0 0.0
      %876 = vmatprep.subr.mxu0 0.0
      %877 = vmatpush1.msra.mxu0 0.0
      %878 = vmatprep.subr.mxu0 0.0
      %879 = vmatpush1.msra.mxu0 0.0
      %880 = vmatprep.subr.mxu0 0.0
      %881 = vmatpush1.msra.mxu0 0.0
      %882 = vmatprep.subr.mxu0 0.0
      %883 = vmatpush1.msra.mxu0 0.0
      %884 = vmatprep.subr.mxu0 0.0
      %885 = vmatpush1.msra.mxu0 0.0
      %886 = vmatprep.subr.mxu0 0.0
      %887 = vmatpush1.msra.mxu0 0.0
      %888 = vmatprep.subr.mxu0 0.0
      %889 = vmatpush1.msra.mxu0 0.0
      %890 = vmatprep.subr.mxu0 0.0
      %891 = vmatpush1.msra.mxu0 0.0
      %892 = vmatprep.subr.mxu0 0.0
      %893 = vmatpush1.msra.mxu0 0.0
      %894 = vmatprep.subr.mxu0 0.0
      %895 = vmatpush1.msra.mxu0 0.0
      %896 = vmatprep.subr.mxu0 0.0
      %897 = vmatpush1.msra.mxu0 0.0
      %898 = vmatprep.subr.mxu0 0.0
      %899 = vmatpush1.msra.mxu0 0.0
      %900 = vmatprep.subr.mxu0 0.0
      %901 = vmatpush1.msra.mxu0 0.0
      %902 = vmatprep.subr.mxu0 0.0
      %903 = vmatpush1.msra.mxu0 0.0
      %904 = vmatprep.subr.mxu0 0.0
      %905 = vmatpush1.msra.mxu0 0.0
      %906 = vmatprep.mubr.f32.mxu0 0.0
      %907 = vmatmul.mubr.f32.gmra.mrb[0].mxu0 %v716
      %v908 = vpop.f32.mrb[0].mxu0
      %v909 = vadd.f32 0.0, %v908
      %v910 = vpop.f32.mrb[0].mxu0
      %911 = vmatprep.mubr.f32.mxu0 0.0
      %912 = vmatmul.mubr.f32.gmra.mrb[0].mxu0 %v717
      %v913 = vpop.f32.mrb[0].mxu0
      %v914 = vadd.f32 0.0, %v913
      %v915 = vpop.f32.mrb[0].mxu0
      %916 = vmatprep.mubr.f32.mxu0 0.0
      %917 = vmatmul.mubr.f32.gmra.mrb[0].mxu0 %v718
      %v918 = vpop.f32.mrb[0].mxu0
      %v919 = vadd.f32 0.0, %v918
      %v920 = vpop.f32.mrb[0].mxu0
      %921 = vmatprep.mubr.f32.mxu0 0.0
      %922 = vmatmul.mubr.f32.gmra.mrb[0].mxu0 %v719
      %v923 = vpop.f32.mrb[0].mxu0
      %v924 = vadd.f32 0.0, %v923
      %v925 = vpop.f32.mrb[0].mxu0
      %926 = vdwg.mxu0
      %v931 = vrot.slane %v909, 1
      %v932 = vrot.slane %v914, 1
      %v933 = vrot.slane %v919, 1
      %v934 = vrot.slane %v924, 1
      %v939 = vadd.f32 %v821, %v931
      %v940 = vadd.f32 %v822, %v932
      %v941 = vadd.f32 %v823, %v933
      %v942 = vadd.f32 %v824, %v934
      %s943 = scalar_lea.vmem %s5, 256
      %v944 = vld [vmem:[%s943] sm:$0xff]
      %v945 = vld [vmem:[%s943 + $0x8] sm:$0xff]
      %v946 = vld [vmem:[%s943 + $0x10] sm:$0xff]
      %v947 = vld [vmem:[%s943 + $0x18] sm:$0xff]
      %v948 = vld [vmem:[%s943 + $0x20] sm:$0xff]
      %v949 = vld [vmem:[%s943 + $0x28] sm:$0xff]
      %v950 = vld [vmem:[%s943 + $0x30] sm:$0xff]
      %v951 = vld [vmem:[%s943 + $0x38] sm:$0xff]
      %v952 = vld [vmem:[%s943 + $0x40] sm:$0xff]
      %v953 = vld [vmem:[%s943 + $0x48] sm:$0xff]
      %v954 = vld [vmem:[%s943 + $0x50] sm:$0xff]
      %v955 = vld [vmem:[%s943 + $0x58] sm:$0xff]
      %v956 = vld [vmem:[%s943 + $0x60] sm:$0xff]
      %v957 = vld [vmem:[%s943 + $0x68] sm:$0xff]
      %v958 = vld [vmem:[%s943 + $0x70] sm:$0xff]
      %v959 = vld [vmem:[%s943 + $0x78] sm:$0xff]
      %960 = vmatprep.subr.mxu0 0.0
      %961 = vmatpush1.msra.mxu0 %v944
      %962 = vmatprep.subr.mxu0 0.0
      %963 = vmatpush1.msra.mxu0 %v945
      %964 = vmatprep.subr.mxu0 0.0
      %965 = vmatpush1.msra.mxu0 %v946
      %966 = vmatprep.subr.mxu0 0.0
      %967 = vmatpush1.msra.mxu0 %v947
      %968 = vmatprep.subr.mxu0 0.0
      %969 = vmatpush1.msra.mxu0 %v948
      %970 = vmatprep.subr.mxu0 0.0
      %971 = vmatpush1.msra.mxu0 %v949
      %972 = vmatprep.subr.mxu0 0.0
      %973 = vmatpush1.msra.mxu0 %v950
      %974 = vmatprep.subr.mxu0 0.0
      %975 = vmatpush1.msra.mxu0 %v951
      %976 = vmatprep.subr.mxu0 0.0
      %977 = vmatpush1.msra.mxu0 %v952
      %978 = vmatprep.subr.mxu0 0.0
      %979 = vmatpush1.msra.mxu0 %v953
      %980 = vmatprep.subr.mxu0 0.0
      %981 = vmatpush1.msra.mxu0 %v954
      %982 = vmatprep.subr.mxu0 0.0
      %983 = vmatpush1.msra.mxu0 %v955
      %984 = vmatprep.subr.mxu0 0.0
      %985 = vmatpush1.msra.mxu0 %v956
      %986 = vmatprep.subr.mxu0 0.0
      %987 = vmatpush1.msra.mxu0 %v957
      %988 = vmatprep.subr.mxu0 0.0
      %989 = vmatpush1.msra.mxu0 %v958
      %990 = vmatprep.subr.mxu0 0.0
      %991 = vmatpush1.msra.mxu0 %v959
      %992 = vmatprep.subr.mxu0 0.0
      %993 = vmatpush1.msra.mxu0 0.0
      %994 = vmatprep.subr.mxu0 0.0
      %995 = vmatpush1.msra.mxu0 0.0
      %996 = vmatprep.subr.mxu0 0.0
      %997 = vmatpush1.msra.mxu0 0.0
      %998 = vmatprep.subr.mxu0 0.0
      %999 = vmatpush1.msra.mxu0 0.0
      %1000 = vmatprep.subr.mxu0 0.0
      %1001 = vmatpush1.msra.mxu0 0.0
      %1002 = vmatprep.subr.mxu0 0.0
      %1003 = vmatpush1.msra.mxu0 0.0
      %1004 = vmatprep.subr.mxu0 0.0
      %1005 = vmatpush1.msra.mxu0 0.0
      %1006 = vmatprep.subr.mxu0 0.0
      %1007 = vmatpush1.msra.mxu0 0.0
      %1008 = vmatprep.subr.mxu0 0.0
      %1009 = vmatpush1.msra.mxu0 0.0
      %1010 = vmatprep.subr.mxu0 0.0
      %1011 = vmatpush1.msra.mxu0 0.0
      %1012 = vmatprep.subr.mxu0 0.0
      %1013 = vmatpush1.msra.mxu0 0.0
      %1014 = vmatprep.subr.mxu0 0.0
      %1015 = vmatpush1.msra.mxu0 0.0
      %1016 = vmatprep.subr.mxu0 0.0
      %1017 = vmatpush1.msra.mxu0 0.0
      %1018 = vmatprep.subr.mxu0 0.0
      %1019 = vmatpush1.msra.mxu0 0.0
      %1020 = vmatprep.subr.mxu0 0.0
      %1021 = vmatpush1.msra.mxu0 0.0
      %1022 = vmatprep.subr.mxu0 0.0
      %1023 = vmatpush1.msra.mxu0 0.0
      %1024 = vmatprep.mubr.f32.mxu0 0.0
      %1025 = vmatmul.mubr.f32.gmra.mrb[0].mxu0 %v716
      %v1026 = vpop.f32.mrb[0].mxu0
      %v1027 = vadd.f32 0.0, %v1026
      %v1028 = vpop.f32.mrb[0].mxu0
      %1029 = vmatprep.mubr.f32.mxu0 0.0
      %1030 = vmatmul.mubr.f32.gmra.mrb[0].mxu0 %v717
      %v1031 = vpop.f32.mrb[0].mxu0
      %v1032 = vadd.f32 0.0, %v1031
      %v1033 = vpop.f32.mrb[0].mxu0
      %1034 = vmatprep.mubr.f32.mxu0 0.0
      %1035 = vmatmul.mubr.f32.gmra.mrb[0].mxu0 %v718
      %v1036 = vpop.f32.mrb[0].mxu0
      %v1037 = vadd.f32 0.0, %v1036
      %v1038 = vpop.f32.mrb[0].mxu0
      %1039 = vmatprep.mubr.f32.mxu0 0.0
      %1040 = vmatmul.mubr.f32.gmra.mrb[0].mxu0 %v719
      %v1041 = vpop.f32.mrb[0].mxu0
      %v1042 = vadd.f32 0.0, %v1041
      %v1043 = vpop.f32.mrb[0].mxu0
      %1044 = vdwg.mxu0
      %v1049 = vrot.slane %v1027, 2
      %v1050 = vrot.slane %v1032, 2
      %v1051 = vrot.slane %v1037, 2
      %v1052 = vrot.slane %v1042, 2
      %v1057 = vadd.f32 %v939, %v1049
      %v1058 = vadd.f32 %v940, %v1050
      %v1059 = vadd.f32 %v941, %v1051
      %v1060 = vadd.f32 %v942, %v1052
      %v1061 = vld [vmem:[%s618] sm:$0xff]
      %v1062 = vld [vmem:[%s618 + $0x8] sm:$0xff]
      %v1063 = vld [vmem:[%s618 + $0x10] sm:$0xff]
      %v1064 = vld [vmem:[%s618 + $0x18] sm:$0xff]
      %s1065 = scalar_lea.vmem %s5, 384
      %v1066 = vld [vmem:[%s1065] sm:$0xff]
      %v1067 = vld [vmem:[%s1065 + $0x8] sm:$0xff]
      %v1068 = vld [vmem:[%s1065 + $0x10] sm:$0xff]
      %v1069 = vld [vmem:[%s1065 + $0x18] sm:$0xff]
      %v1070 = vld [vmem:[%s1065 + $0x20] sm:$0xff]
      %v1071 = vld [vmem:[%s1065 + $0x28] sm:$0xff]
      %v1072 = vld [vmem:[%s1065 + $0x30] sm:$0xff]
      %v1073 = vld [vmem:[%s1065 + $0x38] sm:$0xff]
      %v1074 = vld [vmem:[%s1065 + $0x40] sm:$0xff]
      %v1075 = vld [vmem:[%s1065 + $0x48] sm:$0xff]
      %v1076 = vld [vmem:[%s1065 + $0x50] sm:$0xff]
      %v1077 = vld [vmem:[%s1065 + $0x58] sm:$0xff]
      %v1078 = vld [vmem:[%s1065 + $0x60] sm:$0xff]
      %v1079 = vld [vmem:[%s1065 + $0x68] sm:$0xff]
      %v1080 = vld [vmem:[%s1065 + $0x70] sm:$0xff]
      %v1081 = vld [vmem:[%s1065 + $0x78] sm:$0xff]
      %1082 = vmatprep.subr.mxu0 0.0
      %1083 = vmatpush1.msra.mxu0 %v1066
      %1084 = vmatprep.subr.mxu0 0.0
      %1085 = vmatpush1.msra.mxu0 %v1067
      %1086 = vmatprep.subr.mxu0 0.0
      %1087 = vmatpush1.msra.mxu0 %v1068
      %1088 = vmatprep.subr.mxu0 0.0
      %1089 = vmatpush1.msra.mxu0 %v1069
      %1090 = vmatprep.subr.mxu0 0.0
      %1091 = vmatpush1.msra.mxu0 %v1070
      %1092 = vmatprep.subr.mxu0 0.0
      %1093 = vmatpush1.msra.mxu0 %v1071
      %1094 = vmatprep.subr.mxu0 0.0
      %1095 = vmatpush1.msra.mxu0 %v1072
      %1096 = vmatprep.subr.mxu0 0.0
      %1097 = vmatpush1.msra.mxu0 %v1073
      %1098 = vmatprep.subr.mxu0 0.0
      %1099 = vmatpush1.msra.mxu0 %v1074
      %1100 = vmatprep.subr.mxu0 0.0
      %1101 = vmatpush1.msra.mxu0 %v1075
      %1102 = vmatprep.subr.mxu0 0.0
      %1103 = vmatpush1.msra.mxu0 %v1076
      %1104 = vmatprep.subr.mxu0 0.0
      %1105 = vmatpush1.msra.mxu0 %v1077
      %1106 = vmatprep.subr.mxu0 0.0
      %1107 = vmatpush1.msra.mxu0 %v1078
      %1108 = vmatprep.subr.mxu0 0.0
      %1109 = vmatpush1.msra.mxu0 %v1079
      %1110 = vmatprep.subr.mxu0 0.0
      %1111 = vmatpush1.msra.mxu0 %v1080
      %1112 = vmatprep.subr.mxu0 0.0
      %1113 = vmatpush1.msra.mxu0 %v1081
      %1114 = vmatprep.subr.mxu0 0.0
      %1115 = vmatpush1.msra.mxu0 0.0
      %1116 = vmatprep.subr.mxu0 0.0
      %1117 = vmatpush1.msra.mxu0 0.0
      %1118 = vmatprep.subr.mxu0 0.0
      %1119 = vmatpush1.msra.mxu0 0.0
      %1120 = vmatprep.subr.mxu0 0.0
      %1121 = vmatpush1.msra.mxu0 0.0
      %1122 = vmatprep.subr.mxu0 0.0
      %1123 = vmatpush1.msra.mxu0 0.0
      %1124 = vmatprep.subr.mxu0 0.0
      %1125 = vmatpush1.msra.mxu0 0.0
      %1126 = vmatprep.subr.mxu0 0.0
      %1127 = vmatpush1.msra.mxu0 0.0
      %1128 = vmatprep.subr.mxu0 0.0
      %1129 = vmatpush1.msra.mxu0 0.0
      %1130 = vmatprep.subr.mxu0 0.0
      %1131 = vmatpush1.msra.mxu0 0.0
      %1132 = vmatprep.subr.mxu0 0.0
      %1133 = vmatpush1.msra.mxu0 0.0
      %1134 = vmatprep.subr.mxu0 0.0
      %1135 = vmatpush1.msra.mxu0 0.0
      %1136 = vmatprep.subr.mxu0 0.0
      %1137 = vmatpush1.msra.mxu0 0.0
      %1138 = vmatprep.subr.mxu0 0.0
      %1139 = vmatpush1.msra.mxu0 0.0
      %1140 = vmatprep.subr.mxu0 0.0
      %1141 = vmatpush1.msra.mxu0 0.0
      %1142 = vmatprep.subr.mxu0 0.0
      %1143 = vmatpush1.msra.mxu0 0.0
      %1144 = vmatprep.subr.mxu0 0.0
      %1145 = vmatpush1.msra.mxu0 0.0
      %1146 = vmatprep.mubr.f32.mxu0 0.0
      %1147 = vmatmul.mubr.f32.gmra.mrb[0].mxu0 %v1061
      %v1148 = vpop.f32.mrb[0].mxu0
      %v1149 = vadd.f32 0.0, %v1148
      %v1150 = vpop.f32.mrb[0].mxu0
      %1151 = vmatprep.mubr.f32.mxu0 0.0
      %1152 = vmatmul.mubr.f32.gmra.mrb[0].mxu0 %v1062
      %v1153 = vpop.f32.mrb[0].mxu0
      %v1154 = vadd.f32 0.0, %v1153
      %v1155 = vpop.f32.mrb[0].mxu0
      %1156 = vmatprep.mubr.f32.mxu0 0.0
      %1157 = vmatmul.mubr.f32.gmra.mrb[0].mxu0 %v1063
      %v1158 = vpop.f32.mrb[0].mxu0
      %v1159 = vadd.f32 0.0, %v1158
      %v1160 = vpop.f32.mrb[0].mxu0
      %1161 = vmatprep.mubr.f32.mxu0 0.0
      %1162 = vmatmul.mubr.f32.gmra.mrb[0].mxu0 %v1064
      %v1163 = vpop.f32.mrb[0].mxu0
      %v1164 = vadd.f32 0.0, %v1163
      %v1165 = vpop.f32.mrb[0].mxu0
      %1166 = vdwg.mxu0
      %v1167 = vadd.f32 %v1057, %v1149
      %v1168 = vadd.f32 %v1058, %v1154
      %v1169 = vadd.f32 %v1059, %v1159
      %v1170 = vadd.f32 %v1060, %v1164
      %s1171 = scalar_lea.vmem %s5, 512
      %v1172 = vld [vmem:[%s1171] sm:$0xff]
      %v1173 = vld [vmem:[%s1171 + $0x8] sm:$0xff]
      %v1174 = vld [vmem:[%s1171 + $0x10] sm:$0xff]
      %v1175 = vld [vmem:[%s1171 + $0x18] sm:$0xff]
      %v1176 = vld [vmem:[%s1171 + $0x20] sm:$0xff]
      %v1177 = vld [vmem:[%s1171 + $0x28] sm:$0xff]
      %v1178 = vld [vmem:[%s1171 + $0x30] sm:$0xff]
      %v1179 = vld [vmem:[%s1171 + $0x38] sm:$0xff]
      %v1180 = vld [vmem:[%s1171 + $0x40] sm:$0xff]
      %v1181 = vld [vmem:[%s1171 + $0x48] sm:$0xff]
      %v1182 = vld [vmem:[%s1171 + $0x50] sm:$0xff]
      %v1183 = vld [vmem:[%s1171 + $0x58] sm:$0xff]
      %v1184 = vld [vmem:[%s1171 + $0x60] sm:$0xff]
      %v1185 = vld [vmem:[%s1171 + $0x68] sm:$0xff]
      %v1186 = vld [vmem:[%s1171 + $0x70] sm:$0xff]
      %v1187 = vld [vmem:[%s1171 + $0x78] sm:$0xff]
      %1188 = vmatprep.subr.mxu0 0.0
      %1189 = vmatpush1.msra.mxu0 %v1172
      %1190 = vmatprep.subr.mxu0 0.0
      %1191 = vmatpush1.msra.mxu0 %v1173
      %1192 = vmatprep.subr.mxu0 0.0
      %1193 = vmatpush1.msra.mxu0 %v1174
      %1194 = vmatprep.subr.mxu0 0.0
      %1195 = vmatpush1.msra.mxu0 %v1175
      %1196 = vmatprep.subr.mxu0 0.0
      %1197 = vmatpush1.msra.mxu0 %v1176
      %1198 = vmatprep.subr.mxu0 0.0
      %1199 = vmatpush1.msra.mxu0 %v1177
      %1200 = vmatprep.subr.mxu0 0.0
      %1201 = vmatpush1.msra.mxu0 %v1178
      %1202 = vmatprep.subr.mxu0 0.0
      %1203 = vmatpush1.msra.mxu0 %v1179
      %1204 = vmatprep.subr.mxu0 0.0
      %1205 = vmatpush1.msra.mxu0 %v1180
      %1206 = vmatprep.subr.mxu0 0.0
      %1207 = vmatpush1.msra.mxu0 %v1181
      %1208 = vmatprep.subr.mxu0 0.0
      %1209 = vmatpush1.msra.mxu0 %v1182
      %1210 = vmatprep.subr.mxu0 0.0
      %1211 = vmatpush1.msra.mxu0 %v1183
      %1212 = vmatprep.subr.mxu0 0.0
      %1213 = vmatpush1.msra.mxu0 %v1184
      %1214 = vmatprep.subr.mxu0 0.0
      %1215 = vmatpush1.msra.mxu0 %v1185
      %1216 = vmatprep.subr.mxu0 0.0
      %1217 = vmatpush1.msra.mxu0 %v1186
      %1218 = vmatprep.subr.mxu0 0.0
      %1219 = vmatpush1.msra.mxu0 %v1187
      %1220 = vmatprep.subr.mxu0 0.0
      %1221 = vmatpush1.msra.mxu0 0.0
      %1222 = vmatprep.subr.mxu0 0.0
      %1223 = vmatpush1.msra.mxu0 0.0
      %1224 = vmatprep.subr.mxu0 0.0
      %1225 = vmatpush1.msra.mxu0 0.0
      %1226 = vmatprep.subr.mxu0 0.0
      %1227 = vmatpush1.msra.mxu0 0.0
      %1228 = vmatprep.subr.mxu0 0.0
      %1229 = vmatpush1.msra.mxu0 0.0
      %1230 = vmatprep.subr.mxu0 0.0
      %1231 = vmatpush1.msra.mxu0 0.0
      %1232 = vmatprep.subr.mxu0 0.0
      %1233 = vmatpush1.msra.mxu0 0.0
      %1234 = vmatprep.subr.mxu0 0.0
      %1235 = vmatpush1.msra.mxu0 0.0
      %1236 = vmatprep.subr.mxu0 0.0
      %1237 = vmatpush1.msra.mxu0 0.0
      %1238 = vmatprep.subr.mxu0 0.0
      %1239 = vmatpush1.msra.mxu0 0.0
      %1240 = vmatprep.subr.mxu0 0.0
      %1241 = vmatpush1.msra.mxu0 0.0
      %1242 = vmatprep.subr.mxu0 0.0
      %1243 = vmatpush1.msra.mxu0 0.0
      %1244 = vmatprep.subr.mxu0 0.0
      %1245 = vmatpush1.msra.mxu0 0.0
      %1246 = vmatprep.subr.mxu0 0.0
      %1247 = vmatpush1.msra.mxu0 0.0
      %1248 = vmatprep.subr.mxu0 0.0
      %1249 = vmatpush1.msra.mxu0 0.0
      %1250 = vmatprep.subr.mxu0 0.0
      %1251 = vmatpush1.msra.mxu0 0.0
      %1252 = vmatprep.mubr.f32.mxu0 0.0
      %1253 = vmatmul.mubr.f32.gmra.mrb[0].mxu0 %v1061
      %v1254 = vpop.f32.mrb[0].mxu0
      %v1255 = vadd.f32 0.0, %v1254
      %v1256 = vpop.f32.mrb[0].mxu0
      %1257 = vmatprep.mubr.f32.mxu0 0.0
      %1258 = vmatmul.mubr.f32.gmra.mrb[0].mxu0 %v1062
      %v1259 = vpop.f32.mrb[0].mxu0
      %v1260 = vadd.f32 0.0, %v1259
      %v1261 = vpop.f32.mrb[0].mxu0
      %1262 = vmatprep.mubr.f32.mxu0 0.0
      %1263 = vmatmul.mubr.f32.gmra.mrb[0].mxu0 %v1063
      %v1264 = vpop.f32.mrb[0].mxu0
      %v1265 = vadd.f32 0.0, %v1264
      %v1266 = vpop.f32.mrb[0].mxu0
      %1267 = vmatprep.mubr.f32.mxu0 0.0
      %1268 = vmatmul.mubr.f32.gmra.mrb[0].mxu0 %v1064
      %v1269 = vpop.f32.mrb[0].mxu0
      %v1270 = vadd.f32 0.0, %v1269
      %v1271 = vpop.f32.mrb[0].mxu0
      %1272 = vdwg.mxu0
      %v1277 = vrot.slane %v1255, 1
      %v1278 = vrot.slane %v1260, 1
      %v1279 = vrot.slane %v1265, 1
      %v1280 = vrot.slane %v1270, 1
      %v1285 = vadd.f32 %v1167, %v1277
      %v1286 = vadd.f32 %v1168, %v1278
      %v1287 = vadd.f32 %v1169, %v1279
      %v1288 = vadd.f32 %v1170, %v1280
      %s1289 = scalar_lea.vmem %s5, 640
      %v1290 = vld [vmem:[%s1289] sm:$0xff]
      %v1291 = vld [vmem:[%s1289 + $0x8] sm:$0xff]
      %v1292 = vld [vmem:[%s1289 + $0x10] sm:$0xff]
      %v1293 = vld [vmem:[%s1289 + $0x18] sm:$0xff]
      %v1294 = vld [vmem:[%s1289 + $0x20] sm:$0xff]
      %v1295 = vld [vmem:[%s1289 + $0x28] sm:$0xff]
      %v1296 = vld [vmem:[%s1289 + $0x30] sm:$0xff]
      %v1297 = vld [vmem:[%s1289 + $0x38] sm:$0xff]
      %v1298 = vld [vmem:[%s1289 + $0x40] sm:$0xff]
      %v1299 = vld [vmem:[%s1289 + $0x48] sm:$0xff]
      %v1300 = vld [vmem:[%s1289 + $0x50] sm:$0xff]
      %v1301 = vld [vmem:[%s1289 + $0x58] sm:$0xff]
      %v1302 = vld [vmem:[%s1289 + $0x60] sm:$0xff]
      %v1303 = vld [vmem:[%s1289 + $0x68] sm:$0xff]
      %v1304 = vld [vmem:[%s1289 + $0x70] sm:$0xff]
      %v1305 = vld [vmem:[%s1289 + $0x78] sm:$0xff]
      %1306 = vmatprep.subr.mxu0 0.0
      %1307 = vmatpush1.msra.mxu0 %v1290
      %1308 = vmatprep.subr.mxu0 0.0
      %1309 = vmatpush1.msra.mxu0 %v1291
      %1310 = vmatprep.subr.mxu0 0.0
      %1311 = vmatpush1.msra.mxu0 %v1292
      %1312 = vmatprep.subr.mxu0 0.0
      %1313 = vmatpush1.msra.mxu0 %v1293
      %1314 = vmatprep.subr.mxu0 0.0
      %1315 = vmatpush1.msra.mxu0 %v1294
      %1316 = vmatprep.subr.mxu0 0.0
      %1317 = vmatpush1.msra.mxu0 %v1295
      %1318 = vmatprep.subr.mxu0 0.0
      %1319 = vmatpush1.msra.mxu0 %v1296
      %1320 = vmatprep.subr.mxu0 0.0
      %1321 = vmatpush1.msra.mxu0 %v1297
      %1322 = vmatprep.subr.mxu0 0.0
      %1323 = vmatpush1.msra.mxu0 %v1298
      %1324 = vmatprep.subr.mxu0 0.0
      %1325 = vmatpush1.msra.mxu0 %v1299
      %1326 = vmatprep.subr.mxu0 0.0
      %1327 = vmatpush1.msra.mxu0 %v1300
      %1328 = vmatprep.subr.mxu0 0.0
      %1329 = vmatpush1.msra.mxu0 %v1301
      %1330 = vmatprep.subr.mxu0 0.0
      %1331 = vmatpush1.msra.mxu0 %v1302
      %1332 = vmatprep.subr.mxu0 0.0
      %1333 = vmatpush1.msra.mxu0 %v1303
      %1334 = vmatprep.subr.mxu0 0.0
      %1335 = vmatpush1.msra.mxu0 %v1304
      %1336 = vmatprep.subr.mxu0 0.0
      %1337 = vmatpush1.msra.mxu0 %v1305
      %1338 = vmatprep.subr.mxu0 0.0
      %1339 = vmatpush1.msra.mxu0 0.0
      %1340 = vmatprep.subr.mxu0 0.0
      %1341 = vmatpush1.msra.mxu0 0.0
      %1342 = vmatprep.subr.mxu0 0.0
      %1343 = vmatpush1.msra.mxu0 0.0
      %1344 = vmatprep.subr.mxu0 0.0
      %1345 = vmatpush1.msra.mxu0 0.0
      %1346 = vmatprep.subr.mxu0 0.0
      %1347 = vmatpush1.msra.mxu0 0.0
      %1348 = vmatprep.subr.mxu0 0.0
      %1349 = vmatpush1.msra.mxu0 0.0
      %1350 = vmatprep.subr.mxu0 0.0
      %1351 = vmatpush1.msra.mxu0 0.0
      %1352 = vmatprep.subr.mxu0 0.0
      %1353 = vmatpush1.msra.mxu0 0.0
      %1354 = vmatprep.subr.mxu0 0.0
      %1355 = vmatpush1.msra.mxu0 0.0
      %1356 = vmatprep.subr.mxu0 0.0
      %1357 = vmatpush1.msra.mxu0 0.0
      %1358 = vmatprep.subr.mxu0 0.0
      %1359 = vmatpush1.msra.mxu0 0.0
      %1360 = vmatprep.subr.mxu0 0.0
      %1361 = vmatpush1.msra.mxu0 0.0
      %1362 = vmatprep.subr.mxu0 0.0
      %1363 = vmatpush1.msra.mxu0 0.0
      %1364 = vmatprep.subr.mxu0 0.0
      %1365 = vmatpush1.msra.mxu0 0.0
      %1366 = vmatprep.subr.mxu0 0.0
      %1367 = vmatpush1.msra.mxu0 0.0
      %1368 = vmatprep.subr.mxu0 0.0
      %1369 = vmatpush1.msra.mxu0 0.0
      %1370 = vmatprep.mubr.f32.mxu0 0.0
      %1371 = vmatmul.mubr.f32.gmra.mrb[0].mxu0 %v1061
      %v1372 = vpop.f32.mrb[0].mxu0
      %v1373 = vadd.f32 0.0, %v1372
      %v1374 = vpop.f32.mrb[0].mxu0
      %1375 = vmatprep.mubr.f32.mxu0 0.0
      %1376 = vmatmul.mubr.f32.gmra.mrb[0].mxu0 %v1062
      %v1377 = vpop.f32.mrb[0].mxu0
      %v1378 = vadd.f32 0.0, %v1377
      %v1379 = vpop.f32.mrb[0].mxu0
      %1380 = vmatprep.mubr.f32.mxu0 0.0
      %1381 = vmatmul.mubr.f32.gmra.mrb[0].mxu0 %v1063
      %v1382 = vpop.f32.mrb[0].mxu0
      %v1383 = vadd.f32 0.0, %v1382
      %v1384 = vpop.f32.mrb[0].mxu0
      %1385 = vmatprep.mubr.f32.mxu0 0.0
      %1386 = vmatmul.mubr.f32.gmra.mrb[0].mxu0 %v1064
      %v1387 = vpop.f32.mrb[0].mxu0
      %v1388 = vadd.f32 0.0, %v1387
      %v1389 = vpop.f32.mrb[0].mxu0
      %1390 = vdwg.mxu0
      %v1395 = vrot.slane %v1373, 2
      %v1396 = vrot.slane %v1378, 2
      %v1397 = vrot.slane %v1383, 2
      %v1398 = vrot.slane %v1388, 2
      %v1403 = vadd.f32 %v1285, %v1395
      %v1404 = vadd.f32 %v1286, %v1396
      %v1405 = vadd.f32 %v1287, %v1397
      %v1406 = vadd.f32 %v1288, %v1398
      %s1407 = scalar_lea.vmem [#allocation2], 16
      %v1408 = vld [vmem:[%s1407] sm:$0xff]
      %v1409 = vld [vmem:[%s1407 + $0x8] sm:$0xff]
      %v1410 = vld [vmem:[%s1407 + $0x10] sm:$0xff]
      %v1411 = vld [vmem:[%s1407 + $0x18] sm:$0xff]
      %s1412 = scalar_lea.vmem %s5, 768
      %v1413 = vld [vmem:[%s1412] sm:$0xff]
      %v1414 = vld [vmem:[%s1412 + $0x8] sm:$0xff]
      %v1415 = vld [vmem:[%s1412 + $0x10] sm:$0xff]
      %v1416 = vld [vmem:[%s1412 + $0x18] sm:$0xff]
      %v1417 = vld [vmem:[%s1412 + $0x20] sm:$0xff]
      %v1418 = vld [vmem:[%s1412 + $0x28] sm:$0xff]
      %v1419 = vld [vmem:[%s1412 + $0x30] sm:$0xff]
      %v1420 = vld [vmem:[%s1412 + $0x38] sm:$0xff]
      %v1421 = vld [vmem:[%s1412 + $0x40] sm:$0xff]
      %v1422 = vld [vmem:[%s1412 + $0x48] sm:$0xff]
      %v1423 = vld [vmem:[%s1412 + $0x50] sm:$0xff]
      %v1424 = vld [vmem:[%s1412 + $0x58] sm:$0xff]
      %v1425 = vld [vmem:[%s1412 + $0x60] sm:$0xff]
      %v1426 = vld [vmem:[%s1412 + $0x68] sm:$0xff]
      %v1427 = vld [vmem:[%s1412 + $0x70] sm:$0xff]
      %v1428 = vld [vmem:[%s1412 + $0x78] sm:$0xff]
      %1429 = vmatprep.subr.mxu0 0.0
      %1430 = vmatpush1.msra.mxu0 %v1413
      %1431 = vmatprep.subr.mxu0 0.0
      %1432 = vmatpush1.msra.mxu0 %v1414
      %1433 = vmatprep.subr.mxu0 0.0
      %1434 = vmatpush1.msra.mxu0 %v1415
      %1435 = vmatprep.subr.mxu0 0.0
      %1436 = vmatpush1.msra.mxu0 %v1416
      %1437 = vmatprep.subr.mxu0 0.0
      %1438 = vmatpush1.msra.mxu0 %v1417
      %1439 = vmatprep.subr.mxu0 0.0
      %1440 = vmatpush1.msra.mxu0 %v1418
      %1441 = vmatprep.subr.mxu0 0.0
      %1442 = vmatpush1.msra.mxu0 %v1419
      %1443 = vmatprep.subr.mxu0 0.0
      %1444 = vmatpush1.msra.mxu0 %v1420
      %1445 = vmatprep.subr.mxu0 0.0
      %1446 = vmatpush1.msra.mxu0 %v1421
      %1447 = vmatprep.subr.mxu0 0.0
      %1448 = vmatpush1.msra.mxu0 %v1422
      %1449 = vmatprep.subr.mxu0 0.0
      %1450 = vmatpush1.msra.mxu0 %v1423
      %1451 = vmatprep.subr.mxu0 0.0
      %1452 = vmatpush1.msra.mxu0 %v1424
      %1453 = vmatprep.subr.mxu0 0.0
      %1454 = vmatpush1.msra.mxu0 %v1425
      %1455 = vmatprep.subr.mxu0 0.0
      %1456 = vmatpush1.msra.mxu0 %v1426
      %1457 = vmatprep.subr.mxu0 0.0
      %1458 = vmatpush1.msra.mxu0 %v1427
      %1459 = vmatprep.subr.mxu0 0.0
      %1460 = vmatpush1.msra.mxu0 %v1428
      %1461 = vmatprep.subr.mxu0 0.0
      %1462 = vmatpush1.msra.mxu0 0.0
      %1463 = vmatprep.subr.mxu0 0.0
      %1464 = vmatpush1.msra.mxu0 0.0
      %1465 = vmatprep.subr.mxu0 0.0
      %1466 = vmatpush1.msra.mxu0 0.0
      %1467 = vmatprep.subr.mxu0 0.0
      %1468 = vmatpush1.msra.mxu0 0.0
      %1469 = vmatprep.subr.mxu0 0.0
      %1470 = vmatpush1.msra.mxu0 0.0
      %1471 = vmatprep.subr.mxu0 0.0
      %1472 = vmatpush1.msra.mxu0 0.0
      %1473 = vmatprep.subr.mxu0 0.0
      %1474 = vmatpush1.msra.mxu0 0.0
      %1475 = vmatprep.subr.mxu0 0.0
      %1476 = vmatpush1.msra.mxu0 0.0
      %1477 = vmatprep.subr.mxu0 0.0
      %1478 = vmatpush1.msra.mxu0 0.0
      %1479 = vmatprep.subr.mxu0 0.0
      %1480 = vmatpush1.msra.mxu0 0.0
      %1481 = vmatprep.subr.mxu0 0.0
      %1482 = vmatpush1.msra.mxu0 0.0
      %1483 = vmatprep.subr.mxu0 0.0
      %1484 = vmatpush1.msra.mxu0 0.0
      %1485 = vmatprep.subr.mxu0 0.0
      %1486 = vmatpush1.msra.mxu0 0.0
      %1487 = vmatprep.subr.mxu0 0.0
      %1488 = vmatpush1.msra.mxu0 0.0
      %1489 = vmatprep.subr.mxu0 0.0
      %1490 = vmatpush1.msra.mxu0 0.0
      %1491 = vmatprep.subr.mxu0 0.0
      %1492 = vmatpush1.msra.mxu0 0.0
      %1493 = vmatprep.mubr.f32.mxu0 0.0
      %1494 = vmatmul.mubr.f32.gmra.mrb[0].mxu0 %v1408
      %v1495 = vpop.f32.mrb[0].mxu0
      %v1496 = vadd.f32 0.0, %v1495
      %v1497 = vpop.f32.mrb[0].mxu0
      %1498 = vmatprep.mubr.f32.mxu0 0.0
      %1499 = vmatmul.mubr.f32.gmra.mrb[0].mxu0 %v1409
      %v1500 = vpop.f32.mrb[0].mxu0
      %v1501 = vadd.f32 0.0, %v1500
      %v1502 = vpop.f32.mrb[0].mxu0
      %1503 = vmatprep.mubr.f32.mxu0 0.0
      %1504 = vmatmul.mubr.f32.gmra.mrb[0].mxu0 %v1410
      %v1505 = vpop.f32.mrb[0].mxu0
      %v1506 = vadd.f32 0.0, %v1505
      %v1507 = vpop.f32.mrb[0].mxu0
      %1508 = vmatprep.mubr.f32.mxu0 0.0
      %1509 = vmatmul.mubr.f32.gmra.mrb[0].mxu0 %v1411
      %v1510 = vpop.f32.mrb[0].mxu0
      %v1511 = vadd.f32 0.0, %v1510
      %v1512 = vpop.f32.mrb[0].mxu0
      %1513 = vdwg.mxu0
      %v1514 = vadd.f32 %v1403, %v1496
      %v1515 = vadd.f32 %v1404, %v1501
      %v1516 = vadd.f32 %v1405, %v1506
      %v1517 = vadd.f32 %v1406, %v1511
      %s1518 = scalar_lea.vmem %s5, 896
      %v1519 = vld [vmem:[%s1518] sm:$0xff]
      %v1520 = vld [vmem:[%s1518 + $0x8] sm:$0xff]
      %v1521 = vld [vmem:[%s1518 + $0x10] sm:$0xff]
      %v1522 = vld [vmem:[%s1518 + $0x18] sm:$0xff]
      %v1523 = vld [vmem:[%s1518 + $0x20] sm:$0xff]
      %v1524 = vld [vmem:[%s1518 + $0x28] sm:$0xff]
      %v1525 = vld [vmem:[%s1518 + $0x30] sm:$0xff]
      %v1526 = vld [vmem:[%s1518 + $0x38] sm:$0xff]
      %v1527 = vld [vmem:[%s1518 + $0x40] sm:$0xff]
      %v1528 = vld [vmem:[%s1518 + $0x48] sm:$0xff]
      %v1529 = vld [vmem:[%s1518 + $0x50] sm:$0xff]
      %v1530 = vld [vmem:[%s1518 + $0x58] sm:$0xff]
      %v1531 = vld [vmem:[%s1518 + $0x60] sm:$0xff]
      %v1532 = vld [vmem:[%s1518 + $0x68] sm:$0xff]
      %v1533 = vld [vmem:[%s1518 + $0x70] sm:$0xff]
      %v1534 = vld [vmem:[%s1518 + $0x78] sm:$0xff]
      %1535 = vmatprep.subr.mxu0 0.0
      %1536 = vmatpush1.msra.mxu0 %v1519
      %1537 = vmatprep.subr.mxu0 0.0
      %1538 = vmatpush1.msra.mxu0 %v1520
      %1539 = vmatprep.subr.mxu0 0.0
      %1540 = vmatpush1.msra.mxu0 %v1521
      %1541 = vmatprep.subr.mxu0 0.0
      %1542 = vmatpush1.msra.mxu0 %v1522
      %1543 = vmatprep.subr.mxu0 0.0
      %1544 = vmatpush1.msra.mxu0 %v1523
      %1545 = vmatprep.subr.mxu0 0.0
      %1546 = vmatpush1.msra.mxu0 %v1524
      %1547 = vmatprep.subr.mxu0 0.0
      %1548 = vmatpush1.msra.mxu0 %v1525
      %1549 = vmatprep.subr.mxu0 0.0
      %1550 = vmatpush1.msra.mxu0 %v1526
      %1551 = vmatprep.subr.mxu0 0.0
      %1552 = vmatpush1.msra.mxu0 %v1527
      %1553 = vmatprep.subr.mxu0 0.0
      %1554 = vmatpush1.msra.mxu0 %v1528
      %1555 = vmatprep.subr.mxu0 0.0
      %1556 = vmatpush1.msra.mxu0 %v1529
      %1557 = vmatprep.subr.mxu0 0.0
      %1558 = vmatpush1.msra.mxu0 %v1530
      %1559 = vmatprep.subr.mxu0 0.0
      %1560 = vmatpush1.msra.mxu0 %v1531
      %1561 = vmatprep.subr.mxu0 0.0
      %1562 = vmatpush1.msra.mxu0 %v1532
      %1563 = vmatprep.subr.mxu0 0.0
      %1564 = vmatpush1.msra.mxu0 %v1533
      %1565 = vmatprep.subr.mxu0 0.0
      %1566 = vmatpush1.msra.mxu0 %v1534
      %1567 = vmatprep.subr.mxu0 0.0
      %1568 = vmatpush1.msra.mxu0 0.0
      %1569 = vmatprep.subr.mxu0 0.0
      %1570 = vmatpush1.msra.mxu0 0.0
      %1571 = vmatprep.subr.mxu0 0.0
      %1572 = vmatpush1.msra.mxu0 0.0
      %1573 = vmatprep.subr.mxu0 0.0
      %1574 = vmatpush1.msra.mxu0 0.0
      %1575 = vmatprep.subr.mxu0 0.0
      %1576 = vmatpush1.msra.mxu0 0.0
      %1577 = vmatprep.subr.mxu0 0.0
      %1578 = vmatpush1.msra.mxu0 0.0
      %1579 = vmatprep.subr.mxu0 0.0
      %1580 = vmatpush1.msra.mxu0 0.0
      %1581 = vmatprep.subr.mxu0 0.0
      %1582 = vmatpush1.msra.mxu0 0.0
      %1583 = vmatprep.subr.mxu0 0.0
      %1584 = vmatpush1.msra.mxu0 0.0
      %1585 = vmatprep.subr.mxu0 0.0
      %1586 = vmatpush1.msra.mxu0 0.0
      %1587 = vmatprep.subr.mxu0 0.0
      %1588 = vmatpush1.msra.mxu0 0.0
      %1589 = vmatprep.subr.mxu0 0.0
      %1590 = vmatpush1.msra.mxu0 0.0
      %1591 = vmatprep.subr.mxu0 0.0
      %1592 = vmatpush1.msra.mxu0 0.0
      %1593 = vmatprep.subr.mxu0 0.0
      %1594 = vmatpush1.msra.mxu0 0.0
      %1595 = vmatprep.subr.mxu0 0.0
      %1596 = vmatpush1.msra.mxu0 0.0
      %1597 = vmatprep.subr.mxu0 0.0
      %1598 = vmatpush1.msra.mxu0 0.0
      %1599 = vmatprep.mubr.f32.mxu0 0.0
      %1600 = vmatmul.mubr.f32.gmra.mrb[0].mxu0 %v1408
      %v1601 = vpop.f32.mrb[0].mxu0
      %v1602 = vadd.f32 0.0, %v1601
      %v1603 = vpop.f32.mrb[0].mxu0
      %1604 = vmatprep.mubr.f32.mxu0 0.0
      %1605 = vmatmul.mubr.f32.gmra.mrb[0].mxu0 %v1409
      %v1606 = vpop.f32.mrb[0].mxu0
      %v1607 = vadd.f32 0.0, %v1606
      %v1608 = vpop.f32.mrb[0].mxu0
      %1609 = vmatprep.mubr.f32.mxu0 0.0
      %1610 = vmatmul.mubr.f32.gmra.mrb[0].mxu0 %v1410
      %v1611 = vpop.f32.mrb[0].mxu0
      %v1612 = vadd.f32 0.0, %v1611
      %v1613 = vpop.f32.mrb[0].mxu0
      %1614 = vmatprep.mubr.f32.mxu0 0.0
      %1615 = vmatmul.mubr.f32.gmra.mrb[0].mxu0 %v1411
      %v1616 = vpop.f32.mrb[0].mxu0
      %v1617 = vadd.f32 0.0, %v1616
      %v1618 = vpop.f32.mrb[0].mxu0
      %1619 = vdwg.mxu0
      %v1624 = vrot.slane %v1602, 1
      %v1625 = vrot.slane %v1607, 1
      %v1626 = vrot.slane %v1612, 1
      %v1627 = vrot.slane %v1617, 1
      %v1632 = vadd.f32 %v1514, %v1624
      %v1633 = vadd.f32 %v1515, %v1625
      %v1634 = vadd.f32 %v1516, %v1626
      %v1635 = vadd.f32 %v1517, %v1627
      %s1636 = scalar_lea.vmem %s5, 1024
      %v1637 = vld [vmem:[%s1636] sm:$0xff]
      %v1638 = vld [vmem:[%s1636 + $0x8] sm:$0xff]
      %v1639 = vld [vmem:[%s1636 + $0x10] sm:$0xff]
      %v1640 = vld [vmem:[%s1636 + $0x18] sm:$0xff]
      %v1641 = vld [vmem:[%s1636 + $0x20] sm:$0xff]
      %v1642 = vld [vmem:[%s1636 + $0x28] sm:$0xff]
      %v1643 = vld [vmem:[%s1636 + $0x30] sm:$0xff]
      %v1644 = vld [vmem:[%s1636 + $0x38] sm:$0xff]
      %v1645 = vld [vmem:[%s1636 + $0x40] sm:$0xff]
      %v1646 = vld [vmem:[%s1636 + $0x48] sm:$0xff]
      %v1647 = vld [vmem:[%s1636 + $0x50] sm:$0xff]
      %v1648 = vld [vmem:[%s1636 + $0x58] sm:$0xff]
      %v1649 = vld [vmem:[%s1636 + $0x60] sm:$0xff]
      %v1650 = vld [vmem:[%s1636 + $0x68] sm:$0xff]
      %v1651 = vld [vmem:[%s1636 + $0x70] sm:$0xff]
      %v1652 = vld [vmem:[%s1636 + $0x78] sm:$0xff]
      %1653 = vmatprep.subr.mxu0 0.0
      %1654 = vmatpush1.msra.mxu0 %v1637
      %1655 = vmatprep.subr.mxu0 0.0
      %1656 = vmatpush1.msra.mxu0 %v1638
      %1657 = vmatprep.subr.mxu0 0.0
      %1658 = vmatpush1.msra.mxu0 %v1639
      %1659 = vmatprep.subr.mxu0 0.0
      %1660 = vmatpush1.msra.mxu0 %v1640
      %1661 = vmatprep.subr.mxu0 0.0
      %1662 = vmatpush1.msra.mxu0 %v1641
      %1663 = vmatprep.subr.mxu0 0.0
      %1664 = vmatpush1.msra.mxu0 %v1642
      %1665 = vmatprep.subr.mxu0 0.0
      %1666 = vmatpush1.msra.mxu0 %v1643
      %1667 = vmatprep.subr.mxu0 0.0
      %1668 = vmatpush1.msra.mxu0 %v1644
      %1669 = vmatprep.subr.mxu0 0.0
      %1670 = vmatpush1.msra.mxu0 %v1645
      %1671 = vmatprep.subr.mxu0 0.0
      %1672 = vmatpush1.msra.mxu0 %v1646
      %1673 = vmatprep.subr.mxu0 0.0
      %1674 = vmatpush1.msra.mxu0 %v1647
      %1675 = vmatprep.subr.mxu0 0.0
      %1676 = vmatpush1.msra.mxu0 %v1648
      %1677 = vmatprep.subr.mxu0 0.0
      %1678 = vmatpush1.msra.mxu0 %v1649
      %1679 = vmatprep.subr.mxu0 0.0
      %1680 = vmatpush1.msra.mxu0 %v1650
      %1681 = vmatprep.subr.mxu0 0.0
      %1682 = vmatpush1.msra.mxu0 %v1651
      %1683 = vmatprep.subr.mxu0 0.0
      %1684 = vmatpush1.msra.mxu0 %v1652
      %1685 = vmatprep.subr.mxu0 0.0
      %1686 = vmatpush1.msra.mxu0 0.0
      %1687 = vmatprep.subr.mxu0 0.0
      %1688 = vmatpush1.msra.mxu0 0.0
      %1689 = vmatprep.subr.mxu0 0.0
      %1690 = vmatpush1.msra.mxu0 0.0
      %1691 = vmatprep.subr.mxu0 0.0
      %1692 = vmatpush1.msra.mxu0 0.0
      %1693 = vmatprep.subr.mxu0 0.0
      %1694 = vmatpush1.msra.mxu0 0.0
      %1695 = vmatprep.subr.mxu0 0.0
      %1696 = vmatpush1.msra.mxu0 0.0
      %1697 = vmatprep.subr.mxu0 0.0
      %1698 = vmatpush1.msra.mxu0 0.0
      %1699 = vmatprep.subr.mxu0 0.0
      %1700 = vmatpush1.msra.mxu0 0.0
      %1701 = vmatprep.subr.mxu0 0.0
      %1702 = vmatpush1.msra.mxu0 0.0
      %1703 = vmatprep.subr.mxu0 0.0
      %1704 = vmatpush1.msra.mxu0 0.0
      %1705 = vmatprep.subr.mxu0 0.0
      %1706 = vmatpush1.msra.mxu0 0.0
      %1707 = vmatprep.subr.mxu0 0.0
      %1708 = vmatpush1.msra.mxu0 0.0
      %1709 = vmatprep.subr.mxu0 0.0
      %1710 = vmatpush1.msra.mxu0 0.0
      %1711 = vmatprep.subr.mxu0 0.0
      %1712 = vmatpush1.msra.mxu0 0.0
      %1713 = vmatprep.subr.mxu0 0.0
      %1714 = vmatpush1.msra.mxu0 0.0
      %1715 = vmatprep.subr.mxu0 0.0
      %1716 = vmatpush1.msra.mxu0 0.0
      %1717 = vmatprep.mubr.f32.mxu0 0.0
      %1718 = vmatmul.mubr.f32.gmra.mrb[0].mxu0 %v1408
      %v1719 = vpop.f32.mrb[0].mxu0
      %v1720 = vadd.f32 0.0, %v1719
      %v1721 = vpop.f32.mrb[0].mxu0
      %1722 = vmatprep.mubr.f32.mxu0 0.0
      %1723 = vmatmul.mubr.f32.gmra.mrb[0].mxu0 %v1409
      %v1724 = vpop.f32.mrb[0].mxu0
      %v1725 = vadd.f32 0.0, %v1724
      %v1726 = vpop.f32.mrb[0].mxu0
      %1727 = vmatprep.mubr.f32.mxu0 0.0
      %1728 = vmatmul.mubr.f32.gmra.mrb[0].mxu0 %v1410
      %v1729 = vpop.f32.mrb[0].mxu0
      %v1730 = vadd.f32 0.0, %v1729
      %v1731 = vpop.f32.mrb[0].mxu0
      %1732 = vmatprep.mubr.f32.mxu0 0.0
      %1733 = vmatmul.mubr.f32.gmra.mrb[0].mxu0 %v1411
      %v1734 = vpop.f32.mrb[0].mxu0
      %v1735 = vadd.f32 0.0, %v1734
      %v1736 = vpop.f32.mrb[0].mxu0
      %1737 = vdwg.mxu0
      %v1742 = vrot.slane %v1720, 2
      %v1743 = vrot.slane %v1725, 2
      %v1744 = vrot.slane %v1730, 2
      %v1745 = vrot.slane %v1735, 2
      %v1750 = vadd.f32 %v1632, %v1742
      %v1751 = vadd.f32 %v1633, %v1743
      %v1752 = vadd.f32 %v1634, %v1744
      %v1753 = vadd.f32 %v1635, %v1745
      %s1754 = scalar_lea.vmem [#allocation2], 48
      %v1755 = vld [vmem:[%s1754] sm:$0xff]
      %v1756 = vld [vmem:[%s1754 + $0x8] sm:$0xff]
      %v1757 = vld [vmem:[%s1754 + $0x10] sm:$0xff]
      %v1758 = vld [vmem:[%s1754 + $0x18] sm:$0xff]
      %s1759 = scalar_lea.vmem %s5, 1152
      %v1760 = vld [vmem:[%s1759] sm:$0xff]
      %v1761 = vld [vmem:[%s1759 + $0x8] sm:$0xff]
      %v1762 = vld [vmem:[%s1759 + $0x10] sm:$0xff]
      %v1763 = vld [vmem:[%s1759 + $0x18] sm:$0xff]
      %v1764 = vld [vmem:[%s1759 + $0x20] sm:$0xff]
      %v1765 = vld [vmem:[%s1759 + $0x28] sm:$0xff]
      %v1766 = vld [vmem:[%s1759 + $0x30] sm:$0xff]
      %v1767 = vld [vmem:[%s1759 + $0x38] sm:$0xff]
      %v1768 = vld [vmem:[%s1759 + $0x40] sm:$0xff]
      %v1769 = vld [vmem:[%s1759 + $0x48] sm:$0xff]
      %v1770 = vld [vmem:[%s1759 + $0x50] sm:$0xff]
      %v1771 = vld [vmem:[%s1759 + $0x58] sm:$0xff]
      %v1772 = vld [vmem:[%s1759 + $0x60] sm:$0xff]
      %v1773 = vld [vmem:[%s1759 + $0x68] sm:$0xff]
      %v1774 = vld [vmem:[%s1759 + $0x70] sm:$0xff]
      %v1775 = vld [vmem:[%s1759 + $0x78] sm:$0xff]
      %1776 = vmatprep.subr.mxu0 0.0
      %1777 = vmatpush1.msra.mxu0 %v1760
      %1778 = vmatprep.subr.mxu0 0.0
      %1779 = vmatpush1.msra.mxu0 %v1761
      %1780 = vmatprep.subr.mxu0 0.0
      %1781 = vmatpush1.msra.mxu0 %v1762
      %1782 = vmatprep.subr.mxu0 0.0
      %1783 = vmatpush1.msra.mxu0 %v1763
      %1784 = vmatprep.subr.mxu0 0.0
      %1785 = vmatpush1.msra.mxu0 %v1764
      %1786 = vmatprep.subr.mxu0 0.0
      %1787 = vmatpush1.msra.mxu0 %v1765
      %1788 = vmatprep.subr.mxu0 0.0
      %1789 = vmatpush1.msra.mxu0 %v1766
      %1790 = vmatprep.subr.mxu0 0.0
      %1791 = vmatpush1.msra.mxu0 %v1767
      %1792 = vmatprep.subr.mxu0 0.0
      %1793 = vmatpush1.msra.mxu0 %v1768
      %1794 = vmatprep.subr.mxu0 0.0
      %1795 = vmatpush1.msra.mxu0 %v1769
      %1796 = vmatprep.subr.mxu0 0.0
      %1797 = vmatpush1.msra.mxu0 %v1770
      %1798 = vmatprep.subr.mxu0 0.0
      %1799 = vmatpush1.msra.mxu0 %v1771
      %1800 = vmatprep.subr.mxu0 0.0
      %1801 = vmatpush1.msra.mxu0 %v1772
      %1802 = vmatprep.subr.mxu0 0.0
      %1803 = vmatpush1.msra.mxu0 %v1773
      %1804 = vmatprep.subr.mxu0 0.0
      %1805 = vmatpush1.msra.mxu0 %v1774
      %1806 = vmatprep.subr.mxu0 0.0
      %1807 = vmatpush1.msra.mxu0 %v1775
      %1808 = vmatprep.subr.mxu0 0.0
      %1809 = vmatpush1.msra.mxu0 0.0
      %1810 = vmatprep.subr.mxu0 0.0
      %1811 = vmatpush1.msra.mxu0 0.0
      %1812 = vmatprep.subr.mxu0 0.0
      %1813 = vmatpush1.msra.mxu0 0.0
      %1814 = vmatprep.subr.mxu0 0.0
      %1815 = vmatpush1.msra.mxu0 0.0
      %1816 = vmatprep.subr.mxu0 0.0
      %1817 = vmatpush1.msra.mxu0 0.0
      %1818 = vmatprep.subr.mxu0 0.0
      %1819 = vmatpush1.msra.mxu0 0.0
      %1820 = vmatprep.subr.mxu0 0.0
      %1821 = vmatpush1.msra.mxu0 0.0
      %1822 = vmatprep.subr.mxu0 0.0
      %1823 = vmatpush1.msra.mxu0 0.0
      %1824 = vmatprep.subr.mxu0 0.0
      %1825 = vmatpush1.msra.mxu0 0.0
      %1826 = vmatprep.subr.mxu0 0.0
      %1827 = vmatpush1.msra.mxu0 0.0
      %1828 = vmatprep.subr.mxu0 0.0
      %1829 = vmatpush1.msra.mxu0 0.0
      %1830 = vmatprep.subr.mxu0 0.0
      %1831 = vmatpush1.msra.mxu0 0.0
      %1832 = vmatprep.subr.mxu0 0.0
      %1833 = vmatpush1.msra.mxu0 0.0
      %1834 = vmatprep.subr.mxu0 0.0
      %1835 = vmatpush1.msra.mxu0 0.0
      %1836 = vmatprep.subr.mxu0 0.0
      %1837 = vmatpush1.msra.mxu0 0.0
      %1838 = vmatprep.subr.mxu0 0.0
      %1839 = vmatpush1.msra.mxu0 0.0
      %1840 = vmatprep.mubr.f32.mxu0 0.0
      %1841 = vmatmul.mubr.f32.gmra.mrb[0].mxu0 %v1755
      %v1842 = vpop.f32.mrb[0].mxu0
      %v1843 = vadd.f32 0.0, %v1842
      %v1844 = vpop.f32.mrb[0].mxu0
      %1845 = vmatprep.mubr.f32.mxu0 0.0
      %1846 = vmatmul.mubr.f32.gmra.mrb[0].mxu0 %v1756
      %v1847 = vpop.f32.mrb[0].mxu0
      %v1848 = vadd.f32 0.0, %v1847
      %v1849 = vpop.f32.mrb[0].mxu0
      %1850 = vmatprep.mubr.f32.mxu0 0.0
      %1851 = vmatmul.mubr.f32.gmra.mrb[0].mxu0 %v1757
      %v1852 = vpop.f32.mrb[0].mxu0
      %v1853 = vadd.f32 0.0, %v1852
      %v1854 = vpop.f32.mrb[0].mxu0
      %1855 = vmatprep.mubr.f32.mxu0 0.0
      %1856 = vmatmul.mubr.f32.gmra.mrb[0].mxu0 %v1758
      %v1857 = vpop.f32.mrb[0].mxu0
      %v1858 = vadd.f32 0.0, %v1857
      %v1859 = vpop.f32.mrb[0].mxu0
      %1860 = vdwg.mxu0
      %v1861 = vadd.f32 %v1750, %v1843
      %v1862 = vadd.f32 %v1751, %v1848
      %v1863 = vadd.f32 %v1752, %v1853
      %v1864 = vadd.f32 %v1753, %v1858
      %s1865 = scalar_lea.vmem %s5, 1280
      %v1866 = vld [vmem:[%s1865] sm:$0xff]
      %v1867 = vld [vmem:[%s1865 + $0x8] sm:$0xff]
      %v1868 = vld [vmem:[%s1865 + $0x10] sm:$0xff]
      %v1869 = vld [vmem:[%s1865 + $0x18] sm:$0xff]
      %v1870 = vld [vmem:[%s1865 + $0x20] sm:$0xff]
      %v1871 = vld [vmem:[%s1865 + $0x28] sm:$0xff]
      %v1872 = vld [vmem:[%s1865 + $0x30] sm:$0xff]
      %v1873 = vld [vmem:[%s1865 + $0x38] sm:$0xff]
      %v1874 = vld [vmem:[%s1865 + $0x40] sm:$0xff]
      %v1875 = vld [vmem:[%s1865 + $0x48] sm:$0xff]
      %v1876 = vld [vmem:[%s1865 + $0x50] sm:$0xff]
      %v1877 = vld [vmem:[%s1865 + $0x58] sm:$0xff]
      %v1878 = vld [vmem:[%s1865 + $0x60] sm:$0xff]
      %v1879 = vld [vmem:[%s1865 + $0x68] sm:$0xff]
      %v1880 = vld [vmem:[%s1865 + $0x70] sm:$0xff]
      %v1881 = vld [vmem:[%s1865 + $0x78] sm:$0xff]
      %1882 = vmatprep.subr.mxu0 0.0
      %1883 = vmatpush1.msra.mxu0 %v1866
      %1884 = vmatprep.subr.mxu0 0.0
      %1885 = vmatpush1.msra.mxu0 %v1867
      %1886 = vmatprep.subr.mxu0 0.0
      %1887 = vmatpush1.msra.mxu0 %v1868
      %1888 = vmatprep.subr.mxu0 0.0
      %1889 = vmatpush1.msra.mxu0 %v1869
      %1890 = vmatprep.subr.mxu0 0.0
      %1891 = vmatpush1.msra.mxu0 %v1870
      %1892 = vmatprep.subr.mxu0 0.0
      %1893 = vmatpush1.msra.mxu0 %v1871
      %1894 = vmatprep.subr.mxu0 0.0
      %1895 = vmatpush1.msra.mxu0 %v1872
      %1896 = vmatprep.subr.mxu0 0.0
      %1897 = vmatpush1.msra.mxu0 %v1873
      %1898 = vmatprep.subr.mxu0 0.0
      %1899 = vmatpush1.msra.mxu0 %v1874
      %1900 = vmatprep.subr.mxu0 0.0
      %1901 = vmatpush1.msra.mxu0 %v1875
      %1902 = vmatprep.subr.mxu0 0.0
      %1903 = vmatpush1.msra.mxu0 %v1876
      %1904 = vmatprep.subr.mxu0 0.0
      %1905 = vmatpush1.msra.mxu0 %v1877
      %1906 = vmatprep.subr.mxu0 0.0
      %1907 = vmatpush1.msra.mxu0 %v1878
      %1908 = vmatprep.subr.mxu0 0.0
      %1909 = vmatpush1.msra.mxu0 %v1879
      %1910 = vmatprep.subr.mxu0 0.0
      %1911 = vmatpush1.msra.mxu0 %v1880
      %1912 = vmatprep.subr.mxu0 0.0
      %1913 = vmatpush1.msra.mxu0 %v1881
      %1914 = vmatprep.subr.mxu0 0.0
      %1915 = vmatpush1.msra.mxu0 0.0
      %1916 = vmatprep.subr.mxu0 0.0
      %1917 = vmatpush1.msra.mxu0 0.0
      %1918 = vmatprep.subr.mxu0 0.0
      %1919 = vmatpush1.msra.mxu0 0.0
      %1920 = vmatprep.subr.mxu0 0.0
      %1921 = vmatpush1.msra.mxu0 0.0
      %1922 = vmatprep.subr.mxu0 0.0
      %1923 = vmatpush1.msra.mxu0 0.0
      %1924 = vmatprep.subr.mxu0 0.0
      %1925 = vmatpush1.msra.mxu0 0.0
      %1926 = vmatprep.subr.mxu0 0.0
      %1927 = vmatpush1.msra.mxu0 0.0
      %1928 = vmatprep.subr.mxu0 0.0
      %1929 = vmatpush1.msra.mxu0 0.0
      %1930 = vmatprep.subr.mxu0 0.0
      %1931 = vmatpush1.msra.mxu0 0.0
      %1932 = vmatprep.subr.mxu0 0.0
      %1933 = vmatpush1.msra.mxu0 0.0
      %1934 = vmatprep.subr.mxu0 0.0
      %1935 = vmatpush1.msra.mxu0 0.0
      %1936 = vmatprep.subr.mxu0 0.0
      %1937 = vmatpush1.msra.mxu0 0.0
      %1938 = vmatprep.subr.mxu0 0.0
      %1939 = vmatpush1.msra.mxu0 0.0
      %1940 = vmatprep.subr.mxu0 0.0
      %1941 = vmatpush1.msra.mxu0 0.0
      %1942 = vmatprep.subr.mxu0 0.0
      %1943 = vmatpush1.msra.mxu0 0.0
      %1944 = vmatprep.subr.mxu0 0.0
      %1945 = vmatpush1.msra.mxu0 0.0
      %1946 = vmatprep.mubr.f32.mxu0 0.0
      %1947 = vmatmul.mubr.f32.gmra.mrb[0].mxu0 %v1755
      %v1948 = vpop.f32.mrb[0].mxu0
      %v1949 = vadd.f32 0.0, %v1948
      %v1950 = vpop.f32.mrb[0].mxu0
      %1951 = vmatprep.mubr.f32.mxu0 0.0
      %1952 = vmatmul.mubr.f32.gmra.mrb[0].mxu0 %v1756
      %v1953 = vpop.f32.mrb[0].mxu0
      %v1954 = vadd.f32 0.0, %v1953
      %v1955 = vpop.f32.mrb[0].mxu0
      %1956 = vmatprep.mubr.f32.mxu0 0.0
      %1957 = vmatmul.mubr.f32.gmra.mrb[0].mxu0 %v1757
      %v1958 = vpop.f32.mrb[0].mxu0
      %v1959 = vadd.f32 0.0, %v1958
      %v1960 = vpop.f32.mrb[0].mxu0
      %1961 = vmatprep.mubr.f32.mxu0 0.0
      %1962 = vmatmul.mubr.f32.gmra.mrb[0].mxu0 %v1758
      %v1963 = vpop.f32.mrb[0].mxu0
      %v1964 = vadd.f32 0.0, %v1963
      %v1965 = vpop.f32.mrb[0].mxu0
      %1966 = vdwg.mxu0
      %v1971 = vrot.slane %v1949, 1
      %v1972 = vrot.slane %v1954, 1
      %v1973 = vrot.slane %v1959, 1
      %v1974 = vrot.slane %v1964, 1
      %v1979 = vadd.f32 %v1861, %v1971
      %v1980 = vadd.f32 %v1862, %v1972
      %v1981 = vadd.f32 %v1863, %v1973
      %v1982 = vadd.f32 %v1864, %v1974
      %s1983 = scalar_lea.vmem %s5, 1408
      %v1984 = vld [vmem:[%s1983] sm:$0xff]
      %v1985 = vld [vmem:[%s1983 + $0x8] sm:$0xff]
      %v1986 = vld [vmem:[%s1983 + $0x10] sm:$0xff]
      %v1987 = vld [vmem:[%s1983 + $0x18] sm:$0xff]
      %v1988 = vld [vmem:[%s1983 + $0x20] sm:$0xff]
      %v1989 = vld [vmem:[%s1983 + $0x28] sm:$0xff]
      %v1990 = vld [vmem:[%s1983 + $0x30] sm:$0xff]
      %v1991 = vld [vmem:[%s1983 + $0x38] sm:$0xff]
      %v1992 = vld [vmem:[%s1983 + $0x40] sm:$0xff]
      %v1993 = vld [vmem:[%s1983 + $0x48] sm:$0xff]
      %v1994 = vld [vmem:[%s1983 + $0x50] sm:$0xff]
      %v1995 = vld [vmem:[%s1983 + $0x58] sm:$0xff]
      %v1996 = vld [vmem:[%s1983 + $0x60] sm:$0xff]
      %v1997 = vld [vmem:[%s1983 + $0x68] sm:$0xff]
      %v1998 = vld [vmem:[%s1983 + $0x70] sm:$0xff]
      %v1999 = vld [vmem:[%s1983 + $0x78] sm:$0xff]
      %2000 = vmatprep.subr.mxu0 0.0
      %2001 = vmatpush1.msra.mxu0 %v1984
      %2002 = vmatprep.subr.mxu0 0.0
      %2003 = vmatpush1.msra.mxu0 %v1985
      %2004 = vmatprep.subr.mxu0 0.0
      %2005 = vmatpush1.msra.mxu0 %v1986
      %2006 = vmatprep.subr.mxu0 0.0
      %2007 = vmatpush1.msra.mxu0 %v1987
      %2008 = vmatprep.subr.mxu0 0.0
      %2009 = vmatpush1.msra.mxu0 %v1988
      %2010 = vmatprep.subr.mxu0 0.0
      %2011 = vmatpush1.msra.mxu0 %v1989
      %2012 = vmatprep.subr.mxu0 0.0
      %2013 = vmatpush1.msra.mxu0 %v1990
      %2014 = vmatprep.subr.mxu0 0.0
      %2015 = vmatpush1.msra.mxu0 %v1991
      %2016 = vmatprep.subr.mxu0 0.0
      %2017 = vmatpush1.msra.mxu0 %v1992
      %2018 = vmatprep.subr.mxu0 0.0
      %2019 = vmatpush1.msra.mxu0 %v1993
      %2020 = vmatprep.subr.mxu0 0.0
      %2021 = vmatpush1.msra.mxu0 %v1994
      %2022 = vmatprep.subr.mxu0 0.0
      %2023 = vmatpush1.msra.mxu0 %v1995
      %2024 = vmatprep.subr.mxu0 0.0
      %2025 = vmatpush1.msra.mxu0 %v1996
      %2026 = vmatprep.subr.mxu0 0.0
      %2027 = vmatpush1.msra.mxu0 %v1997
      %2028 = vmatprep.subr.mxu0 0.0
      %2029 = vmatpush1.msra.mxu0 %v1998
      %2030 = vmatprep.subr.mxu0 0.0
      %2031 = vmatpush1.msra.mxu0 %v1999
      %2032 = vmatprep.subr.mxu0 0.0
      %2033 = vmatpush1.msra.mxu0 0.0
      %2034 = vmatprep.subr.mxu0 0.0
      %2035 = vmatpush1.msra.mxu0 0.0
      %2036 = vmatprep.subr.mxu0 0.0
      %2037 = vmatpush1.msra.mxu0 0.0
      %2038 = vmatprep.subr.mxu0 0.0
      %2039 = vmatpush1.msra.mxu0 0.0
      %2040 = vmatprep.subr.mxu0 0.0
      %2041 = vmatpush1.msra.mxu0 0.0
      %2042 = vmatprep.subr.mxu0 0.0
      %2043 = vmatpush1.msra.mxu0 0.0
      %2044 = vmatprep.subr.mxu0 0.0
      %2045 = vmatpush1.msra.mxu0 0.0
      %2046 = vmatprep.subr.mxu0 0.0
      %2047 = vmatpush1.msra.mxu0 0.0
      %2048 = vmatprep.subr.mxu0 0.0
      %2049 = vmatpush1.msra.mxu0 0.0
      %2050 = vmatprep.subr.mxu0 0.0
      %2051 = vmatpush1.msra.mxu0 0.0
      %2052 = vmatprep.subr.mxu0 0.0
      %2053 = vmatpush1.msra.mxu0 0.0
      %2054 = vmatprep.subr.mxu0 0.0
      %2055 = vmatpush1.msra.mxu0 0.0
      %2056 = vmatprep.subr.mxu0 0.0
      %2057 = vmatpush1.msra.mxu0 0.0
      %2058 = vmatprep.subr.mxu0 0.0
      %2059 = vmatpush1.msra.mxu0 0.0
      %2060 = vmatprep.subr.mxu0 0.0
      %2061 = vmatpush1.msra.mxu0 0.0
      %2062 = vmatprep.subr.mxu0 0.0
      %2063 = vmatpush1.msra.mxu0 0.0
      %2064 = vmatprep.mubr.f32.mxu0 0.0
      %2065 = vmatmul.mubr.f32.gmra.mrb[0].mxu0 %v1755
      %v2066 = vpop.f32.mrb[0].mxu0
      %v2067 = vadd.f32 0.0, %v2066
      %v2068 = vpop.f32.mrb[0].mxu0
      %2069 = vmatprep.mubr.f32.mxu0 0.0
      %2070 = vmatmul.mubr.f32.gmra.mrb[0].mxu0 %v1756
      %v2071 = vpop.f32.mrb[0].mxu0
      %v2072 = vadd.f32 0.0, %v2071
      %v2073 = vpop.f32.mrb[0].mxu0
      %2074 = vmatprep.mubr.f32.mxu0 0.0
      %2075 = vmatmul.mubr.f32.gmra.mrb[0].mxu0 %v1757
      %v2076 = vpop.f32.mrb[0].mxu0
      %v2077 = vadd.f32 0.0, %v2076
      %v2078 = vpop.f32.mrb[0].mxu0
      %2079 = vmatprep.mubr.f32.mxu0 0.0
      %2080 = vmatmul.mubr.f32.gmra.mrb[0].mxu0 %v1758
      %v2081 = vpop.f32.mrb[0].mxu0
      %v2082 = vadd.f32 0.0, %v2081
      %v2083 = vpop.f32.mrb[0].mxu0
      %2084 = vdwg.mxu0
      %v2089 = vrot.slane %v2067, 2
      %v2090 = vrot.slane %v2072, 2
      %v2091 = vrot.slane %v2077, 2
      %v2092 = vrot.slane %v2082, 2
      %v2097 = vadd.f32 %v1979, %v2089
      %v2098 = vadd.f32 %v1980, %v2090
      %v2099 = vadd.f32 %v1981, %v2091
      %v2100 = vadd.f32 %v1982, %v2092
      %v2101 = vld [vmem:[%s664] sm:$0xff]
      %v2102 = vld [vmem:[%s664 + $0x8] sm:$0xff]
      %v2103 = vld [vmem:[%s664 + $0x10] sm:$0xff]
      %v2104 = vld [vmem:[%s664 + $0x18] sm:$0xff]
      %s2105 = scalar_lea.vmem %s5, 1536
      %v2106 = vld [vmem:[%s2105] sm:$0xff]
      %v2107 = vld [vmem:[%s2105 + $0x8] sm:$0xff]
      %v2108 = vld [vmem:[%s2105 + $0x10] sm:$0xff]
      %v2109 = vld [vmem:[%s2105 + $0x18] sm:$0xff]
      %v2110 = vld [vmem:[%s2105 + $0x20] sm:$0xff]
      %v2111 = vld [vmem:[%s2105 + $0x28] sm:$0xff]
      %v2112 = vld [vmem:[%s2105 + $0x30] sm:$0xff]
      %v2113 = vld [vmem:[%s2105 + $0x38] sm:$0xff]
      %v2114 = vld [vmem:[%s2105 + $0x40] sm:$0xff]
      %v2115 = vld [vmem:[%s2105 + $0x48] sm:$0xff]
      %v2116 = vld [vmem:[%s2105 + $0x50] sm:$0xff]
      %v2117 = vld [vmem:[%s2105 + $0x58] sm:$0xff]
      %v2118 = vld [vmem:[%s2105 + $0x60] sm:$0xff]
      %v2119 = vld [vmem:[%s2105 + $0x68] sm:$0xff]
      %v2120 = vld [vmem:[%s2105 + $0x70] sm:$0xff]
      %v2121 = vld [vmem:[%s2105 + $0x78] sm:$0xff]
      %2122 = vmatprep.subr.mxu0 0.0
      %2123 = vmatpush1.msra.mxu0 %v2106
      %2124 = vmatprep.subr.mxu0 0.0
      %2125 = vmatpush1.msra.mxu0 %v2107
      %2126 = vmatprep.subr.mxu0 0.0
      %2127 = vmatpush1.msra.mxu0 %v2108
      %2128 = vmatprep.subr.mxu0 0.0
      %2129 = vmatpush1.msra.mxu0 %v2109
      %2130 = vmatprep.subr.mxu0 0.0
      %2131 = vmatpush1.msra.mxu0 %v2110
      %2132 = vmatprep.subr.mxu0 0.0
      %2133 = vmatpush1.msra.mxu0 %v2111
      %2134 = vmatprep.subr.mxu0 0.0
      %2135 = vmatpush1.msra.mxu0 %v2112
      %2136 = vmatprep.subr.mxu0 0.0
      %2137 = vmatpush1.msra.mxu0 %v2113
      %2138 = vmatprep.subr.mxu0 0.0
      %2139 = vmatpush1.msra.mxu0 %v2114
      %2140 = vmatprep.subr.mxu0 0.0
      %2141 = vmatpush1.msra.mxu0 %v2115
      %2142 = vmatprep.subr.mxu0 0.0
      %2143 = vmatpush1.msra.mxu0 %v2116
      %2144 = vmatprep.subr.mxu0 0.0
      %2145 = vmatpush1.msra.mxu0 %v2117
      %2146 = vmatprep.subr.mxu0 0.0
      %2147 = vmatpush1.msra.mxu0 %v2118
      %2148 = vmatprep.subr.mxu0 0.0
      %2149 = vmatpush1.msra.mxu0 %v2119
      %2150 = vmatprep.subr.mxu0 0.0
      %2151 = vmatpush1.msra.mxu0 %v2120
      %2152 = vmatprep.subr.mxu0 0.0
      %2153 = vmatpush1.msra.mxu0 %v2121
      %2154 = vmatprep.subr.mxu0 0.0
      %2155 = vmatpush1.msra.mxu0 0.0
      %2156 = vmatprep.subr.mxu0 0.0
      %2157 = vmatpush1.msra.mxu0 0.0
      %2158 = vmatprep.subr.mxu0 0.0
      %2159 = vmatpush1.msra.mxu0 0.0
      %2160 = vmatprep.subr.mxu0 0.0
      %2161 = vmatpush1.msra.mxu0 0.0
      %2162 = vmatprep.subr.mxu0 0.0
      %2163 = vmatpush1.msra.mxu0 0.0
      %2164 = vmatprep.subr.mxu0 0.0
      %2165 = vmatpush1.msra.mxu0 0.0
      %2166 = vmatprep.subr.mxu0 0.0
      %2167 = vmatpush1.msra.mxu0 0.0
      %2168 = vmatprep.subr.mxu0 0.0
      %2169 = vmatpush1.msra.mxu0 0.0
      %2170 = vmatprep.subr.mxu0 0.0
      %2171 = vmatpush1.msra.mxu0 0.0
      %2172 = vmatprep.subr.mxu0 0.0
      %2173 = vmatpush1.msra.mxu0 0.0
      %2174 = vmatprep.subr.mxu0 0.0
      %2175 = vmatpush1.msra.mxu0 0.0
      %2176 = vmatprep.subr.mxu0 0.0
      %2177 = vmatpush1.msra.mxu0 0.0
      %2178 = vmatprep.subr.mxu0 0.0
      %2179 = vmatpush1.msra.mxu0 0.0
      %2180 = vmatprep.subr.mxu0 0.0
      %2181 = vmatpush1.msra.mxu0 0.0
      %2182 = vmatprep.subr.mxu0 0.0
      %2183 = vmatpush1.msra.mxu0 0.0
      %2184 = vmatprep.subr.mxu0 0.0
      %2185 = vmatpush1.msra.mxu0 0.0
      %2186 = vmatprep.mubr.f32.mxu0 0.0
      %2187 = vmatmul.mubr.f32.gmra.mrb[0].mxu0 %v2101
      %v2188 = vpop.f32.mrb[0].mxu0
      %v2189 = vadd.f32 0.0, %v2188
      %v2190 = vpop.f32.mrb[0].mxu0
      %2191 = vmatprep.mubr.f32.mxu0 0.0
      %2192 = vmatmul.mubr.f32.gmra.mrb[0].mxu0 %v2102
      %v2193 = vpop.f32.mrb[0].mxu0
      %v2194 = vadd.f32 0.0, %v2193
      %v2195 = vpop.f32.mrb[0].mxu0
      %2196 = vmatprep.mubr.f32.mxu0 0.0
      %2197 = vmatmul.mubr.f32.gmra.mrb[0].mxu0 %v2103
      %v2198 = vpop.f32.mrb[0].mxu0
      %v2199 = vadd.f32 0.0, %v2198
      %v2200 = vpop.f32.mrb[0].mxu0
      %2201 = vmatprep.mubr.f32.mxu0 0.0
      %2202 = vmatmul.mubr.f32.gmra.mrb[0].mxu0 %v2104
      %v2203 = vpop.f32.mrb[0].mxu0
      %v2204 = vadd.f32 0.0, %v2203
      %v2205 = vpop.f32.mrb[0].mxu0
      %2206 = vdwg.mxu0
      %v2207 = vadd.f32 %v2097, %v2189
      %v2208 = vadd.f32 %v2098, %v2194
      %v2209 = vadd.f32 %v2099, %v2199
      %v2210 = vadd.f32 %v2100, %v2204
      %s2211 = scalar_lea.vmem %s5, 1664
      %v2212 = vld [vmem:[%s2211] sm:$0xff]
      %v2213 = vld [vmem:[%s2211 + $0x8] sm:$0xff]
      %v2214 = vld [vmem:[%s2211 + $0x10] sm:$0xff]
      %v2215 = vld [vmem:[%s2211 + $0x18] sm:$0xff]
      %v2216 = vld [vmem:[%s2211 + $0x20] sm:$0xff]
      %v2217 = vld [vmem:[%s2211 + $0x28] sm:$0xff]
      %v2218 = vld [vmem:[%s2211 + $0x30] sm:$0xff]
      %v2219 = vld [vmem:[%s2211 + $0x38] sm:$0xff]
      %v2220 = vld [vmem:[%s2211 + $0x40] sm:$0xff]
      %v2221 = vld [vmem:[%s2211 + $0x48] sm:$0xff]
      %v2222 = vld [vmem:[%s2211 + $0x50] sm:$0xff]
      %v2223 = vld [vmem:[%s2211 + $0x58] sm:$0xff]
      %v2224 = vld [vmem:[%s2211 + $0x60] sm:$0xff]
      %v2225 = vld [vmem:[%s2211 + $0x68] sm:$0xff]
      %v2226 = vld [vmem:[%s2211 + $0x70] sm:$0xff]
      %v2227 = vld [vmem:[%s2211 + $0x78] sm:$0xff]
      %2228 = vmatprep.subr.mxu0 0.0
      %2229 = vmatpush1.msra.mxu0 %v2212
      %2230 = vmatprep.subr.mxu0 0.0
      %2231 = vmatpush1.msra.mxu0 %v2213
      %2232 = vmatprep.subr.mxu0 0.0
      %2233 = vmatpush1.msra.mxu0 %v2214
      %2234 = vmatprep.subr.mxu0 0.0
      %2235 = vmatpush1.msra.mxu0 %v2215
      %2236 = vmatprep.subr.mxu0 0.0
      %2237 = vmatpush1.msra.mxu0 %v2216
      %2238 = vmatprep.subr.mxu0 0.0
      %2239 = vmatpush1.msra.mxu0 %v2217
      %2240 = vmatprep.subr.mxu0 0.0
      %2241 = vmatpush1.msra.mxu0 %v2218
      %2242 = vmatprep.subr.mxu0 0.0
      %2243 = vmatpush1.msra.mxu0 %v2219
      %2244 = vmatprep.subr.mxu0 0.0
      %2245 = vmatpush1.msra.mxu0 %v2220
      %2246 = vmatprep.subr.mxu0 0.0
      %2247 = vmatpush1.msra.mxu0 %v2221
      %2248 = vmatprep.subr.mxu0 0.0
      %2249 = vmatpush1.msra.mxu0 %v2222
      %2250 = vmatprep.subr.mxu0 0.0
      %2251 = vmatpush1.msra.mxu0 %v2223
      %2252 = vmatprep.subr.mxu0 0.0
      %2253 = vmatpush1.msra.mxu0 %v2224
      %2254 = vmatprep.subr.mxu0 0.0
      %2255 = vmatpush1.msra.mxu0 %v2225
      %2256 = vmatprep.subr.mxu0 0.0
      %2257 = vmatpush1.msra.mxu0 %v2226
      %2258 = vmatprep.subr.mxu0 0.0
      %2259 = vmatpush1.msra.mxu0 %v2227
      %2260 = vmatprep.subr.mxu0 0.0
      %2261 = vmatpush1.msra.mxu0 0.0
      %2262 = vmatprep.subr.mxu0 0.0
      %2263 = vmatpush1.msra.mxu0 0.0
      %2264 = vmatprep.subr.mxu0 0.0
      %2265 = vmatpush1.msra.mxu0 0.0
      %2266 = vmatprep.subr.mxu0 0.0
      %2267 = vmatpush1.msra.mxu0 0.0
      %2268 = vmatprep.subr.mxu0 0.0
      %2269 = vmatpush1.msra.mxu0 0.0
      %2270 = vmatprep.subr.mxu0 0.0
      %2271 = vmatpush1.msra.mxu0 0.0
      %2272 = vmatprep.subr.mxu0 0.0
      %2273 = vmatpush1.msra.mxu0 0.0
      %2274 = vmatprep.subr.mxu0 0.0
      %2275 = vmatpush1.msra.mxu0 0.0
      %2276 = vmatprep.subr.mxu0 0.0
      %2277 = vmatpush1.msra.mxu0 0.0
      %2278 = vmatprep.subr.mxu0 0.0
      %2279 = vmatpush1.msra.mxu0 0.0
      %2280 = vmatprep.subr.mxu0 0.0
      %2281 = vmatpush1.msra.mxu0 0.0
      %2282 = vmatprep.subr.mxu0 0.0
      %2283 = vmatpush1.msra.mxu0 0.0
      %2284 = vmatprep.subr.mxu0 0.0
      %2285 = vmatpush1.msra.mxu0 0.0
      %2286 = vmatprep.subr.mxu0 0.0
      %2287 = vmatpush1.msra.mxu0 0.0
      %2288 = vmatprep.subr.mxu0 0.0
      %2289 = vmatpush1.msra.mxu0 0.0
      %2290 = vmatprep.subr.mxu0 0.0
      %2291 = vmatpush1.msra.mxu0 0.0
      %2292 = vmatprep.mubr.f32.mxu0 0.0
      %2293 = vmatmul.mubr.f32.gmra.mrb[0].mxu0 %v2101
      %v2294 = vpop.f32.mrb[0].mxu0
      %v2295 = vadd.f32 0.0, %v2294
      %v2296 = vpop.f32.mrb[0].mxu0
      %2297 = vmatprep.mubr.f32.mxu0 0.0
      %2298 = vmatmul.mubr.f32.gmra.mrb[0].mxu0 %v2102
      %v2299 = vpop.f32.mrb[0].mxu0
      %v2300 = vadd.f32 0.0, %v2299
      %v2301 = vpop.f32.mrb[0].mxu0
      %2302 = vmatprep.mubr.f32.mxu0 0.0
      %2303 = vmatmul.mubr.f32.gmra.mrb[0].mxu0 %v2103
      %v2304 = vpop.f32.mrb[0].mxu0
      %v2305 = vadd.f32 0.0, %v2304
      %v2306 = vpop.f32.mrb[0].mxu0
      %2307 = vmatprep.mubr.f32.mxu0 0.0
      %2308 = vmatmul.mubr.f32.gmra.mrb[0].mxu0 %v2104
      %v2309 = vpop.f32.mrb[0].mxu0
      %v2310 = vadd.f32 0.0, %v2309
      %v2311 = vpop.f32.mrb[0].mxu0
      %2312 = vdwg.mxu0
      %v2317 = vrot.slane %v2295, 1
      %v2318 = vrot.slane %v2300, 1
      %v2319 = vrot.slane %v2305, 1
      %v2320 = vrot.slane %v2310, 1
      %v2325 = vadd.f32 %v2207, %v2317
      %v2326 = vadd.f32 %v2208, %v2318
      %v2327 = vadd.f32 %v2209, %v2319
      %v2328 = vadd.f32 %v2210, %v2320
      %s2329 = scalar_lea.vmem %s5, 1792
      %v2330 = vld [vmem:[%s2329] sm:$0xff]
      %v2331 = vld [vmem:[%s2329 + $0x8] sm:$0xff]
      %v2332 = vld [vmem:[%s2329 + $0x10] sm:$0xff]
      %v2333 = vld [vmem:[%s2329 + $0x18] sm:$0xff]
      %v2334 = vld [vmem:[%s2329 + $0x20] sm:$0xff]
      %v2335 = vld [vmem:[%s2329 + $0x28] sm:$0xff]
      %v2336 = vld [vmem:[%s2329 + $0x30] sm:$0xff]
      %v2337 = vld [vmem:[%s2329 + $0x38] sm:$0xff]
      %v2338 = vld [vmem:[%s2329 + $0x40] sm:$0xff]
      %v2339 = vld [vmem:[%s2329 + $0x48] sm:$0xff]
      %v2340 = vld [vmem:[%s2329 + $0x50] sm:$0xff]
      %v2341 = vld [vmem:[%s2329 + $0x58] sm:$0xff]
      %v2342 = vld [vmem:[%s2329 + $0x60] sm:$0xff]
      %v2343 = vld [vmem:[%s2329 + $0x68] sm:$0xff]
      %v2344 = vld [vmem:[%s2329 + $0x70] sm:$0xff]
      %v2345 = vld [vmem:[%s2329 + $0x78] sm:$0xff]
      %2346 = vmatprep.subr.mxu0 0.0
      %2347 = vmatpush1.msra.mxu0 %v2330
      %2348 = vmatprep.subr.mxu0 0.0
      %2349 = vmatpush1.msra.mxu0 %v2331
      %2350 = vmatprep.subr.mxu0 0.0
      %2351 = vmatpush1.msra.mxu0 %v2332
      %2352 = vmatprep.subr.mxu0 0.0
      %2353 = vmatpush1.msra.mxu0 %v2333
      %2354 = vmatprep.subr.mxu0 0.0
      %2355 = vmatpush1.msra.mxu0 %v2334
      %2356 = vmatprep.subr.mxu0 0.0
      %2357 = vmatpush1.msra.mxu0 %v2335
      %2358 = vmatprep.subr.mxu0 0.0
      %2359 = vmatpush1.msra.mxu0 %v2336
      %2360 = vmatprep.subr.mxu0 0.0
      %2361 = vmatpush1.msra.mxu0 %v2337
      %2362 = vmatprep.subr.mxu0 0.0
      %2363 = vmatpush1.msra.mxu0 %v2338
      %2364 = vmatprep.subr.mxu0 0.0
      %2365 = vmatpush1.msra.mxu0 %v2339
      %2366 = vmatprep.subr.mxu0 0.0
      %2367 = vmatpush1.msra.mxu0 %v2340
      %2368 = vmatprep.subr.mxu0 0.0
      %2369 = vmatpush1.msra.mxu0 %v2341
      %2370 = vmatprep.subr.mxu0 0.0
      %2371 = vmatpush1.msra.mxu0 %v2342
      %2372 = vmatprep.subr.mxu0 0.0
      %2373 = vmatpush1.msra.mxu0 %v2343
      %2374 = vmatprep.subr.mxu0 0.0
      %2375 = vmatpush1.msra.mxu0 %v2344
      %2376 = vmatprep.subr.mxu0 0.0
      %2377 = vmatpush1.msra.mxu0 %v2345
      %2378 = vmatprep.subr.mxu0 0.0
      %2379 = vmatpush1.msra.mxu0 0.0
      %2380 = vmatprep.subr.mxu0 0.0
      %2381 = vmatpush1.msra.mxu0 0.0
      %2382 = vmatprep.subr.mxu0 0.0
      %2383 = vmatpush1.msra.mxu0 0.0
      %2384 = vmatprep.subr.mxu0 0.0
      %2385 = vmatpush1.msra.mxu0 0.0
      %2386 = vmatprep.subr.mxu0 0.0
      %2387 = vmatpush1.msra.mxu0 0.0
      %2388 = vmatprep.subr.mxu0 0.0
      %2389 = vmatpush1.msra.mxu0 0.0
      %2390 = vmatprep.subr.mxu0 0.0
      %2391 = vmatpush1.msra.mxu0 0.0
      %2392 = vmatprep.subr.mxu0 0.0
      %2393 = vmatpush1.msra.mxu0 0.0
      %2394 = vmatprep.subr.mxu0 0.0
      %2395 = vmatpush1.msra.mxu0 0.0
      %2396 = vmatprep.subr.mxu0 0.0
      %2397 = vmatpush1.msra.mxu0 0.0
      %2398 = vmatprep.subr.mxu0 0.0
      %2399 = vmatpush1.msra.mxu0 0.0
      %2400 = vmatprep.subr.mxu0 0.0
      %2401 = vmatpush1.msra.mxu0 0.0
      %2402 = vmatprep.subr.mxu0 0.0
      %2403 = vmatpush1.msra.mxu0 0.0
      %2404 = vmatprep.subr.mxu0 0.0
      %2405 = vmatpush1.msra.mxu0 0.0
      %2406 = vmatprep.subr.mxu0 0.0
      %2407 = vmatpush1.msra.mxu0 0.0
      %2408 = vmatprep.subr.mxu0 0.0
      %2409 = vmatpush1.msra.mxu0 0.0
      %2410 = vmatprep.mubr.f32.mxu0 0.0
      %2411 = vmatmul.mubr.f32.gmra.mrb[0].mxu0 %v2101
      %v2412 = vpop.f32.mrb[0].mxu0
      %v2413 = vadd.f32 0.0, %v2412
      %v2414 = vpop.f32.mrb[0].mxu0
      %2415 = vmatprep.mubr.f32.mxu0 0.0
      %2416 = vmatmul.mubr.f32.gmra.mrb[0].mxu0 %v2102
      %v2417 = vpop.f32.mrb[0].mxu0
      %v2418 = vadd.f32 0.0, %v2417
      %v2419 = vpop.f32.mrb[0].mxu0
      %2420 = vmatprep.mubr.f32.mxu0 0.0
      %2421 = vmatmul.mubr.f32.gmra.mrb[0].mxu0 %v2103
      %v2422 = vpop.f32.mrb[0].mxu0
      %v2423 = vadd.f32 0.0, %v2422
      %v2424 = vpop.f32.mrb[0].mxu0
      %2425 = vmatprep.mubr.f32.mxu0 0.0
      %2426 = vmatmul.mubr.f32.gmra.mrb[0].mxu0 %v2104
      %v2427 = vpop.f32.mrb[0].mxu0
      %v2428 = vadd.f32 0.0, %v2427
      %v2429 = vpop.f32.mrb[0].mxu0
      %2430 = vdwg.mxu0
      %v2435 = vrot.slane %v2413, 2
      %v2436 = vrot.slane %v2418, 2
      %v2437 = vrot.slane %v2423, 2
      %v2438 = vrot.slane %v2428, 2
      %v2443 = vadd.f32 %v2325, %v2435
      %v2444 = vadd.f32 %v2326, %v2436
      %v2445 = vadd.f32 %v2327, %v2437
      %v2446 = vadd.f32 %v2328, %v2438
      %s2447 = scalar_lea.vmem [#allocation2], 64
      %v2448 = vld [vmem:[%s2447] sm:$0xff]
      %v2449 = vld [vmem:[%s2447 + $0x8] sm:$0xff]
      %v2450 = vld [vmem:[%s2447 + $0x10] sm:$0xff]
      %v2451 = vld [vmem:[%s2447 + $0x18] sm:$0xff]
      %s2452 = scalar_lea.vmem %s5, 1920
      %v2453 = vld [vmem:[%s2452] sm:$0xff]
      %v2454 = vld [vmem:[%s2452 + $0x8] sm:$0xff]
      %v2455 = vld [vmem:[%s2452 + $0x10] sm:$0xff]
      %v2456 = vld [vmem:[%s2452 + $0x18] sm:$0xff]
      %v2457 = vld [vmem:[%s2452 + $0x20] sm:$0xff]
      %v2458 = vld [vmem:[%s2452 + $0x28] sm:$0xff]
      %v2459 = vld [vmem:[%s2452 + $0x30] sm:$0xff]
      %v2460 = vld [vmem:[%s2452 + $0x38] sm:$0xff]
      %v2461 = vld [vmem:[%s2452 + $0x40] sm:$0xff]
      %v2462 = vld [vmem:[%s2452 + $0x48] sm:$0xff]
      %v2463 = vld [vmem:[%s2452 + $0x50] sm:$0xff]
      %v2464 = vld [vmem:[%s2452 + $0x58] sm:$0xff]
      %v2465 = vld [vmem:[%s2452 + $0x60] sm:$0xff]
      %v2466 = vld [vmem:[%s2452 + $0x68] sm:$0xff]
      %v2467 = vld [vmem:[%s2452 + $0x70] sm:$0xff]
      %v2468 = vld [vmem:[%s2452 + $0x78] sm:$0xff]
      %2469 = vmatprep.subr.mxu0 0.0
      %2470 = vmatpush1.msra.mxu0 %v2453
      %2471 = vmatprep.subr.mxu0 0.0
      %2472 = vmatpush1.msra.mxu0 %v2454
      %2473 = vmatprep.subr.mxu0 0.0
      %2474 = vmatpush1.msra.mxu0 %v2455
      %2475 = vmatprep.subr.mxu0 0.0
      %2476 = vmatpush1.msra.mxu0 %v2456
      %2477 = vmatprep.subr.mxu0 0.0
      %2478 = vmatpush1.msra.mxu0 %v2457
      %2479 = vmatprep.subr.mxu0 0.0
      %2480 = vmatpush1.msra.mxu0 %v2458
      %2481 = vmatprep.subr.mxu0 0.0
      %2482 = vmatpush1.msra.mxu0 %v2459
      %2483 = vmatprep.subr.mxu0 0.0
      %2484 = vmatpush1.msra.mxu0 %v2460
      %2485 = vmatprep.subr.mxu0 0.0
      %2486 = vmatpush1.msra.mxu0 %v2461
      %2487 = vmatprep.subr.mxu0 0.0
      %2488 = vmatpush1.msra.mxu0 %v2462
      %2489 = vmatprep.subr.mxu0 0.0
      %2490 = vmatpush1.msra.mxu0 %v2463
      %2491 = vmatprep.subr.mxu0 0.0
      %2492 = vmatpush1.msra.mxu0 %v2464
      %2493 = vmatprep.subr.mxu0 0.0
      %2494 = vmatpush1.msra.mxu0 %v2465
      %2495 = vmatprep.subr.mxu0 0.0
      %2496 = vmatpush1.msra.mxu0 %v2466
      %2497 = vmatprep.subr.mxu0 0.0
      %2498 = vmatpush1.msra.mxu0 %v2467
      %2499 = vmatprep.subr.mxu0 0.0
      %2500 = vmatpush1.msra.mxu0 %v2468
      %2501 = vmatprep.subr.mxu0 0.0
      %2502 = vmatpush1.msra.mxu0 0.0
      %2503 = vmatprep.subr.mxu0 0.0
      %2504 = vmatpush1.msra.mxu0 0.0
      %2505 = vmatprep.subr.mxu0 0.0
      %2506 = vmatpush1.msra.mxu0 0.0
      %2507 = vmatprep.subr.mxu0 0.0
      %2508 = vmatpush1.msra.mxu0 0.0
      %2509 = vmatprep.subr.mxu0 0.0
      %2510 = vmatpush1.msra.mxu0 0.0
      %2511 = vmatprep.subr.mxu0 0.0
      %2512 = vmatpush1.msra.mxu0 0.0
      %2513 = vmatprep.subr.mxu0 0.0
      %2514 = vmatpush1.msra.mxu0 0.0
      %2515 = vmatprep.subr.mxu0 0.0
      %2516 = vmatpush1.msra.mxu0 0.0
      %2517 = vmatprep.subr.mxu0 0.0
      %2518 = vmatpush1.msra.mxu0 0.0
      %2519 = vmatprep.subr.mxu0 0.0
      %2520 = vmatpush1.msra.mxu0 0.0
      %2521 = vmatprep.subr.mxu0 0.0
      %2522 = vmatpush1.msra.mxu0 0.0
      %2523 = vmatprep.subr.mxu0 0.0
      %2524 = vmatpush1.msra.mxu0 0.0
      %2525 = vmatprep.subr.mxu0 0.0
      %2526 = vmatpush1.msra.mxu0 0.0
      %2527 = vmatprep.subr.mxu0 0.0
      %2528 = vmatpush1.msra.mxu0 0.0
      %2529 = vmatprep.subr.mxu0 0.0
      %2530 = vmatpush1.msra.mxu0 0.0
      %2531 = vmatprep.subr.mxu0 0.0
      %2532 = vmatpush1.msra.mxu0 0.0
      %2533 = vmatprep.mubr.f32.mxu0 0.0
      %2534 = vmatmul.mubr.f32.gmra.mrb[0].mxu0 %v2448
      %v2535 = vpop.f32.mrb[0].mxu0
      %v2536 = vadd.f32 0.0, %v2535
      %v2537 = vpop.f32.mrb[0].mxu0
      %2538 = vmatprep.mubr.f32.mxu0 0.0
      %2539 = vmatmul.mubr.f32.gmra.mrb[0].mxu0 %v2449
      %v2540 = vpop.f32.mrb[0].mxu0
      %v2541 = vadd.f32 0.0, %v2540
      %v2542 = vpop.f32.mrb[0].mxu0
      %2543 = vmatprep.mubr.f32.mxu0 0.0
      %2544 = vmatmul.mubr.f32.gmra.mrb[0].mxu0 %v2450
      %v2545 = vpop.f32.mrb[0].mxu0
      %v2546 = vadd.f32 0.0, %v2545
      %v2547 = vpop.f32.mrb[0].mxu0
      %2548 = vmatprep.mubr.f32.mxu0 0.0
      %2549 = vmatmul.mubr.f32.gmra.mrb[0].mxu0 %v2451
      %v2550 = vpop.f32.mrb[0].mxu0
      %v2551 = vadd.f32 0.0, %v2550
      %v2552 = vpop.f32.mrb[0].mxu0
      %2553 = vdwg.mxu0
      %v2554 = vadd.f32 %v2443, %v2536
      %v2555 = vadd.f32 %v2444, %v2541
      %v2556 = vadd.f32 %v2445, %v2546
      %v2557 = vadd.f32 %v2446, %v2551
      %s2558 = scalar_lea.vmem %s5, 2048
      %v2559 = vld [vmem:[%s2558] sm:$0xff]
      %v2560 = vld [vmem:[%s2558 + $0x8] sm:$0xff]
      %v2561 = vld [vmem:[%s2558 + $0x10] sm:$0xff]
      %v2562 = vld [vmem:[%s2558 + $0x18] sm:$0xff]
      %v2563 = vld [vmem:[%s2558 + $0x20] sm:$0xff]
      %v2564 = vld [vmem:[%s2558 + $0x28] sm:$0xff]
      %v2565 = vld [vmem:[%s2558 + $0x30] sm:$0xff]
      %v2566 = vld [vmem:[%s2558 + $0x38] sm:$0xff]
      %v2567 = vld [vmem:[%s2558 + $0x40] sm:$0xff]
      %v2568 = vld [vmem:[%s2558 + $0x48] sm:$0xff]
      %v2569 = vld [vmem:[%s2558 + $0x50] sm:$0xff]
      %v2570 = vld [vmem:[%s2558 + $0x58] sm:$0xff]
      %v2571 = vld [vmem:[%s2558 + $0x60] sm:$0xff]
      %v2572 = vld [vmem:[%s2558 + $0x68] sm:$0xff]
      %v2573 = vld [vmem:[%s2558 + $0x70] sm:$0xff]
      %v2574 = vld [vmem:[%s2558 + $0x78] sm:$0xff]
      %2575 = vmatprep.subr.mxu0 0.0
      %2576 = vmatpush1.msra.mxu0 %v2559
      %2577 = vmatprep.subr.mxu0 0.0
      %2578 = vmatpush1.msra.mxu0 %v2560
      %2579 = vmatprep.subr.mxu0 0.0
      %2580 = vmatpush1.msra.mxu0 %v2561
      %2581 = vmatprep.subr.mxu0 0.0
      %2582 = vmatpush1.msra.mxu0 %v2562
      %2583 = vmatprep.subr.mxu0 0.0
      %2584 = vmatpush1.msra.mxu0 %v2563
      %2585 = vmatprep.subr.mxu0 0.0
      %2586 = vmatpush1.msra.mxu0 %v2564
      %2587 = vmatprep.subr.mxu0 0.0
      %2588 = vmatpush1.msra.mxu0 %v2565
      %2589 = vmatprep.subr.mxu0 0.0
      %2590 = vmatpush1.msra.mxu0 %v2566
      %2591 = vmatprep.subr.mxu0 0.0
      %2592 = vmatpush1.msra.mxu0 %v2567
      %2593 = vmatprep.subr.mxu0 0.0
      %2594 = vmatpush1.msra.mxu0 %v2568
      %2595 = vmatprep.subr.mxu0 0.0
      %2596 = vmatpush1.msra.mxu0 %v2569
      %2597 = vmatprep.subr.mxu0 0.0
      %2598 = vmatpush1.msra.mxu0 %v2570
      %2599 = vmatprep.subr.mxu0 0.0
      %2600 = vmatpush1.msra.mxu0 %v2571
      %2601 = vmatprep.subr.mxu0 0.0
      %2602 = vmatpush1.msra.mxu0 %v2572
      %2603 = vmatprep.subr.mxu0 0.0
      %2604 = vmatpush1.msra.mxu0 %v2573
      %2605 = vmatprep.subr.mxu0 0.0
      %2606 = vmatpush1.msra.mxu0 %v2574
      %2607 = vmatprep.subr.mxu0 0.0
      %2608 = vmatpush1.msra.mxu0 0.0
      %2609 = vmatprep.subr.mxu0 0.0
      %2610 = vmatpush1.msra.mxu0 0.0
      %2611 = vmatprep.subr.mxu0 0.0
      %2612 = vmatpush1.msra.mxu0 0.0
      %2613 = vmatprep.subr.mxu0 0.0
      %2614 = vmatpush1.msra.mxu0 0.0
      %2615 = vmatprep.subr.mxu0 0.0
      %2616 = vmatpush1.msra.mxu0 0.0
      %2617 = vmatprep.subr.mxu0 0.0
      %2618 = vmatpush1.msra.mxu0 0.0
      %2619 = vmatprep.subr.mxu0 0.0
      %2620 = vmatpush1.msra.mxu0 0.0
      %2621 = vmatprep.subr.mxu0 0.0
      %2622 = vmatpush1.msra.mxu0 0.0
      %2623 = vmatprep.subr.mxu0 0.0
      %2624 = vmatpush1.msra.mxu0 0.0
      %2625 = vmatprep.subr.mxu0 0.0
      %2626 = vmatpush1.msra.mxu0 0.0
      %2627 = vmatprep.subr.mxu0 0.0
      %2628 = vmatpush1.msra.mxu0 0.0
      %2629 = vmatprep.subr.mxu0 0.0
      %2630 = vmatpush1.msra.mxu0 0.0
      %2631 = vmatprep.subr.mxu0 0.0
      %2632 = vmatpush1.msra.mxu0 0.0
      %2633 = vmatprep.subr.mxu0 0.0
      %2634 = vmatpush1.msra.mxu0 0.0
      %2635 = vmatprep.subr.mxu0 0.0
      %2636 = vmatpush1.msra.mxu0 0.0
      %2637 = vmatprep.subr.mxu0 0.0
      %2638 = vmatpush1.msra.mxu0 0.0
      %2639 = vmatprep.mubr.f32.mxu0 0.0
      %2640 = vmatmul.mubr.f32.gmra.mrb[0].mxu0 %v2448
      %v2641 = vpop.f32.mrb[0].mxu0
      %v2642 = vadd.f32 0.0, %v2641
      %v2643 = vpop.f32.mrb[0].mxu0
      %2644 = vmatprep.mubr.f32.mxu0 0.0
      %2645 = vmatmul.mubr.f32.gmra.mrb[0].mxu0 %v2449
      %v2646 = vpop.f32.mrb[0].mxu0
      %v2647 = vadd.f32 0.0, %v2646
      %v2648 = vpop.f32.mrb[0].mxu0
      %2649 = vmatprep.mubr.f32.mxu0 0.0
      %2650 = vmatmul.mubr.f32.gmra.mrb[0].mxu0 %v2450
      %v2651 = vpop.f32.mrb[0].mxu0
      %v2652 = vadd.f32 0.0, %v2651
      %v2653 = vpop.f32.mrb[0].mxu0
      %2654 = vmatprep.mubr.f32.mxu0 0.0
      %2655 = vmatmul.mubr.f32.gmra.mrb[0].mxu0 %v2451
      %v2656 = vpop.f32.mrb[0].mxu0
      %v2657 = vadd.f32 0.0, %v2656
      %v2658 = vpop.f32.mrb[0].mxu0
      %2659 = vdwg.mxu0
      %v2664 = vrot.slane %v2642, 1
      %v2665 = vrot.slane %v2647, 1
      %v2666 = vrot.slane %v2652, 1
      %v2667 = vrot.slane %v2657, 1
      %v2672 = vadd.f32 %v2554, %v2664
      %v2673 = vadd.f32 %v2555, %v2665
      %v2674 = vadd.f32 %v2556, %v2666
      %v2675 = vadd.f32 %v2557, %v2667
      %s2676 = scalar_lea.vmem %s5, 2176
      %v2677 = vld [vmem:[%s2676] sm:$0xff]
      %v2678 = vld [vmem:[%s2676 + $0x8] sm:$0xff]
      %v2679 = vld [vmem:[%s2676 + $0x10] sm:$0xff]
      %v2680 = vld [vmem:[%s2676 + $0x18] sm:$0xff]
      %v2681 = vld [vmem:[%s2676 + $0x20] sm:$0xff]
      %v2682 = vld [vmem:[%s2676 + $0x28] sm:$0xff]
      %v2683 = vld [vmem:[%s2676 + $0x30] sm:$0xff]
      %v2684 = vld [vmem:[%s2676 + $0x38] sm:$0xff]
      %v2685 = vld [vmem:[%s2676 + $0x40] sm:$0xff]
      %v2686 = vld [vmem:[%s2676 + $0x48] sm:$0xff]
      %v2687 = vld [vmem:[%s2676 + $0x50] sm:$0xff]
      %v2688 = vld [vmem:[%s2676 + $0x58] sm:$0xff]
      %v2689 = vld [vmem:[%s2676 + $0x60] sm:$0xff]
      %v2690 = vld [vmem:[%s2676 + $0x68] sm:$0xff]
      %v2691 = vld [vmem:[%s2676 + $0x70] sm:$0xff]
      %v2692 = vld [vmem:[%s2676 + $0x78] sm:$0xff]
      %2693 = vmatprep.subr.mxu0 0.0
      %2694 = vmatpush1.msra.mxu0 %v2677
      %2695 = vmatprep.subr.mxu0 0.0
      %2696 = vmatpush1.msra.mxu0 %v2678
      %2697 = vmatprep.subr.mxu0 0.0
      %2698 = vmatpush1.msra.mxu0 %v2679
      %2699 = vmatprep.subr.mxu0 0.0
      %2700 = vmatpush1.msra.mxu0 %v2680
      %2701 = vmatprep.subr.mxu0 0.0
      %2702 = vmatpush1.msra.mxu0 %v2681
      %2703 = vmatprep.subr.mxu0 0.0
      %2704 = vmatpush1.msra.mxu0 %v2682
      %2705 = vmatprep.subr.mxu0 0.0
      %2706 = vmatpush1.msra.mxu0 %v2683
      %2707 = vmatprep.subr.mxu0 0.0
      %2708 = vmatpush1.msra.mxu0 %v2684
      %2709 = vmatprep.subr.mxu0 0.0
      %2710 = vmatpush1.msra.mxu0 %v2685
      %2711 = vmatprep.subr.mxu0 0.0
      %2712 = vmatpush1.msra.mxu0 %v2686
      %2713 = vmatprep.subr.mxu0 0.0
      %2714 = vmatpush1.msra.mxu0 %v2687
      %2715 = vmatprep.subr.mxu0 0.0
      %2716 = vmatpush1.msra.mxu0 %v2688
      %2717 = vmatprep.subr.mxu0 0.0
      %2718 = vmatpush1.msra.mxu0 %v2689
      %2719 = vmatprep.subr.mxu0 0.0
      %2720 = vmatpush1.msra.mxu0 %v2690
      %2721 = vmatprep.subr.mxu0 0.0
      %2722 = vmatpush1.msra.mxu0 %v2691
      %2723 = vmatprep.subr.mxu0 0.0
      %2724 = vmatpush1.msra.mxu0 %v2692
      %2725 = vmatprep.subr.mxu0 0.0
      %2726 = vmatpush1.msra.mxu0 0.0
      %2727 = vmatprep.subr.mxu0 0.0
      %2728 = vmatpush1.msra.mxu0 0.0
      %2729 = vmatprep.subr.mxu0 0.0
      %2730 = vmatpush1.msra.mxu0 0.0
      %2731 = vmatprep.subr.mxu0 0.0
      %2732 = vmatpush1.msra.mxu0 0.0
      %2733 = vmatprep.subr.mxu0 0.0
      %2734 = vmatpush1.msra.mxu0 0.0
      %2735 = vmatprep.subr.mxu0 0.0
      %2736 = vmatpush1.msra.mxu0 0.0
      %2737 = vmatprep.subr.mxu0 0.0
      %2738 = vmatpush1.msra.mxu0 0.0
      %2739 = vmatprep.subr.mxu0 0.0
      %2740 = vmatpush1.msra.mxu0 0.0
      %2741 = vmatprep.subr.mxu0 0.0
      %2742 = vmatpush1.msra.mxu0 0.0
      %2743 = vmatprep.subr.mxu0 0.0
      %2744 = vmatpush1.msra.mxu0 0.0
      %2745 = vmatprep.subr.mxu0 0.0
      %2746 = vmatpush1.msra.mxu0 0.0
      %2747 = vmatprep.subr.mxu0 0.0
      %2748 = vmatpush1.msra.mxu0 0.0
      %2749 = vmatprep.subr.mxu0 0.0
      %2750 = vmatpush1.msra.mxu0 0.0
      %2751 = vmatprep.subr.mxu0 0.0
      %2752 = vmatpush1.msra.mxu0 0.0
      %2753 = vmatprep.subr.mxu0 0.0
      %2754 = vmatpush1.msra.mxu0 0.0
      %2755 = vmatprep.subr.mxu0 0.0
      %2756 = vmatpush1.msra.mxu0 0.0
      %2757 = vmatprep.mubr.f32.mxu0 0.0
      %2758 = vmatmul.mubr.f32.gmra.mrb[0].mxu0 %v2448
      %v2759 = vpop.f32.mrb[0].mxu0
      %v2760 = vadd.f32 0.0, %v2759
      %v2761 = vpop.f32.mrb[0].mxu0
      %2762 = vmatprep.mubr.f32.mxu0 0.0
      %2763 = vmatmul.mubr.f32.gmra.mrb[0].mxu0 %v2449
      %v2764 = vpop.f32.mrb[0].mxu0
      %v2765 = vadd.f32 0.0, %v2764
      %v2766 = vpop.f32.mrb[0].mxu0
      %2767 = vmatprep.mubr.f32.mxu0 0.0
      %2768 = vmatmul.mubr.f32.gmra.mrb[0].mxu0 %v2450
      %v2769 = vpop.f32.mrb[0].mxu0
      %v2770 = vadd.f32 0.0, %v2769
      %v2771 = vpop.f32.mrb[0].mxu0
      %2772 = vmatprep.mubr.f32.mxu0 0.0
      %2773 = vmatmul.mubr.f32.gmra.mrb[0].mxu0 %v2451
      %v2774 = vpop.f32.mrb[0].mxu0
      %v2775 = vadd.f32 0.0, %v2774
      %v2776 = vpop.f32.mrb[0].mxu0
      %2777 = vdwg.mxu0
      %v2782 = vrot.slane %v2760, 2
      %v2783 = vrot.slane %v2765, 2
      %v2784 = vrot.slane %v2770, 2
      %v2785 = vrot.slane %v2775, 2
      %v2790 = vadd.f32 %v2672, %v2782
      %v2791 = vadd.f32 %v2673, %v2783
      %v2792 = vadd.f32 %v2674, %v2784
      %v2793 = vadd.f32 %v2675, %v2785
      %s2794 = scalar_lea.vmem [#allocation2], 96
      %v2795 = vld [vmem:[%s2794] sm:$0xff]
      %v2796 = vld [vmem:[%s2794 + $0x8] sm:$0xff]
      %v2797 = vld [vmem:[%s2794 + $0x10] sm:$0xff]
      %v2798 = vld [vmem:[%s2794 + $0x18] sm:$0xff]
      %s2799 = scalar_lea.vmem %s5, 2304
      %v2800 = vld [vmem:[%s2799] sm:$0xff]
      %v2801 = vld [vmem:[%s2799 + $0x8] sm:$0xff]
      %v2802 = vld [vmem:[%s2799 + $0x10] sm:$0xff]
      %v2803 = vld [vmem:[%s2799 + $0x18] sm:$0xff]
      %v2804 = vld [vmem:[%s2799 + $0x20] sm:$0xff]
      %v2805 = vld [vmem:[%s2799 + $0x28] sm:$0xff]
      %v2806 = vld [vmem:[%s2799 + $0x30] sm:$0xff]
      %v2807 = vld [vmem:[%s2799 + $0x38] sm:$0xff]
      %v2808 = vld [vmem:[%s2799 + $0x40] sm:$0xff]
      %v2809 = vld [vmem:[%s2799 + $0x48] sm:$0xff]
      %v2810 = vld [vmem:[%s2799 + $0x50] sm:$0xff]
      %v2811 = vld [vmem:[%s2799 + $0x58] sm:$0xff]
      %v2812 = vld [vmem:[%s2799 + $0x60] sm:$0xff]
      %v2813 = vld [vmem:[%s2799 + $0x68] sm:$0xff]
      %v2814 = vld [vmem:[%s2799 + $0x70] sm:$0xff]
      %v2815 = vld [vmem:[%s2799 + $0x78] sm:$0xff]
      %2816 = vmatprep.subr.mxu0 0.0
      %2817 = vmatpush1.msra.mxu0 %v2800
      %2818 = vmatprep.subr.mxu0 0.0
      %2819 = vmatpush1.msra.mxu0 %v2801
      %2820 = vmatprep.subr.mxu0 0.0
      %2821 = vmatpush1.msra.mxu0 %v2802
      %2822 = vmatprep.subr.mxu0 0.0
      %2823 = vmatpush1.msra.mxu0 %v2803
      %2824 = vmatprep.subr.mxu0 0.0
      %2825 = vmatpush1.msra.mxu0 %v2804
      %2826 = vmatprep.subr.mxu0 0.0
      %2827 = vmatpush1.msra.mxu0 %v2805
      %2828 = vmatprep.subr.mxu0 0.0
      %2829 = vmatpush1.msra.mxu0 %v2806
      %2830 = vmatprep.subr.mxu0 0.0
      %2831 = vmatpush1.msra.mxu0 %v2807
      %2832 = vmatprep.subr.mxu0 0.0
      %2833 = vmatpush1.msra.mxu0 %v2808
      %2834 = vmatprep.subr.mxu0 0.0
      %2835 = vmatpush1.msra.mxu0 %v2809
      %2836 = vmatprep.subr.mxu0 0.0
      %2837 = vmatpush1.msra.mxu0 %v2810
      %2838 = vmatprep.subr.mxu0 0.0
      %2839 = vmatpush1.msra.mxu0 %v2811
      %2840 = vmatprep.subr.mxu0 0.0
      %2841 = vmatpush1.msra.mxu0 %v2812
      %2842 = vmatprep.subr.mxu0 0.0
      %2843 = vmatpush1.msra.mxu0 %v2813
      %2844 = vmatprep.subr.mxu0 0.0
      %2845 = vmatpush1.msra.mxu0 %v2814
      %2846 = vmatprep.subr.mxu0 0.0
      %2847 = vmatpush1.msra.mxu0 %v2815
      %2848 = vmatprep.subr.mxu0 0.0
      %2849 = vmatpush1.msra.mxu0 0.0
      %2850 = vmatprep.subr.mxu0 0.0
      %2851 = vmatpush1.msra.mxu0 0.0
      %2852 = vmatprep.subr.mxu0 0.0
      %2853 = vmatpush1.msra.mxu0 0.0
      %2854 = vmatprep.subr.mxu0 0.0
      %2855 = vmatpush1.msra.mxu0 0.0
      %2856 = vmatprep.subr.mxu0 0.0
      %2857 = vmatpush1.msra.mxu0 0.0
      %2858 = vmatprep.subr.mxu0 0.0
      %2859 = vmatpush1.msra.mxu0 0.0
      %2860 = vmatprep.subr.mxu0 0.0
      %2861 = vmatpush1.msra.mxu0 0.0
      %2862 = vmatprep.subr.mxu0 0.0
      %2863 = vmatpush1.msra.mxu0 0.0
      %2864 = vmatprep.subr.mxu0 0.0
      %2865 = vmatpush1.msra.mxu0 0.0
      %2866 = vmatprep.subr.mxu0 0.0
      %2867 = vmatpush1.msra.mxu0 0.0
      %2868 = vmatprep.subr.mxu0 0.0
      %2869 = vmatpush1.msra.mxu0 0.0
      %2870 = vmatprep.subr.mxu0 0.0
      %2871 = vmatpush1.msra.mxu0 0.0
      %2872 = vmatprep.subr.mxu0 0.0
      %2873 = vmatpush1.msra.mxu0 0.0
      %2874 = vmatprep.subr.mxu0 0.0
      %2875 = vmatpush1.msra.mxu0 0.0
      %2876 = vmatprep.subr.mxu0 0.0
      %2877 = vmatpush1.msra.mxu0 0.0
      %2878 = vmatprep.subr.mxu0 0.0
      %2879 = vmatpush1.msra.mxu0 0.0
      %2880 = vmatprep.mubr.f32.mxu0 0.0
      %2881 = vmatmul.mubr.f32.gmra.mrb[0].mxu0 %v2795
      %v2882 = vpop.f32.mrb[0].mxu0
      %v2883 = vadd.f32 0.0, %v2882
      %v2884 = vpop.f32.mrb[0].mxu0
      %2885 = vmatprep.mubr.f32.mxu0 0.0
      %2886 = vmatmul.mubr.f32.gmra.mrb[0].mxu0 %v2796
      %v2887 = vpop.f32.mrb[0].mxu0
      %v2888 = vadd.f32 0.0, %v2887
      %v2889 = vpop.f32.mrb[0].mxu0
      %2890 = vmatprep.mubr.f32.mxu0 0.0
      %2891 = vmatmul.mubr.f32.gmra.mrb[0].mxu0 %v2797
      %v2892 = vpop.f32.mrb[0].mxu0
      %v2893 = vadd.f32 0.0, %v2892
      %v2894 = vpop.f32.mrb[0].mxu0
      %2895 = vmatprep.mubr.f32.mxu0 0.0
      %2896 = vmatmul.mubr.f32.gmra.mrb[0].mxu0 %v2798
      %v2897 = vpop.f32.mrb[0].mxu0
      %v2898 = vadd.f32 0.0, %v2897
      %v2899 = vpop.f32.mrb[0].mxu0
      %2900 = vdwg.mxu0
      %v2901 = vadd.f32 %v2790, %v2883
      %v2902 = vadd.f32 %v2791, %v2888
      %v2903 = vadd.f32 %v2792, %v2893
      %v2904 = vadd.f32 %v2793, %v2898
      %s2905 = scalar_lea.vmem %s5, 2432
      %v2906 = vld [vmem:[%s2905] sm:$0xff]
      %v2907 = vld [vmem:[%s2905 + $0x8] sm:$0xff]
      %v2908 = vld [vmem:[%s2905 + $0x10] sm:$0xff]
      %v2909 = vld [vmem:[%s2905 + $0x18] sm:$0xff]
      %v2910 = vld [vmem:[%s2905 + $0x20] sm:$0xff]
      %v2911 = vld [vmem:[%s2905 + $0x28] sm:$0xff]
      %v2912 = vld [vmem:[%s2905 + $0x30] sm:$0xff]
      %v2913 = vld [vmem:[%s2905 + $0x38] sm:$0xff]
      %v2914 = vld [vmem:[%s2905 + $0x40] sm:$0xff]
      %v2915 = vld [vmem:[%s2905 + $0x48] sm:$0xff]
      %v2916 = vld [vmem:[%s2905 + $0x50] sm:$0xff]
      %v2917 = vld [vmem:[%s2905 + $0x58] sm:$0xff]
      %v2918 = vld [vmem:[%s2905 + $0x60] sm:$0xff]
      %v2919 = vld [vmem:[%s2905 + $0x68] sm:$0xff]
      %v2920 = vld [vmem:[%s2905 + $0x70] sm:$0xff]
      %v2921 = vld [vmem:[%s2905 + $0x78] sm:$0xff]
      %2922 = vmatprep.subr.mxu0 0.0
      %2923 = vmatpush1.msra.mxu0 %v2906
      %2924 = vmatprep.subr.mxu0 0.0
      %2925 = vmatpush1.msra.mxu0 %v2907
      %2926 = vmatprep.subr.mxu0 0.0
      %2927 = vmatpush1.msra.mxu0 %v2908
      %2928 = vmatprep.subr.mxu0 0.0
      %2929 = vmatpush1.msra.mxu0 %v2909
      %2930 = vmatprep.subr.mxu0 0.0
      %2931 = vmatpush1.msra.mxu0 %v2910
      %2932 = vmatprep.subr.mxu0 0.0
      %2933 = vmatpush1.msra.mxu0 %v2911
      %2934 = vmatprep.subr.mxu0 0.0
      %2935 = vmatpush1.msra.mxu0 %v2912
      %2936 = vmatprep.subr.mxu0 0.0
      %2937 = vmatpush1.msra.mxu0 %v2913
      %2938 = vmatprep.subr.mxu0 0.0
      %2939 = vmatpush1.msra.mxu0 %v2914
      %2940 = vmatprep.subr.mxu0 0.0
      %2941 = vmatpush1.msra.mxu0 %v2915
      %2942 = vmatprep.subr.mxu0 0.0
      %2943 = vmatpush1.msra.mxu0 %v2916
      %2944 = vmatprep.subr.mxu0 0.0
      %2945 = vmatpush1.msra.mxu0 %v2917
      %2946 = vmatprep.subr.mxu0 0.0
      %2947 = vmatpush1.msra.mxu0 %v2918
      %2948 = vmatprep.subr.mxu0 0.0
      %2949 = vmatpush1.msra.mxu0 %v2919
      %2950 = vmatprep.subr.mxu0 0.0
      %2951 = vmatpush1.msra.mxu0 %v2920
      %2952 = vmatprep.subr.mxu0 0.0
      %2953 = vmatpush1.msra.mxu0 %v2921
      %2954 = vmatprep.subr.mxu0 0.0
      %2955 = vmatpush1.msra.mxu0 0.0
      %2956 = vmatprep.subr.mxu0 0.0
      %2957 = vmatpush1.msra.mxu0 0.0
      %2958 = vmatprep.subr.mxu0 0.0
      %2959 = vmatpush1.msra.mxu0 0.0
      %2960 = vmatprep.subr.mxu0 0.0
      %2961 = vmatpush1.msra.mxu0 0.0
      %2962 = vmatprep.subr.mxu0 0.0
      %2963 = vmatpush1.msra.mxu0 0.0
      %2964 = vmatprep.subr.mxu0 0.0
      %2965 = vmatpush1.msra.mxu0 0.0
      %2966 = vmatprep.subr.mxu0 0.0
      %2967 = vmatpush1.msra.mxu0 0.0
      %2968 = vmatprep.subr.mxu0 0.0
      %2969 = vmatpush1.msra.mxu0 0.0
      %2970 = vmatprep.subr.mxu0 0.0
      %2971 = vmatpush1.msra.mxu0 0.0
      %2972 = vmatprep.subr.mxu0 0.0
      %2973 = vmatpush1.msra.mxu0 0.0
      %2974 = vmatprep.subr.mxu0 0.0
      %2975 = vmatpush1.msra.mxu0 0.0
      %2976 = vmatprep.subr.mxu0 0.0
      %2977 = vmatpush1.msra.mxu0 0.0
      %2978 = vmatprep.subr.mxu0 0.0
      %2979 = vmatpush1.msra.mxu0 0.0
      %2980 = vmatprep.subr.mxu0 0.0
      %2981 = vmatpush1.msra.mxu0 0.0
      %2982 = vmatprep.subr.mxu0 0.0
      %2983 = vmatpush1.msra.mxu0 0.0
      %2984 = vmatprep.subr.mxu0 0.0
      %2985 = vmatpush1.msra.mxu0 0.0
      %2986 = vmatprep.mubr.f32.mxu0 0.0
      %2987 = vmatmul.mubr.f32.gmra.mrb[0].mxu0 %v2795
      %v2988 = vpop.f32.mrb[0].mxu0
      %v2989 = vadd.f32 0.0, %v2988
      %v2990 = vpop.f32.mrb[0].mxu0
      %2991 = vmatprep.mubr.f32.mxu0 0.0
      %2992 = vmatmul.mubr.f32.gmra.mrb[0].mxu0 %v2796
      %v2993 = vpop.f32.mrb[0].mxu0
      %v2994 = vadd.f32 0.0, %v2993
      %v2995 = vpop.f32.mrb[0].mxu0
      %2996 = vmatprep.mubr.f32.mxu0 0.0
      %2997 = vmatmul.mubr.f32.gmra.mrb[0].mxu0 %v2797
      %v2998 = vpop.f32.mrb[0].mxu0
      %v2999 = vadd.f32 0.0, %v2998
      %v3000 = vpop.f32.mrb[0].mxu0
      %3001 = vmatprep.mubr.f32.mxu0 0.0
      %3002 = vmatmul.mubr.f32.gmra.mrb[0].mxu0 %v2798
      %v3003 = vpop.f32.mrb[0].mxu0
      %v3004 = vadd.f32 0.0, %v3003
      %v3005 = vpop.f32.mrb[0].mxu0
      %3006 = vdwg.mxu0
      %v3011 = vrot.slane %v2989, 1
      %v3012 = vrot.slane %v2994, 1
      %v3013 = vrot.slane %v2999, 1
      %v3014 = vrot.slane %v3004, 1
      %v3019 = vadd.f32 %v2901, %v3011
      %v3020 = vadd.f32 %v2902, %v3012
      %v3021 = vadd.f32 %v2903, %v3013
      %v3022 = vadd.f32 %v2904, %v3014
      %s3023 = scalar_lea.vmem %s5, 2560
      %v3024 = vld [vmem:[%s3023] sm:$0xff]
      %v3025 = vld [vmem:[%s3023 + $0x8] sm:$0xff]
      %v3026 = vld [vmem:[%s3023 + $0x10] sm:$0xff]
      %v3027 = vld [vmem:[%s3023 + $0x18] sm:$0xff]
      %v3028 = vld [vmem:[%s3023 + $0x20] sm:$0xff]
      %v3029 = vld [vmem:[%s3023 + $0x28] sm:$0xff]
      %v3030 = vld [vmem:[%s3023 + $0x30] sm:$0xff]
      %v3031 = vld [vmem:[%s3023 + $0x38] sm:$0xff]
      %v3032 = vld [vmem:[%s3023 + $0x40] sm:$0xff]
      %v3033 = vld [vmem:[%s3023 + $0x48] sm:$0xff]
      %v3034 = vld [vmem:[%s3023 + $0x50] sm:$0xff]
      %v3035 = vld [vmem:[%s3023 + $0x58] sm:$0xff]
      %v3036 = vld [vmem:[%s3023 + $0x60] sm:$0xff]
      %v3037 = vld [vmem:[%s3023 + $0x68] sm:$0xff]
      %v3038 = vld [vmem:[%s3023 + $0x70] sm:$0xff]
      %v3039 = vld [vmem:[%s3023 + $0x78] sm:$0xff]
      %3040 = vmatprep.subr.mxu0 0.0
      %3041 = vmatpush1.msra.mxu0 %v3024
      %3042 = vmatprep.subr.mxu0 0.0
      %3043 = vmatpush1.msra.mxu0 %v3025
      %3044 = vmatprep.subr.mxu0 0.0
      %3045 = vmatpush1.msra.mxu0 %v3026
      %3046 = vmatprep.subr.mxu0 0.0
      %3047 = vmatpush1.msra.mxu0 %v3027
      %3048 = vmatprep.subr.mxu0 0.0
      %3049 = vmatpush1.msra.mxu0 %v3028
      %3050 = vmatprep.subr.mxu0 0.0
      %3051 = vmatpush1.msra.mxu0 %v3029
      %3052 = vmatprep.subr.mxu0 0.0
      %3053 = vmatpush1.msra.mxu0 %v3030
      %3054 = vmatprep.subr.mxu0 0.0
      %3055 = vmatpush1.msra.mxu0 %v3031
      %3056 = vmatprep.subr.mxu0 0.0
      %3057 = vmatpush1.msra.mxu0 %v3032
      %3058 = vmatprep.subr.mxu0 0.0
      %3059 = vmatpush1.msra.mxu0 %v3033
      %3060 = vmatprep.subr.mxu0 0.0
      %3061 = vmatpush1.msra.mxu0 %v3034
      %3062 = vmatprep.subr.mxu0 0.0
      %3063 = vmatpush1.msra.mxu0 %v3035
      %3064 = vmatprep.subr.mxu0 0.0
      %3065 = vmatpush1.msra.mxu0 %v3036
      %3066 = vmatprep.subr.mxu0 0.0
      %3067 = vmatpush1.msra.mxu0 %v3037
      %3068 = vmatprep.subr.mxu0 0.0
      %3069 = vmatpush1.msra.mxu0 %v3038
      %3070 = vmatprep.subr.mxu0 0.0
      %3071 = vmatpush1.msra.mxu0 %v3039
      %3072 = vmatprep.subr.mxu0 0.0
      %3073 = vmatpush1.msra.mxu0 0.0
      %3074 = vmatprep.subr.mxu0 0.0
      %3075 = vmatpush1.msra.mxu0 0.0
      %3076 = vmatprep.subr.mxu0 0.0
      %3077 = vmatpush1.msra.mxu0 0.0
      %3078 = vmatprep.subr.mxu0 0.0
      %3079 = vmatpush1.msra.mxu0 0.0
      %3080 = vmatprep.subr.mxu0 0.0
      %3081 = vmatpush1.msra.mxu0 0.0
      %3082 = vmatprep.subr.mxu0 0.0
      %3083 = vmatpush1.msra.mxu0 0.0
      %3084 = vmatprep.subr.mxu0 0.0
      %3085 = vmatpush1.msra.mxu0 0.0
      %3086 = vmatprep.subr.mxu0 0.0
      %3087 = vmatpush1.msra.mxu0 0.0
      %3088 = vmatprep.subr.mxu0 0.0
      %3089 = vmatpush1.msra.mxu0 0.0
      %3090 = vmatprep.subr.mxu0 0.0
      %3091 = vmatpush1.msra.mxu0 0.0
      %3092 = vmatprep.subr.mxu0 0.0
      %3093 = vmatpush1.msra.mxu0 0.0
      %3094 = vmatprep.subr.mxu0 0.0
      %3095 = vmatpush1.msra.mxu0 0.0
      %3096 = vmatprep.subr.mxu0 0.0
      %3097 = vmatpush1.msra.mxu0 0.0
      %3098 = vmatprep.subr.mxu0 0.0
      %3099 = vmatpush1.msra.mxu0 0.0
      %3100 = vmatprep.subr.mxu0 0.0
      %3101 = vmatpush1.msra.mxu0 0.0
      %3102 = vmatprep.subr.mxu0 0.0
      %3103 = vmatpush1.msra.mxu0 0.0
      %3104 = vmatprep.mubr.f32.mxu0 0.0
      %3105 = vmatmul.mubr.f32.gmra.mrb[0].mxu0 %v2795
      %v3106 = vpop.f32.mrb[0].mxu0
      %v3107 = vadd.f32 0.0, %v3106
      %v3108 = vpop.f32.mrb[0].mxu0
      %3109 = vmatprep.mubr.f32.mxu0 0.0
      %3110 = vmatmul.mubr.f32.gmra.mrb[0].mxu0 %v2796
      %v3111 = vpop.f32.mrb[0].mxu0
      %v3112 = vadd.f32 0.0, %v3111
      %v3113 = vpop.f32.mrb[0].mxu0
      %3114 = vmatprep.mubr.f32.mxu0 0.0
      %3115 = vmatmul.mubr.f32.gmra.mrb[0].mxu0 %v2797
      %v3116 = vpop.f32.mrb[0].mxu0
      %v3117 = vadd.f32 0.0, %v3116
      %v3118 = vpop.f32.mrb[0].mxu0
      %3119 = vmatprep.mubr.f32.mxu0 0.0
      %3120 = vmatmul.mubr.f32.gmra.mrb[0].mxu0 %v2798
      %v3121 = vpop.f32.mrb[0].mxu0
      %v3122 = vadd.f32 0.0, %v3121
      %v3123 = vpop.f32.mrb[0].mxu0
      %3124 = vdwg.mxu0
      %v3129 = vrot.slane %v3107, 2
      %v3130 = vrot.slane %v3112, 2
      %v3131 = vrot.slane %v3117, 2
      %v3132 = vrot.slane %v3122, 2
      %v3137 = vadd.f32 %v3019, %v3129
      %v3138 = vadd.f32 %v3020, %v3130
      %v3139 = vadd.f32 %v3021, %v3131
      %v3140 = vadd.f32 %v3022, %v3132
      %v3141 = vld [vmem:[%s711] sm:$0xff]
      %v3142 = vld [vmem:[%s711 + $0x8] sm:$0xff]
      %v3143 = vld [vmem:[%s711 + $0x10] sm:$0xff]
      %v3144 = vld [vmem:[%s711 + $0x18] sm:$0xff]
      %s3145 = scalar_lea.vmem %s5, 2688
      %v3146 = vld [vmem:[%s3145] sm:$0xff]
      %v3147 = vld [vmem:[%s3145 + $0x8] sm:$0xff]
      %v3148 = vld [vmem:[%s3145 + $0x10] sm:$0xff]
      %v3149 = vld [vmem:[%s3145 + $0x18] sm:$0xff]
      %v3150 = vld [vmem:[%s3145 + $0x20] sm:$0xff]
      %v3151 = vld [vmem:[%s3145 + $0x28] sm:$0xff]
      %v3152 = vld [vmem:[%s3145 + $0x30] sm:$0xff]
      %v3153 = vld [vmem:[%s3145 + $0x38] sm:$0xff]
      %v3154 = vld [vmem:[%s3145 + $0x40] sm:$0xff]
      %v3155 = vld [vmem:[%s3145 + $0x48] sm:$0xff]
      %v3156 = vld [vmem:[%s3145 + $0x50] sm:$0xff]
      %v3157 = vld [vmem:[%s3145 + $0x58] sm:$0xff]
      %v3158 = vld [vmem:[%s3145 + $0x60] sm:$0xff]
      %v3159 = vld [vmem:[%s3145 + $0x68] sm:$0xff]
      %v3160 = vld [vmem:[%s3145 + $0x70] sm:$0xff]
      %v3161 = vld [vmem:[%s3145 + $0x78] sm:$0xff]
      %3162 = vmatprep.subr.mxu0 0.0
      %3163 = vmatpush1.msra.mxu0 %v3146
      %3164 = vmatprep.subr.mxu0 0.0
      %3165 = vmatpush1.msra.mxu0 %v3147
      %3166 = vmatprep.subr.mxu0 0.0
      %3167 = vmatpush1.msra.mxu0 %v3148
      %3168 = vmatprep.subr.mxu0 0.0
      %3169 = vmatpush1.msra.mxu0 %v3149
      %3170 = vmatprep.subr.mxu0 0.0
      %3171 = vmatpush1.msra.mxu0 %v3150
      %3172 = vmatprep.subr.mxu0 0.0
      %3173 = vmatpush1.msra.mxu0 %v3151
      %3174 = vmatprep.subr.mxu0 0.0
      %3175 = vmatpush1.msra.mxu0 %v3152
      %3176 = vmatprep.subr.mxu0 0.0
      %3177 = vmatpush1.msra.mxu0 %v3153
      %3178 = vmatprep.subr.mxu0 0.0
      %3179 = vmatpush1.msra.mxu0 %v3154
      %3180 = vmatprep.subr.mxu0 0.0
      %3181 = vmatpush1.msra.mxu0 %v3155
      %3182 = vmatprep.subr.mxu0 0.0
      %3183 = vmatpush1.msra.mxu0 %v3156
      %3184 = vmatprep.subr.mxu0 0.0
      %3185 = vmatpush1.msra.mxu0 %v3157
      %3186 = vmatprep.subr.mxu0 0.0
      %3187 = vmatpush1.msra.mxu0 %v3158
      %3188 = vmatprep.subr.mxu0 0.0
      %3189 = vmatpush1.msra.mxu0 %v3159
      %3190 = vmatprep.subr.mxu0 0.0
      %3191 = vmatpush1.msra.mxu0 %v3160
      %3192 = vmatprep.subr.mxu0 0.0
      %3193 = vmatpush1.msra.mxu0 %v3161
      %3194 = vmatprep.subr.mxu0 0.0
      %3195 = vmatpush1.msra.mxu0 0.0
      %3196 = vmatprep.subr.mxu0 0.0
      %3197 = vmatpush1.msra.mxu0 0.0
      %3198 = vmatprep.subr.mxu0 0.0
      %3199 = vmatpush1.msra.mxu0 0.0
      %3200 = vmatprep.subr.mxu0 0.0
      %3201 = vmatpush1.msra.mxu0 0.0
      %3202 = vmatprep.subr.mxu0 0.0
      %3203 = vmatpush1.msra.mxu0 0.0
      %3204 = vmatprep.subr.mxu0 0.0
      %3205 = vmatpush1.msra.mxu0 0.0
      %3206 = vmatprep.subr.mxu0 0.0
      %3207 = vmatpush1.msra.mxu0 0.0
      %3208 = vmatprep.subr.mxu0 0.0
      %3209 = vmatpush1.msra.mxu0 0.0
      %3210 = vmatprep.subr.mxu0 0.0
      %3211 = vmatpush1.msra.mxu0 0.0
      %3212 = vmatprep.subr.mxu0 0.0
      %3213 = vmatpush1.msra.mxu0 0.0
      %3214 = vmatprep.subr.mxu0 0.0
      %3215 = vmatpush1.msra.mxu0 0.0
      %3216 = vmatprep.subr.mxu0 0.0
      %3217 = vmatpush1.msra.mxu0 0.0
      %3218 = vmatprep.subr.mxu0 0.0
      %3219 = vmatpush1.msra.mxu0 0.0
      %3220 = vmatprep.subr.mxu0 0.0
      %3221 = vmatpush1.msra.mxu0 0.0
      %3222 = vmatprep.subr.mxu0 0.0
      %3223 = vmatpush1.msra.mxu0 0.0
      %3224 = vmatprep.subr.mxu0 0.0
      %3225 = vmatpush1.msra.mxu0 0.0
      %3226 = vmatprep.mubr.f32.mxu0 0.0
      %3227 = vmatmul.mubr.f32.gmra.mrb[0].mxu0 %v3141
      %v3228 = vpop.f32.mrb[0].mxu0
      %v3229 = vadd.f32 0.0, %v3228
      %v3230 = vpop.f32.mrb[0].mxu0
      %3231 = vmatprep.mubr.f32.mxu0 0.0
      %3232 = vmatmul.mubr.f32.gmra.mrb[0].mxu0 %v3142
      %v3233 = vpop.f32.mrb[0].mxu0
      %v3234 = vadd.f32 0.0, %v3233
      %v3235 = vpop.f32.mrb[0].mxu0
      %3236 = vmatprep.mubr.f32.mxu0 0.0
      %3237 = vmatmul.mubr.f32.gmra.mrb[0].mxu0 %v3143
      %v3238 = vpop.f32.mrb[0].mxu0
      %v3239 = vadd.f32 0.0, %v3238
      %v3240 = vpop.f32.mrb[0].mxu0
      %3241 = vmatprep.mubr.f32.mxu0 0.0
      %3242 = vmatmul.mubr.f32.gmra.mrb[0].mxu0 %v3144
      %v3243 = vpop.f32.mrb[0].mxu0
      %v3244 = vadd.f32 0.0, %v3243
      %v3245 = vpop.f32.mrb[0].mxu0
      %3246 = vdwg.mxu0
      %v3247 = vadd.f32 %v3137, %v3229
      %v3248 = vadd.f32 %v3138, %v3234
      %v3249 = vadd.f32 %v3139, %v3239
      %v3250 = vadd.f32 %v3140, %v3244
      %s3251 = scalar_lea.vmem %s5, 2816
      %v3252 = vld [vmem:[%s3251] sm:$0xff]
      %v3253 = vld [vmem:[%s3251 + $0x8] sm:$0xff]
      %v3254 = vld [vmem:[%s3251 + $0x10] sm:$0xff]
      %v3255 = vld [vmem:[%s3251 + $0x18] sm:$0xff]
      %v3256 = vld [vmem:[%s3251 + $0x20] sm:$0xff]
      %v3257 = vld [vmem:[%s3251 + $0x28] sm:$0xff]
      %v3258 = vld [vmem:[%s3251 + $0x30] sm:$0xff]
      %v3259 = vld [vmem:[%s3251 + $0x38] sm:$0xff]
      %v3260 = vld [vmem:[%s3251 + $0x40] sm:$0xff]
      %v3261 = vld [vmem:[%s3251 + $0x48] sm:$0xff]
      %v3262 = vld [vmem:[%s3251 + $0x50] sm:$0xff]
      %v3263 = vld [vmem:[%s3251 + $0x58] sm:$0xff]
      %v3264 = vld [vmem:[%s3251 + $0x60] sm:$0xff]
      %v3265 = vld [vmem:[%s3251 + $0x68] sm:$0xff]
      %v3266 = vld [vmem:[%s3251 + $0x70] sm:$0xff]
      %v3267 = vld [vmem:[%s3251 + $0x78] sm:$0xff]
      %3268 = vmatprep.subr.mxu0 0.0
      %3269 = vmatpush1.msra.mxu0 %v3252
      %3270 = vmatprep.subr.mxu0 0.0
      %3271 = vmatpush1.msra.mxu0 %v3253
      %3272 = vmatprep.subr.mxu0 0.0
      %3273 = vmatpush1.msra.mxu0 %v3254
      %3274 = vmatprep.subr.mxu0 0.0
      %3275 = vmatpush1.msra.mxu0 %v3255
      %3276 = vmatprep.subr.mxu0 0.0
      %3277 = vmatpush1.msra.mxu0 %v3256
      %3278 = vmatprep.subr.mxu0 0.0
      %3279 = vmatpush1.msra.mxu0 %v3257
      %3280 = vmatprep.subr.mxu0 0.0
      %3281 = vmatpush1.msra.mxu0 %v3258
      %3282 = vmatprep.subr.mxu0 0.0
      %3283 = vmatpush1.msra.mxu0 %v3259
      %3284 = vmatprep.subr.mxu0 0.0
      %3285 = vmatpush1.msra.mxu0 %v3260
      %3286 = vmatprep.subr.mxu0 0.0
      %3287 = vmatpush1.msra.mxu0 %v3261
      %3288 = vmatprep.subr.mxu0 0.0
      %3289 = vmatpush1.msra.mxu0 %v3262
      %3290 = vmatprep.subr.mxu0 0.0
      %3291 = vmatpush1.msra.mxu0 %v3263
      %3292 = vmatprep.subr.mxu0 0.0
      %3293 = vmatpush1.msra.mxu0 %v3264
      %3294 = vmatprep.subr.mxu0 0.0
      %3295 = vmatpush1.msra.mxu0 %v3265
      %3296 = vmatprep.subr.mxu0 0.0
      %3297 = vmatpush1.msra.mxu0 %v3266
      %3298 = vmatprep.subr.mxu0 0.0
      %3299 = vmatpush1.msra.mxu0 %v3267
      %3300 = vmatprep.subr.mxu0 0.0
      %3301 = vmatpush1.msra.mxu0 0.0
      %3302 = vmatprep.subr.mxu0 0.0
      %3303 = vmatpush1.msra.mxu0 0.0
      %3304 = vmatprep.subr.mxu0 0.0
      %3305 = vmatpush1.msra.mxu0 0.0
      %3306 = vmatprep.subr.mxu0 0.0
      %3307 = vmatpush1.msra.mxu0 0.0
      %3308 = vmatprep.subr.mxu0 0.0
      %3309 = vmatpush1.msra.mxu0 0.0
      %3310 = vmatprep.subr.mxu0 0.0
      %3311 = vmatpush1.msra.mxu0 0.0
      %3312 = vmatprep.subr.mxu0 0.0
      %3313 = vmatpush1.msra.mxu0 0.0
      %3314 = vmatprep.subr.mxu0 0.0
      %3315 = vmatpush1.msra.mxu0 0.0
      %3316 = vmatprep.subr.mxu0 0.0
      %3317 = vmatpush1.msra.mxu0 0.0
      %3318 = vmatprep.subr.mxu0 0.0
      %3319 = vmatpush1.msra.mxu0 0.0
      %3320 = vmatprep.subr.mxu0 0.0
      %3321 = vmatpush1.msra.mxu0 0.0
      %3322 = vmatprep.subr.mxu0 0.0
      %3323 = vmatpush1.msra.mxu0 0.0
      %3324 = vmatprep.subr.mxu0 0.0
      %3325 = vmatpush1.msra.mxu0 0.0
      %3326 = vmatprep.subr.mxu0 0.0
      %3327 = vmatpush1.msra.mxu0 0.0
      %3328 = vmatprep.subr.mxu0 0.0
      %3329 = vmatpush1.msra.mxu0 0.0
      %3330 = vmatprep.subr.mxu0 0.0
      %3331 = vmatpush1.msra.mxu0 0.0
      %3332 = vmatprep.mubr.f32.mxu0 0.0
      %3333 = vmatmul.mubr.f32.gmra.mrb[0].mxu0 %v3141
      %v3334 = vpop.f32.mrb[0].mxu0
      %v3335 = vadd.f32 0.0, %v3334
      %v3336 = vpop.f32.mrb[0].mxu0
      %3337 = vmatprep.mubr.f32.mxu0 0.0
      %3338 = vmatmul.mubr.f32.gmra.mrb[0].mxu0 %v3142
      %v3339 = vpop.f32.mrb[0].mxu0
      %v3340 = vadd.f32 0.0, %v3339
      %v3341 = vpop.f32.mrb[0].mxu0
      %3342 = vmatprep.mubr.f32.mxu0 0.0
      %3343 = vmatmul.mubr.f32.gmra.mrb[0].mxu0 %v3143
      %v3344 = vpop.f32.mrb[0].mxu0
      %v3345 = vadd.f32 0.0, %v3344
      %v3346 = vpop.f32.mrb[0].mxu0
      %3347 = vmatprep.mubr.f32.mxu0 0.0
      %3348 = vmatmul.mubr.f32.gmra.mrb[0].mxu0 %v3144
      %v3349 = vpop.f32.mrb[0].mxu0
      %v3350 = vadd.f32 0.0, %v3349
      %v3351 = vpop.f32.mrb[0].mxu0
      %3352 = vdwg.mxu0
      %v3357 = vrot.slane %v3335, 1
      %v3358 = vrot.slane %v3340, 1
      %v3359 = vrot.slane %v3345, 1
      %v3360 = vrot.slane %v3350, 1
      %v3365 = vadd.f32 %v3247, %v3357
      %v3366 = vadd.f32 %v3248, %v3358
      %v3367 = vadd.f32 %v3249, %v3359
      %v3368 = vadd.f32 %v3250, %v3360
      %s3369 = scalar_lea.vmem %s5, 2944
      %v3370 = vld [vmem:[%s3369] sm:$0xff]
      %v3371 = vld [vmem:[%s3369 + $0x8] sm:$0xff]
      %v3372 = vld [vmem:[%s3369 + $0x10] sm:$0xff]
      %v3373 = vld [vmem:[%s3369 + $0x18] sm:$0xff]
      %v3374 = vld [vmem:[%s3369 + $0x20] sm:$0xff]
      %v3375 = vld [vmem:[%s3369 + $0x28] sm:$0xff]
      %v3376 = vld [vmem:[%s3369 + $0x30] sm:$0xff]
      %v3377 = vld [vmem:[%s3369 + $0x38] sm:$0xff]
      %v3378 = vld [vmem:[%s3369 + $0x40] sm:$0xff]
      %v3379 = vld [vmem:[%s3369 + $0x48] sm:$0xff]
      %v3380 = vld [vmem:[%s3369 + $0x50] sm:$0xff]
      %v3381 = vld [vmem:[%s3369 + $0x58] sm:$0xff]
      %v3382 = vld [vmem:[%s3369 + $0x60] sm:$0xff]
      %v3383 = vld [vmem:[%s3369 + $0x68] sm:$0xff]
      %v3384 = vld [vmem:[%s3369 + $0x70] sm:$0xff]
      %v3385 = vld [vmem:[%s3369 + $0x78] sm:$0xff]
      %3386 = vmatprep.subr.mxu0 0.0
      %3387 = vmatpush1.msra.mxu0 %v3370
      %3388 = vmatprep.subr.mxu0 0.0
      %3389 = vmatpush1.msra.mxu0 %v3371
      %3390 = vmatprep.subr.mxu0 0.0
      %3391 = vmatpush1.msra.mxu0 %v3372
      %3392 = vmatprep.subr.mxu0 0.0
      %3393 = vmatpush1.msra.mxu0 %v3373
      %3394 = vmatprep.subr.mxu0 0.0
      %3395 = vmatpush1.msra.mxu0 %v3374
      %3396 = vmatprep.subr.mxu0 0.0
      %3397 = vmatpush1.msra.mxu0 %v3375
      %3398 = vmatprep.subr.mxu0 0.0
      %3399 = vmatpush1.msra.mxu0 %v3376
      %3400 = vmatprep.subr.mxu0 0.0
      %3401 = vmatpush1.msra.mxu0 %v3377
      %3402 = vmatprep.subr.mxu0 0.0
      %3403 = vmatpush1.msra.mxu0 %v3378
      %3404 = vmatprep.subr.mxu0 0.0
      %3405 = vmatpush1.msra.mxu0 %v3379
      %3406 = vmatprep.subr.mxu0 0.0
      %3407 = vmatpush1.msra.mxu0 %v3380
      %3408 = vmatprep.subr.mxu0 0.0
      %3409 = vmatpush1.msra.mxu0 %v3381
      %3410 = vmatprep.subr.mxu0 0.0
      %3411 = vmatpush1.msra.mxu0 %v3382
      %3412 = vmatprep.subr.mxu0 0.0
      %3413 = vmatpush1.msra.mxu0 %v3383
      %3414 = vmatprep.subr.mxu0 0.0
      %3415 = vmatpush1.msra.mxu0 %v3384
      %3416 = vmatprep.subr.mxu0 0.0
      %3417 = vmatpush1.msra.mxu0 %v3385
      %3418 = vmatprep.subr.mxu0 0.0
      %3419 = vmatpush1.msra.mxu0 0.0
      %3420 = vmatprep.subr.mxu0 0.0
      %3421 = vmatpush1.msra.mxu0 0.0
      %3422 = vmatprep.subr.mxu0 0.0
      %3423 = vmatpush1.msra.mxu0 0.0
      %3424 = vmatprep.subr.mxu0 0.0
      %3425 = vmatpush1.msra.mxu0 0.0
      %3426 = vmatprep.subr.mxu0 0.0
      %3427 = vmatpush1.msra.mxu0 0.0
      %3428 = vmatprep.subr.mxu0 0.0
      %3429 = vmatpush1.msra.mxu0 0.0
      %3430 = vmatprep.subr.mxu0 0.0
      %3431 = vmatpush1.msra.mxu0 0.0
      %3432 = vmatprep.subr.mxu0 0.0
      %3433 = vmatpush1.msra.mxu0 0.0
      %3434 = vmatprep.subr.mxu0 0.0
      %3435 = vmatpush1.msra.mxu0 0.0
      %3436 = vmatprep.subr.mxu0 0.0
      %3437 = vmatpush1.msra.mxu0 0.0
      %3438 = vmatprep.subr.mxu0 0.0
      %3439 = vmatpush1.msra.mxu0 0.0
      %3440 = vmatprep.subr.mxu0 0.0
      %3441 = vmatpush1.msra.mxu0 0.0
      %3442 = vmatprep.subr.mxu0 0.0
      %3443 = vmatpush1.msra.mxu0 0.0
      %3444 = vmatprep.subr.mxu0 0.0
      %3445 = vmatpush1.msra.mxu0 0.0
      %3446 = vmatprep.subr.mxu0 0.0
      %3447 = vmatpush1.msra.mxu0 0.0
      %3448 = vmatprep.subr.mxu0 0.0
      %3449 = vmatpush1.msra.mxu0 0.0
      %3450 = vmatprep.mubr.f32.mxu0 0.0
      %3451 = vmatmul.mubr.f32.gmra.mrb[0].mxu0 %v3141
      %v3452 = vpop.f32.mrb[0].mxu0
      %v3453 = vadd.f32 0.0, %v3452
      %v3454 = vpop.f32.mrb[0].mxu0
      %3455 = vmatprep.mubr.f32.mxu0 0.0
      %3456 = vmatmul.mubr.f32.gmra.mrb[0].mxu0 %v3142
      %v3457 = vpop.f32.mrb[0].mxu0
      %v3458 = vadd.f32 0.0, %v3457
      %v3459 = vpop.f32.mrb[0].mxu0
      %3460 = vmatprep.mubr.f32.mxu0 0.0
      %3461 = vmatmul.mubr.f32.gmra.mrb[0].mxu0 %v3143
      %v3462 = vpop.f32.mrb[0].mxu0
      %v3463 = vadd.f32 0.0, %v3462
      %v3464 = vpop.f32.mrb[0].mxu0
      %3465 = vmatprep.mubr.f32.mxu0 0.0
      %3466 = vmatmul.mubr.f32.gmra.mrb[0].mxu0 %v3144
      %v3467 = vpop.f32.mrb[0].mxu0
      %v3468 = vadd.f32 0.0, %v3467
      %v3469 = vpop.f32.mrb[0].mxu0
      %3470 = vdwg.mxu0
      %v3475 = vrot.slane %v3453, 2
      %v3476 = vrot.slane %v3458, 2
      %v3477 = vrot.slane %v3463, 2
      %v3478 = vrot.slane %v3468, 2
      %v3483 = vadd.f32 %v3365, %v3475
      %v3484 = vadd.f32 %v3366, %v3476
      %v3485 = vadd.f32 %v3367, %v3477
      %v3486 = vadd.f32 %v3368, %v3478
      %s3487 = scalar_lea.vmem [#allocation2], 112
      %v3488 = vld [vmem:[%s3487] sm:$0xff]
      %v3489 = vld [vmem:[%s3487 + $0x8] sm:$0xff]
      %v3490 = vld [vmem:[%s3487 + $0x10] sm:$0xff]
      %v3491 = vld [vmem:[%s3487 + $0x18] sm:$0xff]
      %s3492 = scalar_lea.vmem %s5, 3072
      %v3493 = vld [vmem:[%s3492] sm:$0xff]
      %v3494 = vld [vmem:[%s3492 + $0x8] sm:$0xff]
      %v3495 = vld [vmem:[%s3492 + $0x10] sm:$0xff]
      %v3496 = vld [vmem:[%s3492 + $0x18] sm:$0xff]
      %v3497 = vld [vmem:[%s3492 + $0x20] sm:$0xff]
      %v3498 = vld [vmem:[%s3492 + $0x28] sm:$0xff]
      %v3499 = vld [vmem:[%s3492 + $0x30] sm:$0xff]
      %v3500 = vld [vmem:[%s3492 + $0x38] sm:$0xff]
      %v3501 = vld [vmem:[%s3492 + $0x40] sm:$0xff]
      %v3502 = vld [vmem:[%s3492 + $0x48] sm:$0xff]
      %v3503 = vld [vmem:[%s3492 + $0x50] sm:$0xff]
      %v3504 = vld [vmem:[%s3492 + $0x58] sm:$0xff]
      %v3505 = vld [vmem:[%s3492 + $0x60] sm:$0xff]
      %v3506 = vld [vmem:[%s3492 + $0x68] sm:$0xff]
      %v3507 = vld [vmem:[%s3492 + $0x70] sm:$0xff]
      %v3508 = vld [vmem:[%s3492 + $0x78] sm:$0xff]
      %3509 = vmatprep.subr.mxu0 0.0
      %3510 = vmatpush1.msra.mxu0 %v3493
      %3511 = vmatprep.subr.mxu0 0.0
      %3512 = vmatpush1.msra.mxu0 %v3494
      %3513 = vmatprep.subr.mxu0 0.0
      %3514 = vmatpush1.msra.mxu0 %v3495
      %3515 = vmatprep.subr.mxu0 0.0
      %3516 = vmatpush1.msra.mxu0 %v3496
      %3517 = vmatprep.subr.mxu0 0.0
      %3518 = vmatpush1.msra.mxu0 %v3497
      %3519 = vmatprep.subr.mxu0 0.0
      %3520 = vmatpush1.msra.mxu0 %v3498
      %3521 = vmatprep.subr.mxu0 0.0
      %3522 = vmatpush1.msra.mxu0 %v3499
      %3523 = vmatprep.subr.mxu0 0.0
      %3524 = vmatpush1.msra.mxu0 %v3500
      %3525 = vmatprep.subr.mxu0 0.0
      %3526 = vmatpush1.msra.mxu0 %v3501
      %3527 = vmatprep.subr.mxu0 0.0
      %3528 = vmatpush1.msra.mxu0 %v3502
      %3529 = vmatprep.subr.mxu0 0.0
      %3530 = vmatpush1.msra.mxu0 %v3503
      %3531 = vmatprep.subr.mxu0 0.0
      %3532 = vmatpush1.msra.mxu0 %v3504
      %3533 = vmatprep.subr.mxu0 0.0
      %3534 = vmatpush1.msra.mxu0 %v3505
      %3535 = vmatprep.subr.mxu0 0.0
      %3536 = vmatpush1.msra.mxu0 %v3506
      %3537 = vmatprep.subr.mxu0 0.0
      %3538 = vmatpush1.msra.mxu0 %v3507
      %3539 = vmatprep.subr.mxu0 0.0
      %3540 = vmatpush1.msra.mxu0 %v3508
      %3541 = vmatprep.subr.mxu0 0.0
      %3542 = vmatpush1.msra.mxu0 0.0
      %3543 = vmatprep.subr.mxu0 0.0
      %3544 = vmatpush1.msra.mxu0 0.0
      %3545 = vmatprep.subr.mxu0 0.0
      %3546 = vmatpush1.msra.mxu0 0.0
      %3547 = vmatprep.subr.mxu0 0.0
      %3548 = vmatpush1.msra.mxu0 0.0
      %3549 = vmatprep.subr.mxu0 0.0
      %3550 = vmatpush1.msra.mxu0 0.0
      %3551 = vmatprep.subr.mxu0 0.0
      %3552 = vmatpush1.msra.mxu0 0.0
      %3553 = vmatprep.subr.mxu0 0.0
      %3554 = vmatpush1.msra.mxu0 0.0
      %3555 = vmatprep.subr.mxu0 0.0
      %3556 = vmatpush1.msra.mxu0 0.0
      %3557 = vmatprep.subr.mxu0 0.0
      %3558 = vmatpush1.msra.mxu0 0.0
      %3559 = vmatprep.subr.mxu0 0.0
      %3560 = vmatpush1.msra.mxu0 0.0
      %3561 = vmatprep.subr.mxu0 0.0
      %3562 = vmatpush1.msra.mxu0 0.0
      %3563 = vmatprep.subr.mxu0 0.0
      %3564 = vmatpush1.msra.mxu0 0.0
      %3565 = vmatprep.subr.mxu0 0.0
      %3566 = vmatpush1.msra.mxu0 0.0
      %3567 = vmatprep.subr.mxu0 0.0
      %3568 = vmatpush1.msra.mxu0 0.0
      %3569 = vmatprep.subr.mxu0 0.0
      %3570 = vmatpush1.msra.mxu0 0.0
      %3571 = vmatprep.subr.mxu0 0.0
      %3572 = vmatpush1.msra.mxu0 0.0
      %3573 = vmatprep.mubr.f32.mxu0 0.0
      %3574 = vmatmul.mubr.f32.gmra.mrb[0].mxu0 %v3488
      %v3575 = vpop.f32.mrb[0].mxu0
      %v3576 = vadd.f32 0.0, %v3575
      %v3577 = vpop.f32.mrb[0].mxu0
      %3578 = vmatprep.mubr.f32.mxu0 0.0
      %3579 = vmatmul.mubr.f32.gmra.mrb[0].mxu0 %v3489
      %v3580 = vpop.f32.mrb[0].mxu0
      %v3581 = vadd.f32 0.0, %v3580
      %v3582 = vpop.f32.mrb[0].mxu0
      %3583 = vmatprep.mubr.f32.mxu0 0.0
      %3584 = vmatmul.mubr.f32.gmra.mrb[0].mxu0 %v3490
      %v3585 = vpop.f32.mrb[0].mxu0
      %v3586 = vadd.f32 0.0, %v3585
      %v3587 = vpop.f32.mrb[0].mxu0
      %3588 = vmatprep.mubr.f32.mxu0 0.0
      %3589 = vmatmul.mubr.f32.gmra.mrb[0].mxu0 %v3491
      %v3590 = vpop.f32.mrb[0].mxu0
      %v3591 = vadd.f32 0.0, %v3590
      %v3592 = vpop.f32.mrb[0].mxu0
      %3593 = vdwg.mxu0
      %v3594 = vadd.f32 %v3483, %v3576
      %v3595 = vadd.f32 %v3484, %v3581
      %v3596 = vadd.f32 %v3485, %v3586
      %v3597 = vadd.f32 %v3486, %v3591
      %s3598 = scalar_lea.vmem %s5, 3200
      %v3599 = vld [vmem:[%s3598] sm:$0xff]
      %v3600 = vld [vmem:[%s3598 + $0x8] sm:$0xff]
      %v3601 = vld [vmem:[%s3598 + $0x10] sm:$0xff]
      %v3602 = vld [vmem:[%s3598 + $0x18] sm:$0xff]
      %v3603 = vld [vmem:[%s3598 + $0x20] sm:$0xff]
      %v3604 = vld [vmem:[%s3598 + $0x28] sm:$0xff]
      %v3605 = vld [vmem:[%s3598 + $0x30] sm:$0xff]
      %v3606 = vld [vmem:[%s3598 + $0x38] sm:$0xff]
      %v3607 = vld [vmem:[%s3598 + $0x40] sm:$0xff]
      %v3608 = vld [vmem:[%s3598 + $0x48] sm:$0xff]
      %v3609 = vld [vmem:[%s3598 + $0x50] sm:$0xff]
      %v3610 = vld [vmem:[%s3598 + $0x58] sm:$0xff]
      %v3611 = vld [vmem:[%s3598 + $0x60] sm:$0xff]
      %v3612 = vld [vmem:[%s3598 + $0x68] sm:$0xff]
      %v3613 = vld [vmem:[%s3598 + $0x70] sm:$0xff]
      %v3614 = vld [vmem:[%s3598 + $0x78] sm:$0xff]
      %3615 = vmatprep.subr.mxu0 0.0
      %3616 = vmatpush1.msra.mxu0 %v3599
      %3617 = vmatprep.subr.mxu0 0.0
      %3618 = vmatpush1.msra.mxu0 %v3600
      %3619 = vmatprep.subr.mxu0 0.0
      %3620 = vmatpush1.msra.mxu0 %v3601
      %3621 = vmatprep.subr.mxu0 0.0
      %3622 = vmatpush1.msra.mxu0 %v3602
      %3623 = vmatprep.subr.mxu0 0.0
      %3624 = vmatpush1.msra.mxu0 %v3603
      %3625 = vmatprep.subr.mxu0 0.0
      %3626 = vmatpush1.msra.mxu0 %v3604
      %3627 = vmatprep.subr.mxu0 0.0
      %3628 = vmatpush1.msra.mxu0 %v3605
      %3629 = vmatprep.subr.mxu0 0.0
      %3630 = vmatpush1.msra.mxu0 %v3606
      %3631 = vmatprep.subr.mxu0 0.0
      %3632 = vmatpush1.msra.mxu0 %v3607
      %3633 = vmatprep.subr.mxu0 0.0
      %3634 = vmatpush1.msra.mxu0 %v3608
      %3635 = vmatprep.subr.mxu0 0.0
      %3636 = vmatpush1.msra.mxu0 %v3609
      %3637 = vmatprep.subr.mxu0 0.0
      %3638 = vmatpush1.msra.mxu0 %v3610
      %3639 = vmatprep.subr.mxu0 0.0
      %3640 = vmatpush1.msra.mxu0 %v3611
      %3641 = vmatprep.subr.mxu0 0.0
      %3642 = vmatpush1.msra.mxu0 %v3612
      %3643 = vmatprep.subr.mxu0 0.0
      %3644 = vmatpush1.msra.mxu0 %v3613
      %3645 = vmatprep.subr.mxu0 0.0
      %3646 = vmatpush1.msra.mxu0 %v3614
      %3647 = vmatprep.subr.mxu0 0.0
      %3648 = vmatpush1.msra.mxu0 0.0
      %3649 = vmatprep.subr.mxu0 0.0
      %3650 = vmatpush1.msra.mxu0 0.0
      %3651 = vmatprep.subr.mxu0 0.0
      %3652 = vmatpush1.msra.mxu0 0.0
      %3653 = vmatprep.subr.mxu0 0.0
      %3654 = vmatpush1.msra.mxu0 0.0
      %3655 = vmatprep.subr.mxu0 0.0
      %3656 = vmatpush1.msra.mxu0 0.0
      %3657 = vmatprep.subr.mxu0 0.0
      %3658 = vmatpush1.msra.mxu0 0.0
      %3659 = vmatprep.subr.mxu0 0.0
      %3660 = vmatpush1.msra.mxu0 0.0
      %3661 = vmatprep.subr.mxu0 0.0
      %3662 = vmatpush1.msra.mxu0 0.0
      %3663 = vmatprep.subr.mxu0 0.0
      %3664 = vmatpush1.msra.mxu0 0.0
      %3665 = vmatprep.subr.mxu0 0.0
      %3666 = vmatpush1.msra.mxu0 0.0
      %3667 = vmatprep.subr.mxu0 0.0
      %3668 = vmatpush1.msra.mxu0 0.0
      %3669 = vmatprep.subr.mxu0 0.0
      %3670 = vmatpush1.msra.mxu0 0.0
      %3671 = vmatprep.subr.mxu0 0.0
      %3672 = vmatpush1.msra.mxu0 0.0
      %3673 = vmatprep.subr.mxu0 0.0
      %3674 = vmatpush1.msra.mxu0 0.0
      %3675 = vmatprep.subr.mxu0 0.0
      %3676 = vmatpush1.msra.mxu0 0.0
      %3677 = vmatprep.subr.mxu0 0.0
      %3678 = vmatpush1.msra.mxu0 0.0
      %3679 = vmatprep.mubr.f32.mxu0 0.0
      %3680 = vmatmul.mubr.f32.gmra.mrb[0].mxu0 %v3488
      %v3681 = vpop.f32.mrb[0].mxu0
      %v3682 = vadd.f32 0.0, %v3681
      %v3683 = vpop.f32.mrb[0].mxu0
      %3684 = vmatprep.mubr.f32.mxu0 0.0
      %3685 = vmatmul.mubr.f32.gmra.mrb[0].mxu0 %v3489
      %v3686 = vpop.f32.mrb[0].mxu0
      %v3687 = vadd.f32 0.0, %v3686
      %v3688 = vpop.f32.mrb[0].mxu0
      %3689 = vmatprep.mubr.f32.mxu0 0.0
      %3690 = vmatmul.mubr.f32.gmra.mrb[0].mxu0 %v3490
      %v3691 = vpop.f32.mrb[0].mxu0
      %v3692 = vadd.f32 0.0, %v3691
      %v3693 = vpop.f32.mrb[0].mxu0
      %3694 = vmatprep.mubr.f32.mxu0 0.0
      %3695 = vmatmul.mubr.f32.gmra.mrb[0].mxu0 %v3491
      %v3696 = vpop.f32.mrb[0].mxu0
      %v3697 = vadd.f32 0.0, %v3696
      %v3698 = vpop.f32.mrb[0].mxu0
      %3699 = vdwg.mxu0
      %v3704 = vrot.slane %v3682, 1
      %v3705 = vrot.slane %v3687, 1
      %v3706 = vrot.slane %v3692, 1
      %v3707 = vrot.slane %v3697, 1
      %v3712 = vadd.f32 %v3594, %v3704
      %v3713 = vadd.f32 %v3595, %v3705
      %v3714 = vadd.f32 %v3596, %v3706
      %v3715 = vadd.f32 %v3597, %v3707
      %s3716 = scalar_lea.vmem %s5, 3328
      %v3717 = vld [vmem:[%s3716] sm:$0xff]
      %v3718 = vld [vmem:[%s3716 + $0x8] sm:$0xff]
      %v3719 = vld [vmem:[%s3716 + $0x10] sm:$0xff]
      %v3720 = vld [vmem:[%s3716 + $0x18] sm:$0xff]
      %v3721 = vld [vmem:[%s3716 + $0x20] sm:$0xff]
      %v3722 = vld [vmem:[%s3716 + $0x28] sm:$0xff]
      %v3723 = vld [vmem:[%s3716 + $0x30] sm:$0xff]
      %v3724 = vld [vmem:[%s3716 + $0x38] sm:$0xff]
      %v3725 = vld [vmem:[%s3716 + $0x40] sm:$0xff]
      %v3726 = vld [vmem:[%s3716 + $0x48] sm:$0xff]
      %v3727 = vld [vmem:[%s3716 + $0x50] sm:$0xff]
      %v3728 = vld [vmem:[%s3716 + $0x58] sm:$0xff]
      %v3729 = vld [vmem:[%s3716 + $0x60] sm:$0xff]
      %v3730 = vld [vmem:[%s3716 + $0x68] sm:$0xff]
      %v3731 = vld [vmem:[%s3716 + $0x70] sm:$0xff]
      %v3732 = vld [vmem:[%s3716 + $0x78] sm:$0xff]
      %3733 = vmatprep.subr.mxu0 0.0
      %3734 = vmatpush1.msra.mxu0 %v3717
      %3735 = vmatprep.subr.mxu0 0.0
      %3736 = vmatpush1.msra.mxu0 %v3718
      %3737 = vmatprep.subr.mxu0 0.0
      %3738 = vmatpush1.msra.mxu0 %v3719
      %3739 = vmatprep.subr.mxu0 0.0
      %3740 = vmatpush1.msra.mxu0 %v3720
      %3741 = vmatprep.subr.mxu0 0.0
      %3742 = vmatpush1.msra.mxu0 %v3721
      %3743 = vmatprep.subr.mxu0 0.0
      %3744 = vmatpush1.msra.mxu0 %v3722
      %3745 = vmatprep.subr.mxu0 0.0
      %3746 = vmatpush1.msra.mxu0 %v3723
      %3747 = vmatprep.subr.mxu0 0.0
      %3748 = vmatpush1.msra.mxu0 %v3724
      %3749 = vmatprep.subr.mxu0 0.0
      %3750 = vmatpush1.msra.mxu0 %v3725
      %3751 = vmatprep.subr.mxu0 0.0
      %3752 = vmatpush1.msra.mxu0 %v3726
      %3753 = vmatprep.subr.mxu0 0.0
      %3754 = vmatpush1.msra.mxu0 %v3727
      %3755 = vmatprep.subr.mxu0 0.0
      %3756 = vmatpush1.msra.mxu0 %v3728
      %3757 = vmatprep.subr.mxu0 0.0
      %3758 = vmatpush1.msra.mxu0 %v3729
      %3759 = vmatprep.subr.mxu0 0.0
      %3760 = vmatpush1.msra.mxu0 %v3730
      %3761 = vmatprep.subr.mxu0 0.0
      %3762 = vmatpush1.msra.mxu0 %v3731
      %3763 = vmatprep.subr.mxu0 0.0
      %3764 = vmatpush1.msra.mxu0 %v3732
      %3765 = vmatprep.subr.mxu0 0.0
      %3766 = vmatpush1.msra.mxu0 0.0
      %3767 = vmatprep.subr.mxu0 0.0
      %3768 = vmatpush1.msra.mxu0 0.0
      %3769 = vmatprep.subr.mxu0 0.0
      %3770 = vmatpush1.msra.mxu0 0.0
      %3771 = vmatprep.subr.mxu0 0.0
      %3772 = vmatpush1.msra.mxu0 0.0
      %3773 = vmatprep.subr.mxu0 0.0
      %3774 = vmatpush1.msra.mxu0 0.0
      %3775 = vmatprep.subr.mxu0 0.0
      %3776 = vmatpush1.msra.mxu0 0.0
      %3777 = vmatprep.subr.mxu0 0.0
      %3778 = vmatpush1.msra.mxu0 0.0
      %3779 = vmatprep.subr.mxu0 0.0
      %3780 = vmatpush1.msra.mxu0 0.0
      %3781 = vmatprep.subr.mxu0 0.0
      %3782 = vmatpush1.msra.mxu0 0.0
      %3783 = vmatprep.subr.mxu0 0.0
      %3784 = vmatpush1.msra.mxu0 0.0
      %3785 = vmatprep.subr.mxu0 0.0
      %3786 = vmatpush1.msra.mxu0 0.0
      %3787 = vmatprep.subr.mxu0 0.0
      %3788 = vmatpush1.msra.mxu0 0.0
      %3789 = vmatprep.subr.mxu0 0.0
      %3790 = vmatpush1.msra.mxu0 0.0
      %3791 = vmatprep.subr.mxu0 0.0
      %3792 = vmatpush1.msra.mxu0 0.0
      %3793 = vmatprep.subr.mxu0 0.0
      %3794 = vmatpush1.msra.mxu0 0.0
      %3795 = vmatprep.subr.mxu0 0.0
      %3796 = vmatpush1.msra.mxu0 0.0
      %3797 = vmatprep.mubr.f32.mxu0 0.0
      %3798 = vmatmul.mubr.f32.gmra.mrb[0].mxu0 %v3488
      %v3799 = vpop.f32.mrb[0].mxu0
      %v3800 = vadd.f32 0.0, %v3799
      %v3801 = vpop.f32.mrb[0].mxu0
      %3802 = vmatprep.mubr.f32.mxu0 0.0
      %3803 = vmatmul.mubr.f32.gmra.mrb[0].mxu0 %v3489
      %v3804 = vpop.f32.mrb[0].mxu0
      %v3805 = vadd.f32 0.0, %v3804
      %v3806 = vpop.f32.mrb[0].mxu0
      %3807 = vmatprep.mubr.f32.mxu0 0.0
      %3808 = vmatmul.mubr.f32.gmra.mrb[0].mxu0 %v3490
      %v3809 = vpop.f32.mrb[0].mxu0
      %v3810 = vadd.f32 0.0, %v3809
      %v3811 = vpop.f32.mrb[0].mxu0
      %3812 = vmatprep.mubr.f32.mxu0 0.0
      %3813 = vmatmul.mubr.f32.gmra.mrb[0].mxu0 %v3491
      %v3814 = vpop.f32.mrb[0].mxu0
      %v3815 = vadd.f32 0.0, %v3814
      %v3816 = vpop.f32.mrb[0].mxu0
      %3817 = vdwg.mxu0
      %v3822 = vrot.slane %v3800, 2
      %v3823 = vrot.slane %v3805, 2
      %v3824 = vrot.slane %v3810, 2
      %v3825 = vrot.slane %v3815, 2
      %v3830 = vadd.f32 %v3712, %v3822
      %v3831 = vadd.f32 %v3713, %v3823
      %v3832 = vadd.f32 %v3714, %v3824
      %v3833 = vadd.f32 %v3715, %v3825
      %v3834 = vld [vmem:[%s6] sm:$0x1]
      %v3836 = vlaneseq
      %v3837 = vshrl.u32 %v3836, 7
      %v3838 = vsub.s32 0, %v3837
      %v3839 = vrot.slane %v3834, %v3838
      %v3841 = vadd.f32 %v3830, %v3839
      %v3842 = vadd.f32 %v3831, %v3839
      %v3843 = vadd.f32 %v3832, %v3839
      %v3844 = vadd.f32 %v3833, %v3839
      %3845 = vst [vmem:[%s545] sm:$0xf] %v3841
      %3846 = vst [vmem:[%s545 + $0x4] sm:$0xf] %v3842
      %3847 = vst [vmem:[%s545 + $0x8] sm:$0xf] %v3843
      %3848 = vst [vmem:[%s545 + $0xc] sm:$0xf] %v3844
      %v3849 = vld [vmem:[%s548] sm:$0x1]
      %vm3850 = vcmask 1043456
      %v3851 = vsel %vm3850, %v3841, 0.0
      %v3852 = vsel %vm3850, %v3842, 0.0
      %v3853 = vadd.f32 %v3851, %v3852
      %v3854 = vsel %vm3850, %v3843, 0.0
      %v3855 = vadd.f32 %v3853, %v3854
      %v3856 = vsel %vm3850, %v3844, 0.0
      %v3857 = vadd.f32 %v3855, %v3856
      %v3858 = vrot.slane %v3857, 4
      %v3859 = vadd.f32 %v3857, %v3858
      %v3860 = vrot.slane %v3859, 2
      %v3861 = vadd.f32 %v3859, %v3860
      %v3862 = vrot.slane %v3861, 1
      %v3863 = vadd.f32 %v3861, %v3862
      %v3864 = vadd.f32 %v3849, %v3863
      %3865 = vst [vmem:[%s548] sm:$0x1] %v3864
      %v3866 = vld [vmem:[%s551] sm:$0x1]
      %v3867 = vmul.f32 %v3841, %v3841
      %v3868 = vmul.f32 %v3842, %v3842
      %v3869 = vmul.f32 %v3843, %v3843
      %v3870 = vmul.f32 %v3844, %v3844
      %v3871 = vsel %vm3850, %v3867, 0.0
      %v3872 = vsel %vm3850, %v3868, 0.0
      %v3873 = vadd.f32 %v3871, %v3872
      %v3874 = vsel %vm3850, %v3869, 0.0
      %v3875 = vadd.f32 %v3873, %v3874
      %v3876 = vsel %vm3850, %v3870, 0.0
      %v3877 = vadd.f32 %v3875, %v3876
      %v3878 = vrot.slane %v3877, 4
      %v3879 = vadd.f32 %v3877, %v3878
      %v3880 = vrot.slane %v3879, 2
      %v3881 = vadd.f32 %v3879, %v3880
      %v3882 = vrot.slane %v3881, 1
      %v3883 = vadd.f32 %v3881, %v3882
      %v3884 = vadd.f32 %v3866, %v3883
      %3885 = vst [vmem:[%s551] sm:$0x1] %v3884
      %p3886 = scmp.lt.s32.totalorder %s25, 1
      %s3887 = scalar_select %p3886, %s25, 1
      %p3888 = scmp.lt.s32.totalorder %s26, 3
      %s3889 = scalar_select %p3888, %s26, 3
      %s3890 = smul.addr %s3889, 4
      %s3891 = smul.addr %s3887, 16
      %s3892 = sadd.s32 %s3890, %s3891
      %s3893 = smul.addr %s3892, 4
      %s3894 = scalar_lea.vmem %s7, %s3893
      %p3895 = scmp.lt.s32.totalorder %s25, 1
      %s3896 = scalar_select %p3895, %s25, 1
      %s3897 = scalar_lea.vmem %s8, %s3896
      %p3898 = scmp.lt.s32.totalorder %s25, 1
      %s3899 = scalar_select %p3898, %s25, 1
      %s3900 = scalar_lea.vmem %s9, %s3899
      // Predicated region
      $region53: #{down_forward.5} parent=47 // pred_check
        %p3901 = pneg %p249
      $region54: #{down_forward.5} parent=47 // pred_check_branch
        %3903 = sbr.rel (%p3901) target = $region56
      $region55: #{down_forward.5} parent=47 // pred_region
        _
      $region56: #{down_forward.5} parent=47 // pred_fallthru
        _
      // Predicated region
      $region57: #{down_forward.5} parent=47 // pred_check
        %p3904 = pneg %p275
      $region58: #{down_forward.5} parent=47 // pred_check_branch
        %3906 = sbr.rel (%p3904) target = $region60
      $region59: #{down_forward.5} parent=47 // pred_region
        _
      $region60: #{down_forward.5} parent=47 // pred_fallthru
        _
      // Predicated region
      $region61: #{down_forward.5} parent=47 // pred_check
        %p3907 = pneg %p301
      $region62: #{down_forward.5} parent=47 // pred_check_branch
        %3909 = sbr.rel (%p3907) target = $region64
      $region63: #{down_forward.5} parent=47 // pred_region
        _
      $region64: #{down_forward.5} parent=47 // pred_fallthru
        _
    $region48: #{down_forward.5} parent=5 // pred_fallthru
      _
    %p3910 = scmp.le.s32.totalorder 2, %s16
    // Predicated region
    $region65: #{down_forward.5} parent=5 // pred_check
      %p3911 = pneg %p3910
    $region66: #{down_forward.5} parent=5 // pred_check_branch
      %3913 = sbr.rel (%p3911) target = $region68
    $region67: #{down_forward.5} parent=5 // pred_region
      %s3914 = ssub.s32 %s16, 2
      // Predicated region
      $region69: #{down_forward.5} parent=67 // pred_check
        %p3915 = pneg %p255
      $region70: #{down_forward.5} parent=67 // pred_check_branch
        %3917 = sbr.rel (%p3915) target = $region72
      $region71: #{down_forward.5} parent=67 // pred_region
        %p3918 = scmp.lt.s32.totalorder %s27, 1
        %s3919 = scalar_select %p3918, %s27, 1
        %p3920 = scmp.lt.s32.totalorder %s28, 3
        %s3921 = scalar_select %p3920, %s28, 3
        %s3922 = smul.addr %s3921, 4
        %s3923 = smul.addr %s3919, 16
        %s3924 = sadd.s32 %s3922, %s3923
        %s3925 = smul.addr %s3924, 4
        %s3926 = scalar_lea.vmem %s7, %s3925
      $region72: #{down_forward.5} parent=67 // pred_fallthru
        _
      // Predicated region
      $region73: #{down_forward.5} parent=67 // pred_check
        %p3927 = pneg %p281
      $region74: #{down_forward.5} parent=67 // pred_check_branch
        %3929 = sbr.rel (%p3927) target = $region76
      $region75: #{down_forward.5} parent=67 // pred_region
        %p3930 = scmp.lt.s32.totalorder %s27, 1
        %s3931 = scalar_select %p3930, %s27, 1
        %s3932 = scalar_lea.vmem %s8, %s3931
      $region76: #{down_forward.5} parent=67 // pred_fallthru
        _
      // Predicated region
      $region77: #{down_forward.5} parent=67 // pred_check
        %p3933 = pneg %p307
      $region78: #{down_forward.5} parent=67 // pred_check_branch
        %3935 = sbr.rel (%p3933) target = $region80
      $region79: #{down_forward.5} parent=67 // pred_region
        %p3936 = scmp.lt.s32.totalorder %s27, 1
        %s3937 = scalar_select %p3936, %s27, 1
        %s3938 = scalar_lea.vmem %s9, %s3937
      $region80: #{down_forward.5} parent=67 // pred_fallthru
        _
    $region68: #{down_forward.5} parent=5 // pred_fallthru
      _
  $region6: #{down_forward.5} parent=0 // loop_footer
    %s20 = sadd.s32 1, %s16
  $region7: #{down_forward.5} parent=0 // loop_footer_branch
    %15 = sbr.rel target = $region3
  $region8: #{down_forward.5} parent=0 // loop_exit
    _

</llo_original>
